<compile_context>
chip_gen: v5e
topology: v5e:2x2
jax: 0.10.0
libtpu: 0.0.40
codegen_flags: <defaults>
</compile_context>

<pallas_src>
import functools

import jax
import jax.numpy as jnp
from jax.experimental import pallas as pl
from jax.experimental.pallas import tpu as pltpu

N_OUT = 6          # real output width of the torch module
N_OUT_PAD = 128    # lane-dense padded output width


def mlp_kernel(x_ref,
               w1_ref, b1_ref,
               w2_ref, b2_ref,
               w3_ref, b3_ref,
               w4_ref, b4_ref,
               w5_ref, b5_ref,
               o_ref):
    """One batch tile through the whole 5-layer MLP.

    x / W refs are bf16 (MXU native); accumulate, bias-add and ReLU in f32."""
    x = x_ref[...]

    # Layer 1: Linear(n_feature, 1024) -> Dropout (id) -> ReLU
    h = jnp.dot(x, w1_ref[...], preferred_element_type=jnp.float32) + b1_ref[...]
    h = jnp.maximum(h, 0.0).astype(jnp.bfloat16)
    # Layer 2: Linear(1024, 1024) -> Dropout(0.2) (id) -> ReLU
    h = jnp.dot(h, w2_ref[...], preferred_element_type=jnp.float32) + b2_ref[...]
    h = jnp.maximum(h, 0.0).astype(jnp.bfloat16)
    # Layer 3: Linear(1024, 64) -> Dropout (id) -> ReLU
    h = jnp.dot(h, w3_ref[...], preferred_element_type=jnp.float32) + b3_ref[...]
    h = jnp.maximum(h, 0.0).astype(jnp.bfloat16)
    # Layer 4: Linear(64, 64) -> Dropout (id) -> ReLU
    h = jnp.dot(h, w4_ref[...], preferred_element_type=jnp.float32) + b4_ref[...]
    h = jnp.maximum(h, 0.0).astype(jnp.bfloat16)
    # Layer 5: Linear(64, 6), padded to 128 output lanes (zero weights/bias in the pad)
    out = jnp.dot(h, w5_ref[...], preferred_element_type=jnp.float32) + b5_ref[...]
    o_ref[...] = out.astype(o_ref.dtype)


@functools.partial(jax.jit, static_argnames=("batch_tile", "b_pad"))
def _net_forward_impl(x, w1, b1, w2, b2, w3, b3, w4, b4, w5, b5,
                      *, batch_tile, b_pad):
    """Pad/cast inputs and run the fused Pallas MLP. Returns [b_pad, N_OUT_PAD] f32."""
    B, F = x.shape

    # Pad the final layer to 128 output lanes -> lane-dense output stores.
    w5p = jnp.zeros((w5.shape[0], N_OUT_PAD), w5.dtype).at[:, :N_OUT].set(w5)
    b5p = jnp.zeros((1, N_OUT_PAD), b5.dtype).at[:, :N_OUT].set(b5)

    # bf16 matmul operands (MXU native rate); biases stay f32.
    xb = x.astype(jnp.bfloat16)
    if b_pad != B:
        xb = jnp.pad(xb, ((0, b_pad - B), (0, 0)))

    weight_args = [w1.astype(jnp.bfloat16), b1,
                   w2.astype(jnp.bfloat16), b2,
                   w3.astype(jnp.bfloat16), b3,
                   w4.astype(jnp.bfloat16), b4,
                   w5p.astype(jnp.bfloat16), b5p]

    n_tiles = b_pad // batch_tile

    flops = 2 * b_pad * (F * 1024 + 1024 * 1024 + 1024 * 64 + 64 * 64 + 64 * N_OUT_PAD)
    bytes_accessed = (b_pad * F * 2
                      + sum(int(a.size) * a.dtype.itemsize for a in weight_args)
                      + b_pad * N_OUT_PAD * 4)
    cost = pl.CostEstimate(flops=flops, transcendentals=0,
                           bytes_accessed=bytes_accessed)

    # x tile walks the batch; weights/biases use constant index maps (fetched once,
    # resident across the whole grid).
    in_specs = [pl.BlockSpec((batch_tile, F), lambda i: (i, 0))]
    for a in weight_args:
        in_specs.append(pl.BlockSpec(a.shape, lambda i, _nd=a.ndim: (0,) * _nd))
    out_specs = pl.BlockSpec((batch_tile, N_OUT_PAD), lambda i: (i, 0))

    return pl.pallas_call(
        mlp_kernel,
        out_shape=jax.ShapeDtypeStruct((b_pad, N_OUT_PAD), jnp.float32),
        grid_spec=pltpu.PrefetchScalarGridSpec(
            num_scalar_prefetch=0,
            grid=(n_tiles,),
            in_specs=in_specs,
            out_specs=out_specs,
        ),
        compiler_params=pltpu.CompilerParams(
            dimension_semantics=("parallel",),
            vmem_limit_bytes=48 << 20,   # fits v7x's 64 MiB physical VMEM
        ),
        cost_estimate=cost,
    )(xb, *weight_args)


def net_forward(x, params, *, batch_tile=256):
    """Run the fused MLP.

    x: [B, n_feature] float32 (torch nn.Linear input convention).
    params: 5 pairs (W, b); W stored [in_dim, out_dim], b [1, out_dim], float32.
    Returns [B, 6] float32."""
    B, _ = x.shape
    (w1, b1), (w2, b2), (w3, b3), (w4, b4), (w5, b5) = params

    n_tiles = pl.cdiv(B, batch_tile)
    b_pad = int(n_tiles) * batch_tile

    out_pad = _net_forward_impl(x, w1, b1, w2, b2, w3, b3, w4, b4, w5, b5,
                                batch_tile=batch_tile, b_pad=b_pad)
    return out_pad[:B, :N_OUT]


def init_params(key, n_feature):
    """Deterministic init mimicking torch nn.Linear default (uniform +/- 1/sqrt(fan_in)).
    Weights stored as [in_dim, out_dim]; biases as [1, out_dim]."""
    dims = [(n_feature, 1024), (1024, 1024), (1024, 64), (64, 64), (64, N_OUT)]
    params = []
    for (fan_in, fan_out) in dims:
        key, kw, kb = jax.random.split(key, 3)
        bound = 1.0 / (fan_in ** 0.5)
        w = jax.random.uniform(kw, (fan_in, fan_out), jnp.float32, -bound, bound)
        b = jax.random.uniform(kb, (1, fan_out), jnp.float32, -bound, bound)
        params.append((w, b))
    return params


def reference_forward(x, params):
    """Pure-JAX reference with the same numerics as the kernel
    (bf16 matmul operands, f32 accumulation / bias-add / ReLU)."""
    h = x.astype(jnp.bfloat16)
    n = len(params)
    for idx, (w, b) in enumerate(params):
        h = jnp.dot(h, w.astype(jnp.bfloat16), preferred_element_type=jnp.float32) + b
        if idx < n - 1:  # ReLU after every layer except the last
            h = jnp.maximum(h, 0.0).astype(jnp.bfloat16)
    return h


if __name__ == "__main__":
    key = jax.random.PRNGKey(0)
    key, kx = jax.random.split(key)

    batch = 300       # not a tile multiple -> exercises batch padding; 2 grid steps of 256
    n_feature = 32    # small synthetic feature count

    x = jax.random.normal(kx, (batch, n_feature), jnp.float32)
    params = init_params(key, n_feature)

    out = net_forward(x, params, batch_tile=256)
    out = jax.block_until_ready(out)

    ref = reference_forward(x, params)
    assert out.shape == (batch, N_OUT), out.shape
    assert jnp.allclose(out, ref, atol=1e-2, rtol=1e-2), "mismatch vs reference"

    print("KERNEL_OK")
</pallas_src>

<mosaic_0001>
module attributes {stable_mosaic.version = 11 : i64} {
  func.func @mlp_kernel(%arg0: i32, %arg1: memref<256x32xbf16, #tpu.memory_space<vmem>>, %arg2: memref<32x1024xbf16, #tpu.memory_space<vmem>>, %arg3: memref<1x1024xf32, #tpu.memory_space<vmem>>, %arg4: memref<1024x1024xbf16, #tpu.memory_space<vmem>>, %arg5: memref<1x1024xf32, #tpu.memory_space<vmem>>, %arg6: memref<1024x64xbf16, #tpu.memory_space<vmem>>, %arg7: memref<1x64xf32, #tpu.memory_space<vmem>>, %arg8: memref<64x64xbf16, #tpu.memory_space<vmem>>, %arg9: memref<1x64xf32, #tpu.memory_space<vmem>>, %arg10: memref<64x128xbf16, #tpu.memory_space<vmem>>, %arg11: memref<1x128xf32, #tpu.memory_space<vmem>>, %arg12: memref<256x128xf32, #tpu.memory_space<vmem>>) attributes {dimension_semantics = [#tpu.dimension_semantics<parallel>], iteration_bounds = array<i64: 2>, scalar_prefetch = 0 : i64, scratch_operands = 0 : i64, tpu.core_type = #tpu.core_type<tc>, window_params = [{transform_indices = @transform_0, window_bounds = array<i64: 256, 32>}, {pipeline_mode = #tpu.pipeline_mode<synchronous>, transform_indices = @transform_1, window_bounds = array<i64: 32, 1024>}, {pipeline_mode = #tpu.pipeline_mode<synchronous>, transform_indices = @transform_2, window_bounds = array<i64: 1, 1024>}, {pipeline_mode = #tpu.pipeline_mode<synchronous>, transform_indices = @transform_3, window_bounds = array<i64: 1024, 1024>}, {pipeline_mode = #tpu.pipeline_mode<synchronous>, transform_indices = @transform_4, window_bounds = array<i64: 1, 1024>}, {pipeline_mode = #tpu.pipeline_mode<synchronous>, transform_indices = @transform_5, window_bounds = array<i64: 1024, 64>}, {pipeline_mode = #tpu.pipeline_mode<synchronous>, transform_indices = @transform_6, window_bounds = array<i64: 1, 64>}, {pipeline_mode = #tpu.pipeline_mode<synchronous>, transform_indices = @transform_7, window_bounds = array<i64: 64, 64>}, {pipeline_mode = #tpu.pipeline_mode<synchronous>, transform_indices = @transform_8, window_bounds = array<i64: 1, 64>}, {pipeline_mode = #tpu.pipeline_mode<synchronous>, transform_indices = @transform_9, window_bounds = array<i64: 64, 128>}, {pipeline_mode = #tpu.pipeline_mode<synchronous>, transform_indices = @transform_10, window_bounds = array<i64: 1, 128>}, {transform_indices = @transform_11, window_bounds = array<i64: 256, 128>}]} {
    %c0 = arith.constant 0 : index
    %c0_0 = arith.constant 0 : index
    %0 = vector.load %arg1[%c0, %c0_0] : memref<256x32xbf16, #tpu.memory_space<vmem>>, vector<256x32xbf16>
    %c0_1 = arith.constant 0 : index
    %c0_2 = arith.constant 0 : index
    %1 = vector.load %arg2[%c0_1, %c0_2] : memref<32x1024xbf16, #tpu.memory_space<vmem>>, vector<32x1024xbf16>
    %cst = arith.constant dense<0.000000e+00> : vector<256x1024xf32>
    %2 = tpu.matmul %0, %1, %cst {dimension_numbers = #tpu.dot_dimension_numbers<[1], [0], [0], [1], [0, 0, 1, 1], [], []>} : vector<256x32xbf16>, vector<32x1024xbf16>, vector<256x1024xf32> -> vector<256x1024xf32>
    %c0_3 = arith.constant 0 : index
    %c0_4 = arith.constant 0 : index
    %3 = vector.load %arg3[%c0_3, %c0_4] : memref<1x1024xf32, #tpu.memory_space<vmem>>, vector<1x1024xf32>
    %4 = vector.broadcast %3 : vector<1x1024xf32> to vector<256x1024xf32>
    %5 = arith.addf %2, %4 : vector<256x1024xf32>
    %cst_5 = arith.constant 0.000000e+00 : f32
    %6 = vector.broadcast %cst_5 : f32 to vector<256x1024xf32>
    %7 = arith.maximumf %5, %6 : vector<256x1024xf32>
    %8 = arith.truncf %7 : vector<256x1024xf32> to vector<256x1024xbf16>
    %c0_6 = arith.constant 0 : index
    %c0_7 = arith.constant 0 : index
    %9 = vector.load %arg4[%c0_6, %c0_7] : memref<1024x1024xbf16, #tpu.memory_space<vmem>>, vector<1024x1024xbf16>
    %cst_8 = arith.constant dense<0.000000e+00> : vector<256x1024xf32>
    %10 = tpu.matmul %8, %9, %cst_8 {dimension_numbers = #tpu.dot_dimension_numbers<[1], [0], [0], [1], [0, 0, 1, 1], [], []>} : vector<256x1024xbf16>, vector<1024x1024xbf16>, vector<256x1024xf32> -> vector<256x1024xf32>
    %c0_9 = arith.constant 0 : index
    %c0_10 = arith.constant 0 : index
    %11 = vector.load %arg5[%c0_9, %c0_10] : memref<1x1024xf32, #tpu.memory_space<vmem>>, vector<1x1024xf32>
    %12 = vector.broadcast %11 : vector<1x1024xf32> to vector<256x1024xf32>
    %13 = arith.addf %10, %12 : vector<256x1024xf32>
    %cst_11 = arith.constant 0.000000e+00 : f32
    %14 = vector.broadcast %cst_11 : f32 to vector<256x1024xf32>
    %15 = arith.maximumf %13, %14 : vector<256x1024xf32>
    %16 = arith.truncf %15 : vector<256x1024xf32> to vector<256x1024xbf16>
    %c0_12 = arith.constant 0 : index
    %c0_13 = arith.constant 0 : index
    %17 = vector.load %arg6[%c0_12, %c0_13] : memref<1024x64xbf16, #tpu.memory_space<vmem>>, vector<1024x64xbf16>
    %cst_14 = arith.constant dense<0.000000e+00> : vector<256x64xf32>
    %18 = tpu.matmul %16, %17, %cst_14 {dimension_numbers = #tpu.dot_dimension_numbers<[1], [0], [0], [1], [0, 0, 1, 1], [], []>} : vector<256x1024xbf16>, vector<1024x64xbf16>, vector<256x64xf32> -> vector<256x64xf32>
    %c0_15 = arith.constant 0 : index
    %c0_16 = arith.constant 0 : index
    %19 = vector.load %arg7[%c0_15, %c0_16] : memref<1x64xf32, #tpu.memory_space<vmem>>, vector<1x64xf32>
    %20 = vector.broadcast %19 : vector<1x64xf32> to vector<256x64xf32>
    %21 = arith.addf %18, %20 : vector<256x64xf32>
    %cst_17 = arith.constant 0.000000e+00 : f32
    %22 = vector.broadcast %cst_17 : f32 to vector<256x64xf32>
    %23 = arith.maximumf %21, %22 : vector<256x64xf32>
    %24 = arith.truncf %23 : vector<256x64xf32> to vector<256x64xbf16>
    %c0_18 = arith.constant 0 : index
    %c0_19 = arith.constant 0 : index
    %25 = vector.load %arg8[%c0_18, %c0_19] : memref<64x64xbf16, #tpu.memory_space<vmem>>, vector<64x64xbf16>
    %cst_20 = arith.constant dense<0.000000e+00> : vector<256x64xf32>
    %26 = tpu.matmul %24, %25, %cst_20 {dimension_numbers = #tpu.dot_dimension_numbers<[1], [0], [0], [1], [0, 0, 1, 1], [], []>} : vector<256x64xbf16>, vector<64x64xbf16>, vector<256x64xf32> -> vector<256x64xf32>
    %c0_21 = arith.constant 0 : index
    %c0_22 = arith.constant 0 : index
    %27 = vector.load %arg9[%c0_21, %c0_22] : memref<1x64xf32, #tpu.memory_space<vmem>>, vector<1x64xf32>
    %28 = vector.broadcast %27 : vector<1x64xf32> to vector<256x64xf32>
    %29 = arith.addf %26, %28 : vector<256x64xf32>
    %cst_23 = arith.constant 0.000000e+00 : f32
    %30 = vector.broadcast %cst_23 : f32 to vector<256x64xf32>
    %31 = arith.maximumf %29, %30 : vector<256x64xf32>
    %32 = arith.truncf %31 : vector<256x64xf32> to vector<256x64xbf16>
    %c0_24 = arith.constant 0 : index
    %c0_25 = arith.constant 0 : index
    %33 = vector.load %arg10[%c0_24, %c0_25] : memref<64x128xbf16, #tpu.memory_space<vmem>>, vector<64x128xbf16>
    %cst_26 = arith.constant dense<0.000000e+00> : vector<256x128xf32>
    %34 = tpu.matmul %32, %33, %cst_26 {dimension_numbers = #tpu.dot_dimension_numbers<[1], [0], [0], [1], [0, 0, 1, 1], [], []>} : vector<256x64xbf16>, vector<64x128xbf16>, vector<256x128xf32> -> vector<256x128xf32>
    %c0_27 = arith.constant 0 : index
    %c0_28 = arith.constant 0 : index
    %35 = vector.load %arg11[%c0_27, %c0_28] : memref<1x128xf32, #tpu.memory_space<vmem>>, vector<1x128xf32>
    %36 = vector.broadcast %35 : vector<1x128xf32> to vector<256x128xf32>
    %37 = arith.addf %34, %36 : vector<256x128xf32>
    %c0_29 = arith.constant 0 : index
    %c0_30 = arith.constant 0 : index
    %38 = vector.load %arg12[%c0_29, %c0_30] : memref<256x128xf32, #tpu.memory_space<vmem>>, vector<256x128xf32>
    tpu.vector_store %arg12[%c0_29, %c0_30], %37 {strides = array<i32>} : memref<256x128xf32, #tpu.memory_space<vmem>>, vector<256x128xf32>,
    return
  }
  func.func @transform_0(%arg0: i32) -> (i32, i32) {
    %c0_i32 = arith.constant 0 : i32
    %c0_i32_0 = arith.constant 0 : i32
    return %arg0, %c0_i32 : i32, i32
  }
  func.func @transform_1(%arg0: i32) -> (i32, i32) {
    %c0_i32 = arith.constant 0 : i32
    %c0_i32_0 = arith.constant 0 : i32
    %c0_i32_1 = arith.constant 0 : i32
    return %c0_i32, %c0_i32_0 : i32, i32
  }
  func.func @transform_2(%arg0: i32) -> (i32, i32) {
    %c0_i32 = arith.constant 0 : i32
    %c0_i32_0 = arith.constant 0 : i32
    %c0_i32_1 = arith.constant 0 : i32
    return %c0_i32, %c0_i32_0 : i32, i32
  }
  func.func @transform_3(%arg0: i32) -> (i32, i32) {
    %c0_i32 = arith.constant 0 : i32
    %c0_i32_0 = arith.constant 0 : i32
    %c0_i32_1 = arith.constant 0 : i32
    return %c0_i32, %c0_i32_0 : i32, i32
  }
  func.func @transform_4(%arg0: i32) -> (i32, i32) {
    %c0_i32 = arith.constant 0 : i32
    %c0_i32_0 = arith.constant 0 : i32
    %c0_i32_1 = arith.constant 0 : i32
    return %c0_i32, %c0_i32_0 : i32, i32
  }
  func.func @transform_5(%arg0: i32) -> (i32, i32) {
    %c0_i32 = arith.constant 0 : i32
    %c0_i32_0 = arith.constant 0 : i32
    %c0_i32_1 = arith.constant 0 : i32
    return %c0_i32, %c0_i32_0 : i32, i32
  }
  func.func @transform_6(%arg0: i32) -> (i32, i32) {
    %c0_i32 = arith.constant 0 : i32
    %c0_i32_0 = arith.constant 0 : i32
    %c0_i32_1 = arith.constant 0 : i32
    return %c0_i32, %c0_i32_0 : i32, i32
  }
  func.func @transform_7(%arg0: i32) -> (i32, i32) {
    %c0_i32 = arith.constant 0 : i32
    %c0_i32_0 = arith.constant 0 : i32
    %c0_i32_1 = arith.constant 0 : i32
    return %c0_i32, %c0_i32_0 : i32, i32
  }
  func.func @transform_8(%arg0: i32) -> (i32, i32) {
    %c0_i32 = arith.constant 0 : i32
    %c0_i32_0 = arith.constant 0 : i32
    %c0_i32_1 = arith.constant 0 : i32
    return %c0_i32, %c0_i32_0 : i32, i32
  }
  func.func @transform_9(%arg0: i32) -> (i32, i32) {
    %c0_i32 = arith.constant 0 : i32
    %c0_i32_0 = arith.constant 0 : i32
    %c0_i32_1 = arith.constant 0 : i32
    return %c0_i32, %c0_i32_0 : i32, i32
  }
  func.func @transform_10(%arg0: i32) -> (i32, i32) {
    %c0_i32 = arith.constant 0 : i32
    %c0_i32_0 = arith.constant 0 : i32
    %c0_i32_1 = arith.constant 0 : i32
    return %c0_i32, %c0_i32_0 : i32, i32
  }
  func.func @transform_11(%arg0: i32) -> (i32, i32) {
    %c0_i32 = arith.constant 0 : i32
    %c0_i32_0 = arith.constant 0 : i32
    return %arg0, %c0_i32 : i32, i32
  }
}

</mosaic_0001>

<llo_original>
// kernel: _net_forward_impl.1
$region0: #{_net_forward_impl.1}
  #allocation0 [shape = 'u32[]', space=smem, size = 0x4, offset = 0x4, fixed_abs, tag = 'smem constant byte address 0x4 - core index']
  #allocation1 [shape = 'u32[72,128]{1,0:T(1,128)}', space=vmem, size = 0x9000, scoped, tag = 'internal scratch']
  %s0 = inlined_call_operand.vmem [shape: bf16[512,32], index: 0, kind: input, shape index: {}]
  %s1 = inlined_call_operand.vmem [shape: bf16[32,1024], index: 1, kind: input, shape index: {}]
  %s2 = inlined_call_operand.vmem [shape: f32[1,1024], index: 2, kind: input, shape index: {}]
  %s3 = inlined_call_operand.vmem [shape: bf16[1024,1024], index: 3, kind: input, shape index: {}]
  %s4 = inlined_call_operand.vmem [shape: f32[1,1024], index: 4, kind: input, shape index: {}]
  %s5 = inlined_call_operand.vmem [shape: bf16[1024,64], index: 5, kind: input, shape index: {}]
  %s6 = inlined_call_operand.vmem [shape: f32[1,64], index: 6, kind: input, shape index: {}]
  %s7 = inlined_call_operand.vmem [shape: bf16[64,64], index: 7, kind: input, shape index: {}]
  %s8 = inlined_call_operand.vmem [shape: f32[1,64], index: 8, kind: input, shape index: {}]
  %s9 = inlined_call_operand.vmem [shape: bf16[64,128], index: 9, kind: input, shape index: {}]
  %s10 = inlined_call_operand.vmem [shape: f32[1,128], index: 10, kind: input, shape index: {}]
  %s11 = inlined_call_operand.hbm [shape: f32[512,128], index: 11, kind: output, shape index: {}]
  %s12 = sld [smem:[#allocation0]]
  $region77: #{_net_forward_impl.1} parent=0
    _
  %s14 = ssub.s32 1, %s12
  %s15 = scalar_select 0, %s14, %s12
  $region1: #{_net_forward_impl.1} parent=0
    #allocation2 [shape = 'u8[262144]{0}', space=vmem, size = 0x40000, scoped, tag = 'output window, operand 0']
    #allocation3 [shape = 's32[2]{0}', space=sflag, size = 0x8, scoped, tag = 'scoped memory for _net_forward_impl.1']
    %16 = vsyncpa [#allocation3], 0
    %s17 = scalar_lea.sflag [#allocation3], 1
    %18 = vsyncpa %s17, 0
    loop: start=0, step=1, limit=4
    $region2: #{_net_forward_impl.1} parent=1 // loop_pre_header
      _
    $region3: #{_net_forward_impl.1} parent=1 // loop_header
      %s20 = sphi 0, %s24
      %p21 = scmp.ge.s32.totalorder %s20, 4
      %s30 = sphi 0, %s32
      %s33 = sphi 0, %s30
      %s34 = sphi 0, %s33
      %s50 = sphi 0, %s34
      %s54 = sphi 0, %s54
      %s56 = sphi 0, %s54
      %s57 = sphi 0, %s56
      %s71 = sphi 0, %s57
      %s75 = sphi 0, %s75
      %s77 = sphi 0, %s75
      %s78 = sphi 0, %s77
      %s92 = sphi 0, %s78
      %s96 = sphi 0, %s96
      %s98 = sphi 0, %s96
      %s99 = sphi 0, %s98
      %s113 = sphi 0, %s99
      %s117 = sphi 0, %s117
      %s119 = sphi 0, %s117
      %s120 = sphi 0, %s119
      %s134 = sphi 0, %s120
      %s138 = sphi 0, %s138
      %s140 = sphi 0, %s138
      %s141 = sphi 0, %s140
      %s155 = sphi 0, %s141
      %s159 = sphi 0, %s159
      %s161 = sphi 0, %s159
      %s162 = sphi 0, %s161
      %s176 = sphi 0, %s162
      %s180 = sphi 0, %s180
      %s182 = sphi 0, %s180
      %s183 = sphi 0, %s182
      %s197 = sphi 0, %s183
      %s201 = sphi 0, %s201
      %s203 = sphi 0, %s201
      %s204 = sphi 0, %s203
      %s218 = sphi 0, %s204
      %s222 = sphi 0, %s222
      %s224 = sphi 0, %s222
      %s225 = sphi 0, %s224
      %s239 = sphi 0, %s225
      %s243 = sphi 0, %s243
      %s245 = sphi 0, %s243
      %s246 = sphi 0, %s245
      %s260 = sphi 0, %s246
      %s266 = sphi 0, %s268
      %s269 = sphi 0, %s266
      %s270 = sphi 0, %s269
      %s286 = sphi 0, %s270
    $region4: #{_net_forward_impl.1} parent=1 // loop_header_branch
      %23 = sbr.rel (%p21) target = $region8
    $region5: #{_net_forward_impl.1} parent=1 // loop_body
      %s25 = ssub.s32 %s20, 1
      %s26 = ssub.s32 %s20, 2
      %s27 = sadd.s32 %s20, 1
      %s28 = ssub.s32 %s20, %s27
      %p29 = scmp.eq.s32.totalorder %s28, 0
      %s31 = sadd.s32 %s30, 1
      %s32 = scalar_select %p29, %s30, %s31
      %p35 = pneg %p29
      %p36 = scmp.eq.s32.totalorder %s20, 1
      %p37 = por %p35, %p36
      %p38 = scmp.ne.s32.totalorder %s30, %s33
      %p39 = scmp.eq.s32.totalorder %s20, 0
      %p40 = por %p38, %p39
      %p41 = scmp.ne.s32.totalorder %s30, %s33
      %p42 = scmp.eq.s32.totalorder %s25, 1
      %p43 = por %p41, %p42
      %p44 = scmp.ne.s32.totalorder %s33, %s34
      %p45 = scmp.eq.s32.totalorder %s25, 0
      %p46 = por %p44, %p45
      %p47 = scmp.ne.s32.totalorder %s33, %s34
      %p48 = scmp.eq.s32.totalorder %s26, 1
      %p49 = por %p47, %p48
      %p51 = scmp.ne.s32.totalorder %s34, %s50
      %p52 = scmp.eq.s32.totalorder %s26, 0
      %p53 = por %p51, %p52
      %s55 = sadd.s32 %s54, 1
      %p58 = scmp.eq.s32.totalorder %s20, 1
      %p59 = scmp.ne.s32.totalorder %s54, %s56
      %p60 = scmp.eq.s32.totalorder %s20, 0
      %p61 = por %p59, %p60
      %p62 = scmp.ne.s32.totalorder %s54, %s56
      %p63 = scmp.eq.s32.totalorder %s25, 1
      %p64 = por %p62, %p63
      %p65 = scmp.ne.s32.totalorder %s56, %s57
      %p66 = scmp.eq.s32.totalorder %s25, 0
      %p67 = por %p65, %p66
      %p68 = scmp.ne.s32.totalorder %s56, %s57
      %p69 = scmp.eq.s32.totalorder %s26, 1
      %p70 = por %p68, %p69
      %p72 = scmp.ne.s32.totalorder %s57, %s71
      %p73 = scmp.eq.s32.totalorder %s26, 0
      %p74 = por %p72, %p73
      %s76 = sadd.s32 %s75, 1
      %p79 = scmp.eq.s32.totalorder %s20, 1
      %p80 = scmp.ne.s32.totalorder %s75, %s77
      %p81 = scmp.eq.s32.totalorder %s20, 0
      %p82 = por %p80, %p81
      %p83 = scmp.ne.s32.totalorder %s75, %s77
      %p84 = scmp.eq.s32.totalorder %s25, 1
      %p85 = por %p83, %p84
      %p86 = scmp.ne.s32.totalorder %s77, %s78
      %p87 = scmp.eq.s32.totalorder %s25, 0
      %p88 = por %p86, %p87
      %p89 = scmp.ne.s32.totalorder %s77, %s78
      %p90 = scmp.eq.s32.totalorder %s26, 1
      %p91 = por %p89, %p90
      %p93 = scmp.ne.s32.totalorder %s78, %s92
      %p94 = scmp.eq.s32.totalorder %s26, 0
      %p95 = por %p93, %p94
      %s97 = sadd.s32 %s96, 1
      %p100 = scmp.eq.s32.totalorder %s20, 1
      %p101 = scmp.ne.s32.totalorder %s96, %s98
      %p102 = scmp.eq.s32.totalorder %s20, 0
      %p103 = por %p101, %p102
      %p104 = scmp.ne.s32.totalorder %s96, %s98
      %p105 = scmp.eq.s32.totalorder %s25, 1
      %p106 = por %p104, %p105
      %p107 = scmp.ne.s32.totalorder %s98, %s99
      %p108 = scmp.eq.s32.totalorder %s25, 0
      %p109 = por %p107, %p108
      %p110 = scmp.ne.s32.totalorder %s98, %s99
      %p111 = scmp.eq.s32.totalorder %s26, 1
      %p112 = por %p110, %p111
      %p114 = scmp.ne.s32.totalorder %s99, %s113
      %p115 = scmp.eq.s32.totalorder %s26, 0
      %p116 = por %p114, %p115
      %s118 = sadd.s32 %s117, 1
      %p121 = scmp.eq.s32.totalorder %s20, 1
      %p122 = scmp.ne.s32.totalorder %s117, %s119
      %p123 = scmp.eq.s32.totalorder %s20, 0
      %p124 = por %p122, %p123
      %p125 = scmp.ne.s32.totalorder %s117, %s119
      %p126 = scmp.eq.s32.totalorder %s25, 1
      %p127 = por %p125, %p126
      %p128 = scmp.ne.s32.totalorder %s119, %s120
      %p129 = scmp.eq.s32.totalorder %s25, 0
      %p130 = por %p128, %p129
      %p131 = scmp.ne.s32.totalorder %s119, %s120
      %p132 = scmp.eq.s32.totalorder %s26, 1
      %p133 = por %p131, %p132
      %p135 = scmp.ne.s32.totalorder %s120, %s134
      %p136 = scmp.eq.s32.totalorder %s26, 0
      %p137 = por %p135, %p136
      %s139 = sadd.s32 %s138, 1
      %p142 = scmp.eq.s32.totalorder %s20, 1
      %p143 = scmp.ne.s32.totalorder %s138, %s140
      %p144 = scmp.eq.s32.totalorder %s20, 0
      %p145 = por %p143, %p144
      %p146 = scmp.ne.s32.totalorder %s138, %s140
      %p147 = scmp.eq.s32.totalorder %s25, 1
      %p148 = por %p146, %p147
      %p149 = scmp.ne.s32.totalorder %s140, %s141
      %p150 = scmp.eq.s32.totalorder %s25, 0
      %p151 = por %p149, %p150
      %p152 = scmp.ne.s32.totalorder %s140, %s141
      %p153 = scmp.eq.s32.totalorder %s26, 1
      %p154 = por %p152, %p153
      %p156 = scmp.ne.s32.totalorder %s141, %s155
      %p157 = scmp.eq.s32.totalorder %s26, 0
      %p158 = por %p156, %p157
      %s160 = sadd.s32 %s159, 1
      %p163 = scmp.eq.s32.totalorder %s20, 1
      %p164 = scmp.ne.s32.totalorder %s159, %s161
      %p165 = scmp.eq.s32.totalorder %s20, 0
      %p166 = por %p164, %p165
      %p167 = scmp.ne.s32.totalorder %s159, %s161
      %p168 = scmp.eq.s32.totalorder %s25, 1
      %p169 = por %p167, %p168
      %p170 = scmp.ne.s32.totalorder %s161, %s162
      %p171 = scmp.eq.s32.totalorder %s25, 0
      %p172 = por %p170, %p171
      %p173 = scmp.ne.s32.totalorder %s161, %s162
      %p174 = scmp.eq.s32.totalorder %s26, 1
      %p175 = por %p173, %p174
      %p177 = scmp.ne.s32.totalorder %s162, %s176
      %p178 = scmp.eq.s32.totalorder %s26, 0
      %p179 = por %p177, %p178
      %s181 = sadd.s32 %s180, 1
      %p184 = scmp.eq.s32.totalorder %s20, 1
      %p185 = scmp.ne.s32.totalorder %s180, %s182
      %p186 = scmp.eq.s32.totalorder %s20, 0
      %p187 = por %p185, %p186
      %p188 = scmp.ne.s32.totalorder %s180, %s182
      %p189 = scmp.eq.s32.totalorder %s25, 1
      %p190 = por %p188, %p189
      %p191 = scmp.ne.s32.totalorder %s182, %s183
      %p192 = scmp.eq.s32.totalorder %s25, 0
      %p193 = por %p191, %p192
      %p194 = scmp.ne.s32.totalorder %s182, %s183
      %p195 = scmp.eq.s32.totalorder %s26, 1
      %p196 = por %p194, %p195
      %p198 = scmp.ne.s32.totalorder %s183, %s197
      %p199 = scmp.eq.s32.totalorder %s26, 0
      %p200 = por %p198, %p199
      %s202 = sadd.s32 %s201, 1
      %p205 = scmp.eq.s32.totalorder %s20, 1
      %p206 = scmp.ne.s32.totalorder %s201, %s203
      %p207 = scmp.eq.s32.totalorder %s20, 0
      %p208 = por %p206, %p207
      %p209 = scmp.ne.s32.totalorder %s201, %s203
      %p210 = scmp.eq.s32.totalorder %s25, 1
      %p211 = por %p209, %p210
      %p212 = scmp.ne.s32.totalorder %s203, %s204
      %p213 = scmp.eq.s32.totalorder %s25, 0
      %p214 = por %p212, %p213
      %p215 = scmp.ne.s32.totalorder %s203, %s204
      %p216 = scmp.eq.s32.totalorder %s26, 1
      %p217 = por %p215, %p216
      %p219 = scmp.ne.s32.totalorder %s204, %s218
      %p220 = scmp.eq.s32.totalorder %s26, 0
      %p221 = por %p219, %p220
      %s223 = sadd.s32 %s222, 1
      %p226 = scmp.eq.s32.totalorder %s20, 1
      %p227 = scmp.ne.s32.totalorder %s222, %s224
      %p228 = scmp.eq.s32.totalorder %s20, 0
      %p229 = por %p227, %p228
      %p230 = scmp.ne.s32.totalorder %s222, %s224
      %p231 = scmp.eq.s32.totalorder %s25, 1
      %p232 = por %p230, %p231
      %p233 = scmp.ne.s32.totalorder %s224, %s225
      %p234 = scmp.eq.s32.totalorder %s25, 0
      %p235 = por %p233, %p234
      %p236 = scmp.ne.s32.totalorder %s224, %s225
      %p237 = scmp.eq.s32.totalorder %s26, 1
      %p238 = por %p236, %p237
      %p240 = scmp.ne.s32.totalorder %s225, %s239
      %p241 = scmp.eq.s32.totalorder %s26, 0
      %p242 = por %p240, %p241
      %s244 = sadd.s32 %s243, 1
      %p247 = scmp.eq.s32.totalorder %s20, 1
      %p248 = scmp.ne.s32.totalorder %s243, %s245
      %p249 = scmp.eq.s32.totalorder %s20, 0
      %p250 = por %p248, %p249
      %p251 = scmp.ne.s32.totalorder %s243, %s245
      %p252 = scmp.eq.s32.totalorder %s25, 1
      %p253 = por %p251, %p252
      %p254 = scmp.ne.s32.totalorder %s245, %s246
      %p255 = scmp.eq.s32.totalorder %s25, 0
      %p256 = por %p254, %p255
      %p257 = scmp.ne.s32.totalorder %s245, %s246
      %p258 = scmp.eq.s32.totalorder %s26, 1
      %p259 = por %p257, %p258
      %p261 = scmp.ne.s32.totalorder %s246, %s260
      %p262 = scmp.eq.s32.totalorder %s26, 0
      %p263 = por %p261, %p262
      %s264 = ssub.s32 %s20, %s27
      %p265 = scmp.eq.s32.totalorder %s264, 0
      %s267 = sadd.s32 %s266, 1
      %s268 = scalar_select %p265, %s266, %s267
      %p271 = pneg %p265
      %p272 = scmp.eq.s32.totalorder %s20, 1
      %p273 = por %p271, %p272
      %p274 = scmp.ne.s32.totalorder %s266, %s269
      %p275 = scmp.eq.s32.totalorder %s20, 0
      %p276 = por %p274, %p275
      %p277 = scmp.ne.s32.totalorder %s266, %s269
      %p278 = scmp.eq.s32.totalorder %s25, 1
      %p279 = por %p277, %p278
      %p280 = scmp.ne.s32.totalorder %s269, %s270
      %p281 = scmp.eq.s32.totalorder %s25, 0
      %p282 = por %p280, %p281
      %p283 = scmp.ne.s32.totalorder %s269, %s270
      %p284 = scmp.eq.s32.totalorder %s26, 1
      %p285 = por %p283, %p284
      %p287 = scmp.ne.s32.totalorder %s270, %s286
      %p288 = scmp.eq.s32.totalorder %s26, 0
      %p289 = por %p287, %p288
      %p290 = scmp.le.s32.totalorder 1, %s20
      %p291 = scmp.lt.s32.totalorder %s20, 3
      %p292 = pnand %p290, %p291
      %p293 = pneg %p292
      // Predicated region
      $region9: #{_net_forward_impl.1} parent=5 // pred_check
        _
      $region10: #{_net_forward_impl.1} parent=5 // pred_check_branch
        %295 = sbr.rel (%p292) target = $region12
      $region11: #{_net_forward_impl.1} parent=5 // pred_region
        %s296 = ssub.s32 %s20, 1
        // Predicated region
        $region13: #{_net_forward_impl.1} parent=11 // pred_check
          %p297 = pneg %p67
        $region14: #{_net_forward_impl.1} parent=11 // pred_check_branch
          %299 = sbr.rel (%p297) target = $region16
        $region15: #{_net_forward_impl.1} parent=11 // pred_region
          _
        $region16: #{_net_forward_impl.1} parent=11 // pred_fallthru
          _
        // Predicated region
        $region17: #{_net_forward_impl.1} parent=11 // pred_check
          %p300 = pneg %p88
        $region18: #{_net_forward_impl.1} parent=11 // pred_check_branch
          %302 = sbr.rel (%p300) target = $region20
        $region19: #{_net_forward_impl.1} parent=11 // pred_region
          _
        $region20: #{_net_forward_impl.1} parent=11 // pred_fallthru
          _
        // Predicated region
        $region21: #{_net_forward_impl.1} parent=11 // pred_check
          %p303 = pneg %p109
        $region22: #{_net_forward_impl.1} parent=11 // pred_check_branch
          %305 = sbr.rel (%p303) target = $region24
        $region23: #{_net_forward_impl.1} parent=11 // pred_region
          _
        $region24: #{_net_forward_impl.1} parent=11 // pred_fallthru
          _
        // Predicated region
        $region25: #{_net_forward_impl.1} parent=11 // pred_check
          %p306 = pneg %p130
        $region26: #{_net_forward_impl.1} parent=11 // pred_check_branch
          %308 = sbr.rel (%p306) target = $region28
        $region27: #{_net_forward_impl.1} parent=11 // pred_region
          _
        $region28: #{_net_forward_impl.1} parent=11 // pred_fallthru
          _
        // Predicated region
        $region29: #{_net_forward_impl.1} parent=11 // pred_check
          %p309 = pneg %p151
        $region30: #{_net_forward_impl.1} parent=11 // pred_check_branch
          %311 = sbr.rel (%p309) target = $region32
        $region31: #{_net_forward_impl.1} parent=11 // pred_region
          _
        $region32: #{_net_forward_impl.1} parent=11 // pred_fallthru
          _
        // Predicated region
        $region33: #{_net_forward_impl.1} parent=11 // pred_check
          %p312 = pneg %p172
        $region34: #{_net_forward_impl.1} parent=11 // pred_check_branch
          %314 = sbr.rel (%p312) target = $region36
        $region35: #{_net_forward_impl.1} parent=11 // pred_region
          _
        $region36: #{_net_forward_impl.1} parent=11 // pred_fallthru
          _
        // Predicated region
        $region37: #{_net_forward_impl.1} parent=11 // pred_check
          %p315 = pneg %p193
        $region38: #{_net_forward_impl.1} parent=11 // pred_check_branch
          %317 = sbr.rel (%p315) target = $region40
        $region39: #{_net_forward_impl.1} parent=11 // pred_region
          _
        $region40: #{_net_forward_impl.1} parent=11 // pred_fallthru
          _
        // Predicated region
        $region41: #{_net_forward_impl.1} parent=11 // pred_check
          %p318 = pneg %p214
        $region42: #{_net_forward_impl.1} parent=11 // pred_check_branch
          %320 = sbr.rel (%p318) target = $region44
        $region43: #{_net_forward_impl.1} parent=11 // pred_region
          _
        $region44: #{_net_forward_impl.1} parent=11 // pred_fallthru
          _
        // Predicated region
        $region45: #{_net_forward_impl.1} parent=11 // pred_check
          %p321 = pneg %p235
        $region46: #{_net_forward_impl.1} parent=11 // pred_check_branch
          %323 = sbr.rel (%p321) target = $region48
        $region47: #{_net_forward_impl.1} parent=11 // pred_region
          _
        $region48: #{_net_forward_impl.1} parent=11 // pred_fallthru
          _
        // Predicated region
        $region49: #{_net_forward_impl.1} parent=11 // pred_check
          %p324 = pneg %p256
        $region50: #{_net_forward_impl.1} parent=11 // pred_check_branch
          %326 = sbr.rel (%p324) target = $region52
        $region51: #{_net_forward_impl.1} parent=11 // pred_region
          _
        $region52: #{_net_forward_impl.1} parent=11 // pred_fallthru
          _
      $region12: #{_net_forward_impl.1} parent=5 // pred_fallthru
        _
      %p327 = scmp.lt.s32.totalorder %s20, 2
      // Predicated region
      $region53: #{_net_forward_impl.1} parent=5 // pred_check
        %p328 = pneg %p327
      $region54: #{_net_forward_impl.1} parent=5 // pred_check_branch
        %330 = sbr.rel (%p328) target = $region56
      $region55: #{_net_forward_impl.1} parent=5 // pred_region
        // Predicated region
        $region57: #{_net_forward_impl.1} parent=55 // pred_check
          %p331 = pneg %p40
        $region58: #{_net_forward_impl.1} parent=55 // pred_check_branch
          %333 = sbr.rel (%p331) target = $region60
        $region59: #{_net_forward_impl.1} parent=55 // pred_region
          %s334 = smul.u32 32, %s20
          %p335 = scmp.lt.s32.totalorder %s334, 63
          %s336 = scalar_select %p335, %s334, 63
          %s337 = smul.addr %s336, 4
          %s338 = scalar_lea.vmem %s0, %s337
          %s339 = smul.u32 32, %s20
        $region60: #{_net_forward_impl.1} parent=55 // pred_fallthru
          _
      $region56: #{_net_forward_impl.1} parent=5 // pred_fallthru
        _
      %p340 = scmp.le.s32.totalorder 1, %s20
      %p341 = scmp.lt.s32.totalorder %s20, 3
      %p342 = pnand %p340, %p341
      %p343 = pneg %p342
      // Predicated region
      $region61: #{_net_forward_impl.1} parent=5 // pred_check
        _
      $region62: #{_net_forward_impl.1} parent=5 // pred_check_branch
        %345 = sbr.rel (%p342) target = $region64
      $region63: #{_net_forward_impl.1} parent=5 // pred_region
        %s346 = ssub.s32 %s20, 1
        %s347 = smul.u32 32, %s25
        %p348 = scmp.lt.s32.totalorder %s347, 63
        %s349 = scalar_select %p348, %s347, 63
        %s350 = smul.addr %s349, 4
        %s351 = scalar_lea.vmem %s0, %s350
        %p352 = pneg %p46
        %p353 = pneg %p43
        %p354 = pneg %p67
        %p355 = pneg %p64
        %p356 = pneg %p88
        %p357 = pneg %p85
        %p358 = pneg %p109
        %p359 = pneg %p106
        %p360 = pneg %p130
        %p361 = pneg %p127
        %p362 = pneg %p151
        %p363 = pneg %p148
        %p364 = pneg %p172
        %p365 = pneg %p169
        %p366 = pneg %p193
        %p367 = pneg %p190
        %p368 = pneg %p214
        %p369 = pneg %p211
        %p370 = pneg %p235
        %p371 = pneg %p232
        %p372 = pneg %p256
        %p373 = pneg %p253
        %p374 = pneg %p282
        %p375 = pneg %p279
        %s376 = sand.u32 %s269, 1
        %s377 = scalar_lea.sflag [#allocation3], %s376
        %s378 = sand.u32 %s269, 1
        %s379 = smul.addr %s378, 256
        %s380 = scalar_lea.vmem [#allocation2], %s379
        %s381 = smul.u32 32, %s25
        %p382 = scmp.lt.s32.totalorder %s381, 63
        %s383 = scalar_select %p382, %s381, 63
        %s384 = smul.addr %s383, 4
        %s385 = scalar_lea.vmem %s0, %s384
        %s386 = smul.u32 32, %s25
        %s387 = smul.u32 32, %s25
        %v389 = vld [vmem:[%s385] sm:$0xf]
        %v390 = vld [vmem:[%s385 + $0x4] sm:$0xf]
        %v391 = vld [vmem:[%s385 + $0x8] sm:$0xf]
        %v392 = vld [vmem:[%s385 + $0xc] sm:$0xf]
        %v393 = vld [vmem:[%s385 + $0x10] sm:$0xf]
        %v394 = vld [vmem:[%s385 + $0x14] sm:$0xf]
        %v395 = vld [vmem:[%s385 + $0x18] sm:$0xf]
        %v396 = vld [vmem:[%s385 + $0x1c] sm:$0xf]
        %v397 = vld [vmem:[%s385 + $0x20] sm:$0xf]
        %v398 = vld [vmem:[%s385 + $0x24] sm:$0xf]
        %v399 = vld [vmem:[%s385 + $0x28] sm:$0xf]
        %v400 = vld [vmem:[%s385 + $0x2c] sm:$0xf]
        %v401 = vld [vmem:[%s385 + $0x30] sm:$0xf]
        %v402 = vld [vmem:[%s385 + $0x34] sm:$0xf]
        %v403 = vld [vmem:[%s385 + $0x38] sm:$0xf]
        %v404 = vld [vmem:[%s385 + $0x3c] sm:$0xf]
        %v405 = vld [vmem:[%s385 + $0x40] sm:$0xf]
        %v406 = vld [vmem:[%s385 + $0x44] sm:$0xf]
        %v407 = vld [vmem:[%s385 + $0x48] sm:$0xf]
        %v408 = vld [vmem:[%s385 + $0x4c] sm:$0xf]
        %v409 = vld [vmem:[%s385 + $0x50] sm:$0xf]
        %v410 = vld [vmem:[%s385 + $0x54] sm:$0xf]
        %v411 = vld [vmem:[%s385 + $0x58] sm:$0xf]
        %v412 = vld [vmem:[%s385 + $0x5c] sm:$0xf]
        %v413 = vld [vmem:[%s385 + $0x60] sm:$0xf]
        %v414 = vld [vmem:[%s385 + $0x64] sm:$0xf]
        %v415 = vld [vmem:[%s385 + $0x68] sm:$0xf]
        %v416 = vld [vmem:[%s385 + $0x6c] sm:$0xf]
        %v417 = vld [vmem:[%s385 + $0x70] sm:$0xf]
        %v418 = vld [vmem:[%s385 + $0x74] sm:$0xf]
        %v419 = vld [vmem:[%s385 + $0x78] sm:$0xf]
        %v420 = vld [vmem:[%s385 + $0x7c] sm:$0xf]
        %v421 = vld [vmem:[%s1] sm:$0xff]
        %v422 = vld [vmem:[%s1 + $0x8] sm:$0xff]
        %v423 = vld [vmem:[%s1 + $0x10] sm:$0xff]
        %v424 = vld [vmem:[%s1 + $0x18] sm:$0xff]
        %v425 = vld [vmem:[%s1 + $0x20] sm:$0xff]
        %v426 = vld [vmem:[%s1 + $0x28] sm:$0xff]
        %v427 = vld [vmem:[%s1 + $0x30] sm:$0xff]
        %v428 = vld [vmem:[%s1 + $0x38] sm:$0xff]
        %v429 = vld [vmem:[%s1 + $0x40] sm:$0xff]
        %v430 = vld [vmem:[%s1 + $0x48] sm:$0xff]
        %v431 = vld [vmem:[%s1 + $0x50] sm:$0xff]
        %v432 = vld [vmem:[%s1 + $0x58] sm:$0xff]
        %v433 = vld [vmem:[%s1 + $0x60] sm:$0xff]
        %v434 = vld [vmem:[%s1 + $0x68] sm:$0xff]
        %v435 = vld [vmem:[%s1 + $0x70] sm:$0xff]
        %v436 = vld [vmem:[%s1 + $0x78] sm:$0xff]
        %v437 = vld [vmem:[%s2] sm:$0xff]
        %v439 = vperm.slane %v437, 0
        %v440 = vperm.slane %v437, 1
        %v441 = vperm.slane %v437, 2
        %v442 = vperm.slane %v437, 3
        %v443 = vperm.slane %v437, 4
        %v444 = vperm.slane %v437, 5
        %v445 = vperm.slane %v437, 6
        %v446 = vperm.slane %v437, 7
        %v487 = vunpack.c.l.b16 %v389
        %v488 = vunpack.c.l.b16 %v390
        %v489 = vunpack.c.l.b16 %v391
        %v490 = vunpack.c.l.b16 %v392
        %v491 = vunpack.c.l.b16 %v393
        %v492 = vunpack.c.l.b16 %v394
        %v493 = vunpack.c.l.b16 %v395
        %v494 = vunpack.c.l.b16 %v396
        %v495 = vunpack.c.l.b16 %v397
        %v496 = vunpack.c.l.b16 %v398
        %v497 = vunpack.c.l.b16 %v399
        %v498 = vunpack.c.l.b16 %v400
        %v499 = vunpack.c.l.b16 %v401
        %v500 = vunpack.c.l.b16 %v402
        %v501 = vunpack.c.l.b16 %v403
        %v502 = vunpack.c.l.b16 %v404
        %v503 = vunpack.c.l.b16 %v405
        %v504 = vunpack.c.l.b16 %v406
        %v505 = vunpack.c.l.b16 %v407
        %v506 = vunpack.c.l.b16 %v408
        %v507 = vunpack.c.l.b16 %v409
        %v508 = vunpack.c.l.b16 %v410
        %v509 = vunpack.c.l.b16 %v411
        %v510 = vunpack.c.l.b16 %v412
        %v511 = vunpack.c.l.b16 %v413
        %v512 = vunpack.c.l.b16 %v414
        %v513 = vunpack.c.l.b16 %v415
        %v514 = vunpack.c.l.b16 %v416
        %v515 = vunpack.c.l.b16 %v417
        %v516 = vunpack.c.l.b16 %v418
        %v517 = vunpack.c.l.b16 %v419
        %v518 = vunpack.c.l.b16 %v420
        %v519 = vpack.c.b16 %v488, %v487
        %v520 = vpack.c.b16 %v490, %v489
        %v521 = vpack.c.b16 %v492, %v491
        %v522 = vpack.c.b16 %v494, %v493
        %v523 = vpack.c.b16 %v496, %v495
        %v524 = vpack.c.b16 %v498, %v497
        %v525 = vpack.c.b16 %v500, %v499
        %v526 = vpack.c.b16 %v502, %v501
        %v527 = vpack.c.b16 %v504, %v503
        %v528 = vpack.c.b16 %v506, %v505
        %v529 = vpack.c.b16 %v508, %v507
        %v530 = vpack.c.b16 %v510, %v509
        %v531 = vpack.c.b16 %v512, %v511
        %v532 = vpack.c.b16 %v514, %v513
        %v533 = vpack.c.b16 %v516, %v515
        %v534 = vpack.c.b16 %v518, %v517
        %v551 = vunpack.c.l.b16 %v421
        %v552 = vunpack.c.h.b16 %v421
        %v553 = vunpack.c.l.b16 %v422
        %v554 = vunpack.c.h.b16 %v422
        %v555 = vunpack.c.l.b16 %v423
        %v556 = vunpack.c.h.b16 %v423
        %v557 = vunpack.c.l.b16 %v424
        %v558 = vunpack.c.h.b16 %v424
        %v559 = vunpack.c.l.b16 %v425
        %v560 = vunpack.c.h.b16 %v425
        %v561 = vunpack.c.l.b16 %v426
        %v562 = vunpack.c.h.b16 %v426
        %v563 = vunpack.c.l.b16 %v427
        %v564 = vunpack.c.h.b16 %v427
        %v565 = vunpack.c.l.b16 %v428
        %v566 = vunpack.c.h.b16 %v428
        %v567 = vunpack.c.l.b16 %v429
        %v568 = vunpack.c.h.b16 %v429
        %v569 = vunpack.c.l.b16 %v430
        %v570 = vunpack.c.h.b16 %v430
        %v571 = vunpack.c.l.b16 %v431
        %v572 = vunpack.c.h.b16 %v431
        %v573 = vunpack.c.l.b16 %v432
        %v574 = vunpack.c.h.b16 %v432
        %v575 = vunpack.c.l.b16 %v433
        %v576 = vunpack.c.h.b16 %v433
        %v577 = vunpack.c.l.b16 %v434
        %v578 = vunpack.c.h.b16 %v434
        %v579 = vunpack.c.l.b16 %v435
        %v580 = vunpack.c.h.b16 %v435
        %v581 = vunpack.c.l.b16 %v436
        %v582 = vunpack.c.h.b16 %v436
        %v583 = vpack.c.b16 %v559, %v551
        %v584 = vpack.c.b16 %v560, %v552
        %v585 = vpack.c.b16 %v561, %v553
        %v586 = vpack.c.b16 %v562, %v554
        %v587 = vpack.c.b16 %v563, %v555
        %v588 = vpack.c.b16 %v564, %v556
        %v589 = vpack.c.b16 %v565, %v557
        %v590 = vpack.c.b16 %v566, %v558
        %v591 = vpack.c.b16 %v575, %v567
        %v592 = vpack.c.b16 %v576, %v568
        %v593 = vpack.c.b16 %v577, %v569
        %v594 = vpack.c.b16 %v578, %v570
        %v595 = vpack.c.b16 %v579, %v571
        %v596 = vpack.c.b16 %v580, %v572
        %v597 = vpack.c.b16 %v581, %v573
        %v598 = vpack.c.b16 %v582, %v574
        %vm615 = vcmask 261120
        %v617 = vsel %vm615, %v519, 0
        %v620 = vsel %vm615, %v520, 0
        %v623 = vsel %vm615, %v521, 0
        %v626 = vsel %vm615, %v522, 0
        %v629 = vsel %vm615, %v523, 0
        %v632 = vsel %vm615, %v524, 0
        %v635 = vsel %vm615, %v525, 0
        %v638 = vsel %vm615, %v526, 0
        %v641 = vsel %vm615, %v527, 0
        %v644 = vsel %vm615, %v528, 0
        %v647 = vsel %vm615, %v529, 0
        %v650 = vsel %vm615, %v530, 0
        %v653 = vsel %vm615, %v531, 0
        %v656 = vsel %vm615, %v532, 0
        %v659 = vsel %vm615, %v533, 0
        %v662 = vsel %vm615, %v534, 0
        %664 = vmatpush.bf16.msra.mxu0 0
        %665 = vmatpush.bf16.msra.mxu0 0
        %666 = vmatpush.bf16.msra.mxu0 0
        %667 = vmatpush.bf16.msra.mxu0 0
        %668 = vmatpush.bf16.msra.mxu0 0
        %669 = vmatpush.bf16.msra.mxu0 0
        %670 = vmatpush.bf16.msra.mxu0 %v591
        %671 = vmatpush.bf16.msra.mxu0 %v583
        %672 = vmatmul.bf16.gmra.mxu0 %v617
        %v673 = vpop.f32.mrf.mxu0
        %v674 = vadd.f32 %v439, %v673
        %v675 = vpop.f32.mrf.mxu0
        %v676 = vadd.f32 %v439, %v675
        %677 = vmatmul.bf16.gmra.mxu0 %v620
        %v678 = vpop.f32.mrf.mxu0
        %v679 = vadd.f32 %v439, %v678
        %v680 = vpop.f32.mrf.mxu0
        %v681 = vadd.f32 %v439, %v680
        %682 = vmatmul.bf16.gmra.mxu0 %v623
        %v683 = vpop.f32.mrf.mxu0
        %v684 = vadd.f32 %v439, %v683
        %v685 = vpop.f32.mrf.mxu0
        %v686 = vadd.f32 %v439, %v685
        %687 = vmatmul.bf16.gmra.mxu0 %v626
        %v688 = vpop.f32.mrf.mxu0
        %v689 = vadd.f32 %v439, %v688
        %v690 = vpop.f32.mrf.mxu0
        %v691 = vadd.f32 %v439, %v690
        %692 = vmatmul.bf16.gmra.mxu0 %v629
        %v693 = vpop.f32.mrf.mxu0
        %v694 = vadd.f32 %v439, %v693
        %v695 = vpop.f32.mrf.mxu0
        %v696 = vadd.f32 %v439, %v695
        %697 = vmatmul.bf16.gmra.mxu0 %v632
        %v698 = vpop.f32.mrf.mxu0
        %v699 = vadd.f32 %v439, %v698
        %v700 = vpop.f32.mrf.mxu0
        %v701 = vadd.f32 %v439, %v700
        %702 = vmatmul.bf16.gmra.mxu0 %v635
        %v703 = vpop.f32.mrf.mxu0
        %v704 = vadd.f32 %v439, %v703
        %v705 = vpop.f32.mrf.mxu0
        %v706 = vadd.f32 %v439, %v705
        %707 = vmatmul.bf16.gmra.mxu0 %v638
        %v708 = vpop.f32.mrf.mxu0
        %v709 = vadd.f32 %v439, %v708
        %v710 = vpop.f32.mrf.mxu0
        %v711 = vadd.f32 %v439, %v710
        %712 = vmatmul.bf16.gmra.mxu0 %v641
        %v713 = vpop.f32.mrf.mxu0
        %v714 = vadd.f32 %v439, %v713
        %v715 = vpop.f32.mrf.mxu0
        %v716 = vadd.f32 %v439, %v715
        %717 = vmatmul.bf16.gmra.mxu0 %v644
        %v718 = vpop.f32.mrf.mxu0
        %v719 = vadd.f32 %v439, %v718
        %v720 = vpop.f32.mrf.mxu0
        %v721 = vadd.f32 %v439, %v720
        %722 = vmatmul.bf16.gmra.mxu0 %v647
        %v723 = vpop.f32.mrf.mxu0
        %v724 = vadd.f32 %v439, %v723
        %v725 = vpop.f32.mrf.mxu0
        %v726 = vadd.f32 %v439, %v725
        %727 = vmatmul.bf16.gmra.mxu0 %v650
        %v728 = vpop.f32.mrf.mxu0
        %v729 = vadd.f32 %v439, %v728
        %v730 = vpop.f32.mrf.mxu0
        %v731 = vadd.f32 %v439, %v730
        %732 = vmatmul.bf16.gmra.mxu0 %v653
        %v733 = vpop.f32.mrf.mxu0
        %v734 = vadd.f32 %v439, %v733
        %v735 = vpop.f32.mrf.mxu0
        %v736 = vadd.f32 %v439, %v735
        %737 = vmatmul.bf16.gmra.mxu0 %v656
        %v738 = vpop.f32.mrf.mxu0
        %v739 = vadd.f32 %v439, %v738
        %v740 = vpop.f32.mrf.mxu0
        %v741 = vadd.f32 %v439, %v740
        %742 = vmatmul.bf16.gmra.mxu0 %v659
        %v743 = vpop.f32.mrf.mxu0
        %v744 = vadd.f32 %v439, %v743
        %v745 = vpop.f32.mrf.mxu0
        %v746 = vadd.f32 %v439, %v745
        %747 = vmatmul.bf16.gmra.mxu0 %v662
        %v748 = vpop.f32.mrf.mxu0
        %v749 = vadd.f32 %v439, %v748
        %v750 = vpop.f32.mrf.mxu0
        %v751 = vadd.f32 %v439, %v750
        %752 = vdwg.mxu0
        %753 = vmatpush.bf16.msra.mxu0 0
        %754 = vmatpush.bf16.msra.mxu0 0
        %755 = vmatpush.bf16.msra.mxu0 0
        %756 = vmatpush.bf16.msra.mxu0 0
        %757 = vmatpush.bf16.msra.mxu0 0
        %758 = vmatpush.bf16.msra.mxu0 0
        %759 = vmatpush.bf16.msra.mxu0 %v592
        %760 = vmatpush.bf16.msra.mxu0 %v584
        %761 = vmatmul.bf16.gmra.mxu0 %v617
        %v762 = vpop.f32.mrf.mxu0
        %v763 = vadd.f32 %v440, %v762
        %v764 = vpop.f32.mrf.mxu0
        %v765 = vadd.f32 %v440, %v764
        %766 = vmatmul.bf16.gmra.mxu0 %v620
        %v767 = vpop.f32.mrf.mxu0
        %v768 = vadd.f32 %v440, %v767
        %v769 = vpop.f32.mrf.mxu0
        %v770 = vadd.f32 %v440, %v769
        %771 = vmatmul.bf16.gmra.mxu0 %v623
        %v772 = vpop.f32.mrf.mxu0
        %v773 = vadd.f32 %v440, %v772
        %v774 = vpop.f32.mrf.mxu0
        %v775 = vadd.f32 %v440, %v774
        %776 = vmatmul.bf16.gmra.mxu0 %v626
        %v777 = vpop.f32.mrf.mxu0
        %v778 = vadd.f32 %v440, %v777
        %v779 = vpop.f32.mrf.mxu0
        %v780 = vadd.f32 %v440, %v779
        %781 = vmatmul.bf16.gmra.mxu0 %v629
        %v782 = vpop.f32.mrf.mxu0
        %v783 = vadd.f32 %v440, %v782
        %v784 = vpop.f32.mrf.mxu0
        %v785 = vadd.f32 %v440, %v784
        %786 = vmatmul.bf16.gmra.mxu0 %v632
        %v787 = vpop.f32.mrf.mxu0
        %v788 = vadd.f32 %v440, %v787
        %v789 = vpop.f32.mrf.mxu0
        %v790 = vadd.f32 %v440, %v789
        %791 = vmatmul.bf16.gmra.mxu0 %v635
        %v792 = vpop.f32.mrf.mxu0
        %v793 = vadd.f32 %v440, %v792
        %v794 = vpop.f32.mrf.mxu0
        %v795 = vadd.f32 %v440, %v794
        %796 = vmatmul.bf16.gmra.mxu0 %v638
        %v797 = vpop.f32.mrf.mxu0
        %v798 = vadd.f32 %v440, %v797
        %v799 = vpop.f32.mrf.mxu0
        %v800 = vadd.f32 %v440, %v799
        %801 = vmatmul.bf16.gmra.mxu0 %v641
        %v802 = vpop.f32.mrf.mxu0
        %v803 = vadd.f32 %v440, %v802
        %v804 = vpop.f32.mrf.mxu0
        %v805 = vadd.f32 %v440, %v804
        %806 = vmatmul.bf16.gmra.mxu0 %v644
        %v807 = vpop.f32.mrf.mxu0
        %v808 = vadd.f32 %v440, %v807
        %v809 = vpop.f32.mrf.mxu0
        %v810 = vadd.f32 %v440, %v809
        %811 = vmatmul.bf16.gmra.mxu0 %v647
        %v812 = vpop.f32.mrf.mxu0
        %v813 = vadd.f32 %v440, %v812
        %v814 = vpop.f32.mrf.mxu0
        %v815 = vadd.f32 %v440, %v814
        %816 = vmatmul.bf16.gmra.mxu0 %v650
        %v817 = vpop.f32.mrf.mxu0
        %v818 = vadd.f32 %v440, %v817
        %v819 = vpop.f32.mrf.mxu0
        %v820 = vadd.f32 %v440, %v819
        %821 = vmatmul.bf16.gmra.mxu0 %v653
        %v822 = vpop.f32.mrf.mxu0
        %v823 = vadd.f32 %v440, %v822
        %v824 = vpop.f32.mrf.mxu0
        %v825 = vadd.f32 %v440, %v824
        %826 = vmatmul.bf16.gmra.mxu0 %v656
        %v827 = vpop.f32.mrf.mxu0
        %v828 = vadd.f32 %v440, %v827
        %v829 = vpop.f32.mrf.mxu0
        %v830 = vadd.f32 %v440, %v829
        %831 = vmatmul.bf16.gmra.mxu0 %v659
        %v832 = vpop.f32.mrf.mxu0
        %v833 = vadd.f32 %v440, %v832
        %v834 = vpop.f32.mrf.mxu0
        %v835 = vadd.f32 %v440, %v834
        %836 = vmatmul.bf16.gmra.mxu0 %v662
        %v837 = vpop.f32.mrf.mxu0
        %v838 = vadd.f32 %v440, %v837
        %v839 = vpop.f32.mrf.mxu0
        %v840 = vadd.f32 %v440, %v839
        %841 = vdwg.mxu0
        %842 = vmatpush.bf16.msra.mxu0 0
        %843 = vmatpush.bf16.msra.mxu0 0
        %844 = vmatpush.bf16.msra.mxu0 0
        %845 = vmatpush.bf16.msra.mxu0 0
        %846 = vmatpush.bf16.msra.mxu0 0
        %847 = vmatpush.bf16.msra.mxu0 0
        %848 = vmatpush.bf16.msra.mxu0 %v593
        %849 = vmatpush.bf16.msra.mxu0 %v585
        %850 = vmatmul.bf16.gmra.mxu0 %v617
        %v851 = vpop.f32.mrf.mxu0
        %v852 = vadd.f32 %v441, %v851
        %v853 = vpop.f32.mrf.mxu0
        %v854 = vadd.f32 %v441, %v853
        %855 = vmatmul.bf16.gmra.mxu0 %v620
        %v856 = vpop.f32.mrf.mxu0
        %v857 = vadd.f32 %v441, %v856
        %v858 = vpop.f32.mrf.mxu0
        %v859 = vadd.f32 %v441, %v858
        %860 = vmatmul.bf16.gmra.mxu0 %v623
        %v861 = vpop.f32.mrf.mxu0
        %v862 = vadd.f32 %v441, %v861
        %v863 = vpop.f32.mrf.mxu0
        %v864 = vadd.f32 %v441, %v863
        %865 = vmatmul.bf16.gmra.mxu0 %v626
        %v866 = vpop.f32.mrf.mxu0
        %v867 = vadd.f32 %v441, %v866
        %v868 = vpop.f32.mrf.mxu0
        %v869 = vadd.f32 %v441, %v868
        %870 = vmatmul.bf16.gmra.mxu0 %v629
        %v871 = vpop.f32.mrf.mxu0
        %v872 = vadd.f32 %v441, %v871
        %v873 = vpop.f32.mrf.mxu0
        %v874 = vadd.f32 %v441, %v873
        %875 = vmatmul.bf16.gmra.mxu0 %v632
        %v876 = vpop.f32.mrf.mxu0
        %v877 = vadd.f32 %v441, %v876
        %v878 = vpop.f32.mrf.mxu0
        %v879 = vadd.f32 %v441, %v878
        %880 = vmatmul.bf16.gmra.mxu0 %v635
        %v881 = vpop.f32.mrf.mxu0
        %v882 = vadd.f32 %v441, %v881
        %v883 = vpop.f32.mrf.mxu0
        %v884 = vadd.f32 %v441, %v883
        %885 = vmatmul.bf16.gmra.mxu0 %v638
        %v886 = vpop.f32.mrf.mxu0
        %v887 = vadd.f32 %v441, %v886
        %v888 = vpop.f32.mrf.mxu0
        %v889 = vadd.f32 %v441, %v888
        %890 = vmatmul.bf16.gmra.mxu0 %v641
        %v891 = vpop.f32.mrf.mxu0
        %v892 = vadd.f32 %v441, %v891
        %v893 = vpop.f32.mrf.mxu0
        %v894 = vadd.f32 %v441, %v893
        %895 = vmatmul.bf16.gmra.mxu0 %v644
        %v896 = vpop.f32.mrf.mxu0
        %v897 = vadd.f32 %v441, %v896
        %v898 = vpop.f32.mrf.mxu0
        %v899 = vadd.f32 %v441, %v898
        %900 = vmatmul.bf16.gmra.mxu0 %v647
        %v901 = vpop.f32.mrf.mxu0
        %v902 = vadd.f32 %v441, %v901
        %v903 = vpop.f32.mrf.mxu0
        %v904 = vadd.f32 %v441, %v903
        %905 = vmatmul.bf16.gmra.mxu0 %v650
        %v906 = vpop.f32.mrf.mxu0
        %v907 = vadd.f32 %v441, %v906
        %v908 = vpop.f32.mrf.mxu0
        %v909 = vadd.f32 %v441, %v908
        %910 = vmatmul.bf16.gmra.mxu0 %v653
        %v911 = vpop.f32.mrf.mxu0
        %v912 = vadd.f32 %v441, %v911
        %v913 = vpop.f32.mrf.mxu0
        %v914 = vadd.f32 %v441, %v913
        %915 = vmatmul.bf16.gmra.mxu0 %v656
        %v916 = vpop.f32.mrf.mxu0
        %v917 = vadd.f32 %v441, %v916
        %v918 = vpop.f32.mrf.mxu0
        %v919 = vadd.f32 %v441, %v918
        %920 = vmatmul.bf16.gmra.mxu0 %v659
        %v921 = vpop.f32.mrf.mxu0
        %v922 = vadd.f32 %v441, %v921
        %v923 = vpop.f32.mrf.mxu0
        %v924 = vadd.f32 %v441, %v923
        %925 = vmatmul.bf16.gmra.mxu0 %v662
        %v926 = vpop.f32.mrf.mxu0
        %v927 = vadd.f32 %v441, %v926
        %v928 = vpop.f32.mrf.mxu0
        %v929 = vadd.f32 %v441, %v928
        %930 = vdwg.mxu0
        %931 = vmatpush.bf16.msra.mxu0 0
        %932 = vmatpush.bf16.msra.mxu0 0
        %933 = vmatpush.bf16.msra.mxu0 0
        %934 = vmatpush.bf16.msra.mxu0 0
        %935 = vmatpush.bf16.msra.mxu0 0
        %936 = vmatpush.bf16.msra.mxu0 0
        %937 = vmatpush.bf16.msra.mxu0 %v594
        %938 = vmatpush.bf16.msra.mxu0 %v586
        %939 = vmatmul.bf16.gmra.mxu0 %v617
        %v940 = vpop.f32.mrf.mxu0
        %v941 = vadd.f32 %v442, %v940
        %v942 = vpop.f32.mrf.mxu0
        %v943 = vadd.f32 %v442, %v942
        %944 = vmatmul.bf16.gmra.mxu0 %v620
        %v945 = vpop.f32.mrf.mxu0
        %v946 = vadd.f32 %v442, %v945
        %v947 = vpop.f32.mrf.mxu0
        %v948 = vadd.f32 %v442, %v947
        %949 = vmatmul.bf16.gmra.mxu0 %v623
        %v950 = vpop.f32.mrf.mxu0
        %v951 = vadd.f32 %v442, %v950
        %v952 = vpop.f32.mrf.mxu0
        %v953 = vadd.f32 %v442, %v952
        %954 = vmatmul.bf16.gmra.mxu0 %v626
        %v955 = vpop.f32.mrf.mxu0
        %v956 = vadd.f32 %v442, %v955
        %v957 = vpop.f32.mrf.mxu0
        %v958 = vadd.f32 %v442, %v957
        %959 = vmatmul.bf16.gmra.mxu0 %v629
        %v960 = vpop.f32.mrf.mxu0
        %v961 = vadd.f32 %v442, %v960
        %v962 = vpop.f32.mrf.mxu0
        %v963 = vadd.f32 %v442, %v962
        %964 = vmatmul.bf16.gmra.mxu0 %v632
        %v965 = vpop.f32.mrf.mxu0
        %v966 = vadd.f32 %v442, %v965
        %v967 = vpop.f32.mrf.mxu0
        %v968 = vadd.f32 %v442, %v967
        %969 = vmatmul.bf16.gmra.mxu0 %v635
        %v970 = vpop.f32.mrf.mxu0
        %v971 = vadd.f32 %v442, %v970
        %v972 = vpop.f32.mrf.mxu0
        %v973 = vadd.f32 %v442, %v972
        %974 = vmatmul.bf16.gmra.mxu0 %v638
        %v975 = vpop.f32.mrf.mxu0
        %v976 = vadd.f32 %v442, %v975
        %v977 = vpop.f32.mrf.mxu0
        %v978 = vadd.f32 %v442, %v977
        %979 = vmatmul.bf16.gmra.mxu0 %v641
        %v980 = vpop.f32.mrf.mxu0
        %v981 = vadd.f32 %v442, %v980
        %v982 = vpop.f32.mrf.mxu0
        %v983 = vadd.f32 %v442, %v982
        %984 = vmatmul.bf16.gmra.mxu0 %v644
        %v985 = vpop.f32.mrf.mxu0
        %v986 = vadd.f32 %v442, %v985
        %v987 = vpop.f32.mrf.mxu0
        %v988 = vadd.f32 %v442, %v987
        %989 = vmatmul.bf16.gmra.mxu0 %v647
        %v990 = vpop.f32.mrf.mxu0
        %v991 = vadd.f32 %v442, %v990
        %v992 = vpop.f32.mrf.mxu0
        %v993 = vadd.f32 %v442, %v992
        %994 = vmatmul.bf16.gmra.mxu0 %v650
        %v995 = vpop.f32.mrf.mxu0
        %v996 = vadd.f32 %v442, %v995
        %v997 = vpop.f32.mrf.mxu0
        %v998 = vadd.f32 %v442, %v997
        %999 = vmatmul.bf16.gmra.mxu0 %v653
        %v1000 = vpop.f32.mrf.mxu0
        %v1001 = vadd.f32 %v442, %v1000
        %v1002 = vpop.f32.mrf.mxu0
        %v1003 = vadd.f32 %v442, %v1002
        %1004 = vmatmul.bf16.gmra.mxu0 %v656
        %v1005 = vpop.f32.mrf.mxu0
        %v1006 = vadd.f32 %v442, %v1005
        %v1007 = vpop.f32.mrf.mxu0
        %v1008 = vadd.f32 %v442, %v1007
        %1009 = vmatmul.bf16.gmra.mxu0 %v659
        %v1010 = vpop.f32.mrf.mxu0
        %v1011 = vadd.f32 %v442, %v1010
        %v1012 = vpop.f32.mrf.mxu0
        %v1013 = vadd.f32 %v442, %v1012
        %1014 = vmatmul.bf16.gmra.mxu0 %v662
        %v1015 = vpop.f32.mrf.mxu0
        %v1016 = vadd.f32 %v442, %v1015
        %v1017 = vpop.f32.mrf.mxu0
        %v1018 = vadd.f32 %v442, %v1017
        %1019 = vdwg.mxu0
        %1020 = vmatpush.bf16.msra.mxu0 0
        %1021 = vmatpush.bf16.msra.mxu0 0
        %1022 = vmatpush.bf16.msra.mxu0 0
        %1023 = vmatpush.bf16.msra.mxu0 0
        %1024 = vmatpush.bf16.msra.mxu0 0
        %1025 = vmatpush.bf16.msra.mxu0 0
        %1026 = vmatpush.bf16.msra.mxu0 %v595
        %1027 = vmatpush.bf16.msra.mxu0 %v587
        %1028 = vmatmul.bf16.gmra.mxu0 %v617
        %v1029 = vpop.f32.mrf.mxu0
        %v1030 = vadd.f32 %v443, %v1029
        %v1031 = vpop.f32.mrf.mxu0
        %v1032 = vadd.f32 %v443, %v1031
        %1033 = vmatmul.bf16.gmra.mxu0 %v620
        %v1034 = vpop.f32.mrf.mxu0
        %v1035 = vadd.f32 %v443, %v1034
        %v1036 = vpop.f32.mrf.mxu0
        %v1037 = vadd.f32 %v443, %v1036
        %1038 = vmatmul.bf16.gmra.mxu0 %v623
        %v1039 = vpop.f32.mrf.mxu0
        %v1040 = vadd.f32 %v443, %v1039
        %v1041 = vpop.f32.mrf.mxu0
        %v1042 = vadd.f32 %v443, %v1041
        %1043 = vmatmul.bf16.gmra.mxu0 %v626
        %v1044 = vpop.f32.mrf.mxu0
        %v1045 = vadd.f32 %v443, %v1044
        %v1046 = vpop.f32.mrf.mxu0
        %v1047 = vadd.f32 %v443, %v1046
        %1048 = vmatmul.bf16.gmra.mxu0 %v629
        %v1049 = vpop.f32.mrf.mxu0
        %v1050 = vadd.f32 %v443, %v1049
        %v1051 = vpop.f32.mrf.mxu0
        %v1052 = vadd.f32 %v443, %v1051
        %1053 = vmatmul.bf16.gmra.mxu0 %v632
        %v1054 = vpop.f32.mrf.mxu0
        %v1055 = vadd.f32 %v443, %v1054
        %v1056 = vpop.f32.mrf.mxu0
        %v1057 = vadd.f32 %v443, %v1056
        %1058 = vmatmul.bf16.gmra.mxu0 %v635
        %v1059 = vpop.f32.mrf.mxu0
        %v1060 = vadd.f32 %v443, %v1059
        %v1061 = vpop.f32.mrf.mxu0
        %v1062 = vadd.f32 %v443, %v1061
        %1063 = vmatmul.bf16.gmra.mxu0 %v638
        %v1064 = vpop.f32.mrf.mxu0
        %v1065 = vadd.f32 %v443, %v1064
        %v1066 = vpop.f32.mrf.mxu0
        %v1067 = vadd.f32 %v443, %v1066
        %1068 = vmatmul.bf16.gmra.mxu0 %v641
        %v1069 = vpop.f32.mrf.mxu0
        %v1070 = vadd.f32 %v443, %v1069
        %v1071 = vpop.f32.mrf.mxu0
        %v1072 = vadd.f32 %v443, %v1071
        %1073 = vmatmul.bf16.gmra.mxu0 %v644
        %v1074 = vpop.f32.mrf.mxu0
        %v1075 = vadd.f32 %v443, %v1074
        %v1076 = vpop.f32.mrf.mxu0
        %v1077 = vadd.f32 %v443, %v1076
        %1078 = vmatmul.bf16.gmra.mxu0 %v647
        %v1079 = vpop.f32.mrf.mxu0
        %v1080 = vadd.f32 %v443, %v1079
        %v1081 = vpop.f32.mrf.mxu0
        %v1082 = vadd.f32 %v443, %v1081
        %1083 = vmatmul.bf16.gmra.mxu0 %v650
        %v1084 = vpop.f32.mrf.mxu0
        %v1085 = vadd.f32 %v443, %v1084
        %v1086 = vpop.f32.mrf.mxu0
        %v1087 = vadd.f32 %v443, %v1086
        %1088 = vmatmul.bf16.gmra.mxu0 %v653
        %v1089 = vpop.f32.mrf.mxu0
        %v1090 = vadd.f32 %v443, %v1089
        %v1091 = vpop.f32.mrf.mxu0
        %v1092 = vadd.f32 %v443, %v1091
        %1093 = vmatmul.bf16.gmra.mxu0 %v656
        %v1094 = vpop.f32.mrf.mxu0
        %v1095 = vadd.f32 %v443, %v1094
        %v1096 = vpop.f32.mrf.mxu0
        %v1097 = vadd.f32 %v443, %v1096
        %1098 = vmatmul.bf16.gmra.mxu0 %v659
        %v1099 = vpop.f32.mrf.mxu0
        %v1100 = vadd.f32 %v443, %v1099
        %v1101 = vpop.f32.mrf.mxu0
        %v1102 = vadd.f32 %v443, %v1101
        %1103 = vmatmul.bf16.gmra.mxu0 %v662
        %v1104 = vpop.f32.mrf.mxu0
        %v1105 = vadd.f32 %v443, %v1104
        %v1106 = vpop.f32.mrf.mxu0
        %v1107 = vadd.f32 %v443, %v1106
        %1108 = vdwg.mxu0
        %1109 = vmatpush.bf16.msra.mxu0 0
        %1110 = vmatpush.bf16.msra.mxu0 0
        %1111 = vmatpush.bf16.msra.mxu0 0
        %1112 = vmatpush.bf16.msra.mxu0 0
        %1113 = vmatpush.bf16.msra.mxu0 0
        %1114 = vmatpush.bf16.msra.mxu0 0
        %1115 = vmatpush.bf16.msra.mxu0 %v596
        %1116 = vmatpush.bf16.msra.mxu0 %v588
        %1117 = vmatmul.bf16.gmra.mxu0 %v617
        %v1118 = vpop.f32.mrf.mxu0
        %v1119 = vadd.f32 %v444, %v1118
        %v1120 = vpop.f32.mrf.mxu0
        %v1121 = vadd.f32 %v444, %v1120
        %1122 = vmatmul.bf16.gmra.mxu0 %v620
        %v1123 = vpop.f32.mrf.mxu0
        %v1124 = vadd.f32 %v444, %v1123
        %v1125 = vpop.f32.mrf.mxu0
        %v1126 = vadd.f32 %v444, %v1125
        %1127 = vmatmul.bf16.gmra.mxu0 %v623
        %v1128 = vpop.f32.mrf.mxu0
        %v1129 = vadd.f32 %v444, %v1128
        %v1130 = vpop.f32.mrf.mxu0
        %v1131 = vadd.f32 %v444, %v1130
        %1132 = vmatmul.bf16.gmra.mxu0 %v626
        %v1133 = vpop.f32.mrf.mxu0
        %v1134 = vadd.f32 %v444, %v1133
        %v1135 = vpop.f32.mrf.mxu0
        %v1136 = vadd.f32 %v444, %v1135
        %1137 = vmatmul.bf16.gmra.mxu0 %v629
        %v1138 = vpop.f32.mrf.mxu0
        %v1139 = vadd.f32 %v444, %v1138
        %v1140 = vpop.f32.mrf.mxu0
        %v1141 = vadd.f32 %v444, %v1140
        %1142 = vmatmul.bf16.gmra.mxu0 %v632
        %v1143 = vpop.f32.mrf.mxu0
        %v1144 = vadd.f32 %v444, %v1143
        %v1145 = vpop.f32.mrf.mxu0
        %v1146 = vadd.f32 %v444, %v1145
        %1147 = vmatmul.bf16.gmra.mxu0 %v635
        %v1148 = vpop.f32.mrf.mxu0
        %v1149 = vadd.f32 %v444, %v1148
        %v1150 = vpop.f32.mrf.mxu0
        %v1151 = vadd.f32 %v444, %v1150
        %1152 = vmatmul.bf16.gmra.mxu0 %v638
        %v1153 = vpop.f32.mrf.mxu0
        %v1154 = vadd.f32 %v444, %v1153
        %v1155 = vpop.f32.mrf.mxu0
        %v1156 = vadd.f32 %v444, %v1155
        %1157 = vmatmul.bf16.gmra.mxu0 %v641
        %v1158 = vpop.f32.mrf.mxu0
        %v1159 = vadd.f32 %v444, %v1158
        %v1160 = vpop.f32.mrf.mxu0
        %v1161 = vadd.f32 %v444, %v1160
        %1162 = vmatmul.bf16.gmra.mxu0 %v644
        %v1163 = vpop.f32.mrf.mxu0
        %v1164 = vadd.f32 %v444, %v1163
        %v1165 = vpop.f32.mrf.mxu0
        %v1166 = vadd.f32 %v444, %v1165
        %1167 = vmatmul.bf16.gmra.mxu0 %v647
        %v1168 = vpop.f32.mrf.mxu0
        %v1169 = vadd.f32 %v444, %v1168
        %v1170 = vpop.f32.mrf.mxu0
        %v1171 = vadd.f32 %v444, %v1170
        %1172 = vmatmul.bf16.gmra.mxu0 %v650
        %v1173 = vpop.f32.mrf.mxu0
        %v1174 = vadd.f32 %v444, %v1173
        %v1175 = vpop.f32.mrf.mxu0
        %v1176 = vadd.f32 %v444, %v1175
        %1177 = vmatmul.bf16.gmra.mxu0 %v653
        %v1178 = vpop.f32.mrf.mxu0
        %v1179 = vadd.f32 %v444, %v1178
        %v1180 = vpop.f32.mrf.mxu0
        %v1181 = vadd.f32 %v444, %v1180
        %1182 = vmatmul.bf16.gmra.mxu0 %v656
        %v1183 = vpop.f32.mrf.mxu0
        %v1184 = vadd.f32 %v444, %v1183
        %v1185 = vpop.f32.mrf.mxu0
        %v1186 = vadd.f32 %v444, %v1185
        %1187 = vmatmul.bf16.gmra.mxu0 %v659
        %v1188 = vpop.f32.mrf.mxu0
        %v1189 = vadd.f32 %v444, %v1188
        %v1190 = vpop.f32.mrf.mxu0
        %v1191 = vadd.f32 %v444, %v1190
        %1192 = vmatmul.bf16.gmra.mxu0 %v662
        %v1193 = vpop.f32.mrf.mxu0
        %v1194 = vadd.f32 %v444, %v1193
        %v1195 = vpop.f32.mrf.mxu0
        %v1196 = vadd.f32 %v444, %v1195
        %1197 = vdwg.mxu0
        %1198 = vmatpush.bf16.msra.mxu0 0
        %1199 = vmatpush.bf16.msra.mxu0 0
        %1200 = vmatpush.bf16.msra.mxu0 0
        %1201 = vmatpush.bf16.msra.mxu0 0
        %1202 = vmatpush.bf16.msra.mxu0 0
        %1203 = vmatpush.bf16.msra.mxu0 0
        %1204 = vmatpush.bf16.msra.mxu0 %v597
        %1205 = vmatpush.bf16.msra.mxu0 %v589
        %1206 = vmatmul.bf16.gmra.mxu0 %v617
        %v1207 = vpop.f32.mrf.mxu0
        %v1208 = vadd.f32 %v445, %v1207
        %v1209 = vpop.f32.mrf.mxu0
        %v1210 = vadd.f32 %v445, %v1209
        %1211 = vmatmul.bf16.gmra.mxu0 %v620
        %v1212 = vpop.f32.mrf.mxu0
        %v1213 = vadd.f32 %v445, %v1212
        %v1214 = vpop.f32.mrf.mxu0
        %v1215 = vadd.f32 %v445, %v1214
        %1216 = vmatmul.bf16.gmra.mxu0 %v623
        %v1217 = vpop.f32.mrf.mxu0
        %v1218 = vadd.f32 %v445, %v1217
        %v1219 = vpop.f32.mrf.mxu0
        %v1220 = vadd.f32 %v445, %v1219
        %1221 = vmatmul.bf16.gmra.mxu0 %v626
        %v1222 = vpop.f32.mrf.mxu0
        %v1223 = vadd.f32 %v445, %v1222
        %v1224 = vpop.f32.mrf.mxu0
        %v1225 = vadd.f32 %v445, %v1224
        %1226 = vmatmul.bf16.gmra.mxu0 %v629
        %v1227 = vpop.f32.mrf.mxu0
        %v1228 = vadd.f32 %v445, %v1227
        %v1229 = vpop.f32.mrf.mxu0
        %v1230 = vadd.f32 %v445, %v1229
        %1231 = vmatmul.bf16.gmra.mxu0 %v632
        %v1232 = vpop.f32.mrf.mxu0
        %v1233 = vadd.f32 %v445, %v1232
        %v1234 = vpop.f32.mrf.mxu0
        %v1235 = vadd.f32 %v445, %v1234
        %1236 = vmatmul.bf16.gmra.mxu0 %v635
        %v1237 = vpop.f32.mrf.mxu0
        %v1238 = vadd.f32 %v445, %v1237
        %v1239 = vpop.f32.mrf.mxu0
        %v1240 = vadd.f32 %v445, %v1239
        %1241 = vmatmul.bf16.gmra.mxu0 %v638
        %v1242 = vpop.f32.mrf.mxu0
        %v1243 = vadd.f32 %v445, %v1242
        %v1244 = vpop.f32.mrf.mxu0
        %v1245 = vadd.f32 %v445, %v1244
        %1246 = vmatmul.bf16.gmra.mxu0 %v641
        %v1247 = vpop.f32.mrf.mxu0
        %v1248 = vadd.f32 %v445, %v1247
        %v1249 = vpop.f32.mrf.mxu0
        %v1250 = vadd.f32 %v445, %v1249
        %1251 = vmatmul.bf16.gmra.mxu0 %v644
        %v1252 = vpop.f32.mrf.mxu0
        %v1253 = vadd.f32 %v445, %v1252
        %v1254 = vpop.f32.mrf.mxu0
        %v1255 = vadd.f32 %v445, %v1254
        %1256 = vmatmul.bf16.gmra.mxu0 %v647
        %v1257 = vpop.f32.mrf.mxu0
        %v1258 = vadd.f32 %v445, %v1257
        %v1259 = vpop.f32.mrf.mxu0
        %v1260 = vadd.f32 %v445, %v1259
        %1261 = vmatmul.bf16.gmra.mxu0 %v650
        %v1262 = vpop.f32.mrf.mxu0
        %v1263 = vadd.f32 %v445, %v1262
        %v1264 = vpop.f32.mrf.mxu0
        %v1265 = vadd.f32 %v445, %v1264
        %1266 = vmatmul.bf16.gmra.mxu0 %v653
        %v1267 = vpop.f32.mrf.mxu0
        %v1268 = vadd.f32 %v445, %v1267
        %v1269 = vpop.f32.mrf.mxu0
        %v1270 = vadd.f32 %v445, %v1269
        %1271 = vmatmul.bf16.gmra.mxu0 %v656
        %v1272 = vpop.f32.mrf.mxu0
        %v1273 = vadd.f32 %v445, %v1272
        %v1274 = vpop.f32.mrf.mxu0
        %v1275 = vadd.f32 %v445, %v1274
        %1276 = vmatmul.bf16.gmra.mxu0 %v659
        %v1277 = vpop.f32.mrf.mxu0
        %v1278 = vadd.f32 %v445, %v1277
        %v1279 = vpop.f32.mrf.mxu0
        %v1280 = vadd.f32 %v445, %v1279
        %1281 = vmatmul.bf16.gmra.mxu0 %v662
        %v1282 = vpop.f32.mrf.mxu0
        %v1283 = vadd.f32 %v445, %v1282
        %v1284 = vpop.f32.mrf.mxu0
        %v1285 = vadd.f32 %v445, %v1284
        %1286 = vdwg.mxu0
        %1287 = vmatpush.bf16.msra.mxu0 0
        %1288 = vmatpush.bf16.msra.mxu0 0
        %1289 = vmatpush.bf16.msra.mxu0 0
        %1290 = vmatpush.bf16.msra.mxu0 0
        %1291 = vmatpush.bf16.msra.mxu0 0
        %1292 = vmatpush.bf16.msra.mxu0 0
        %1293 = vmatpush.bf16.msra.mxu0 %v598
        %1294 = vmatpush.bf16.msra.mxu0 %v590
        %1295 = vmatmul.bf16.gmra.mxu0 %v617
        %v1296 = vpop.f32.mrf.mxu0
        %v1297 = vadd.f32 %v446, %v1296
        %v1298 = vpop.f32.mrf.mxu0
        %v1299 = vadd.f32 %v446, %v1298
        %1300 = vmatmul.bf16.gmra.mxu0 %v620
        %v1301 = vpop.f32.mrf.mxu0
        %v1302 = vadd.f32 %v446, %v1301
        %v1303 = vpop.f32.mrf.mxu0
        %v1304 = vadd.f32 %v446, %v1303
        %1305 = vmatmul.bf16.gmra.mxu0 %v623
        %v1306 = vpop.f32.mrf.mxu0
        %v1307 = vadd.f32 %v446, %v1306
        %v1308 = vpop.f32.mrf.mxu0
        %v1309 = vadd.f32 %v446, %v1308
        %1310 = vmatmul.bf16.gmra.mxu0 %v626
        %v1311 = vpop.f32.mrf.mxu0
        %v1312 = vadd.f32 %v446, %v1311
        %v1313 = vpop.f32.mrf.mxu0
        %v1314 = vadd.f32 %v446, %v1313
        %1315 = vmatmul.bf16.gmra.mxu0 %v629
        %v1316 = vpop.f32.mrf.mxu0
        %v1317 = vadd.f32 %v446, %v1316
        %v1318 = vpop.f32.mrf.mxu0
        %v1319 = vadd.f32 %v446, %v1318
        %1320 = vmatmul.bf16.gmra.mxu0 %v632
        %v1321 = vpop.f32.mrf.mxu0
        %v1322 = vadd.f32 %v446, %v1321
        %v1323 = vpop.f32.mrf.mxu0
        %v1324 = vadd.f32 %v446, %v1323
        %1325 = vmatmul.bf16.gmra.mxu0 %v635
        %v1326 = vpop.f32.mrf.mxu0
        %v1327 = vadd.f32 %v446, %v1326
        %v1328 = vpop.f32.mrf.mxu0
        %v1329 = vadd.f32 %v446, %v1328
        %1330 = vmatmul.bf16.gmra.mxu0 %v638
        %v1331 = vpop.f32.mrf.mxu0
        %v1332 = vadd.f32 %v446, %v1331
        %v1333 = vpop.f32.mrf.mxu0
        %v1334 = vadd.f32 %v446, %v1333
        %1335 = vmatmul.bf16.gmra.mxu0 %v641
        %v1336 = vpop.f32.mrf.mxu0
        %v1337 = vadd.f32 %v446, %v1336
        %v1338 = vpop.f32.mrf.mxu0
        %v1339 = vadd.f32 %v446, %v1338
        %1340 = vmatmul.bf16.gmra.mxu0 %v644
        %v1341 = vpop.f32.mrf.mxu0
        %v1342 = vadd.f32 %v446, %v1341
        %v1343 = vpop.f32.mrf.mxu0
        %v1344 = vadd.f32 %v446, %v1343
        %1345 = vmatmul.bf16.gmra.mxu0 %v647
        %v1346 = vpop.f32.mrf.mxu0
        %v1347 = vadd.f32 %v446, %v1346
        %v1348 = vpop.f32.mrf.mxu0
        %v1349 = vadd.f32 %v446, %v1348
        %1350 = vmatmul.bf16.gmra.mxu0 %v650
        %v1351 = vpop.f32.mrf.mxu0
        %v1352 = vadd.f32 %v446, %v1351
        %v1353 = vpop.f32.mrf.mxu0
        %v1354 = vadd.f32 %v446, %v1353
        %1355 = vmatmul.bf16.gmra.mxu0 %v653
        %v1356 = vpop.f32.mrf.mxu0
        %v1357 = vadd.f32 %v446, %v1356
        %v1358 = vpop.f32.mrf.mxu0
        %v1359 = vadd.f32 %v446, %v1358
        %1360 = vmatmul.bf16.gmra.mxu0 %v656
        %v1361 = vpop.f32.mrf.mxu0
        %v1362 = vadd.f32 %v446, %v1361
        %v1363 = vpop.f32.mrf.mxu0
        %v1364 = vadd.f32 %v446, %v1363
        %1365 = vmatmul.bf16.gmra.mxu0 %v659
        %v1366 = vpop.f32.mrf.mxu0
        %v1367 = vadd.f32 %v446, %v1366
        %v1368 = vpop.f32.mrf.mxu0
        %v1369 = vadd.f32 %v446, %v1368
        %1370 = vmatmul.bf16.gmra.mxu0 %v662
        %v1371 = vpop.f32.mrf.mxu0
        %v1372 = vadd.f32 %v446, %v1371
        %v1373 = vpop.f32.mrf.mxu0
        %v1374 = vadd.f32 %v446, %v1373
        %1375 = vdwg.mxu0
        %v1376 = vmax.f32 %v674, 0.0
        %v1377 = vmax.f32 %v763, 0.0
        %v1378 = vmax.f32 %v852, 0.0
        %v1379 = vmax.f32 %v941, 0.0
        %v1380 = vmax.f32 %v1030, 0.0
        %v1381 = vmax.f32 %v1119, 0.0
        %v1382 = vmax.f32 %v1208, 0.0
        %v1383 = vmax.f32 %v1297, 0.0
        %v1384 = vmax.f32 %v676, 0.0
        %v1385 = vmax.f32 %v765, 0.0
        %v1386 = vmax.f32 %v854, 0.0
        %v1387 = vmax.f32 %v943, 0.0
        %v1388 = vmax.f32 %v1032, 0.0
        %v1389 = vmax.f32 %v1121, 0.0
        %v1390 = vmax.f32 %v1210, 0.0
        %v1391 = vmax.f32 %v1299, 0.0
        %v1392 = vmax.f32 %v679, 0.0
        %v1393 = vmax.f32 %v768, 0.0
        %v1394 = vmax.f32 %v857, 0.0
        %v1395 = vmax.f32 %v946, 0.0
        %v1396 = vmax.f32 %v1035, 0.0
        %v1397 = vmax.f32 %v1124, 0.0
        %v1398 = vmax.f32 %v1213, 0.0
        %v1399 = vmax.f32 %v1302, 0.0
        %v1400 = vmax.f32 %v681, 0.0
        %v1401 = vmax.f32 %v770, 0.0
        %v1402 = vmax.f32 %v859, 0.0
        %v1403 = vmax.f32 %v948, 0.0
        %v1404 = vmax.f32 %v1037, 0.0
        %v1405 = vmax.f32 %v1126, 0.0
        %v1406 = vmax.f32 %v1215, 0.0
        %v1407 = vmax.f32 %v1304, 0.0
        %v1408 = vmax.f32 %v684, 0.0
        %v1409 = vmax.f32 %v773, 0.0
        %v1410 = vmax.f32 %v862, 0.0
        %v1411 = vmax.f32 %v951, 0.0
        %v1412 = vmax.f32 %v1040, 0.0
        %v1413 = vmax.f32 %v1129, 0.0
        %v1414 = vmax.f32 %v1218, 0.0
        %v1415 = vmax.f32 %v1307, 0.0
        %v1416 = vmax.f32 %v686, 0.0
        %v1417 = vmax.f32 %v775, 0.0
        %v1418 = vmax.f32 %v864, 0.0
        %v1419 = vmax.f32 %v953, 0.0
        %v1420 = vmax.f32 %v1042, 0.0
        %v1421 = vmax.f32 %v1131, 0.0
        %v1422 = vmax.f32 %v1220, 0.0
        %v1423 = vmax.f32 %v1309, 0.0
        %v1424 = vmax.f32 %v689, 0.0
        %v1425 = vmax.f32 %v778, 0.0
        %v1426 = vmax.f32 %v867, 0.0
        %v1427 = vmax.f32 %v956, 0.0
        %v1428 = vmax.f32 %v1045, 0.0
        %v1429 = vmax.f32 %v1134, 0.0
        %v1430 = vmax.f32 %v1223, 0.0
        %v1431 = vmax.f32 %v1312, 0.0
        %v1432 = vmax.f32 %v691, 0.0
        %v1433 = vmax.f32 %v780, 0.0
        %v1434 = vmax.f32 %v869, 0.0
        %v1435 = vmax.f32 %v958, 0.0
        %v1436 = vmax.f32 %v1047, 0.0
        %v1437 = vmax.f32 %v1136, 0.0
        %v1438 = vmax.f32 %v1225, 0.0
        %v1439 = vmax.f32 %v1314, 0.0
        %v1440 = vmax.f32 %v694, 0.0
        %v1441 = vmax.f32 %v783, 0.0
        %v1442 = vmax.f32 %v872, 0.0
        %v1443 = vmax.f32 %v961, 0.0
        %v1444 = vmax.f32 %v1050, 0.0
        %v1445 = vmax.f32 %v1139, 0.0
        %v1446 = vmax.f32 %v1228, 0.0
        %v1447 = vmax.f32 %v1317, 0.0
        %v1448 = vmax.f32 %v696, 0.0
        %v1449 = vmax.f32 %v785, 0.0
        %v1450 = vmax.f32 %v874, 0.0
        %v1451 = vmax.f32 %v963, 0.0
        %v1452 = vmax.f32 %v1052, 0.0
        %v1453 = vmax.f32 %v1141, 0.0
        %v1454 = vmax.f32 %v1230, 0.0
        %v1455 = vmax.f32 %v1319, 0.0
        %v1456 = vmax.f32 %v699, 0.0
        %v1457 = vmax.f32 %v788, 0.0
        %v1458 = vmax.f32 %v877, 0.0
        %v1459 = vmax.f32 %v966, 0.0
        %v1460 = vmax.f32 %v1055, 0.0
        %v1461 = vmax.f32 %v1144, 0.0
        %v1462 = vmax.f32 %v1233, 0.0
        %v1463 = vmax.f32 %v1322, 0.0
        %v1464 = vmax.f32 %v701, 0.0
        %v1465 = vmax.f32 %v790, 0.0
        %v1466 = vmax.f32 %v879, 0.0
        %v1467 = vmax.f32 %v968, 0.0
        %v1468 = vmax.f32 %v1057, 0.0
        %v1469 = vmax.f32 %v1146, 0.0
        %v1470 = vmax.f32 %v1235, 0.0
        %v1471 = vmax.f32 %v1324, 0.0
        %v1472 = vmax.f32 %v704, 0.0
        %v1473 = vmax.f32 %v793, 0.0
        %v1474 = vmax.f32 %v882, 0.0
        %v1475 = vmax.f32 %v971, 0.0
        %v1476 = vmax.f32 %v1060, 0.0
        %v1477 = vmax.f32 %v1149, 0.0
        %v1478 = vmax.f32 %v1238, 0.0
        %v1479 = vmax.f32 %v1327, 0.0
        %v1480 = vmax.f32 %v706, 0.0
        %v1481 = vmax.f32 %v795, 0.0
        %v1482 = vmax.f32 %v884, 0.0
        %v1483 = vmax.f32 %v973, 0.0
        %v1484 = vmax.f32 %v1062, 0.0
        %v1485 = vmax.f32 %v1151, 0.0
        %v1486 = vmax.f32 %v1240, 0.0
        %v1487 = vmax.f32 %v1329, 0.0
        %v1488 = vmax.f32 %v709, 0.0
        %v1489 = vmax.f32 %v798, 0.0
        %v1490 = vmax.f32 %v887, 0.0
        %v1491 = vmax.f32 %v976, 0.0
        %v1492 = vmax.f32 %v1065, 0.0
        %v1493 = vmax.f32 %v1154, 0.0
        %v1494 = vmax.f32 %v1243, 0.0
        %v1495 = vmax.f32 %v1332, 0.0
        %v1496 = vmax.f32 %v711, 0.0
        %v1497 = vmax.f32 %v800, 0.0
        %v1498 = vmax.f32 %v889, 0.0
        %v1499 = vmax.f32 %v978, 0.0
        %v1500 = vmax.f32 %v1067, 0.0
        %v1501 = vmax.f32 %v1156, 0.0
        %v1502 = vmax.f32 %v1245, 0.0
        %v1503 = vmax.f32 %v1334, 0.0
        %v1504 = vmax.f32 %v714, 0.0
        %v1505 = vmax.f32 %v803, 0.0
        %v1506 = vmax.f32 %v892, 0.0
        %v1507 = vmax.f32 %v981, 0.0
        %v1508 = vmax.f32 %v1070, 0.0
        %v1509 = vmax.f32 %v1159, 0.0
        %v1510 = vmax.f32 %v1248, 0.0
        %v1511 = vmax.f32 %v1337, 0.0
        %v1512 = vmax.f32 %v716, 0.0
        %v1513 = vmax.f32 %v805, 0.0
        %v1514 = vmax.f32 %v894, 0.0
        %v1515 = vmax.f32 %v983, 0.0
        %v1516 = vmax.f32 %v1072, 0.0
        %v1517 = vmax.f32 %v1161, 0.0
        %v1518 = vmax.f32 %v1250, 0.0
        %v1519 = vmax.f32 %v1339, 0.0
        %v1520 = vmax.f32 %v719, 0.0
        %v1521 = vmax.f32 %v808, 0.0
        %v1522 = vmax.f32 %v897, 0.0
        %v1523 = vmax.f32 %v986, 0.0
        %v1524 = vmax.f32 %v1075, 0.0
        %v1525 = vmax.f32 %v1164, 0.0
        %v1526 = vmax.f32 %v1253, 0.0
        %v1527 = vmax.f32 %v1342, 0.0
        %v1528 = vmax.f32 %v721, 0.0
        %v1529 = vmax.f32 %v810, 0.0
        %v1530 = vmax.f32 %v899, 0.0
        %v1531 = vmax.f32 %v988, 0.0
        %v1532 = vmax.f32 %v1077, 0.0
        %v1533 = vmax.f32 %v1166, 0.0
        %v1534 = vmax.f32 %v1255, 0.0
        %v1535 = vmax.f32 %v1344, 0.0
        %v1536 = vmax.f32 %v724, 0.0
        %v1537 = vmax.f32 %v813, 0.0
        %v1538 = vmax.f32 %v902, 0.0
        %v1539 = vmax.f32 %v991, 0.0
        %v1540 = vmax.f32 %v1080, 0.0
        %v1541 = vmax.f32 %v1169, 0.0
        %v1542 = vmax.f32 %v1258, 0.0
        %v1543 = vmax.f32 %v1347, 0.0
        %v1544 = vmax.f32 %v726, 0.0
        %v1545 = vmax.f32 %v815, 0.0
        %v1546 = vmax.f32 %v904, 0.0
        %v1547 = vmax.f32 %v993, 0.0
        %v1548 = vmax.f32 %v1082, 0.0
        %v1549 = vmax.f32 %v1171, 0.0
        %v1550 = vmax.f32 %v1260, 0.0
        %v1551 = vmax.f32 %v1349, 0.0
        %v1552 = vmax.f32 %v729, 0.0
        %v1553 = vmax.f32 %v818, 0.0
        %v1554 = vmax.f32 %v907, 0.0
        %v1555 = vmax.f32 %v996, 0.0
        %v1556 = vmax.f32 %v1085, 0.0
        %v1557 = vmax.f32 %v1174, 0.0
        %v1558 = vmax.f32 %v1263, 0.0
        %v1559 = vmax.f32 %v1352, 0.0
        %v1560 = vmax.f32 %v731, 0.0
        %v1561 = vmax.f32 %v820, 0.0
        %v1562 = vmax.f32 %v909, 0.0
        %v1563 = vmax.f32 %v998, 0.0
        %v1564 = vmax.f32 %v1087, 0.0
        %v1565 = vmax.f32 %v1176, 0.0
        %v1566 = vmax.f32 %v1265, 0.0
        %v1567 = vmax.f32 %v1354, 0.0
        %v1568 = vmax.f32 %v734, 0.0
        %v1569 = vmax.f32 %v823, 0.0
        %v1570 = vmax.f32 %v912, 0.0
        %v1571 = vmax.f32 %v1001, 0.0
        %v1572 = vmax.f32 %v1090, 0.0
        %v1573 = vmax.f32 %v1179, 0.0
        %v1574 = vmax.f32 %v1268, 0.0
        %v1575 = vmax.f32 %v1357, 0.0
        %v1576 = vmax.f32 %v736, 0.0
        %v1577 = vmax.f32 %v825, 0.0
        %v1578 = vmax.f32 %v914, 0.0
        %v1579 = vmax.f32 %v1003, 0.0
        %v1580 = vmax.f32 %v1092, 0.0
        %v1581 = vmax.f32 %v1181, 0.0
        %v1582 = vmax.f32 %v1270, 0.0
        %v1583 = vmax.f32 %v1359, 0.0
        %v1584 = vmax.f32 %v739, 0.0
        %v1585 = vmax.f32 %v828, 0.0
        %v1586 = vmax.f32 %v917, 0.0
        %v1587 = vmax.f32 %v1006, 0.0
        %v1588 = vmax.f32 %v1095, 0.0
        %v1589 = vmax.f32 %v1184, 0.0
        %v1590 = vmax.f32 %v1273, 0.0
        %v1591 = vmax.f32 %v1362, 0.0
        %v1592 = vmax.f32 %v741, 0.0
        %v1593 = vmax.f32 %v830, 0.0
        %v1594 = vmax.f32 %v919, 0.0
        %v1595 = vmax.f32 %v1008, 0.0
        %v1596 = vmax.f32 %v1097, 0.0
        %v1597 = vmax.f32 %v1186, 0.0
        %v1598 = vmax.f32 %v1275, 0.0
        %v1599 = vmax.f32 %v1364, 0.0
        %v1600 = vmax.f32 %v744, 0.0
        %v1601 = vmax.f32 %v833, 0.0
        %v1602 = vmax.f32 %v922, 0.0
        %v1603 = vmax.f32 %v1011, 0.0
        %v1604 = vmax.f32 %v1100, 0.0
        %v1605 = vmax.f32 %v1189, 0.0
        %v1606 = vmax.f32 %v1278, 0.0
        %v1607 = vmax.f32 %v1367, 0.0
        %v1608 = vmax.f32 %v746, 0.0
        %v1609 = vmax.f32 %v835, 0.0
        %v1610 = vmax.f32 %v924, 0.0
        %v1611 = vmax.f32 %v1013, 0.0
        %v1612 = vmax.f32 %v1102, 0.0
        %v1613 = vmax.f32 %v1191, 0.0
        %v1614 = vmax.f32 %v1280, 0.0
        %v1615 = vmax.f32 %v1369, 0.0
        %v1616 = vmax.f32 %v749, 0.0
        %v1617 = vmax.f32 %v838, 0.0
        %v1618 = vmax.f32 %v927, 0.0
        %v1619 = vmax.f32 %v1016, 0.0
        %v1620 = vmax.f32 %v1105, 0.0
        %v1621 = vmax.f32 %v1194, 0.0
        %v1622 = vmax.f32 %v1283, 0.0
        %v1623 = vmax.f32 %v1372, 0.0
        %v1624 = vmax.f32 %v751, 0.0
        %v1625 = vmax.f32 %v840, 0.0
        %v1626 = vmax.f32 %v929, 0.0
        %v1627 = vmax.f32 %v1018, 0.0
        %v1628 = vmax.f32 %v1107, 0.0
        %v1629 = vmax.f32 %v1196, 0.0
        %v1630 = vmax.f32 %v1285, 0.0
        %v1631 = vmax.f32 %v1374, 0.0
        %v1632 = vpack.c.bf16 %v1384, %v1376
        %v1633 = vpack.c.bf16 %v1385, %v1377
        %v1634 = vpack.c.bf16 %v1386, %v1378
        %v1635 = vpack.c.bf16 %v1387, %v1379
        %v1636 = vpack.c.bf16 %v1388, %v1380
        %v1637 = vpack.c.bf16 %v1389, %v1381
        %v1638 = vpack.c.bf16 %v1390, %v1382
        %v1639 = vpack.c.bf16 %v1391, %v1383
        %v1640 = vpack.c.bf16 %v1400, %v1392
        %v1641 = vpack.c.bf16 %v1401, %v1393
        %v1642 = vpack.c.bf16 %v1402, %v1394
        %v1643 = vpack.c.bf16 %v1403, %v1395
        %v1644 = vpack.c.bf16 %v1404, %v1396
        %v1645 = vpack.c.bf16 %v1405, %v1397
        %v1646 = vpack.c.bf16 %v1406, %v1398
        %v1647 = vpack.c.bf16 %v1407, %v1399
        %v1648 = vpack.c.bf16 %v1416, %v1408
        %v1649 = vpack.c.bf16 %v1417, %v1409
        %v1650 = vpack.c.bf16 %v1418, %v1410
        %v1651 = vpack.c.bf16 %v1419, %v1411
        %v1652 = vpack.c.bf16 %v1420, %v1412
        %v1653 = vpack.c.bf16 %v1421, %v1413
        %v1654 = vpack.c.bf16 %v1422, %v1414
        %v1655 = vpack.c.bf16 %v1423, %v1415
        %v1656 = vpack.c.bf16 %v1432, %v1424
        %v1657 = vpack.c.bf16 %v1433, %v1425
        %v1658 = vpack.c.bf16 %v1434, %v1426
        %v1659 = vpack.c.bf16 %v1435, %v1427
        %v1660 = vpack.c.bf16 %v1436, %v1428
        %v1661 = vpack.c.bf16 %v1437, %v1429
        %v1662 = vpack.c.bf16 %v1438, %v1430
        %v1663 = vpack.c.bf16 %v1439, %v1431
        %v1664 = vpack.c.bf16 %v1448, %v1440
        %v1665 = vpack.c.bf16 %v1449, %v1441
        %v1666 = vpack.c.bf16 %v1450, %v1442
        %v1667 = vpack.c.bf16 %v1451, %v1443
        %v1668 = vpack.c.bf16 %v1452, %v1444
        %v1669 = vpack.c.bf16 %v1453, %v1445
        %v1670 = vpack.c.bf16 %v1454, %v1446
        %v1671 = vpack.c.bf16 %v1455, %v1447
        %v1672 = vpack.c.bf16 %v1464, %v1456
        %v1673 = vpack.c.bf16 %v1465, %v1457
        %v1674 = vpack.c.bf16 %v1466, %v1458
        %v1675 = vpack.c.bf16 %v1467, %v1459
        %v1676 = vpack.c.bf16 %v1468, %v1460
        %v1677 = vpack.c.bf16 %v1469, %v1461
        %v1678 = vpack.c.bf16 %v1470, %v1462
        %v1679 = vpack.c.bf16 %v1471, %v1463
        %v1680 = vpack.c.bf16 %v1480, %v1472
        %v1681 = vpack.c.bf16 %v1481, %v1473
        %v1682 = vpack.c.bf16 %v1482, %v1474
        %v1683 = vpack.c.bf16 %v1483, %v1475
        %v1684 = vpack.c.bf16 %v1484, %v1476
        %v1685 = vpack.c.bf16 %v1485, %v1477
        %v1686 = vpack.c.bf16 %v1486, %v1478
        %v1687 = vpack.c.bf16 %v1487, %v1479
        %v1688 = vpack.c.bf16 %v1496, %v1488
        %v1689 = vpack.c.bf16 %v1497, %v1489
        %v1690 = vpack.c.bf16 %v1498, %v1490
        %v1691 = vpack.c.bf16 %v1499, %v1491
        %v1692 = vpack.c.bf16 %v1500, %v1492
        %v1693 = vpack.c.bf16 %v1501, %v1493
        %v1694 = vpack.c.bf16 %v1502, %v1494
        %v1695 = vpack.c.bf16 %v1503, %v1495
        %v1696 = vpack.c.bf16 %v1512, %v1504
        %v1697 = vpack.c.bf16 %v1513, %v1505
        %v1698 = vpack.c.bf16 %v1514, %v1506
        %v1699 = vpack.c.bf16 %v1515, %v1507
        %v1700 = vpack.c.bf16 %v1516, %v1508
        %v1701 = vpack.c.bf16 %v1517, %v1509
        %v1702 = vpack.c.bf16 %v1518, %v1510
        %v1703 = vpack.c.bf16 %v1519, %v1511
        %v1704 = vpack.c.bf16 %v1528, %v1520
        %v1705 = vpack.c.bf16 %v1529, %v1521
        %v1706 = vpack.c.bf16 %v1530, %v1522
        %v1707 = vpack.c.bf16 %v1531, %v1523
        %v1708 = vpack.c.bf16 %v1532, %v1524
        %v1709 = vpack.c.bf16 %v1533, %v1525
        %v1710 = vpack.c.bf16 %v1534, %v1526
        %v1711 = vpack.c.bf16 %v1535, %v1527
        %v1712 = vpack.c.bf16 %v1544, %v1536
        %v1713 = vpack.c.bf16 %v1545, %v1537
        %v1714 = vpack.c.bf16 %v1546, %v1538
        %v1715 = vpack.c.bf16 %v1547, %v1539
        %v1716 = vpack.c.bf16 %v1548, %v1540
        %v1717 = vpack.c.bf16 %v1549, %v1541
        %v1718 = vpack.c.bf16 %v1550, %v1542
        %v1719 = vpack.c.bf16 %v1551, %v1543
        %v1720 = vpack.c.bf16 %v1560, %v1552
        %v1721 = vpack.c.bf16 %v1561, %v1553
        %v1722 = vpack.c.bf16 %v1562, %v1554
        %v1723 = vpack.c.bf16 %v1563, %v1555
        %v1724 = vpack.c.bf16 %v1564, %v1556
        %v1725 = vpack.c.bf16 %v1565, %v1557
        %v1726 = vpack.c.bf16 %v1566, %v1558
        %v1727 = vpack.c.bf16 %v1567, %v1559
        %v1728 = vpack.c.bf16 %v1576, %v1568
        %v1729 = vpack.c.bf16 %v1577, %v1569
        %v1730 = vpack.c.bf16 %v1578, %v1570
        %v1731 = vpack.c.bf16 %v1579, %v1571
        %v1732 = vpack.c.bf16 %v1580, %v1572
        %v1733 = vpack.c.bf16 %v1581, %v1573
        %v1734 = vpack.c.bf16 %v1582, %v1574
        %v1735 = vpack.c.bf16 %v1583, %v1575
        %v1736 = vpack.c.bf16 %v1592, %v1584
        %v1737 = vpack.c.bf16 %v1593, %v1585
        %v1738 = vpack.c.bf16 %v1594, %v1586
        %v1739 = vpack.c.bf16 %v1595, %v1587
        %v1740 = vpack.c.bf16 %v1596, %v1588
        %v1741 = vpack.c.bf16 %v1597, %v1589
        %v1742 = vpack.c.bf16 %v1598, %v1590
        %v1743 = vpack.c.bf16 %v1599, %v1591
        %v1744 = vpack.c.bf16 %v1608, %v1600
        %v1745 = vpack.c.bf16 %v1609, %v1601
        %v1746 = vpack.c.bf16 %v1610, %v1602
        %v1747 = vpack.c.bf16 %v1611, %v1603
        %v1748 = vpack.c.bf16 %v1612, %v1604
        %v1749 = vpack.c.bf16 %v1613, %v1605
        %v1750 = vpack.c.bf16 %v1614, %v1606
        %v1751 = vpack.c.bf16 %v1615, %v1607
        %v1752 = vpack.c.bf16 %v1624, %v1616
        %v1753 = vpack.c.bf16 %v1625, %v1617
        %v1754 = vpack.c.bf16 %v1626, %v1618
        %v1755 = vpack.c.bf16 %v1627, %v1619
        %v1756 = vpack.c.bf16 %v1628, %v1620
        %v1757 = vpack.c.bf16 %v1629, %v1621
        %v1758 = vpack.c.bf16 %v1630, %v1622
        %v1759 = vpack.c.bf16 %v1631, %v1623
        %v1760 = vld [vmem:[%s3] sm:$0xff]
        %v1761 = vld [vmem:[%s3 + $0x8] sm:$0xff]
        %v1762 = vld [vmem:[%s3 + $0x10] sm:$0xff]
        %v1763 = vld [vmem:[%s3 + $0x18] sm:$0xff]
        %v1764 = vld [vmem:[%s3 + $0x20] sm:$0xff]
        %v1765 = vld [vmem:[%s3 + $0x28] sm:$0xff]
        %v1766 = vld [vmem:[%s3 + $0x30] sm:$0xff]
        %v1767 = vld [vmem:[%s3 + $0x38] sm:$0xff]
        %v1768 = vld [vmem:[%s3 + $0x40] sm:$0xff]
        %v1769 = vld [vmem:[%s3 + $0x48] sm:$0xff]
        %v1770 = vld [vmem:[%s3 + $0x50] sm:$0xff]
        %v1771 = vld [vmem:[%s3 + $0x58] sm:$0xff]
        %v1772 = vld [vmem:[%s3 + $0x60] sm:$0xff]
        %v1773 = vld [vmem:[%s3 + $0x68] sm:$0xff]
        %v1774 = vld [vmem:[%s3 + $0x70] sm:$0xff]
        %v1775 = vld [vmem:[%s3 + $0x78] sm:$0xff]
        %v1776 = vld [vmem:[%s3 + $0x80] sm:$0xff]
        %v1777 = vld [vmem:[%s3 + $0x88] sm:$0xff]
        %v1778 = vld [vmem:[%s3 + $0x90] sm:$0xff]
        %v1779 = vld [vmem:[%s3 + $0x98] sm:$0xff]
        %v1780 = vld [vmem:[%s3 + $0xa0] sm:$0xff]
        %v1781 = vld [vmem:[%s3 + $0xa8] sm:$0xff]
        %v1782 = vld [vmem:[%s3 + $0xb0] sm:$0xff]
        %v1783 = vld [vmem:[%s3 + $0xb8] sm:$0xff]
        %v1784 = vld [vmem:[%s3 + $0xc0] sm:$0xff]
        %v1785 = vld [vmem:[%s3 + $0xc8] sm:$0xff]
        %v1786 = vld [vmem:[%s3 + $0xd0] sm:$0xff]
        %v1787 = vld [vmem:[%s3 + $0xd8] sm:$0xff]
        %v1788 = vld [vmem:[%s3 + $0xe0] sm:$0xff]
        %v1789 = vld [vmem:[%s3 + $0xe8] sm:$0xff]
        %v1790 = vld [vmem:[%s3 + $0xf0] sm:$0xff]
        %v1791 = vld [vmem:[%s3 + $0xf8] sm:$0xff]
        %v1792 = vld [vmem:[%s3 + $0x100] sm:$0xff]
        %v1793 = vld [vmem:[%s3 + $0x108] sm:$0xff]
        %v1794 = vld [vmem:[%s3 + $0x110] sm:$0xff]
        %v1795 = vld [vmem:[%s3 + $0x118] sm:$0xff]
        %v1796 = vld [vmem:[%s3 + $0x120] sm:$0xff]
        %v1797 = vld [vmem:[%s3 + $0x128] sm:$0xff]
        %v1798 = vld [vmem:[%s3 + $0x130] sm:$0xff]
        %v1799 = vld [vmem:[%s3 + $0x138] sm:$0xff]
        %v1800 = vld [vmem:[%s3 + $0x140] sm:$0xff]
        %v1801 = vld [vmem:[%s3 + $0x148] sm:$0xff]
        %v1802 = vld [vmem:[%s3 + $0x150] sm:$0xff]
        %v1803 = vld [vmem:[%s3 + $0x158] sm:$0xff]
        %v1804 = vld [vmem:[%s3 + $0x160] sm:$0xff]
        %v1805 = vld [vmem:[%s3 + $0x168] sm:$0xff]
        %v1806 = vld [vmem:[%s3 + $0x170] sm:$0xff]
        %v1807 = vld [vmem:[%s3 + $0x178] sm:$0xff]
        %v1808 = vld [vmem:[%s3 + $0x180] sm:$0xff]
        %v1809 = vld [vmem:[%s3 + $0x188] sm:$0xff]
        %v1810 = vld [vmem:[%s3 + $0x190] sm:$0xff]
        %v1811 = vld [vmem:[%s3 + $0x198] sm:$0xff]
        %v1812 = vld [vmem:[%s3 + $0x1a0] sm:$0xff]
        %v1813 = vld [vmem:[%s3 + $0x1a8] sm:$0xff]
        %v1814 = vld [vmem:[%s3 + $0x1b0] sm:$0xff]
        %v1815 = vld [vmem:[%s3 + $0x1b8] sm:$0xff]
        %v1816 = vld [vmem:[%s3 + $0x1c0] sm:$0xff]
        %v1817 = vld [vmem:[%s3 + $0x1c8] sm:$0xff]
        %v1818 = vld [vmem:[%s3 + $0x1d0] sm:$0xff]
        %v1819 = vld [vmem:[%s3 + $0x1d8] sm:$0xff]
        %v1820 = vld [vmem:[%s3 + $0x1e0] sm:$0xff]
        %v1821 = vld [vmem:[%s3 + $0x1e8] sm:$0xff]
        %v1822 = vld [vmem:[%s3 + $0x1f0] sm:$0xff]
        %v1823 = vld [vmem:[%s3 + $0x1f8] sm:$0xff]
        %v1824 = vld [vmem:[%s3 + $0x200] sm:$0xff]
        %v1825 = vld [vmem:[%s3 + $0x208] sm:$0xff]
        %v1826 = vld [vmem:[%s3 + $0x210] sm:$0xff]
        %v1827 = vld [vmem:[%s3 + $0x218] sm:$0xff]
        %v1828 = vld [vmem:[%s3 + $0x220] sm:$0xff]
        %v1829 = vld [vmem:[%s3 + $0x228] sm:$0xff]
        %v1830 = vld [vmem:[%s3 + $0x230] sm:$0xff]
        %v1831 = vld [vmem:[%s3 + $0x238] sm:$0xff]
        %v1832 = vld [vmem:[%s3 + $0x240] sm:$0xff]
        %v1833 = vld [vmem:[%s3 + $0x248] sm:$0xff]
        %v1834 = vld [vmem:[%s3 + $0x250] sm:$0xff]
        %v1835 = vld [vmem:[%s3 + $0x258] sm:$0xff]
        %v1836 = vld [vmem:[%s3 + $0x260] sm:$0xff]
        %v1837 = vld [vmem:[%s3 + $0x268] sm:$0xff]
        %v1838 = vld [vmem:[%s3 + $0x270] sm:$0xff]
        %v1839 = vld [vmem:[%s3 + $0x278] sm:$0xff]
        %v1840 = vld [vmem:[%s3 + $0x280] sm:$0xff]
        %v1841 = vld [vmem:[%s3 + $0x288] sm:$0xff]
        %v1842 = vld [vmem:[%s3 + $0x290] sm:$0xff]
        %v1843 = vld [vmem:[%s3 + $0x298] sm:$0xff]
        %v1844 = vld [vmem:[%s3 + $0x2a0] sm:$0xff]
        %v1845 = vld [vmem:[%s3 + $0x2a8] sm:$0xff]
        %v1846 = vld [vmem:[%s3 + $0x2b0] sm:$0xff]
        %v1847 = vld [vmem:[%s3 + $0x2b8] sm:$0xff]
        %v1848 = vld [vmem:[%s3 + $0x2c0] sm:$0xff]
        %v1849 = vld [vmem:[%s3 + $0x2c8] sm:$0xff]
        %v1850 = vld [vmem:[%s3 + $0x2d0] sm:$0xff]
        %v1851 = vld [vmem:[%s3 + $0x2d8] sm:$0xff]
        %v1852 = vld [vmem:[%s3 + $0x2e0] sm:$0xff]
        %v1853 = vld [vmem:[%s3 + $0x2e8] sm:$0xff]
        %v1854 = vld [vmem:[%s3 + $0x2f0] sm:$0xff]
        %v1855 = vld [vmem:[%s3 + $0x2f8] sm:$0xff]
        %v1856 = vld [vmem:[%s3 + $0x300] sm:$0xff]
        %v1857 = vld [vmem:[%s3 + $0x308] sm:$0xff]
        %v1858 = vld [vmem:[%s3 + $0x310] sm:$0xff]
        %v1859 = vld [vmem:[%s3 + $0x318] sm:$0xff]
        %v1860 = vld [vmem:[%s3 + $0x320] sm:$0xff]
        %v1861 = vld [vmem:[%s3 + $0x328] sm:$0xff]
        %v1862 = vld [vmem:[%s3 + $0x330] sm:$0xff]
        %v1863 = vld [vmem:[%s3 + $0x338] sm:$0xff]
        %v1864 = vld [vmem:[%s3 + $0x340] sm:$0xff]
        %v1865 = vld [vmem:[%s3 + $0x348] sm:$0xff]
        %v1866 = vld [vmem:[%s3 + $0x350] sm:$0xff]
        %v1867 = vld [vmem:[%s3 + $0x358] sm:$0xff]
        %v1868 = vld [vmem:[%s3 + $0x360] sm:$0xff]
        %v1869 = vld [vmem:[%s3 + $0x368] sm:$0xff]
        %v1870 = vld [vmem:[%s3 + $0x370] sm:$0xff]
        %v1871 = vld [vmem:[%s3 + $0x378] sm:$0xff]
        %v1872 = vld [vmem:[%s3 + $0x380] sm:$0xff]
        %v1873 = vld [vmem:[%s3 + $0x388] sm:$0xff]
        %v1874 = vld [vmem:[%s3 + $0x390] sm:$0xff]
        %v1875 = vld [vmem:[%s3 + $0x398] sm:$0xff]
        %v1876 = vld [vmem:[%s3 + $0x3a0] sm:$0xff]
        %v1877 = vld [vmem:[%s3 + $0x3a8] sm:$0xff]
        %v1878 = vld [vmem:[%s3 + $0x3b0] sm:$0xff]
        %v1879 = vld [vmem:[%s3 + $0x3b8] sm:$0xff]
        %v1880 = vld [vmem:[%s3 + $0x3c0] sm:$0xff]
        %v1881 = vld [vmem:[%s3 + $0x3c8] sm:$0xff]
        %v1882 = vld [vmem:[%s3 + $0x3d0] sm:$0xff]
        %v1883 = vld [vmem:[%s3 + $0x3d8] sm:$0xff]
        %v1884 = vld [vmem:[%s3 + $0x3e0] sm:$0xff]
        %v1885 = vld [vmem:[%s3 + $0x3e8] sm:$0xff]
        %v1886 = vld [vmem:[%s3 + $0x3f0] sm:$0xff]
        %v1887 = vld [vmem:[%s3 + $0x3f8] sm:$0xff]
        %v1888 = vld [vmem:[%s3 + $0x400] sm:$0xff]
        %v1889 = vld [vmem:[%s3 + $0x408] sm:$0xff]
        %v1890 = vld [vmem:[%s3 + $0x410] sm:$0xff]
        %v1891 = vld [vmem:[%s3 + $0x418] sm:$0xff]
        %v1892 = vld [vmem:[%s3 + $0x420] sm:$0xff]
        %v1893 = vld [vmem:[%s3 + $0x428] sm:$0xff]
        %v1894 = vld [vmem:[%s3 + $0x430] sm:$0xff]
        %v1895 = vld [vmem:[%s3 + $0x438] sm:$0xff]
        %v1896 = vld [vmem:[%s3 + $0x440] sm:$0xff]
        %v1897 = vld [vmem:[%s3 + $0x448] sm:$0xff]
        %v1898 = vld [vmem:[%s3 + $0x450] sm:$0xff]
        %v1899 = vld [vmem:[%s3 + $0x458] sm:$0xff]
        %v1900 = vld [vmem:[%s3 + $0x460] sm:$0xff]
        %v1901 = vld [vmem:[%s3 + $0x468] sm:$0xff]
        %v1902 = vld [vmem:[%s3 + $0x470] sm:$0xff]
        %v1903 = vld [vmem:[%s3 + $0x478] sm:$0xff]
        %v1904 = vld [vmem:[%s3 + $0x480] sm:$0xff]
        %v1905 = vld [vmem:[%s3 + $0x488] sm:$0xff]
        %v1906 = vld [vmem:[%s3 + $0x490] sm:$0xff]
        %v1907 = vld [vmem:[%s3 + $0x498] sm:$0xff]
        %v1908 = vld [vmem:[%s3 + $0x4a0] sm:$0xff]
        %v1909 = vld [vmem:[%s3 + $0x4a8] sm:$0xff]
        %v1910 = vld [vmem:[%s3 + $0x4b0] sm:$0xff]
        %v1911 = vld [vmem:[%s3 + $0x4b8] sm:$0xff]
        %v1912 = vld [vmem:[%s3 + $0x4c0] sm:$0xff]
        %v1913 = vld [vmem:[%s3 + $0x4c8] sm:$0xff]
        %v1914 = vld [vmem:[%s3 + $0x4d0] sm:$0xff]
        %v1915 = vld [vmem:[%s3 + $0x4d8] sm:$0xff]
        %v1916 = vld [vmem:[%s3 + $0x4e0] sm:$0xff]
        %v1917 = vld [vmem:[%s3 + $0x4e8] sm:$0xff]
        %v1918 = vld [vmem:[%s3 + $0x4f0] sm:$0xff]
        %v1919 = vld [vmem:[%s3 + $0x4f8] sm:$0xff]
        %v1920 = vld [vmem:[%s3 + $0x500] sm:$0xff]
        %v1921 = vld [vmem:[%s3 + $0x508] sm:$0xff]
        %v1922 = vld [vmem:[%s3 + $0x510] sm:$0xff]
        %v1923 = vld [vmem:[%s3 + $0x518] sm:$0xff]
        %v1924 = vld [vmem:[%s3 + $0x520] sm:$0xff]
        %v1925 = vld [vmem:[%s3 + $0x528] sm:$0xff]
        %v1926 = vld [vmem:[%s3 + $0x530] sm:$0xff]
        %v1927 = vld [vmem:[%s3 + $0x538] sm:$0xff]
        %v1928 = vld [vmem:[%s3 + $0x540] sm:$0xff]
        %v1929 = vld [vmem:[%s3 + $0x548] sm:$0xff]
        %v1930 = vld [vmem:[%s3 + $0x550] sm:$0xff]
        %v1931 = vld [vmem:[%s3 + $0x558] sm:$0xff]
        %v1932 = vld [vmem:[%s3 + $0x560] sm:$0xff]
        %v1933 = vld [vmem:[%s3 + $0x568] sm:$0xff]
        %v1934 = vld [vmem:[%s3 + $0x570] sm:$0xff]
        %v1935 = vld [vmem:[%s3 + $0x578] sm:$0xff]
        %v1936 = vld [vmem:[%s3 + $0x580] sm:$0xff]
        %v1937 = vld [vmem:[%s3 + $0x588] sm:$0xff]
        %v1938 = vld [vmem:[%s3 + $0x590] sm:$0xff]
        %v1939 = vld [vmem:[%s3 + $0x598] sm:$0xff]
        %v1940 = vld [vmem:[%s3 + $0x5a0] sm:$0xff]
        %v1941 = vld [vmem:[%s3 + $0x5a8] sm:$0xff]
        %v1942 = vld [vmem:[%s3 + $0x5b0] sm:$0xff]
        %v1943 = vld [vmem:[%s3 + $0x5b8] sm:$0xff]
        %v1944 = vld [vmem:[%s3 + $0x5c0] sm:$0xff]
        %v1945 = vld [vmem:[%s3 + $0x5c8] sm:$0xff]
        %v1946 = vld [vmem:[%s3 + $0x5d0] sm:$0xff]
        %v1947 = vld [vmem:[%s3 + $0x5d8] sm:$0xff]
        %v1948 = vld [vmem:[%s3 + $0x5e0] sm:$0xff]
        %v1949 = vld [vmem:[%s3 + $0x5e8] sm:$0xff]
        %v1950 = vld [vmem:[%s3 + $0x5f0] sm:$0xff]
        %v1951 = vld [vmem:[%s3 + $0x5f8] sm:$0xff]
        %v1952 = vld [vmem:[%s3 + $0x600] sm:$0xff]
        %v1953 = vld [vmem:[%s3 + $0x608] sm:$0xff]
        %v1954 = vld [vmem:[%s3 + $0x610] sm:$0xff]
        %v1955 = vld [vmem:[%s3 + $0x618] sm:$0xff]
        %v1956 = vld [vmem:[%s3 + $0x620] sm:$0xff]
        %v1957 = vld [vmem:[%s3 + $0x628] sm:$0xff]
        %v1958 = vld [vmem:[%s3 + $0x630] sm:$0xff]
        %v1959 = vld [vmem:[%s3 + $0x638] sm:$0xff]
        %v1960 = vld [vmem:[%s3 + $0x640] sm:$0xff]
        %v1961 = vld [vmem:[%s3 + $0x648] sm:$0xff]
        %v1962 = vld [vmem:[%s3 + $0x650] sm:$0xff]
        %v1963 = vld [vmem:[%s3 + $0x658] sm:$0xff]
        %v1964 = vld [vmem:[%s3 + $0x660] sm:$0xff]
        %v1965 = vld [vmem:[%s3 + $0x668] sm:$0xff]
        %v1966 = vld [vmem:[%s3 + $0x670] sm:$0xff]
        %v1967 = vld [vmem:[%s3 + $0x678] sm:$0xff]
        %v1968 = vld [vmem:[%s3 + $0x680] sm:$0xff]
        %v1969 = vld [vmem:[%s3 + $0x688] sm:$0xff]
        %v1970 = vld [vmem:[%s3 + $0x690] sm:$0xff]
        %v1971 = vld [vmem:[%s3 + $0x698] sm:$0xff]
        %v1972 = vld [vmem:[%s3 + $0x6a0] sm:$0xff]
        %v1973 = vld [vmem:[%s3 + $0x6a8] sm:$0xff]
        %v1974 = vld [vmem:[%s3 + $0x6b0] sm:$0xff]
        %v1975 = vld [vmem:[%s3 + $0x6b8] sm:$0xff]
        %v1976 = vld [vmem:[%s3 + $0x6c0] sm:$0xff]
        %v1977 = vld [vmem:[%s3 + $0x6c8] sm:$0xff]
        %v1978 = vld [vmem:[%s3 + $0x6d0] sm:$0xff]
        %v1979 = vld [vmem:[%s3 + $0x6d8] sm:$0xff]
        %v1980 = vld [vmem:[%s3 + $0x6e0] sm:$0xff]
        %v1981 = vld [vmem:[%s3 + $0x6e8] sm:$0xff]
        %v1982 = vld [vmem:[%s3 + $0x6f0] sm:$0xff]
        %v1983 = vld [vmem:[%s3 + $0x6f8] sm:$0xff]
        %v1984 = vld [vmem:[%s3 + $0x700] sm:$0xff]
        %v1985 = vld [vmem:[%s3 + $0x708] sm:$0xff]
        %v1986 = vld [vmem:[%s3 + $0x710] sm:$0xff]
        %v1987 = vld [vmem:[%s3 + $0x718] sm:$0xff]
        %v1988 = vld [vmem:[%s3 + $0x720] sm:$0xff]
        %v1989 = vld [vmem:[%s3 + $0x728] sm:$0xff]
        %v1990 = vld [vmem:[%s3 + $0x730] sm:$0xff]
        %v1991 = vld [vmem:[%s3 + $0x738] sm:$0xff]
        %v1992 = vld [vmem:[%s3 + $0x740] sm:$0xff]
        %v1993 = vld [vmem:[%s3 + $0x748] sm:$0xff]
        %v1994 = vld [vmem:[%s3 + $0x750] sm:$0xff]
        %v1995 = vld [vmem:[%s3 + $0x758] sm:$0xff]
        %v1996 = vld [vmem:[%s3 + $0x760] sm:$0xff]
        %v1997 = vld [vmem:[%s3 + $0x768] sm:$0xff]
        %v1998 = vld [vmem:[%s3 + $0x770] sm:$0xff]
        %v1999 = vld [vmem:[%s3 + $0x778] sm:$0xff]
        %v2000 = vld [vmem:[%s3 + $0x780] sm:$0xff]
        %v2001 = vld [vmem:[%s3 + $0x788] sm:$0xff]
        %v2002 = vld [vmem:[%s3 + $0x790] sm:$0xff]
        %v2003 = vld [vmem:[%s3 + $0x798] sm:$0xff]
        %v2004 = vld [vmem:[%s3 + $0x7a0] sm:$0xff]
        %v2005 = vld [vmem:[%s3 + $0x7a8] sm:$0xff]
        %v2006 = vld [vmem:[%s3 + $0x7b0] sm:$0xff]
        %v2007 = vld [vmem:[%s3 + $0x7b8] sm:$0xff]
        %v2008 = vld [vmem:[%s3 + $0x7c0] sm:$0xff]
        %v2009 = vld [vmem:[%s3 + $0x7c8] sm:$0xff]
        %v2010 = vld [vmem:[%s3 + $0x7d0] sm:$0xff]
        %v2011 = vld [vmem:[%s3 + $0x7d8] sm:$0xff]
        %v2012 = vld [vmem:[%s3 + $0x7e0] sm:$0xff]
        %v2013 = vld [vmem:[%s3 + $0x7e8] sm:$0xff]
        %v2014 = vld [vmem:[%s3 + $0x7f0] sm:$0xff]
        %v2015 = vld [vmem:[%s3 + $0x7f8] sm:$0xff]
        %v2016 = vld [vmem:[%s3 + $0x800] sm:$0xff]
        %v2017 = vld [vmem:[%s3 + $0x808] sm:$0xff]
        %v2018 = vld [vmem:[%s3 + $0x810] sm:$0xff]
        %v2019 = vld [vmem:[%s3 + $0x818] sm:$0xff]
        %v2020 = vld [vmem:[%s3 + $0x820] sm:$0xff]
        %v2021 = vld [vmem:[%s3 + $0x828] sm:$0xff]
        %v2022 = vld [vmem:[%s3 + $0x830] sm:$0xff]
        %v2023 = vld [vmem:[%s3 + $0x838] sm:$0xff]
        %v2024 = vld [vmem:[%s3 + $0x840] sm:$0xff]
        %v2025 = vld [vmem:[%s3 + $0x848] sm:$0xff]
        %v2026 = vld [vmem:[%s3 + $0x850] sm:$0xff]
        %v2027 = vld [vmem:[%s3 + $0x858] sm:$0xff]
        %v2028 = vld [vmem:[%s3 + $0x860] sm:$0xff]
        %v2029 = vld [vmem:[%s3 + $0x868] sm:$0xff]
        %v2030 = vld [vmem:[%s3 + $0x870] sm:$0xff]
        %v2031 = vld [vmem:[%s3 + $0x878] sm:$0xff]
        %v2032 = vld [vmem:[%s3 + $0x880] sm:$0xff]
        %v2033 = vld [vmem:[%s3 + $0x888] sm:$0xff]
        %v2034 = vld [vmem:[%s3 + $0x890] sm:$0xff]
        %v2035 = vld [vmem:[%s3 + $0x898] sm:$0xff]
        %v2036 = vld [vmem:[%s3 + $0x8a0] sm:$0xff]
        %v2037 = vld [vmem:[%s3 + $0x8a8] sm:$0xff]
        %v2038 = vld [vmem:[%s3 + $0x8b0] sm:$0xff]
        %v2039 = vld [vmem:[%s3 + $0x8b8] sm:$0xff]
        %v2040 = vld [vmem:[%s3 + $0x8c0] sm:$0xff]
        %v2041 = vld [vmem:[%s3 + $0x8c8] sm:$0xff]
        %v2042 = vld [vmem:[%s3 + $0x8d0] sm:$0xff]
        %v2043 = vld [vmem:[%s3 + $0x8d8] sm:$0xff]
        %v2044 = vld [vmem:[%s3 + $0x8e0] sm:$0xff]
        %v2045 = vld [vmem:[%s3 + $0x8e8] sm:$0xff]
        %v2046 = vld [vmem:[%s3 + $0x8f0] sm:$0xff]
        %v2047 = vld [vmem:[%s3 + $0x8f8] sm:$0xff]
        %v2048 = vld [vmem:[%s3 + $0x900] sm:$0xff]
        %v2049 = vld [vmem:[%s3 + $0x908] sm:$0xff]
        %v2050 = vld [vmem:[%s3 + $0x910] sm:$0xff]
        %v2051 = vld [vmem:[%s3 + $0x918] sm:$0xff]
        %v2052 = vld [vmem:[%s3 + $0x920] sm:$0xff]
        %v2053 = vld [vmem:[%s3 + $0x928] sm:$0xff]
        %v2054 = vld [vmem:[%s3 + $0x930] sm:$0xff]
        %v2055 = vld [vmem:[%s3 + $0x938] sm:$0xff]
        %v2056 = vld [vmem:[%s3 + $0x940] sm:$0xff]
        %v2057 = vld [vmem:[%s3 + $0x948] sm:$0xff]
        %v2058 = vld [vmem:[%s3 + $0x950] sm:$0xff]
        %v2059 = vld [vmem:[%s3 + $0x958] sm:$0xff]
        %v2060 = vld [vmem:[%s3 + $0x960] sm:$0xff]
        %v2061 = vld [vmem:[%s3 + $0x968] sm:$0xff]
        %v2062 = vld [vmem:[%s3 + $0x970] sm:$0xff]
        %v2063 = vld [vmem:[%s3 + $0x978] sm:$0xff]
        %v2064 = vld [vmem:[%s3 + $0x980] sm:$0xff]
        %v2065 = vld [vmem:[%s3 + $0x988] sm:$0xff]
        %v2066 = vld [vmem:[%s3 + $0x990] sm:$0xff]
        %v2067 = vld [vmem:[%s3 + $0x998] sm:$0xff]
        %v2068 = vld [vmem:[%s3 + $0x9a0] sm:$0xff]
        %v2069 = vld [vmem:[%s3 + $0x9a8] sm:$0xff]
        %v2070 = vld [vmem:[%s3 + $0x9b0] sm:$0xff]
        %v2071 = vld [vmem:[%s3 + $0x9b8] sm:$0xff]
        %v2072 = vld [vmem:[%s3 + $0x9c0] sm:$0xff]
        %v2073 = vld [vmem:[%s3 + $0x9c8] sm:$0xff]
        %v2074 = vld [vmem:[%s3 + $0x9d0] sm:$0xff]
        %v2075 = vld [vmem:[%s3 + $0x9d8] sm:$0xff]
        %v2076 = vld [vmem:[%s3 + $0x9e0] sm:$0xff]
        %v2077 = vld [vmem:[%s3 + $0x9e8] sm:$0xff]
        %v2078 = vld [vmem:[%s3 + $0x9f0] sm:$0xff]
        %v2079 = vld [vmem:[%s3 + $0x9f8] sm:$0xff]
        %v2080 = vld [vmem:[%s3 + $0xa00] sm:$0xff]
        %v2081 = vld [vmem:[%s3 + $0xa08] sm:$0xff]
        %v2082 = vld [vmem:[%s3 + $0xa10] sm:$0xff]
        %v2083 = vld [vmem:[%s3 + $0xa18] sm:$0xff]
        %v2084 = vld [vmem:[%s3 + $0xa20] sm:$0xff]
        %v2085 = vld [vmem:[%s3 + $0xa28] sm:$0xff]
        %v2086 = vld [vmem:[%s3 + $0xa30] sm:$0xff]
        %v2087 = vld [vmem:[%s3 + $0xa38] sm:$0xff]
        %v2088 = vld [vmem:[%s3 + $0xa40] sm:$0xff]
        %v2089 = vld [vmem:[%s3 + $0xa48] sm:$0xff]
        %v2090 = vld [vmem:[%s3 + $0xa50] sm:$0xff]
        %v2091 = vld [vmem:[%s3 + $0xa58] sm:$0xff]
        %v2092 = vld [vmem:[%s3 + $0xa60] sm:$0xff]
        %v2093 = vld [vmem:[%s3 + $0xa68] sm:$0xff]
        %v2094 = vld [vmem:[%s3 + $0xa70] sm:$0xff]
        %v2095 = vld [vmem:[%s3 + $0xa78] sm:$0xff]
        %v2096 = vld [vmem:[%s3 + $0xa80] sm:$0xff]
        %v2097 = vld [vmem:[%s3 + $0xa88] sm:$0xff]
        %v2098 = vld [vmem:[%s3 + $0xa90] sm:$0xff]
        %v2099 = vld [vmem:[%s3 + $0xa98] sm:$0xff]
        %v2100 = vld [vmem:[%s3 + $0xaa0] sm:$0xff]
        %v2101 = vld [vmem:[%s3 + $0xaa8] sm:$0xff]
        %v2102 = vld [vmem:[%s3 + $0xab0] sm:$0xff]
        %v2103 = vld [vmem:[%s3 + $0xab8] sm:$0xff]
        %v2104 = vld [vmem:[%s3 + $0xac0] sm:$0xff]
        %v2105 = vld [vmem:[%s3 + $0xac8] sm:$0xff]
        %v2106 = vld [vmem:[%s3 + $0xad0] sm:$0xff]
        %v2107 = vld [vmem:[%s3 + $0xad8] sm:$0xff]
        %v2108 = vld [vmem:[%s3 + $0xae0] sm:$0xff]
        %v2109 = vld [vmem:[%s3 + $0xae8] sm:$0xff]
        %v2110 = vld [vmem:[%s3 + $0xaf0] sm:$0xff]
        %v2111 = vld [vmem:[%s3 + $0xaf8] sm:$0xff]
        %v2112 = vld [vmem:[%s3 + $0xb00] sm:$0xff]
        %v2113 = vld [vmem:[%s3 + $0xb08] sm:$0xff]
        %v2114 = vld [vmem:[%s3 + $0xb10] sm:$0xff]
        %v2115 = vld [vmem:[%s3 + $0xb18] sm:$0xff]
        %v2116 = vld [vmem:[%s3 + $0xb20] sm:$0xff]
        %v2117 = vld [vmem:[%s3 + $0xb28] sm:$0xff]
        %v2118 = vld [vmem:[%s3 + $0xb30] sm:$0xff]
        %v2119 = vld [vmem:[%s3 + $0xb38] sm:$0xff]
        %v2120 = vld [vmem:[%s3 + $0xb40] sm:$0xff]
        %v2121 = vld [vmem:[%s3 + $0xb48] sm:$0xff]
        %v2122 = vld [vmem:[%s3 + $0xb50] sm:$0xff]
        %v2123 = vld [vmem:[%s3 + $0xb58] sm:$0xff]
        %v2124 = vld [vmem:[%s3 + $0xb60] sm:$0xff]
        %v2125 = vld [vmem:[%s3 + $0xb68] sm:$0xff]
        %v2126 = vld [vmem:[%s3 + $0xb70] sm:$0xff]
        %v2127 = vld [vmem:[%s3 + $0xb78] sm:$0xff]
        %v2128 = vld [vmem:[%s3 + $0xb80] sm:$0xff]
        %v2129 = vld [vmem:[%s3 + $0xb88] sm:$0xff]
        %v2130 = vld [vmem:[%s3 + $0xb90] sm:$0xff]
        %v2131 = vld [vmem:[%s3 + $0xb98] sm:$0xff]
        %v2132 = vld [vmem:[%s3 + $0xba0] sm:$0xff]
        %v2133 = vld [vmem:[%s3 + $0xba8] sm:$0xff]
        %v2134 = vld [vmem:[%s3 + $0xbb0] sm:$0xff]
        %v2135 = vld [vmem:[%s3 + $0xbb8] sm:$0xff]
        %v2136 = vld [vmem:[%s3 + $0xbc0] sm:$0xff]
        %v2137 = vld [vmem:[%s3 + $0xbc8] sm:$0xff]
        %v2138 = vld [vmem:[%s3 + $0xbd0] sm:$0xff]
        %v2139 = vld [vmem:[%s3 + $0xbd8] sm:$0xff]
        %v2140 = vld [vmem:[%s3 + $0xbe0] sm:$0xff]
        %v2141 = vld [vmem:[%s3 + $0xbe8] sm:$0xff]
        %v2142 = vld [vmem:[%s3 + $0xbf0] sm:$0xff]
        %v2143 = vld [vmem:[%s3 + $0xbf8] sm:$0xff]
        %v2144 = vld [vmem:[%s3 + $0xc00] sm:$0xff]
        %v2145 = vld [vmem:[%s3 + $0xc08] sm:$0xff]
        %v2146 = vld [vmem:[%s3 + $0xc10] sm:$0xff]
        %v2147 = vld [vmem:[%s3 + $0xc18] sm:$0xff]
        %v2148 = vld [vmem:[%s3 + $0xc20] sm:$0xff]
        %v2149 = vld [vmem:[%s3 + $0xc28] sm:$0xff]
        %v2150 = vld [vmem:[%s3 + $0xc30] sm:$0xff]
        %v2151 = vld [vmem:[%s3 + $0xc38] sm:$0xff]
        %v2152 = vld [vmem:[%s3 + $0xc40] sm:$0xff]
        %v2153 = vld [vmem:[%s3 + $0xc48] sm:$0xff]
        %v2154 = vld [vmem:[%s3 + $0xc50] sm:$0xff]
        %v2155 = vld [vmem:[%s3 + $0xc58] sm:$0xff]
        %v2156 = vld [vmem:[%s3 + $0xc60] sm:$0xff]
        %v2157 = vld [vmem:[%s3 + $0xc68] sm:$0xff]
        %v2158 = vld [vmem:[%s3 + $0xc70] sm:$0xff]
        %v2159 = vld [vmem:[%s3 + $0xc78] sm:$0xff]
        %v2160 = vld [vmem:[%s3 + $0xc80] sm:$0xff]
        %v2161 = vld [vmem:[%s3 + $0xc88] sm:$0xff]
        %v2162 = vld [vmem:[%s3 + $0xc90] sm:$0xff]
        %v2163 = vld [vmem:[%s3 + $0xc98] sm:$0xff]
        %v2164 = vld [vmem:[%s3 + $0xca0] sm:$0xff]
        %v2165 = vld [vmem:[%s3 + $0xca8] sm:$0xff]
        %v2166 = vld [vmem:[%s3 + $0xcb0] sm:$0xff]
        %v2167 = vld [vmem:[%s3 + $0xcb8] sm:$0xff]
        %v2168 = vld [vmem:[%s3 + $0xcc0] sm:$0xff]
        %v2169 = vld [vmem:[%s3 + $0xcc8] sm:$0xff]
        %v2170 = vld [vmem:[%s3 + $0xcd0] sm:$0xff]
        %v2171 = vld [vmem:[%s3 + $0xcd8] sm:$0xff]
        %v2172 = vld [vmem:[%s3 + $0xce0] sm:$0xff]
        %v2173 = vld [vmem:[%s3 + $0xce8] sm:$0xff]
        %v2174 = vld [vmem:[%s3 + $0xcf0] sm:$0xff]
        %v2175 = vld [vmem:[%s3 + $0xcf8] sm:$0xff]
        %v2176 = vld [vmem:[%s3 + $0xd00] sm:$0xff]
        %v2177 = vld [vmem:[%s3 + $0xd08] sm:$0xff]
        %v2178 = vld [vmem:[%s3 + $0xd10] sm:$0xff]
        %v2179 = vld [vmem:[%s3 + $0xd18] sm:$0xff]
        %v2180 = vld [vmem:[%s3 + $0xd20] sm:$0xff]
        %v2181 = vld [vmem:[%s3 + $0xd28] sm:$0xff]
        %v2182 = vld [vmem:[%s3 + $0xd30] sm:$0xff]
        %v2183 = vld [vmem:[%s3 + $0xd38] sm:$0xff]
        %v2184 = vld [vmem:[%s3 + $0xd40] sm:$0xff]
        %v2185 = vld [vmem:[%s3 + $0xd48] sm:$0xff]
        %v2186 = vld [vmem:[%s3 + $0xd50] sm:$0xff]
        %v2187 = vld [vmem:[%s3 + $0xd58] sm:$0xff]
        %v2188 = vld [vmem:[%s3 + $0xd60] sm:$0xff]
        %v2189 = vld [vmem:[%s3 + $0xd68] sm:$0xff]
        %v2190 = vld [vmem:[%s3 + $0xd70] sm:$0xff]
        %v2191 = vld [vmem:[%s3 + $0xd78] sm:$0xff]
        %v2192 = vld [vmem:[%s3 + $0xd80] sm:$0xff]
        %v2193 = vld [vmem:[%s3 + $0xd88] sm:$0xff]
        %v2194 = vld [vmem:[%s3 + $0xd90] sm:$0xff]
        %v2195 = vld [vmem:[%s3 + $0xd98] sm:$0xff]
        %v2196 = vld [vmem:[%s3 + $0xda0] sm:$0xff]
        %v2197 = vld [vmem:[%s3 + $0xda8] sm:$0xff]
        %v2198 = vld [vmem:[%s3 + $0xdb0] sm:$0xff]
        %v2199 = vld [vmem:[%s3 + $0xdb8] sm:$0xff]
        %v2200 = vld [vmem:[%s3 + $0xdc0] sm:$0xff]
        %v2201 = vld [vmem:[%s3 + $0xdc8] sm:$0xff]
        %v2202 = vld [vmem:[%s3 + $0xdd0] sm:$0xff]
        %v2203 = vld [vmem:[%s3 + $0xdd8] sm:$0xff]
        %v2204 = vld [vmem:[%s3 + $0xde0] sm:$0xff]
        %v2205 = vld [vmem:[%s3 + $0xde8] sm:$0xff]
        %v2206 = vld [vmem:[%s3 + $0xdf0] sm:$0xff]
        %v2207 = vld [vmem:[%s3 + $0xdf8] sm:$0xff]
        %v2208 = vld [vmem:[%s3 + $0xe00] sm:$0xff]
        %v2209 = vld [vmem:[%s3 + $0xe08] sm:$0xff]
        %v2210 = vld [vmem:[%s3 + $0xe10] sm:$0xff]
        %v2211 = vld [vmem:[%s3 + $0xe18] sm:$0xff]
        %v2212 = vld [vmem:[%s3 + $0xe20] sm:$0xff]
        %v2213 = vld [vmem:[%s3 + $0xe28] sm:$0xff]
        %v2214 = vld [vmem:[%s3 + $0xe30] sm:$0xff]
        %v2215 = vld [vmem:[%s3 + $0xe38] sm:$0xff]
        %v2216 = vld [vmem:[%s3 + $0xe40] sm:$0xff]
        %v2217 = vld [vmem:[%s3 + $0xe48] sm:$0xff]
        %v2218 = vld [vmem:[%s3 + $0xe50] sm:$0xff]
        %v2219 = vld [vmem:[%s3 + $0xe58] sm:$0xff]
        %v2220 = vld [vmem:[%s3 + $0xe60] sm:$0xff]
        %v2221 = vld [vmem:[%s3 + $0xe68] sm:$0xff]
        %v2222 = vld [vmem:[%s3 + $0xe70] sm:$0xff]
        %v2223 = vld [vmem:[%s3 + $0xe78] sm:$0xff]
        %v2224 = vld [vmem:[%s3 + $0xe80] sm:$0xff]
        %v2225 = vld [vmem:[%s3 + $0xe88] sm:$0xff]
        %v2226 = vld [vmem:[%s3 + $0xe90] sm:$0xff]
        %v2227 = vld [vmem:[%s3 + $0xe98] sm:$0xff]
        %v2228 = vld [vmem:[%s3 + $0xea0] sm:$0xff]
        %v2229 = vld [vmem:[%s3 + $0xea8] sm:$0xff]
        %v2230 = vld [vmem:[%s3 + $0xeb0] sm:$0xff]
        %v2231 = vld [vmem:[%s3 + $0xeb8] sm:$0xff]
        %v2232 = vld [vmem:[%s3 + $0xec0] sm:$0xff]
        %v2233 = vld [vmem:[%s3 + $0xec8] sm:$0xff]
        %v2234 = vld [vmem:[%s3 + $0xed0] sm:$0xff]
        %v2235 = vld [vmem:[%s3 + $0xed8] sm:$0xff]
        %v2236 = vld [vmem:[%s3 + $0xee0] sm:$0xff]
        %v2237 = vld [vmem:[%s3 + $0xee8] sm:$0xff]
        %v2238 = vld [vmem:[%s3 + $0xef0] sm:$0xff]
        %v2239 = vld [vmem:[%s3 + $0xef8] sm:$0xff]
        %v2240 = vld [vmem:[%s3 + $0xf00] sm:$0xff]
        %v2241 = vld [vmem:[%s3 + $0xf08] sm:$0xff]
        %v2242 = vld [vmem:[%s3 + $0xf10] sm:$0xff]
        %v2243 = vld [vmem:[%s3 + $0xf18] sm:$0xff]
        %v2244 = vld [vmem:[%s3 + $0xf20] sm:$0xff]
        %v2245 = vld [vmem:[%s3 + $0xf28] sm:$0xff]
        %v2246 = vld [vmem:[%s3 + $0xf30] sm:$0xff]
        %v2247 = vld [vmem:[%s3 + $0xf38] sm:$0xff]
        %v2248 = vld [vmem:[%s3 + $0xf40] sm:$0xff]
        %v2249 = vld [vmem:[%s3 + $0xf48] sm:$0xff]
        %v2250 = vld [vmem:[%s3 + $0xf50] sm:$0xff]
        %v2251 = vld [vmem:[%s3 + $0xf58] sm:$0xff]
        %v2252 = vld [vmem:[%s3 + $0xf60] sm:$0xff]
        %v2253 = vld [vmem:[%s3 + $0xf68] sm:$0xff]
        %v2254 = vld [vmem:[%s3 + $0xf70] sm:$0xff]
        %v2255 = vld [vmem:[%s3 + $0xf78] sm:$0xff]
        %v2256 = vld [vmem:[%s3 + $0xf80] sm:$0xff]
        %v2257 = vld [vmem:[%s3 + $0xf88] sm:$0xff]
        %v2258 = vld [vmem:[%s3 + $0xf90] sm:$0xff]
        %v2259 = vld [vmem:[%s3 + $0xf98] sm:$0xff]
        %v2260 = vld [vmem:[%s3 + $0xfa0] sm:$0xff]
        %v2261 = vld [vmem:[%s3 + $0xfa8] sm:$0xff]
        %v2262 = vld [vmem:[%s3 + $0xfb0] sm:$0xff]
        %v2263 = vld [vmem:[%s3 + $0xfb8] sm:$0xff]
        %v2264 = vld [vmem:[%s3 + $0xfc0] sm:$0xff]
        %v2265 = vld [vmem:[%s3 + $0xfc8] sm:$0xff]
        %v2266 = vld [vmem:[%s3 + $0xfd0] sm:$0xff]
        %v2267 = vld [vmem:[%s3 + $0xfd8] sm:$0xff]
        %v2268 = vld [vmem:[%s3 + $0xfe0] sm:$0xff]
        %v2269 = vld [vmem:[%s3 + $0xfe8] sm:$0xff]
        %v2270 = vld [vmem:[%s3 + $0xff0] sm:$0xff]
        %v2271 = vld [vmem:[%s3 + $0xff8] sm:$0xff]
        %v2272 = vld [vmem:[%s4] sm:$0xff]
        %v2274 = vperm.slane %v2272, 0
        %v2275 = vperm.slane %v2272, 1
        %v2276 = vperm.slane %v2272, 2
        %v2277 = vperm.slane %v2272, 3
        %v2278 = vperm.slane %v2272, 4
        %v2279 = vperm.slane %v2272, 5
        %v2280 = vperm.slane %v2272, 6
        %v2281 = vperm.slane %v2272, 7
        %v2802 = vunpack.c.l.b16 %v1760
        %v2803 = vunpack.c.h.b16 %v1760
        %v2804 = vunpack.c.l.b16 %v1761
        %v2805 = vunpack.c.h.b16 %v1761
        %v2806 = vunpack.c.l.b16 %v1762
        %v2807 = vunpack.c.h.b16 %v1762
        %v2808 = vunpack.c.l.b16 %v1763
        %v2809 = vunpack.c.h.b16 %v1763
        %v2810 = vunpack.c.l.b16 %v1764
        %v2811 = vunpack.c.h.b16 %v1764
        %v2812 = vunpack.c.l.b16 %v1765
        %v2813 = vunpack.c.h.b16 %v1765
        %v2814 = vunpack.c.l.b16 %v1766
        %v2815 = vunpack.c.h.b16 %v1766
        %v2816 = vunpack.c.l.b16 %v1767
        %v2817 = vunpack.c.h.b16 %v1767
        %v2818 = vunpack.c.l.b16 %v1768
        %v2819 = vunpack.c.h.b16 %v1768
        %v2820 = vunpack.c.l.b16 %v1769
        %v2821 = vunpack.c.h.b16 %v1769
        %v2822 = vunpack.c.l.b16 %v1770
        %v2823 = vunpack.c.h.b16 %v1770
        %v2824 = vunpack.c.l.b16 %v1771
        %v2825 = vunpack.c.h.b16 %v1771
        %v2826 = vunpack.c.l.b16 %v1772
        %v2827 = vunpack.c.h.b16 %v1772
        %v2828 = vunpack.c.l.b16 %v1773
        %v2829 = vunpack.c.h.b16 %v1773
        %v2830 = vunpack.c.l.b16 %v1774
        %v2831 = vunpack.c.h.b16 %v1774
        %v2832 = vunpack.c.l.b16 %v1775
        %v2833 = vunpack.c.h.b16 %v1775
        %v2834 = vunpack.c.l.b16 %v1776
        %v2835 = vunpack.c.h.b16 %v1776
        %v2836 = vunpack.c.l.b16 %v1777
        %v2837 = vunpack.c.h.b16 %v1777
        %v2838 = vunpack.c.l.b16 %v1778
        %v2839 = vunpack.c.h.b16 %v1778
        %v2840 = vunpack.c.l.b16 %v1779
        %v2841 = vunpack.c.h.b16 %v1779
        %v2842 = vunpack.c.l.b16 %v1780
        %v2843 = vunpack.c.h.b16 %v1780
        %v2844 = vunpack.c.l.b16 %v1781
        %v2845 = vunpack.c.h.b16 %v1781
        %v2846 = vunpack.c.l.b16 %v1782
        %v2847 = vunpack.c.h.b16 %v1782
        %v2848 = vunpack.c.l.b16 %v1783
        %v2849 = vunpack.c.h.b16 %v1783
        %v2850 = vunpack.c.l.b16 %v1784
        %v2851 = vunpack.c.h.b16 %v1784
        %v2852 = vunpack.c.l.b16 %v1785
        %v2853 = vunpack.c.h.b16 %v1785
        %v2854 = vunpack.c.l.b16 %v1786
        %v2855 = vunpack.c.h.b16 %v1786
        %v2856 = vunpack.c.l.b16 %v1787
        %v2857 = vunpack.c.h.b16 %v1787
        %v2858 = vunpack.c.l.b16 %v1788
        %v2859 = vunpack.c.h.b16 %v1788
        %v2860 = vunpack.c.l.b16 %v1789
        %v2861 = vunpack.c.h.b16 %v1789
        %v2862 = vunpack.c.l.b16 %v1790
        %v2863 = vunpack.c.h.b16 %v1790
        %v2864 = vunpack.c.l.b16 %v1791
        %v2865 = vunpack.c.h.b16 %v1791
        %v2866 = vunpack.c.l.b16 %v1792
        %v2867 = vunpack.c.h.b16 %v1792
        %v2868 = vunpack.c.l.b16 %v1793
        %v2869 = vunpack.c.h.b16 %v1793
        %v2870 = vunpack.c.l.b16 %v1794
        %v2871 = vunpack.c.h.b16 %v1794
        %v2872 = vunpack.c.l.b16 %v1795
        %v2873 = vunpack.c.h.b16 %v1795
        %v2874 = vunpack.c.l.b16 %v1796
        %v2875 = vunpack.c.h.b16 %v1796
        %v2876 = vunpack.c.l.b16 %v1797
        %v2877 = vunpack.c.h.b16 %v1797
        %v2878 = vunpack.c.l.b16 %v1798
        %v2879 = vunpack.c.h.b16 %v1798
        %v2880 = vunpack.c.l.b16 %v1799
        %v2881 = vunpack.c.h.b16 %v1799
        %v2882 = vunpack.c.l.b16 %v1800
        %v2883 = vunpack.c.h.b16 %v1800
        %v2884 = vunpack.c.l.b16 %v1801
        %v2885 = vunpack.c.h.b16 %v1801
        %v2886 = vunpack.c.l.b16 %v1802
        %v2887 = vunpack.c.h.b16 %v1802
        %v2888 = vunpack.c.l.b16 %v1803
        %v2889 = vunpack.c.h.b16 %v1803
        %v2890 = vunpack.c.l.b16 %v1804
        %v2891 = vunpack.c.h.b16 %v1804
        %v2892 = vunpack.c.l.b16 %v1805
        %v2893 = vunpack.c.h.b16 %v1805
        %v2894 = vunpack.c.l.b16 %v1806
        %v2895 = vunpack.c.h.b16 %v1806
        %v2896 = vunpack.c.l.b16 %v1807
        %v2897 = vunpack.c.h.b16 %v1807
        %v2898 = vunpack.c.l.b16 %v1808
        %v2899 = vunpack.c.h.b16 %v1808
        %v2900 = vunpack.c.l.b16 %v1809
        %v2901 = vunpack.c.h.b16 %v1809
        %v2902 = vunpack.c.l.b16 %v1810
        %v2903 = vunpack.c.h.b16 %v1810
        %v2904 = vunpack.c.l.b16 %v1811
        %v2905 = vunpack.c.h.b16 %v1811
        %v2906 = vunpack.c.l.b16 %v1812
        %v2907 = vunpack.c.h.b16 %v1812
        %v2908 = vunpack.c.l.b16 %v1813
        %v2909 = vunpack.c.h.b16 %v1813
        %v2910 = vunpack.c.l.b16 %v1814
        %v2911 = vunpack.c.h.b16 %v1814
        %v2912 = vunpack.c.l.b16 %v1815
        %v2913 = vunpack.c.h.b16 %v1815
        %v2914 = vunpack.c.l.b16 %v1816
        %v2915 = vunpack.c.h.b16 %v1816
        %v2916 = vunpack.c.l.b16 %v1817
        %v2917 = vunpack.c.h.b16 %v1817
        %v2918 = vunpack.c.l.b16 %v1818
        %v2919 = vunpack.c.h.b16 %v1818
        %v2920 = vunpack.c.l.b16 %v1819
        %v2921 = vunpack.c.h.b16 %v1819
        %v2922 = vunpack.c.l.b16 %v1820
        %v2923 = vunpack.c.h.b16 %v1820
        %v2924 = vunpack.c.l.b16 %v1821
        %v2925 = vunpack.c.h.b16 %v1821
        %v2926 = vunpack.c.l.b16 %v1822
        %v2927 = vunpack.c.h.b16 %v1822
        %v2928 = vunpack.c.l.b16 %v1823
        %v2929 = vunpack.c.h.b16 %v1823
        %v2930 = vunpack.c.l.b16 %v1824
        %v2931 = vunpack.c.h.b16 %v1824
        %v2932 = vunpack.c.l.b16 %v1825
        %v2933 = vunpack.c.h.b16 %v1825
        %v2934 = vunpack.c.l.b16 %v1826
        %v2935 = vunpack.c.h.b16 %v1826
        %v2936 = vunpack.c.l.b16 %v1827
        %v2937 = vunpack.c.h.b16 %v1827
        %v2938 = vunpack.c.l.b16 %v1828
        %v2939 = vunpack.c.h.b16 %v1828
        %v2940 = vunpack.c.l.b16 %v1829
        %v2941 = vunpack.c.h.b16 %v1829
        %v2942 = vunpack.c.l.b16 %v1830
        %v2943 = vunpack.c.h.b16 %v1830
        %v2944 = vunpack.c.l.b16 %v1831
        %v2945 = vunpack.c.h.b16 %v1831
        %v2946 = vunpack.c.l.b16 %v1832
        %v2947 = vunpack.c.h.b16 %v1832
        %v2948 = vunpack.c.l.b16 %v1833
        %v2949 = vunpack.c.h.b16 %v1833
        %v2950 = vunpack.c.l.b16 %v1834
        %v2951 = vunpack.c.h.b16 %v1834
        %v2952 = vunpack.c.l.b16 %v1835
        %v2953 = vunpack.c.h.b16 %v1835
        %v2954 = vunpack.c.l.b16 %v1836
        %v2955 = vunpack.c.h.b16 %v1836
        %v2956 = vunpack.c.l.b16 %v1837
        %v2957 = vunpack.c.h.b16 %v1837
        %v2958 = vunpack.c.l.b16 %v1838
        %v2959 = vunpack.c.h.b16 %v1838
        %v2960 = vunpack.c.l.b16 %v1839
        %v2961 = vunpack.c.h.b16 %v1839
        %v2962 = vunpack.c.l.b16 %v1840
        %v2963 = vunpack.c.h.b16 %v1840
        %v2964 = vunpack.c.l.b16 %v1841
        %v2965 = vunpack.c.h.b16 %v1841
        %v2966 = vunpack.c.l.b16 %v1842
        %v2967 = vunpack.c.h.b16 %v1842
        %v2968 = vunpack.c.l.b16 %v1843
        %v2969 = vunpack.c.h.b16 %v1843
        %v2970 = vunpack.c.l.b16 %v1844
        %v2971 = vunpack.c.h.b16 %v1844
        %v2972 = vunpack.c.l.b16 %v1845
        %v2973 = vunpack.c.h.b16 %v1845
        %v2974 = vunpack.c.l.b16 %v1846
        %v2975 = vunpack.c.h.b16 %v1846
        %v2976 = vunpack.c.l.b16 %v1847
        %v2977 = vunpack.c.h.b16 %v1847
        %v2978 = vunpack.c.l.b16 %v1848
        %v2979 = vunpack.c.h.b16 %v1848
        %v2980 = vunpack.c.l.b16 %v1849
        %v2981 = vunpack.c.h.b16 %v1849
        %v2982 = vunpack.c.l.b16 %v1850
        %v2983 = vunpack.c.h.b16 %v1850
        %v2984 = vunpack.c.l.b16 %v1851
        %v2985 = vunpack.c.h.b16 %v1851
        %v2986 = vunpack.c.l.b16 %v1852
        %v2987 = vunpack.c.h.b16 %v1852
        %v2988 = vunpack.c.l.b16 %v1853
        %v2989 = vunpack.c.h.b16 %v1853
        %v2990 = vunpack.c.l.b16 %v1854
        %v2991 = vunpack.c.h.b16 %v1854
        %v2992 = vunpack.c.l.b16 %v1855
        %v2993 = vunpack.c.h.b16 %v1855
        %v2994 = vunpack.c.l.b16 %v1856
        %v2995 = vunpack.c.h.b16 %v1856
        %v2996 = vunpack.c.l.b16 %v1857
        %v2997 = vunpack.c.h.b16 %v1857
        %v2998 = vunpack.c.l.b16 %v1858
        %v2999 = vunpack.c.h.b16 %v1858
        %v3000 = vunpack.c.l.b16 %v1859
        %v3001 = vunpack.c.h.b16 %v1859
        %v3002 = vunpack.c.l.b16 %v1860
        %v3003 = vunpack.c.h.b16 %v1860
        %v3004 = vunpack.c.l.b16 %v1861
        %v3005 = vunpack.c.h.b16 %v1861
        %v3006 = vunpack.c.l.b16 %v1862
        %v3007 = vunpack.c.h.b16 %v1862
        %v3008 = vunpack.c.l.b16 %v1863
        %v3009 = vunpack.c.h.b16 %v1863
        %v3010 = vunpack.c.l.b16 %v1864
        %v3011 = vunpack.c.h.b16 %v1864
        %v3012 = vunpack.c.l.b16 %v1865
        %v3013 = vunpack.c.h.b16 %v1865
        %v3014 = vunpack.c.l.b16 %v1866
        %v3015 = vunpack.c.h.b16 %v1866
        %v3016 = vunpack.c.l.b16 %v1867
        %v3017 = vunpack.c.h.b16 %v1867
        %v3018 = vunpack.c.l.b16 %v1868
        %v3019 = vunpack.c.h.b16 %v1868
        %v3020 = vunpack.c.l.b16 %v1869
        %v3021 = vunpack.c.h.b16 %v1869
        %v3022 = vunpack.c.l.b16 %v1870
        %v3023 = vunpack.c.h.b16 %v1870
        %v3024 = vunpack.c.l.b16 %v1871
        %v3025 = vunpack.c.h.b16 %v1871
        %v3026 = vunpack.c.l.b16 %v1872
        %v3027 = vunpack.c.h.b16 %v1872
        %v3028 = vunpack.c.l.b16 %v1873
        %v3029 = vunpack.c.h.b16 %v1873
        %v3030 = vunpack.c.l.b16 %v1874
        %v3031 = vunpack.c.h.b16 %v1874
        %v3032 = vunpack.c.l.b16 %v1875
        %v3033 = vunpack.c.h.b16 %v1875
        %v3034 = vunpack.c.l.b16 %v1876
        %v3035 = vunpack.c.h.b16 %v1876
        %v3036 = vunpack.c.l.b16 %v1877
        %v3037 = vunpack.c.h.b16 %v1877
        %v3038 = vunpack.c.l.b16 %v1878
        %v3039 = vunpack.c.h.b16 %v1878
        %v3040 = vunpack.c.l.b16 %v1879
        %v3041 = vunpack.c.h.b16 %v1879
        %v3042 = vunpack.c.l.b16 %v1880
        %v3043 = vunpack.c.h.b16 %v1880
        %v3044 = vunpack.c.l.b16 %v1881
        %v3045 = vunpack.c.h.b16 %v1881
        %v3046 = vunpack.c.l.b16 %v1882
        %v3047 = vunpack.c.h.b16 %v1882
        %v3048 = vunpack.c.l.b16 %v1883
        %v3049 = vunpack.c.h.b16 %v1883
        %v3050 = vunpack.c.l.b16 %v1884
        %v3051 = vunpack.c.h.b16 %v1884
        %v3052 = vunpack.c.l.b16 %v1885
        %v3053 = vunpack.c.h.b16 %v1885
        %v3054 = vunpack.c.l.b16 %v1886
        %v3055 = vunpack.c.h.b16 %v1886
        %v3056 = vunpack.c.l.b16 %v1887
        %v3057 = vunpack.c.h.b16 %v1887
        %v3058 = vunpack.c.l.b16 %v1888
        %v3059 = vunpack.c.h.b16 %v1888
        %v3060 = vunpack.c.l.b16 %v1889
        %v3061 = vunpack.c.h.b16 %v1889
        %v3062 = vunpack.c.l.b16 %v1890
        %v3063 = vunpack.c.h.b16 %v1890
        %v3064 = vunpack.c.l.b16 %v1891
        %v3065 = vunpack.c.h.b16 %v1891
        %v3066 = vunpack.c.l.b16 %v1892
        %v3067 = vunpack.c.h.b16 %v1892
        %v3068 = vunpack.c.l.b16 %v1893
        %v3069 = vunpack.c.h.b16 %v1893
        %v3070 = vunpack.c.l.b16 %v1894
        %v3071 = vunpack.c.h.b16 %v1894
        %v3072 = vunpack.c.l.b16 %v1895
        %v3073 = vunpack.c.h.b16 %v1895
        %v3074 = vunpack.c.l.b16 %v1896
        %v3075 = vunpack.c.h.b16 %v1896
        %v3076 = vunpack.c.l.b16 %v1897
        %v3077 = vunpack.c.h.b16 %v1897
        %v3078 = vunpack.c.l.b16 %v1898
        %v3079 = vunpack.c.h.b16 %v1898
        %v3080 = vunpack.c.l.b16 %v1899
        %v3081 = vunpack.c.h.b16 %v1899
        %v3082 = vunpack.c.l.b16 %v1900
        %v3083 = vunpack.c.h.b16 %v1900
        %v3084 = vunpack.c.l.b16 %v1901
        %v3085 = vunpack.c.h.b16 %v1901
        %v3086 = vunpack.c.l.b16 %v1902
        %v3087 = vunpack.c.h.b16 %v1902
        %v3088 = vunpack.c.l.b16 %v1903
        %v3089 = vunpack.c.h.b16 %v1903
        %v3090 = vunpack.c.l.b16 %v1904
        %v3091 = vunpack.c.h.b16 %v1904
        %v3092 = vunpack.c.l.b16 %v1905
        %v3093 = vunpack.c.h.b16 %v1905
        %v3094 = vunpack.c.l.b16 %v1906
        %v3095 = vunpack.c.h.b16 %v1906
        %v3096 = vunpack.c.l.b16 %v1907
        %v3097 = vunpack.c.h.b16 %v1907
        %v3098 = vunpack.c.l.b16 %v1908
        %v3099 = vunpack.c.h.b16 %v1908
        %v3100 = vunpack.c.l.b16 %v1909
        %v3101 = vunpack.c.h.b16 %v1909
        %v3102 = vunpack.c.l.b16 %v1910
        %v3103 = vunpack.c.h.b16 %v1910
        %v3104 = vunpack.c.l.b16 %v1911
        %v3105 = vunpack.c.h.b16 %v1911
        %v3106 = vunpack.c.l.b16 %v1912
        %v3107 = vunpack.c.h.b16 %v1912
        %v3108 = vunpack.c.l.b16 %v1913
        %v3109 = vunpack.c.h.b16 %v1913
        %v3110 = vunpack.c.l.b16 %v1914
        %v3111 = vunpack.c.h.b16 %v1914
        %v3112 = vunpack.c.l.b16 %v1915
        %v3113 = vunpack.c.h.b16 %v1915
        %v3114 = vunpack.c.l.b16 %v1916
        %v3115 = vunpack.c.h.b16 %v1916
        %v3116 = vunpack.c.l.b16 %v1917
        %v3117 = vunpack.c.h.b16 %v1917
        %v3118 = vunpack.c.l.b16 %v1918
        %v3119 = vunpack.c.h.b16 %v1918
        %v3120 = vunpack.c.l.b16 %v1919
        %v3121 = vunpack.c.h.b16 %v1919
        %v3122 = vunpack.c.l.b16 %v1920
        %v3123 = vunpack.c.h.b16 %v1920
        %v3124 = vunpack.c.l.b16 %v1921
        %v3125 = vunpack.c.h.b16 %v1921
        %v3126 = vunpack.c.l.b16 %v1922
        %v3127 = vunpack.c.h.b16 %v1922
        %v3128 = vunpack.c.l.b16 %v1923
        %v3129 = vunpack.c.h.b16 %v1923
        %v3130 = vunpack.c.l.b16 %v1924
        %v3131 = vunpack.c.h.b16 %v1924
        %v3132 = vunpack.c.l.b16 %v1925
        %v3133 = vunpack.c.h.b16 %v1925
        %v3134 = vunpack.c.l.b16 %v1926
        %v3135 = vunpack.c.h.b16 %v1926
        %v3136 = vunpack.c.l.b16 %v1927
        %v3137 = vunpack.c.h.b16 %v1927
        %v3138 = vunpack.c.l.b16 %v1928
        %v3139 = vunpack.c.h.b16 %v1928
        %v3140 = vunpack.c.l.b16 %v1929
        %v3141 = vunpack.c.h.b16 %v1929
        %v3142 = vunpack.c.l.b16 %v1930
        %v3143 = vunpack.c.h.b16 %v1930
        %v3144 = vunpack.c.l.b16 %v1931
        %v3145 = vunpack.c.h.b16 %v1931
        %v3146 = vunpack.c.l.b16 %v1932
        %v3147 = vunpack.c.h.b16 %v1932
        %v3148 = vunpack.c.l.b16 %v1933
        %v3149 = vunpack.c.h.b16 %v1933
        %v3150 = vunpack.c.l.b16 %v1934
        %v3151 = vunpack.c.h.b16 %v1934
        %v3152 = vunpack.c.l.b16 %v1935
        %v3153 = vunpack.c.h.b16 %v1935
        %v3154 = vunpack.c.l.b16 %v1936
        %v3155 = vunpack.c.h.b16 %v1936
        %v3156 = vunpack.c.l.b16 %v1937
        %v3157 = vunpack.c.h.b16 %v1937
        %v3158 = vunpack.c.l.b16 %v1938
        %v3159 = vunpack.c.h.b16 %v1938
        %v3160 = vunpack.c.l.b16 %v1939
        %v3161 = vunpack.c.h.b16 %v1939
        %v3162 = vunpack.c.l.b16 %v1940
        %v3163 = vunpack.c.h.b16 %v1940
        %v3164 = vunpack.c.l.b16 %v1941
        %v3165 = vunpack.c.h.b16 %v1941
        %v3166 = vunpack.c.l.b16 %v1942
        %v3167 = vunpack.c.h.b16 %v1942
        %v3168 = vunpack.c.l.b16 %v1943
        %v3169 = vunpack.c.h.b16 %v1943
        %v3170 = vunpack.c.l.b16 %v1944
        %v3171 = vunpack.c.h.b16 %v1944
        %v3172 = vunpack.c.l.b16 %v1945
        %v3173 = vunpack.c.h.b16 %v1945
        %v3174 = vunpack.c.l.b16 %v1946
        %v3175 = vunpack.c.h.b16 %v1946
        %v3176 = vunpack.c.l.b16 %v1947
        %v3177 = vunpack.c.h.b16 %v1947
        %v3178 = vunpack.c.l.b16 %v1948
        %v3179 = vunpack.c.h.b16 %v1948
        %v3180 = vunpack.c.l.b16 %v1949
        %v3181 = vunpack.c.h.b16 %v1949
        %v3182 = vunpack.c.l.b16 %v1950
        %v3183 = vunpack.c.h.b16 %v1950
        %v3184 = vunpack.c.l.b16 %v1951
        %v3185 = vunpack.c.h.b16 %v1951
        %v3186 = vunpack.c.l.b16 %v1952
        %v3187 = vunpack.c.h.b16 %v1952
        %v3188 = vunpack.c.l.b16 %v1953
        %v3189 = vunpack.c.h.b16 %v1953
        %v3190 = vunpack.c.l.b16 %v1954
        %v3191 = vunpack.c.h.b16 %v1954
        %v3192 = vunpack.c.l.b16 %v1955
        %v3193 = vunpack.c.h.b16 %v1955
        %v3194 = vunpack.c.l.b16 %v1956
        %v3195 = vunpack.c.h.b16 %v1956
        %v3196 = vunpack.c.l.b16 %v1957
        %v3197 = vunpack.c.h.b16 %v1957
        %v3198 = vunpack.c.l.b16 %v1958
        %v3199 = vunpack.c.h.b16 %v1958
        %v3200 = vunpack.c.l.b16 %v1959
        %v3201 = vunpack.c.h.b16 %v1959
        %v3202 = vunpack.c.l.b16 %v1960
        %v3203 = vunpack.c.h.b16 %v1960
        %v3204 = vunpack.c.l.b16 %v1961
        %v3205 = vunpack.c.h.b16 %v1961
        %v3206 = vunpack.c.l.b16 %v1962
        %v3207 = vunpack.c.h.b16 %v1962
        %v3208 = vunpack.c.l.b16 %v1963
        %v3209 = vunpack.c.h.b16 %v1963
        %v3210 = vunpack.c.l.b16 %v1964
        %v3211 = vunpack.c.h.b16 %v1964
        %v3212 = vunpack.c.l.b16 %v1965
        %v3213 = vunpack.c.h.b16 %v1965
        %v3214 = vunpack.c.l.b16 %v1966
        %v3215 = vunpack.c.h.b16 %v1966
        %v3216 = vunpack.c.l.b16 %v1967
        %v3217 = vunpack.c.h.b16 %v1967
        %v3218 = vunpack.c.l.b16 %v1968
        %v3219 = vunpack.c.h.b16 %v1968
        %v3220 = vunpack.c.l.b16 %v1969
        %v3221 = vunpack.c.h.b16 %v1969
        %v3222 = vunpack.c.l.b16 %v1970
        %v3223 = vunpack.c.h.b16 %v1970
        %v3224 = vunpack.c.l.b16 %v1971
        %v3225 = vunpack.c.h.b16 %v1971
        %v3226 = vunpack.c.l.b16 %v1972
        %v3227 = vunpack.c.h.b16 %v1972
        %v3228 = vunpack.c.l.b16 %v1973
        %v3229 = vunpack.c.h.b16 %v1973
        %v3230 = vunpack.c.l.b16 %v1974
        %v3231 = vunpack.c.h.b16 %v1974
        %v3232 = vunpack.c.l.b16 %v1975
        %v3233 = vunpack.c.h.b16 %v1975
        %v3234 = vunpack.c.l.b16 %v1976
        %v3235 = vunpack.c.h.b16 %v1976
        %v3236 = vunpack.c.l.b16 %v1977
        %v3237 = vunpack.c.h.b16 %v1977
        %v3238 = vunpack.c.l.b16 %v1978
        %v3239 = vunpack.c.h.b16 %v1978
        %v3240 = vunpack.c.l.b16 %v1979
        %v3241 = vunpack.c.h.b16 %v1979
        %v3242 = vunpack.c.l.b16 %v1980
        %v3243 = vunpack.c.h.b16 %v1980
        %v3244 = vunpack.c.l.b16 %v1981
        %v3245 = vunpack.c.h.b16 %v1981
        %v3246 = vunpack.c.l.b16 %v1982
        %v3247 = vunpack.c.h.b16 %v1982
        %v3248 = vunpack.c.l.b16 %v1983
        %v3249 = vunpack.c.h.b16 %v1983
        %v3250 = vunpack.c.l.b16 %v1984
        %v3251 = vunpack.c.h.b16 %v1984
        %v3252 = vunpack.c.l.b16 %v1985
        %v3253 = vunpack.c.h.b16 %v1985
        %v3254 = vunpack.c.l.b16 %v1986
        %v3255 = vunpack.c.h.b16 %v1986
        %v3256 = vunpack.c.l.b16 %v1987
        %v3257 = vunpack.c.h.b16 %v1987
        %v3258 = vunpack.c.l.b16 %v1988
        %v3259 = vunpack.c.h.b16 %v1988
        %v3260 = vunpack.c.l.b16 %v1989
        %v3261 = vunpack.c.h.b16 %v1989
        %v3262 = vunpack.c.l.b16 %v1990
        %v3263 = vunpack.c.h.b16 %v1990
        %v3264 = vunpack.c.l.b16 %v1991
        %v3265 = vunpack.c.h.b16 %v1991
        %v3266 = vunpack.c.l.b16 %v1992
        %v3267 = vunpack.c.h.b16 %v1992
        %v3268 = vunpack.c.l.b16 %v1993
        %v3269 = vunpack.c.h.b16 %v1993
        %v3270 = vunpack.c.l.b16 %v1994
        %v3271 = vunpack.c.h.b16 %v1994
        %v3272 = vunpack.c.l.b16 %v1995
        %v3273 = vunpack.c.h.b16 %v1995
        %v3274 = vunpack.c.l.b16 %v1996
        %v3275 = vunpack.c.h.b16 %v1996
        %v3276 = vunpack.c.l.b16 %v1997
        %v3277 = vunpack.c.h.b16 %v1997
        %v3278 = vunpack.c.l.b16 %v1998
        %v3279 = vunpack.c.h.b16 %v1998
        %v3280 = vunpack.c.l.b16 %v1999
        %v3281 = vunpack.c.h.b16 %v1999
        %v3282 = vunpack.c.l.b16 %v2000
        %v3283 = vunpack.c.h.b16 %v2000
        %v3284 = vunpack.c.l.b16 %v2001
        %v3285 = vunpack.c.h.b16 %v2001
        %v3286 = vunpack.c.l.b16 %v2002
        %v3287 = vunpack.c.h.b16 %v2002
        %v3288 = vunpack.c.l.b16 %v2003
        %v3289 = vunpack.c.h.b16 %v2003
        %v3290 = vunpack.c.l.b16 %v2004
        %v3291 = vunpack.c.h.b16 %v2004
        %v3292 = vunpack.c.l.b16 %v2005
        %v3293 = vunpack.c.h.b16 %v2005
        %v3294 = vunpack.c.l.b16 %v2006
        %v3295 = vunpack.c.h.b16 %v2006
        %v3296 = vunpack.c.l.b16 %v2007
        %v3297 = vunpack.c.h.b16 %v2007
        %v3298 = vunpack.c.l.b16 %v2008
        %v3299 = vunpack.c.h.b16 %v2008
        %v3300 = vunpack.c.l.b16 %v2009
        %v3301 = vunpack.c.h.b16 %v2009
        %v3302 = vunpack.c.l.b16 %v2010
        %v3303 = vunpack.c.h.b16 %v2010
        %v3304 = vunpack.c.l.b16 %v2011
        %v3305 = vunpack.c.h.b16 %v2011
        %v3306 = vunpack.c.l.b16 %v2012
        %v3307 = vunpack.c.h.b16 %v2012
        %v3308 = vunpack.c.l.b16 %v2013
        %v3309 = vunpack.c.h.b16 %v2013
        %v3310 = vunpack.c.l.b16 %v2014
        %v3311 = vunpack.c.h.b16 %v2014
        %v3312 = vunpack.c.l.b16 %v2015
        %v3313 = vunpack.c.h.b16 %v2015
        %v3314 = vunpack.c.l.b16 %v2016
        %v3315 = vunpack.c.h.b16 %v2016
        %v3316 = vunpack.c.l.b16 %v2017
        %v3317 = vunpack.c.h.b16 %v2017
        %v3318 = vunpack.c.l.b16 %v2018
        %v3319 = vunpack.c.h.b16 %v2018
        %v3320 = vunpack.c.l.b16 %v2019
        %v3321 = vunpack.c.h.b16 %v2019
        %v3322 = vunpack.c.l.b16 %v2020
        %v3323 = vunpack.c.h.b16 %v2020
        %v3324 = vunpack.c.l.b16 %v2021
        %v3325 = vunpack.c.h.b16 %v2021
        %v3326 = vunpack.c.l.b16 %v2022
        %v3327 = vunpack.c.h.b16 %v2022
        %v3328 = vunpack.c.l.b16 %v2023
        %v3329 = vunpack.c.h.b16 %v2023
        %v3330 = vunpack.c.l.b16 %v2024
        %v3331 = vunpack.c.h.b16 %v2024
        %v3332 = vunpack.c.l.b16 %v2025
        %v3333 = vunpack.c.h.b16 %v2025
        %v3334 = vunpack.c.l.b16 %v2026
        %v3335 = vunpack.c.h.b16 %v2026
        %v3336 = vunpack.c.l.b16 %v2027
        %v3337 = vunpack.c.h.b16 %v2027
        %v3338 = vunpack.c.l.b16 %v2028
        %v3339 = vunpack.c.h.b16 %v2028
        %v3340 = vunpack.c.l.b16 %v2029
        %v3341 = vunpack.c.h.b16 %v2029
        %v3342 = vunpack.c.l.b16 %v2030
        %v3343 = vunpack.c.h.b16 %v2030
        %v3344 = vunpack.c.l.b16 %v2031
        %v3345 = vunpack.c.h.b16 %v2031
        %v3346 = vunpack.c.l.b16 %v2032
        %v3347 = vunpack.c.h.b16 %v2032
        %v3348 = vunpack.c.l.b16 %v2033
        %v3349 = vunpack.c.h.b16 %v2033
        %v3350 = vunpack.c.l.b16 %v2034
        %v3351 = vunpack.c.h.b16 %v2034
        %v3352 = vunpack.c.l.b16 %v2035
        %v3353 = vunpack.c.h.b16 %v2035
        %v3354 = vunpack.c.l.b16 %v2036
        %v3355 = vunpack.c.h.b16 %v2036
        %v3356 = vunpack.c.l.b16 %v2037
        %v3357 = vunpack.c.h.b16 %v2037
        %v3358 = vunpack.c.l.b16 %v2038
        %v3359 = vunpack.c.h.b16 %v2038
        %v3360 = vunpack.c.l.b16 %v2039
        %v3361 = vunpack.c.h.b16 %v2039
        %v3362 = vunpack.c.l.b16 %v2040
        %v3363 = vunpack.c.h.b16 %v2040
        %v3364 = vunpack.c.l.b16 %v2041
        %v3365 = vunpack.c.h.b16 %v2041
        %v3366 = vunpack.c.l.b16 %v2042
        %v3367 = vunpack.c.h.b16 %v2042
        %v3368 = vunpack.c.l.b16 %v2043
        %v3369 = vunpack.c.h.b16 %v2043
        %v3370 = vunpack.c.l.b16 %v2044
        %v3371 = vunpack.c.h.b16 %v2044
        %v3372 = vunpack.c.l.b16 %v2045
        %v3373 = vunpack.c.h.b16 %v2045
        %v3374 = vunpack.c.l.b16 %v2046
        %v3375 = vunpack.c.h.b16 %v2046
        %v3376 = vunpack.c.l.b16 %v2047
        %v3377 = vunpack.c.h.b16 %v2047
        %v3378 = vunpack.c.l.b16 %v2048
        %v3379 = vunpack.c.h.b16 %v2048
        %v3380 = vunpack.c.l.b16 %v2049
        %v3381 = vunpack.c.h.b16 %v2049
        %v3382 = vunpack.c.l.b16 %v2050
        %v3383 = vunpack.c.h.b16 %v2050
        %v3384 = vunpack.c.l.b16 %v2051
        %v3385 = vunpack.c.h.b16 %v2051
        %v3386 = vunpack.c.l.b16 %v2052
        %v3387 = vunpack.c.h.b16 %v2052
        %v3388 = vunpack.c.l.b16 %v2053
        %v3389 = vunpack.c.h.b16 %v2053
        %v3390 = vunpack.c.l.b16 %v2054
        %v3391 = vunpack.c.h.b16 %v2054
        %v3392 = vunpack.c.l.b16 %v2055
        %v3393 = vunpack.c.h.b16 %v2055
        %v3394 = vunpack.c.l.b16 %v2056
        %v3395 = vunpack.c.h.b16 %v2056
        %v3396 = vunpack.c.l.b16 %v2057
        %v3397 = vunpack.c.h.b16 %v2057
        %v3398 = vunpack.c.l.b16 %v2058
        %v3399 = vunpack.c.h.b16 %v2058
        %v3400 = vunpack.c.l.b16 %v2059
        %v3401 = vunpack.c.h.b16 %v2059
        %v3402 = vunpack.c.l.b16 %v2060
        %v3403 = vunpack.c.h.b16 %v2060
        %v3404 = vunpack.c.l.b16 %v2061
        %v3405 = vunpack.c.h.b16 %v2061
        %v3406 = vunpack.c.l.b16 %v2062
        %v3407 = vunpack.c.h.b16 %v2062
        %v3408 = vunpack.c.l.b16 %v2063
        %v3409 = vunpack.c.h.b16 %v2063
        %v3410 = vunpack.c.l.b16 %v2064
        %v3411 = vunpack.c.h.b16 %v2064
        %v3412 = vunpack.c.l.b16 %v2065
        %v3413 = vunpack.c.h.b16 %v2065
        %v3414 = vunpack.c.l.b16 %v2066
        %v3415 = vunpack.c.h.b16 %v2066
        %v3416 = vunpack.c.l.b16 %v2067
        %v3417 = vunpack.c.h.b16 %v2067
        %v3418 = vunpack.c.l.b16 %v2068
        %v3419 = vunpack.c.h.b16 %v2068
        %v3420 = vunpack.c.l.b16 %v2069
        %v3421 = vunpack.c.h.b16 %v2069
        %v3422 = vunpack.c.l.b16 %v2070
        %v3423 = vunpack.c.h.b16 %v2070
        %v3424 = vunpack.c.l.b16 %v2071
        %v3425 = vunpack.c.h.b16 %v2071
        %v3426 = vunpack.c.l.b16 %v2072
        %v3427 = vunpack.c.h.b16 %v2072
        %v3428 = vunpack.c.l.b16 %v2073
        %v3429 = vunpack.c.h.b16 %v2073
        %v3430 = vunpack.c.l.b16 %v2074
        %v3431 = vunpack.c.h.b16 %v2074
        %v3432 = vunpack.c.l.b16 %v2075
        %v3433 = vunpack.c.h.b16 %v2075
        %v3434 = vunpack.c.l.b16 %v2076
        %v3435 = vunpack.c.h.b16 %v2076
        %v3436 = vunpack.c.l.b16 %v2077
        %v3437 = vunpack.c.h.b16 %v2077
        %v3438 = vunpack.c.l.b16 %v2078
        %v3439 = vunpack.c.h.b16 %v2078
        %v3440 = vunpack.c.l.b16 %v2079
        %v3441 = vunpack.c.h.b16 %v2079
        %v3442 = vunpack.c.l.b16 %v2080
        %v3443 = vunpack.c.h.b16 %v2080
        %v3444 = vunpack.c.l.b16 %v2081
        %v3445 = vunpack.c.h.b16 %v2081
        %v3446 = vunpack.c.l.b16 %v2082
        %v3447 = vunpack.c.h.b16 %v2082
        %v3448 = vunpack.c.l.b16 %v2083
        %v3449 = vunpack.c.h.b16 %v2083
        %v3450 = vunpack.c.l.b16 %v2084
        %v3451 = vunpack.c.h.b16 %v2084
        %v3452 = vunpack.c.l.b16 %v2085
        %v3453 = vunpack.c.h.b16 %v2085
        %v3454 = vunpack.c.l.b16 %v2086
        %v3455 = vunpack.c.h.b16 %v2086
        %v3456 = vunpack.c.l.b16 %v2087
        %v3457 = vunpack.c.h.b16 %v2087
        %v3458 = vunpack.c.l.b16 %v2088
        %v3459 = vunpack.c.h.b16 %v2088
        %v3460 = vunpack.c.l.b16 %v2089
        %v3461 = vunpack.c.h.b16 %v2089
        %v3462 = vunpack.c.l.b16 %v2090
        %v3463 = vunpack.c.h.b16 %v2090
        %v3464 = vunpack.c.l.b16 %v2091
        %v3465 = vunpack.c.h.b16 %v2091
        %v3466 = vunpack.c.l.b16 %v2092
        %v3467 = vunpack.c.h.b16 %v2092
        %v3468 = vunpack.c.l.b16 %v2093
        %v3469 = vunpack.c.h.b16 %v2093
        %v3470 = vunpack.c.l.b16 %v2094
        %v3471 = vunpack.c.h.b16 %v2094
        %v3472 = vunpack.c.l.b16 %v2095
        %v3473 = vunpack.c.h.b16 %v2095
        %v3474 = vunpack.c.l.b16 %v2096
        %v3475 = vunpack.c.h.b16 %v2096
        %v3476 = vunpack.c.l.b16 %v2097
        %v3477 = vunpack.c.h.b16 %v2097
        %v3478 = vunpack.c.l.b16 %v2098
        %v3479 = vunpack.c.h.b16 %v2098
        %v3480 = vunpack.c.l.b16 %v2099
        %v3481 = vunpack.c.h.b16 %v2099
        %v3482 = vunpack.c.l.b16 %v2100
        %v3483 = vunpack.c.h.b16 %v2100
        %v3484 = vunpack.c.l.b16 %v2101
        %v3485 = vunpack.c.h.b16 %v2101
        %v3486 = vunpack.c.l.b16 %v2102
        %v3487 = vunpack.c.h.b16 %v2102
        %v3488 = vunpack.c.l.b16 %v2103
        %v3489 = vunpack.c.h.b16 %v2103
        %v3490 = vunpack.c.l.b16 %v2104
        %v3491 = vunpack.c.h.b16 %v2104
        %v3492 = vunpack.c.l.b16 %v2105
        %v3493 = vunpack.c.h.b16 %v2105
        %v3494 = vunpack.c.l.b16 %v2106
        %v3495 = vunpack.c.h.b16 %v2106
        %v3496 = vunpack.c.l.b16 %v2107
        %v3497 = vunpack.c.h.b16 %v2107
        %v3498 = vunpack.c.l.b16 %v2108
        %v3499 = vunpack.c.h.b16 %v2108
        %v3500 = vunpack.c.l.b16 %v2109
        %v3501 = vunpack.c.h.b16 %v2109
        %v3502 = vunpack.c.l.b16 %v2110
        %v3503 = vunpack.c.h.b16 %v2110
        %v3504 = vunpack.c.l.b16 %v2111
        %v3505 = vunpack.c.h.b16 %v2111
        %v3506 = vunpack.c.l.b16 %v2112
        %v3507 = vunpack.c.h.b16 %v2112
        %v3508 = vunpack.c.l.b16 %v2113
        %v3509 = vunpack.c.h.b16 %v2113
        %v3510 = vunpack.c.l.b16 %v2114
        %v3511 = vunpack.c.h.b16 %v2114
        %v3512 = vunpack.c.l.b16 %v2115
        %v3513 = vunpack.c.h.b16 %v2115
        %v3514 = vunpack.c.l.b16 %v2116
        %v3515 = vunpack.c.h.b16 %v2116
        %v3516 = vunpack.c.l.b16 %v2117
        %v3517 = vunpack.c.h.b16 %v2117
        %v3518 = vunpack.c.l.b16 %v2118
        %v3519 = vunpack.c.h.b16 %v2118
        %v3520 = vunpack.c.l.b16 %v2119
        %v3521 = vunpack.c.h.b16 %v2119
        %v3522 = vunpack.c.l.b16 %v2120
        %v3523 = vunpack.c.h.b16 %v2120
        %v3524 = vunpack.c.l.b16 %v2121
        %v3525 = vunpack.c.h.b16 %v2121
        %v3526 = vunpack.c.l.b16 %v2122
        %v3527 = vunpack.c.h.b16 %v2122
        %v3528 = vunpack.c.l.b16 %v2123
        %v3529 = vunpack.c.h.b16 %v2123
        %v3530 = vunpack.c.l.b16 %v2124
        %v3531 = vunpack.c.h.b16 %v2124
        %v3532 = vunpack.c.l.b16 %v2125
        %v3533 = vunpack.c.h.b16 %v2125
        %v3534 = vunpack.c.l.b16 %v2126
        %v3535 = vunpack.c.h.b16 %v2126
        %v3536 = vunpack.c.l.b16 %v2127
        %v3537 = vunpack.c.h.b16 %v2127
        %v3538 = vunpack.c.l.b16 %v2128
        %v3539 = vunpack.c.h.b16 %v2128
        %v3540 = vunpack.c.l.b16 %v2129
        %v3541 = vunpack.c.h.b16 %v2129
        %v3542 = vunpack.c.l.b16 %v2130
        %v3543 = vunpack.c.h.b16 %v2130
        %v3544 = vunpack.c.l.b16 %v2131
        %v3545 = vunpack.c.h.b16 %v2131
        %v3546 = vunpack.c.l.b16 %v2132
        %v3547 = vunpack.c.h.b16 %v2132
        %v3548 = vunpack.c.l.b16 %v2133
        %v3549 = vunpack.c.h.b16 %v2133
        %v3550 = vunpack.c.l.b16 %v2134
        %v3551 = vunpack.c.h.b16 %v2134
        %v3552 = vunpack.c.l.b16 %v2135
        %v3553 = vunpack.c.h.b16 %v2135
        %v3554 = vunpack.c.l.b16 %v2136
        %v3555 = vunpack.c.h.b16 %v2136
        %v3556 = vunpack.c.l.b16 %v2137
        %v3557 = vunpack.c.h.b16 %v2137
        %v3558 = vunpack.c.l.b16 %v2138
        %v3559 = vunpack.c.h.b16 %v2138
        %v3560 = vunpack.c.l.b16 %v2139
        %v3561 = vunpack.c.h.b16 %v2139
        %v3562 = vunpack.c.l.b16 %v2140
        %v3563 = vunpack.c.h.b16 %v2140
        %v3564 = vunpack.c.l.b16 %v2141
        %v3565 = vunpack.c.h.b16 %v2141
        %v3566 = vunpack.c.l.b16 %v2142
        %v3567 = vunpack.c.h.b16 %v2142
        %v3568 = vunpack.c.l.b16 %v2143
        %v3569 = vunpack.c.h.b16 %v2143
        %v3570 = vunpack.c.l.b16 %v2144
        %v3571 = vunpack.c.h.b16 %v2144
        %v3572 = vunpack.c.l.b16 %v2145
        %v3573 = vunpack.c.h.b16 %v2145
        %v3574 = vunpack.c.l.b16 %v2146
        %v3575 = vunpack.c.h.b16 %v2146
        %v3576 = vunpack.c.l.b16 %v2147
        %v3577 = vunpack.c.h.b16 %v2147
        %v3578 = vunpack.c.l.b16 %v2148
        %v3579 = vunpack.c.h.b16 %v2148
        %v3580 = vunpack.c.l.b16 %v2149
        %v3581 = vunpack.c.h.b16 %v2149
        %v3582 = vunpack.c.l.b16 %v2150
        %v3583 = vunpack.c.h.b16 %v2150
        %v3584 = vunpack.c.l.b16 %v2151
        %v3585 = vunpack.c.h.b16 %v2151
        %v3586 = vunpack.c.l.b16 %v2152
        %v3587 = vunpack.c.h.b16 %v2152
        %v3588 = vunpack.c.l.b16 %v2153
        %v3589 = vunpack.c.h.b16 %v2153
        %v3590 = vunpack.c.l.b16 %v2154
        %v3591 = vunpack.c.h.b16 %v2154
        %v3592 = vunpack.c.l.b16 %v2155
        %v3593 = vunpack.c.h.b16 %v2155
        %v3594 = vunpack.c.l.b16 %v2156
        %v3595 = vunpack.c.h.b16 %v2156
        %v3596 = vunpack.c.l.b16 %v2157
        %v3597 = vunpack.c.h.b16 %v2157
        %v3598 = vunpack.c.l.b16 %v2158
        %v3599 = vunpack.c.h.b16 %v2158
        %v3600 = vunpack.c.l.b16 %v2159
        %v3601 = vunpack.c.h.b16 %v2159
        %v3602 = vunpack.c.l.b16 %v2160
        %v3603 = vunpack.c.h.b16 %v2160
        %v3604 = vunpack.c.l.b16 %v2161
        %v3605 = vunpack.c.h.b16 %v2161
        %v3606 = vunpack.c.l.b16 %v2162
        %v3607 = vunpack.c.h.b16 %v2162
        %v3608 = vunpack.c.l.b16 %v2163
        %v3609 = vunpack.c.h.b16 %v2163
        %v3610 = vunpack.c.l.b16 %v2164
        %v3611 = vunpack.c.h.b16 %v2164
        %v3612 = vunpack.c.l.b16 %v2165
        %v3613 = vunpack.c.h.b16 %v2165
        %v3614 = vunpack.c.l.b16 %v2166
        %v3615 = vunpack.c.h.b16 %v2166
        %v3616 = vunpack.c.l.b16 %v2167
        %v3617 = vunpack.c.h.b16 %v2167
        %v3618 = vunpack.c.l.b16 %v2168
        %v3619 = vunpack.c.h.b16 %v2168
        %v3620 = vunpack.c.l.b16 %v2169
        %v3621 = vunpack.c.h.b16 %v2169
        %v3622 = vunpack.c.l.b16 %v2170
        %v3623 = vunpack.c.h.b16 %v2170
        %v3624 = vunpack.c.l.b16 %v2171
        %v3625 = vunpack.c.h.b16 %v2171
        %v3626 = vunpack.c.l.b16 %v2172
        %v3627 = vunpack.c.h.b16 %v2172
        %v3628 = vunpack.c.l.b16 %v2173
        %v3629 = vunpack.c.h.b16 %v2173
        %v3630 = vunpack.c.l.b16 %v2174
        %v3631 = vunpack.c.h.b16 %v2174
        %v3632 = vunpack.c.l.b16 %v2175
        %v3633 = vunpack.c.h.b16 %v2175
        %v3634 = vunpack.c.l.b16 %v2176
        %v3635 = vunpack.c.h.b16 %v2176
        %v3636 = vunpack.c.l.b16 %v2177
        %v3637 = vunpack.c.h.b16 %v2177
        %v3638 = vunpack.c.l.b16 %v2178
        %v3639 = vunpack.c.h.b16 %v2178
        %v3640 = vunpack.c.l.b16 %v2179
        %v3641 = vunpack.c.h.b16 %v2179
        %v3642 = vunpack.c.l.b16 %v2180
        %v3643 = vunpack.c.h.b16 %v2180
        %v3644 = vunpack.c.l.b16 %v2181
        %v3645 = vunpack.c.h.b16 %v2181
        %v3646 = vunpack.c.l.b16 %v2182
        %v3647 = vunpack.c.h.b16 %v2182
        %v3648 = vunpack.c.l.b16 %v2183
        %v3649 = vunpack.c.h.b16 %v2183
        %v3650 = vunpack.c.l.b16 %v2184
        %v3651 = vunpack.c.h.b16 %v2184
        %v3652 = vunpack.c.l.b16 %v2185
        %v3653 = vunpack.c.h.b16 %v2185
        %v3654 = vunpack.c.l.b16 %v2186
        %v3655 = vunpack.c.h.b16 %v2186
        %v3656 = vunpack.c.l.b16 %v2187
        %v3657 = vunpack.c.h.b16 %v2187
        %v3658 = vunpack.c.l.b16 %v2188
        %v3659 = vunpack.c.h.b16 %v2188
        %v3660 = vunpack.c.l.b16 %v2189
        %v3661 = vunpack.c.h.b16 %v2189
        %v3662 = vunpack.c.l.b16 %v2190
        %v3663 = vunpack.c.h.b16 %v2190
        %v3664 = vunpack.c.l.b16 %v2191
        %v3665 = vunpack.c.h.b16 %v2191
        %v3666 = vunpack.c.l.b16 %v2192
        %v3667 = vunpack.c.h.b16 %v2192
        %v3668 = vunpack.c.l.b16 %v2193
        %v3669 = vunpack.c.h.b16 %v2193
        %v3670 = vunpack.c.l.b16 %v2194
        %v3671 = vunpack.c.h.b16 %v2194
        %v3672 = vunpack.c.l.b16 %v2195
        %v3673 = vunpack.c.h.b16 %v2195
        %v3674 = vunpack.c.l.b16 %v2196
        %v3675 = vunpack.c.h.b16 %v2196
        %v3676 = vunpack.c.l.b16 %v2197
        %v3677 = vunpack.c.h.b16 %v2197
        %v3678 = vunpack.c.l.b16 %v2198
        %v3679 = vunpack.c.h.b16 %v2198
        %v3680 = vunpack.c.l.b16 %v2199
        %v3681 = vunpack.c.h.b16 %v2199
        %v3682 = vunpack.c.l.b16 %v2200
        %v3683 = vunpack.c.h.b16 %v2200
        %v3684 = vunpack.c.l.b16 %v2201
        %v3685 = vunpack.c.h.b16 %v2201
        %v3686 = vunpack.c.l.b16 %v2202
        %v3687 = vunpack.c.h.b16 %v2202
        %v3688 = vunpack.c.l.b16 %v2203
        %v3689 = vunpack.c.h.b16 %v2203
        %v3690 = vunpack.c.l.b16 %v2204
        %v3691 = vunpack.c.h.b16 %v2204
        %v3692 = vunpack.c.l.b16 %v2205
        %v3693 = vunpack.c.h.b16 %v2205
        %v3694 = vunpack.c.l.b16 %v2206
        %v3695 = vunpack.c.h.b16 %v2206
        %v3696 = vunpack.c.l.b16 %v2207
        %v3697 = vunpack.c.h.b16 %v2207
        %v3698 = vunpack.c.l.b16 %v2208
        %v3699 = vunpack.c.h.b16 %v2208
        %v3700 = vunpack.c.l.b16 %v2209
        %v3701 = vunpack.c.h.b16 %v2209
        %v3702 = vunpack.c.l.b16 %v2210
        %v3703 = vunpack.c.h.b16 %v2210
        %v3704 = vunpack.c.l.b16 %v2211
        %v3705 = vunpack.c.h.b16 %v2211
        %v3706 = vunpack.c.l.b16 %v2212
        %v3707 = vunpack.c.h.b16 %v2212
        %v3708 = vunpack.c.l.b16 %v2213
        %v3709 = vunpack.c.h.b16 %v2213
        %v3710 = vunpack.c.l.b16 %v2214
        %v3711 = vunpack.c.h.b16 %v2214
        %v3712 = vunpack.c.l.b16 %v2215
        %v3713 = vunpack.c.h.b16 %v2215
        %v3714 = vunpack.c.l.b16 %v2216
        %v3715 = vunpack.c.h.b16 %v2216
        %v3716 = vunpack.c.l.b16 %v2217
        %v3717 = vunpack.c.h.b16 %v2217
        %v3718 = vunpack.c.l.b16 %v2218
        %v3719 = vunpack.c.h.b16 %v2218
        %v3720 = vunpack.c.l.b16 %v2219
        %v3721 = vunpack.c.h.b16 %v2219
        %v3722 = vunpack.c.l.b16 %v2220
        %v3723 = vunpack.c.h.b16 %v2220
        %v3724 = vunpack.c.l.b16 %v2221
        %v3725 = vunpack.c.h.b16 %v2221
        %v3726 = vunpack.c.l.b16 %v2222
        %v3727 = vunpack.c.h.b16 %v2222
        %v3728 = vunpack.c.l.b16 %v2223
        %v3729 = vunpack.c.h.b16 %v2223
        %v3730 = vunpack.c.l.b16 %v2224
        %v3731 = vunpack.c.h.b16 %v2224
        %v3732 = vunpack.c.l.b16 %v2225
        %v3733 = vunpack.c.h.b16 %v2225
        %v3734 = vunpack.c.l.b16 %v2226
        %v3735 = vunpack.c.h.b16 %v2226
        %v3736 = vunpack.c.l.b16 %v2227
        %v3737 = vunpack.c.h.b16 %v2227
        %v3738 = vunpack.c.l.b16 %v2228
        %v3739 = vunpack.c.h.b16 %v2228
        %v3740 = vunpack.c.l.b16 %v2229
        %v3741 = vunpack.c.h.b16 %v2229
        %v3742 = vunpack.c.l.b16 %v2230
        %v3743 = vunpack.c.h.b16 %v2230
        %v3744 = vunpack.c.l.b16 %v2231
        %v3745 = vunpack.c.h.b16 %v2231
        %v3746 = vunpack.c.l.b16 %v2232
        %v3747 = vunpack.c.h.b16 %v2232
        %v3748 = vunpack.c.l.b16 %v2233
        %v3749 = vunpack.c.h.b16 %v2233
        %v3750 = vunpack.c.l.b16 %v2234
        %v3751 = vunpack.c.h.b16 %v2234
        %v3752 = vunpack.c.l.b16 %v2235
        %v3753 = vunpack.c.h.b16 %v2235
        %v3754 = vunpack.c.l.b16 %v2236
        %v3755 = vunpack.c.h.b16 %v2236
        %v3756 = vunpack.c.l.b16 %v2237
        %v3757 = vunpack.c.h.b16 %v2237
        %v3758 = vunpack.c.l.b16 %v2238
        %v3759 = vunpack.c.h.b16 %v2238
        %v3760 = vunpack.c.l.b16 %v2239
        %v3761 = vunpack.c.h.b16 %v2239
        %v3762 = vunpack.c.l.b16 %v2240
        %v3763 = vunpack.c.h.b16 %v2240
        %v3764 = vunpack.c.l.b16 %v2241
        %v3765 = vunpack.c.h.b16 %v2241
        %v3766 = vunpack.c.l.b16 %v2242
        %v3767 = vunpack.c.h.b16 %v2242
        %v3768 = vunpack.c.l.b16 %v2243
        %v3769 = vunpack.c.h.b16 %v2243
        %v3770 = vunpack.c.l.b16 %v2244
        %v3771 = vunpack.c.h.b16 %v2244
        %v3772 = vunpack.c.l.b16 %v2245
        %v3773 = vunpack.c.h.b16 %v2245
        %v3774 = vunpack.c.l.b16 %v2246
        %v3775 = vunpack.c.h.b16 %v2246
        %v3776 = vunpack.c.l.b16 %v2247
        %v3777 = vunpack.c.h.b16 %v2247
        %v3778 = vunpack.c.l.b16 %v2248
        %v3779 = vunpack.c.h.b16 %v2248
        %v3780 = vunpack.c.l.b16 %v2249
        %v3781 = vunpack.c.h.b16 %v2249
        %v3782 = vunpack.c.l.b16 %v2250
        %v3783 = vunpack.c.h.b16 %v2250
        %v3784 = vunpack.c.l.b16 %v2251
        %v3785 = vunpack.c.h.b16 %v2251
        %v3786 = vunpack.c.l.b16 %v2252
        %v3787 = vunpack.c.h.b16 %v2252
        %v3788 = vunpack.c.l.b16 %v2253
        %v3789 = vunpack.c.h.b16 %v2253
        %v3790 = vunpack.c.l.b16 %v2254
        %v3791 = vunpack.c.h.b16 %v2254
        %v3792 = vunpack.c.l.b16 %v2255
        %v3793 = vunpack.c.h.b16 %v2255
        %v3794 = vunpack.c.l.b16 %v2256
        %v3795 = vunpack.c.h.b16 %v2256
        %v3796 = vunpack.c.l.b16 %v2257
        %v3797 = vunpack.c.h.b16 %v2257
        %v3798 = vunpack.c.l.b16 %v2258
        %v3799 = vunpack.c.h.b16 %v2258
        %v3800 = vunpack.c.l.b16 %v2259
        %v3801 = vunpack.c.h.b16 %v2259
        %v3802 = vunpack.c.l.b16 %v2260
        %v3803 = vunpack.c.h.b16 %v2260
        %v3804 = vunpack.c.l.b16 %v2261
        %v3805 = vunpack.c.h.b16 %v2261
        %v3806 = vunpack.c.l.b16 %v2262
        %v3807 = vunpack.c.h.b16 %v2262
        %v3808 = vunpack.c.l.b16 %v2263
        %v3809 = vunpack.c.h.b16 %v2263
        %v3810 = vunpack.c.l.b16 %v2264
        %v3811 = vunpack.c.h.b16 %v2264
        %v3812 = vunpack.c.l.b16 %v2265
        %v3813 = vunpack.c.h.b16 %v2265
        %v3814 = vunpack.c.l.b16 %v2266
        %v3815 = vunpack.c.h.b16 %v2266
        %v3816 = vunpack.c.l.b16 %v2267
        %v3817 = vunpack.c.h.b16 %v2267
        %v3818 = vunpack.c.l.b16 %v2268
        %v3819 = vunpack.c.h.b16 %v2268
        %v3820 = vunpack.c.l.b16 %v2269
        %v3821 = vunpack.c.h.b16 %v2269
        %v3822 = vunpack.c.l.b16 %v2270
        %v3823 = vunpack.c.h.b16 %v2270
        %v3824 = vunpack.c.l.b16 %v2271
        %v3825 = vunpack.c.h.b16 %v2271
        %v3826 = vpack.c.b16 %v2810, %v2802
        %v3827 = vpack.c.b16 %v2811, %v2803
        %v3828 = vpack.c.b16 %v2812, %v2804
        %v3829 = vpack.c.b16 %v2813, %v2805
        %v3830 = vpack.c.b16 %v2814, %v2806
        %v3831 = vpack.c.b16 %v2815, %v2807
        %v3832 = vpack.c.b16 %v2816, %v2808
        %v3833 = vpack.c.b16 %v2817, %v2809
        %v3834 = vpack.c.b16 %v2826, %v2818
        %v3835 = vpack.c.b16 %v2827, %v2819
        %v3836 = vpack.c.b16 %v2828, %v2820
        %v3837 = vpack.c.b16 %v2829, %v2821
        %v3838 = vpack.c.b16 %v2830, %v2822
        %v3839 = vpack.c.b16 %v2831, %v2823
        %v3840 = vpack.c.b16 %v2832, %v2824
        %v3841 = vpack.c.b16 %v2833, %v2825
        %v3842 = vpack.c.b16 %v2842, %v2834
        %v3843 = vpack.c.b16 %v2843, %v2835
        %v3844 = vpack.c.b16 %v2844, %v2836
        %v3845 = vpack.c.b16 %v2845, %v2837
        %v3846 = vpack.c.b16 %v2846, %v2838
        %v3847 = vpack.c.b16 %v2847, %v2839
        %v3848 = vpack.c.b16 %v2848, %v2840
        %v3849 = vpack.c.b16 %v2849, %v2841
        %v3850 = vpack.c.b16 %v2858, %v2850
        %v3851 = vpack.c.b16 %v2859, %v2851
        %v3852 = vpack.c.b16 %v2860, %v2852
        %v3853 = vpack.c.b16 %v2861, %v2853
        %v3854 = vpack.c.b16 %v2862, %v2854
        %v3855 = vpack.c.b16 %v2863, %v2855
        %v3856 = vpack.c.b16 %v2864, %v2856
        %v3857 = vpack.c.b16 %v2865, %v2857
        %v3858 = vpack.c.b16 %v2874, %v2866
        %v3859 = vpack.c.b16 %v2875, %v2867
        %v3860 = vpack.c.b16 %v2876, %v2868
        %v3861 = vpack.c.b16 %v2877, %v2869
        %v3862 = vpack.c.b16 %v2878, %v2870
        %v3863 = vpack.c.b16 %v2879, %v2871
        %v3864 = vpack.c.b16 %v2880, %v2872
        %v3865 = vpack.c.b16 %v2881, %v2873
        %v3866 = vpack.c.b16 %v2890, %v2882
        %v3867 = vpack.c.b16 %v2891, %v2883
        %v3868 = vpack.c.b16 %v2892, %v2884
        %v3869 = vpack.c.b16 %v2893, %v2885
        %v3870 = vpack.c.b16 %v2894, %v2886
        %v3871 = vpack.c.b16 %v2895, %v2887
        %v3872 = vpack.c.b16 %v2896, %v2888
        %v3873 = vpack.c.b16 %v2897, %v2889
        %v3874 = vpack.c.b16 %v2906, %v2898
        %v3875 = vpack.c.b16 %v2907, %v2899
        %v3876 = vpack.c.b16 %v2908, %v2900
        %v3877 = vpack.c.b16 %v2909, %v2901
        %v3878 = vpack.c.b16 %v2910, %v2902
        %v3879 = vpack.c.b16 %v2911, %v2903
        %v3880 = vpack.c.b16 %v2912, %v2904
        %v3881 = vpack.c.b16 %v2913, %v2905
        %v3882 = vpack.c.b16 %v2922, %v2914
        %v3883 = vpack.c.b16 %v2923, %v2915
        %v3884 = vpack.c.b16 %v2924, %v2916
        %v3885 = vpack.c.b16 %v2925, %v2917
        %v3886 = vpack.c.b16 %v2926, %v2918
        %v3887 = vpack.c.b16 %v2927, %v2919
        %v3888 = vpack.c.b16 %v2928, %v2920
        %v3889 = vpack.c.b16 %v2929, %v2921
        %v3890 = vpack.c.b16 %v2938, %v2930
        %v3891 = vpack.c.b16 %v2939, %v2931
        %v3892 = vpack.c.b16 %v2940, %v2932
        %v3893 = vpack.c.b16 %v2941, %v2933
        %v3894 = vpack.c.b16 %v2942, %v2934
        %v3895 = vpack.c.b16 %v2943, %v2935
        %v3896 = vpack.c.b16 %v2944, %v2936
        %v3897 = vpack.c.b16 %v2945, %v2937
        %v3898 = vpack.c.b16 %v2954, %v2946
        %v3899 = vpack.c.b16 %v2955, %v2947
        %v3900 = vpack.c.b16 %v2956, %v2948
        %v3901 = vpack.c.b16 %v2957, %v2949
        %v3902 = vpack.c.b16 %v2958, %v2950
        %v3903 = vpack.c.b16 %v2959, %v2951
        %v3904 = vpack.c.b16 %v2960, %v2952
        %v3905 = vpack.c.b16 %v2961, %v2953
        %v3906 = vpack.c.b16 %v2970, %v2962
        %v3907 = vpack.c.b16 %v2971, %v2963
        %v3908 = vpack.c.b16 %v2972, %v2964
        %v3909 = vpack.c.b16 %v2973, %v2965
        %v3910 = vpack.c.b16 %v2974, %v2966
        %v3911 = vpack.c.b16 %v2975, %v2967
        %v3912 = vpack.c.b16 %v2976, %v2968
        %v3913 = vpack.c.b16 %v2977, %v2969
        %v3914 = vpack.c.b16 %v2986, %v2978
        %v3915 = vpack.c.b16 %v2987, %v2979
        %v3916 = vpack.c.b16 %v2988, %v2980
        %v3917 = vpack.c.b16 %v2989, %v2981
        %v3918 = vpack.c.b16 %v2990, %v2982
        %v3919 = vpack.c.b16 %v2991, %v2983
        %v3920 = vpack.c.b16 %v2992, %v2984
        %v3921 = vpack.c.b16 %v2993, %v2985
        %v3922 = vpack.c.b16 %v3002, %v2994
        %v3923 = vpack.c.b16 %v3003, %v2995
        %v3924 = vpack.c.b16 %v3004, %v2996
        %v3925 = vpack.c.b16 %v3005, %v2997
        %v3926 = vpack.c.b16 %v3006, %v2998
        %v3927 = vpack.c.b16 %v3007, %v2999
        %v3928 = vpack.c.b16 %v3008, %v3000
        %v3929 = vpack.c.b16 %v3009, %v3001
        %v3930 = vpack.c.b16 %v3018, %v3010
        %v3931 = vpack.c.b16 %v3019, %v3011
        %v3932 = vpack.c.b16 %v3020, %v3012
        %v3933 = vpack.c.b16 %v3021, %v3013
        %v3934 = vpack.c.b16 %v3022, %v3014
        %v3935 = vpack.c.b16 %v3023, %v3015
        %v3936 = vpack.c.b16 %v3024, %v3016
        %v3937 = vpack.c.b16 %v3025, %v3017
        %v3938 = vpack.c.b16 %v3034, %v3026
        %v3939 = vpack.c.b16 %v3035, %v3027
        %v3940 = vpack.c.b16 %v3036, %v3028
        %v3941 = vpack.c.b16 %v3037, %v3029
        %v3942 = vpack.c.b16 %v3038, %v3030
        %v3943 = vpack.c.b16 %v3039, %v3031
        %v3944 = vpack.c.b16 %v3040, %v3032
        %v3945 = vpack.c.b16 %v3041, %v3033
        %v3946 = vpack.c.b16 %v3050, %v3042
        %v3947 = vpack.c.b16 %v3051, %v3043
        %v3948 = vpack.c.b16 %v3052, %v3044
        %v3949 = vpack.c.b16 %v3053, %v3045
        %v3950 = vpack.c.b16 %v3054, %v3046
        %v3951 = vpack.c.b16 %v3055, %v3047
        %v3952 = vpack.c.b16 %v3056, %v3048
        %v3953 = vpack.c.b16 %v3057, %v3049
        %v3954 = vpack.c.b16 %v3066, %v3058
        %v3955 = vpack.c.b16 %v3067, %v3059
        %v3956 = vpack.c.b16 %v3068, %v3060
        %v3957 = vpack.c.b16 %v3069, %v3061
        %v3958 = vpack.c.b16 %v3070, %v3062
        %v3959 = vpack.c.b16 %v3071, %v3063
        %v3960 = vpack.c.b16 %v3072, %v3064
        %v3961 = vpack.c.b16 %v3073, %v3065
        %v3962 = vpack.c.b16 %v3082, %v3074
        %v3963 = vpack.c.b16 %v3083, %v3075
        %v3964 = vpack.c.b16 %v3084, %v3076
        %v3965 = vpack.c.b16 %v3085, %v3077
        %v3966 = vpack.c.b16 %v3086, %v3078
        %v3967 = vpack.c.b16 %v3087, %v3079
        %v3968 = vpack.c.b16 %v3088, %v3080
        %v3969 = vpack.c.b16 %v3089, %v3081
        %v3970 = vpack.c.b16 %v3098, %v3090
        %v3971 = vpack.c.b16 %v3099, %v3091
        %v3972 = vpack.c.b16 %v3100, %v3092
        %v3973 = vpack.c.b16 %v3101, %v3093
        %v3974 = vpack.c.b16 %v3102, %v3094
        %v3975 = vpack.c.b16 %v3103, %v3095
        %v3976 = vpack.c.b16 %v3104, %v3096
        %v3977 = vpack.c.b16 %v3105, %v3097
        %v3978 = vpack.c.b16 %v3114, %v3106
        %v3979 = vpack.c.b16 %v3115, %v3107
        %v3980 = vpack.c.b16 %v3116, %v3108
        %v3981 = vpack.c.b16 %v3117, %v3109
        %v3982 = vpack.c.b16 %v3118, %v3110
        %v3983 = vpack.c.b16 %v3119, %v3111
        %v3984 = vpack.c.b16 %v3120, %v3112
        %v3985 = vpack.c.b16 %v3121, %v3113
        %v3986 = vpack.c.b16 %v3130, %v3122
        %v3987 = vpack.c.b16 %v3131, %v3123
        %v3988 = vpack.c.b16 %v3132, %v3124
        %v3989 = vpack.c.b16 %v3133, %v3125
        %v3990 = vpack.c.b16 %v3134, %v3126
        %v3991 = vpack.c.b16 %v3135, %v3127
        %v3992 = vpack.c.b16 %v3136, %v3128
        %v3993 = vpack.c.b16 %v3137, %v3129
        %v3994 = vpack.c.b16 %v3146, %v3138
        %v3995 = vpack.c.b16 %v3147, %v3139
        %v3996 = vpack.c.b16 %v3148, %v3140
        %v3997 = vpack.c.b16 %v3149, %v3141
        %v3998 = vpack.c.b16 %v3150, %v3142
        %v3999 = vpack.c.b16 %v3151, %v3143
        %v4000 = vpack.c.b16 %v3152, %v3144
        %v4001 = vpack.c.b16 %v3153, %v3145
        %v4002 = vpack.c.b16 %v3162, %v3154
        %v4003 = vpack.c.b16 %v3163, %v3155
        %v4004 = vpack.c.b16 %v3164, %v3156
        %v4005 = vpack.c.b16 %v3165, %v3157
        %v4006 = vpack.c.b16 %v3166, %v3158
        %v4007 = vpack.c.b16 %v3167, %v3159
        %v4008 = vpack.c.b16 %v3168, %v3160
        %v4009 = vpack.c.b16 %v3169, %v3161
        %v4010 = vpack.c.b16 %v3178, %v3170
        %v4011 = vpack.c.b16 %v3179, %v3171
        %v4012 = vpack.c.b16 %v3180, %v3172
        %v4013 = vpack.c.b16 %v3181, %v3173
        %v4014 = vpack.c.b16 %v3182, %v3174
        %v4015 = vpack.c.b16 %v3183, %v3175
        %v4016 = vpack.c.b16 %v3184, %v3176
        %v4017 = vpack.c.b16 %v3185, %v3177
        %v4018 = vpack.c.b16 %v3194, %v3186
        %v4019 = vpack.c.b16 %v3195, %v3187
        %v4020 = vpack.c.b16 %v3196, %v3188
        %v4021 = vpack.c.b16 %v3197, %v3189
        %v4022 = vpack.c.b16 %v3198, %v3190
        %v4023 = vpack.c.b16 %v3199, %v3191
        %v4024 = vpack.c.b16 %v3200, %v3192
        %v4025 = vpack.c.b16 %v3201, %v3193
        %v4026 = vpack.c.b16 %v3210, %v3202
        %v4027 = vpack.c.b16 %v3211, %v3203
        %v4028 = vpack.c.b16 %v3212, %v3204
        %v4029 = vpack.c.b16 %v3213, %v3205
        %v4030 = vpack.c.b16 %v3214, %v3206
        %v4031 = vpack.c.b16 %v3215, %v3207
        %v4032 = vpack.c.b16 %v3216, %v3208
        %v4033 = vpack.c.b16 %v3217, %v3209
        %v4034 = vpack.c.b16 %v3226, %v3218
        %v4035 = vpack.c.b16 %v3227, %v3219
        %v4036 = vpack.c.b16 %v3228, %v3220
        %v4037 = vpack.c.b16 %v3229, %v3221
        %v4038 = vpack.c.b16 %v3230, %v3222
        %v4039 = vpack.c.b16 %v3231, %v3223
        %v4040 = vpack.c.b16 %v3232, %v3224
        %v4041 = vpack.c.b16 %v3233, %v3225
        %v4042 = vpack.c.b16 %v3242, %v3234
        %v4043 = vpack.c.b16 %v3243, %v3235
        %v4044 = vpack.c.b16 %v3244, %v3236
        %v4045 = vpack.c.b16 %v3245, %v3237
        %v4046 = vpack.c.b16 %v3246, %v3238
        %v4047 = vpack.c.b16 %v3247, %v3239
        %v4048 = vpack.c.b16 %v3248, %v3240
        %v4049 = vpack.c.b16 %v3249, %v3241
        %v4050 = vpack.c.b16 %v3258, %v3250
        %v4051 = vpack.c.b16 %v3259, %v3251
        %v4052 = vpack.c.b16 %v3260, %v3252
        %v4053 = vpack.c.b16 %v3261, %v3253
        %v4054 = vpack.c.b16 %v3262, %v3254
        %v4055 = vpack.c.b16 %v3263, %v3255
        %v4056 = vpack.c.b16 %v3264, %v3256
        %v4057 = vpack.c.b16 %v3265, %v3257
        %v4058 = vpack.c.b16 %v3274, %v3266
        %v4059 = vpack.c.b16 %v3275, %v3267
        %v4060 = vpack.c.b16 %v3276, %v3268
        %v4061 = vpack.c.b16 %v3277, %v3269
        %v4062 = vpack.c.b16 %v3278, %v3270
        %v4063 = vpack.c.b16 %v3279, %v3271
        %v4064 = vpack.c.b16 %v3280, %v3272
        %v4065 = vpack.c.b16 %v3281, %v3273
        %v4066 = vpack.c.b16 %v3290, %v3282
        %v4067 = vpack.c.b16 %v3291, %v3283
        %v4068 = vpack.c.b16 %v3292, %v3284
        %v4069 = vpack.c.b16 %v3293, %v3285
        %v4070 = vpack.c.b16 %v3294, %v3286
        %v4071 = vpack.c.b16 %v3295, %v3287
        %v4072 = vpack.c.b16 %v3296, %v3288
        %v4073 = vpack.c.b16 %v3297, %v3289
        %v4074 = vpack.c.b16 %v3306, %v3298
        %v4075 = vpack.c.b16 %v3307, %v3299
        %v4076 = vpack.c.b16 %v3308, %v3300
        %v4077 = vpack.c.b16 %v3309, %v3301
        %v4078 = vpack.c.b16 %v3310, %v3302
        %v4079 = vpack.c.b16 %v3311, %v3303
        %v4080 = vpack.c.b16 %v3312, %v3304
        %v4081 = vpack.c.b16 %v3313, %v3305
        %v4082 = vpack.c.b16 %v3322, %v3314
        %v4083 = vpack.c.b16 %v3323, %v3315
        %v4084 = vpack.c.b16 %v3324, %v3316
        %v4085 = vpack.c.b16 %v3325, %v3317
        %v4086 = vpack.c.b16 %v3326, %v3318
        %v4087 = vpack.c.b16 %v3327, %v3319
        %v4088 = vpack.c.b16 %v3328, %v3320
        %v4089 = vpack.c.b16 %v3329, %v3321
        %v4090 = vpack.c.b16 %v3338, %v3330
        %v4091 = vpack.c.b16 %v3339, %v3331
        %v4092 = vpack.c.b16 %v3340, %v3332
        %v4093 = vpack.c.b16 %v3341, %v3333
        %v4094 = vpack.c.b16 %v3342, %v3334
        %v4095 = vpack.c.b16 %v3343, %v3335
        %v4096 = vpack.c.b16 %v3344, %v3336
        %v4097 = vpack.c.b16 %v3345, %v3337
        %v4098 = vpack.c.b16 %v3354, %v3346
        %v4099 = vpack.c.b16 %v3355, %v3347
        %v4100 = vpack.c.b16 %v3356, %v3348
        %v4101 = vpack.c.b16 %v3357, %v3349
        %v4102 = vpack.c.b16 %v3358, %v3350
        %v4103 = vpack.c.b16 %v3359, %v3351
        %v4104 = vpack.c.b16 %v3360, %v3352
        %v4105 = vpack.c.b16 %v3361, %v3353
        %v4106 = vpack.c.b16 %v3370, %v3362
        %v4107 = vpack.c.b16 %v3371, %v3363
        %v4108 = vpack.c.b16 %v3372, %v3364
        %v4109 = vpack.c.b16 %v3373, %v3365
        %v4110 = vpack.c.b16 %v3374, %v3366
        %v4111 = vpack.c.b16 %v3375, %v3367
        %v4112 = vpack.c.b16 %v3376, %v3368
        %v4113 = vpack.c.b16 %v3377, %v3369
        %v4114 = vpack.c.b16 %v3386, %v3378
        %v4115 = vpack.c.b16 %v3387, %v3379
        %v4116 = vpack.c.b16 %v3388, %v3380
        %v4117 = vpack.c.b16 %v3389, %v3381
        %v4118 = vpack.c.b16 %v3390, %v3382
        %v4119 = vpack.c.b16 %v3391, %v3383
        %v4120 = vpack.c.b16 %v3392, %v3384
        %v4121 = vpack.c.b16 %v3393, %v3385
        %v4122 = vpack.c.b16 %v3402, %v3394
        %v4123 = vpack.c.b16 %v3403, %v3395
        %v4124 = vpack.c.b16 %v3404, %v3396
        %v4125 = vpack.c.b16 %v3405, %v3397
        %v4126 = vpack.c.b16 %v3406, %v3398
        %v4127 = vpack.c.b16 %v3407, %v3399
        %v4128 = vpack.c.b16 %v3408, %v3400
        %v4129 = vpack.c.b16 %v3409, %v3401
        %v4130 = vpack.c.b16 %v3418, %v3410
        %v4131 = vpack.c.b16 %v3419, %v3411
        %v4132 = vpack.c.b16 %v3420, %v3412
        %v4133 = vpack.c.b16 %v3421, %v3413
        %v4134 = vpack.c.b16 %v3422, %v3414
        %v4135 = vpack.c.b16 %v3423, %v3415
        %v4136 = vpack.c.b16 %v3424, %v3416
        %v4137 = vpack.c.b16 %v3425, %v3417
        %v4138 = vpack.c.b16 %v3434, %v3426
        %v4139 = vpack.c.b16 %v3435, %v3427
        %v4140 = vpack.c.b16 %v3436, %v3428
        %v4141 = vpack.c.b16 %v3437, %v3429
        %v4142 = vpack.c.b16 %v3438, %v3430
        %v4143 = vpack.c.b16 %v3439, %v3431
        %v4144 = vpack.c.b16 %v3440, %v3432
        %v4145 = vpack.c.b16 %v3441, %v3433
        %v4146 = vpack.c.b16 %v3450, %v3442
        %v4147 = vpack.c.b16 %v3451, %v3443
        %v4148 = vpack.c.b16 %v3452, %v3444
        %v4149 = vpack.c.b16 %v3453, %v3445
        %v4150 = vpack.c.b16 %v3454, %v3446
        %v4151 = vpack.c.b16 %v3455, %v3447
        %v4152 = vpack.c.b16 %v3456, %v3448
        %v4153 = vpack.c.b16 %v3457, %v3449
        %v4154 = vpack.c.b16 %v3466, %v3458
        %v4155 = vpack.c.b16 %v3467, %v3459
        %v4156 = vpack.c.b16 %v3468, %v3460
        %v4157 = vpack.c.b16 %v3469, %v3461
        %v4158 = vpack.c.b16 %v3470, %v3462
        %v4159 = vpack.c.b16 %v3471, %v3463
        %v4160 = vpack.c.b16 %v3472, %v3464
        %v4161 = vpack.c.b16 %v3473, %v3465
        %v4162 = vpack.c.b16 %v3482, %v3474
        %v4163 = vpack.c.b16 %v3483, %v3475
        %v4164 = vpack.c.b16 %v3484, %v3476
        %v4165 = vpack.c.b16 %v3485, %v3477
        %v4166 = vpack.c.b16 %v3486, %v3478
        %v4167 = vpack.c.b16 %v3487, %v3479
        %v4168 = vpack.c.b16 %v3488, %v3480
        %v4169 = vpack.c.b16 %v3489, %v3481
        %v4170 = vpack.c.b16 %v3498, %v3490
        %v4171 = vpack.c.b16 %v3499, %v3491
        %v4172 = vpack.c.b16 %v3500, %v3492
        %v4173 = vpack.c.b16 %v3501, %v3493
        %v4174 = vpack.c.b16 %v3502, %v3494
        %v4175 = vpack.c.b16 %v3503, %v3495
        %v4176 = vpack.c.b16 %v3504, %v3496
        %v4177 = vpack.c.b16 %v3505, %v3497
        %v4178 = vpack.c.b16 %v3514, %v3506
        %v4179 = vpack.c.b16 %v3515, %v3507
        %v4180 = vpack.c.b16 %v3516, %v3508
        %v4181 = vpack.c.b16 %v3517, %v3509
        %v4182 = vpack.c.b16 %v3518, %v3510
        %v4183 = vpack.c.b16 %v3519, %v3511
        %v4184 = vpack.c.b16 %v3520, %v3512
        %v4185 = vpack.c.b16 %v3521, %v3513
        %v4186 = vpack.c.b16 %v3530, %v3522
        %v4187 = vpack.c.b16 %v3531, %v3523
        %v4188 = vpack.c.b16 %v3532, %v3524
        %v4189 = vpack.c.b16 %v3533, %v3525
        %v4190 = vpack.c.b16 %v3534, %v3526
        %v4191 = vpack.c.b16 %v3535, %v3527
        %v4192 = vpack.c.b16 %v3536, %v3528
        %v4193 = vpack.c.b16 %v3537, %v3529
        %v4194 = vpack.c.b16 %v3546, %v3538
        %v4195 = vpack.c.b16 %v3547, %v3539
        %v4196 = vpack.c.b16 %v3548, %v3540
        %v4197 = vpack.c.b16 %v3549, %v3541
        %v4198 = vpack.c.b16 %v3550, %v3542
        %v4199 = vpack.c.b16 %v3551, %v3543
        %v4200 = vpack.c.b16 %v3552, %v3544
        %v4201 = vpack.c.b16 %v3553, %v3545
        %v4202 = vpack.c.b16 %v3562, %v3554
        %v4203 = vpack.c.b16 %v3563, %v3555
        %v4204 = vpack.c.b16 %v3564, %v3556
        %v4205 = vpack.c.b16 %v3565, %v3557
        %v4206 = vpack.c.b16 %v3566, %v3558
        %v4207 = vpack.c.b16 %v3567, %v3559
        %v4208 = vpack.c.b16 %v3568, %v3560
        %v4209 = vpack.c.b16 %v3569, %v3561
        %v4210 = vpack.c.b16 %v3578, %v3570
        %v4211 = vpack.c.b16 %v3579, %v3571
        %v4212 = vpack.c.b16 %v3580, %v3572
        %v4213 = vpack.c.b16 %v3581, %v3573
        %v4214 = vpack.c.b16 %v3582, %v3574
        %v4215 = vpack.c.b16 %v3583, %v3575
        %v4216 = vpack.c.b16 %v3584, %v3576
        %v4217 = vpack.c.b16 %v3585, %v3577
        %v4218 = vpack.c.b16 %v3594, %v3586
        %v4219 = vpack.c.b16 %v3595, %v3587
        %v4220 = vpack.c.b16 %v3596, %v3588
        %v4221 = vpack.c.b16 %v3597, %v3589
        %v4222 = vpack.c.b16 %v3598, %v3590
        %v4223 = vpack.c.b16 %v3599, %v3591
        %v4224 = vpack.c.b16 %v3600, %v3592
        %v4225 = vpack.c.b16 %v3601, %v3593
        %v4226 = vpack.c.b16 %v3610, %v3602
        %v4227 = vpack.c.b16 %v3611, %v3603
        %v4228 = vpack.c.b16 %v3612, %v3604
        %v4229 = vpack.c.b16 %v3613, %v3605
        %v4230 = vpack.c.b16 %v3614, %v3606
        %v4231 = vpack.c.b16 %v3615, %v3607
        %v4232 = vpack.c.b16 %v3616, %v3608
        %v4233 = vpack.c.b16 %v3617, %v3609
        %v4234 = vpack.c.b16 %v3626, %v3618
        %v4235 = vpack.c.b16 %v3627, %v3619
        %v4236 = vpack.c.b16 %v3628, %v3620
        %v4237 = vpack.c.b16 %v3629, %v3621
        %v4238 = vpack.c.b16 %v3630, %v3622
        %v4239 = vpack.c.b16 %v3631, %v3623
        %v4240 = vpack.c.b16 %v3632, %v3624
        %v4241 = vpack.c.b16 %v3633, %v3625
        %v4242 = vpack.c.b16 %v3642, %v3634
        %v4243 = vpack.c.b16 %v3643, %v3635
        %v4244 = vpack.c.b16 %v3644, %v3636
        %v4245 = vpack.c.b16 %v3645, %v3637
        %v4246 = vpack.c.b16 %v3646, %v3638
        %v4247 = vpack.c.b16 %v3647, %v3639
        %v4248 = vpack.c.b16 %v3648, %v3640
        %v4249 = vpack.c.b16 %v3649, %v3641
        %v4250 = vpack.c.b16 %v3658, %v3650
        %v4251 = vpack.c.b16 %v3659, %v3651
        %v4252 = vpack.c.b16 %v3660, %v3652
        %v4253 = vpack.c.b16 %v3661, %v3653
        %v4254 = vpack.c.b16 %v3662, %v3654
        %v4255 = vpack.c.b16 %v3663, %v3655
        %v4256 = vpack.c.b16 %v3664, %v3656
        %v4257 = vpack.c.b16 %v3665, %v3657
        %v4258 = vpack.c.b16 %v3674, %v3666
        %v4259 = vpack.c.b16 %v3675, %v3667
        %v4260 = vpack.c.b16 %v3676, %v3668
        %v4261 = vpack.c.b16 %v3677, %v3669
        %v4262 = vpack.c.b16 %v3678, %v3670
        %v4263 = vpack.c.b16 %v3679, %v3671
        %v4264 = vpack.c.b16 %v3680, %v3672
        %v4265 = vpack.c.b16 %v3681, %v3673
        %v4266 = vpack.c.b16 %v3690, %v3682
        %v4267 = vpack.c.b16 %v3691, %v3683
        %v4268 = vpack.c.b16 %v3692, %v3684
        %v4269 = vpack.c.b16 %v3693, %v3685
        %v4270 = vpack.c.b16 %v3694, %v3686
        %v4271 = vpack.c.b16 %v3695, %v3687
        %v4272 = vpack.c.b16 %v3696, %v3688
        %v4273 = vpack.c.b16 %v3697, %v3689
        %v4274 = vpack.c.b16 %v3706, %v3698
        %v4275 = vpack.c.b16 %v3707, %v3699
        %v4276 = vpack.c.b16 %v3708, %v3700
        %v4277 = vpack.c.b16 %v3709, %v3701
        %v4278 = vpack.c.b16 %v3710, %v3702
        %v4279 = vpack.c.b16 %v3711, %v3703
        %v4280 = vpack.c.b16 %v3712, %v3704
        %v4281 = vpack.c.b16 %v3713, %v3705
        %v4282 = vpack.c.b16 %v3722, %v3714
        %v4283 = vpack.c.b16 %v3723, %v3715
        %v4284 = vpack.c.b16 %v3724, %v3716
        %v4285 = vpack.c.b16 %v3725, %v3717
        %v4286 = vpack.c.b16 %v3726, %v3718
        %v4287 = vpack.c.b16 %v3727, %v3719
        %v4288 = vpack.c.b16 %v3728, %v3720
        %v4289 = vpack.c.b16 %v3729, %v3721
        %v4290 = vpack.c.b16 %v3738, %v3730
        %v4291 = vpack.c.b16 %v3739, %v3731
        %v4292 = vpack.c.b16 %v3740, %v3732
        %v4293 = vpack.c.b16 %v3741, %v3733
        %v4294 = vpack.c.b16 %v3742, %v3734
        %v4295 = vpack.c.b16 %v3743, %v3735
        %v4296 = vpack.c.b16 %v3744, %v3736
        %v4297 = vpack.c.b16 %v3745, %v3737
        %v4298 = vpack.c.b16 %v3754, %v3746
        %v4299 = vpack.c.b16 %v3755, %v3747
        %v4300 = vpack.c.b16 %v3756, %v3748
        %v4301 = vpack.c.b16 %v3757, %v3749
        %v4302 = vpack.c.b16 %v3758, %v3750
        %v4303 = vpack.c.b16 %v3759, %v3751
        %v4304 = vpack.c.b16 %v3760, %v3752
        %v4305 = vpack.c.b16 %v3761, %v3753
        %v4306 = vpack.c.b16 %v3770, %v3762
        %v4307 = vpack.c.b16 %v3771, %v3763
        %v4308 = vpack.c.b16 %v3772, %v3764
        %v4309 = vpack.c.b16 %v3773, %v3765
        %v4310 = vpack.c.b16 %v3774, %v3766
        %v4311 = vpack.c.b16 %v3775, %v3767
        %v4312 = vpack.c.b16 %v3776, %v3768
        %v4313 = vpack.c.b16 %v3777, %v3769
        %v4314 = vpack.c.b16 %v3786, %v3778
        %v4315 = vpack.c.b16 %v3787, %v3779
        %v4316 = vpack.c.b16 %v3788, %v3780
        %v4317 = vpack.c.b16 %v3789, %v3781
        %v4318 = vpack.c.b16 %v3790, %v3782
        %v4319 = vpack.c.b16 %v3791, %v3783
        %v4320 = vpack.c.b16 %v3792, %v3784
        %v4321 = vpack.c.b16 %v3793, %v3785
        %v4322 = vpack.c.b16 %v3802, %v3794
        %v4323 = vpack.c.b16 %v3803, %v3795
        %v4324 = vpack.c.b16 %v3804, %v3796
        %v4325 = vpack.c.b16 %v3805, %v3797
        %v4326 = vpack.c.b16 %v3806, %v3798
        %v4327 = vpack.c.b16 %v3807, %v3799
        %v4328 = vpack.c.b16 %v3808, %v3800
        %v4329 = vpack.c.b16 %v3809, %v3801
        %v4330 = vpack.c.b16 %v3818, %v3810
        %v4331 = vpack.c.b16 %v3819, %v3811
        %v4332 = vpack.c.b16 %v3820, %v3812
        %v4333 = vpack.c.b16 %v3821, %v3813
        %v4334 = vpack.c.b16 %v3822, %v3814
        %v4335 = vpack.c.b16 %v3823, %v3815
        %v4336 = vpack.c.b16 %v3824, %v3816
        %v4337 = vpack.c.b16 %v3825, %v3817
        %4850 = vmatpush.bf16.msra.mxu0 %v3882
        %4851 = vmatpush.bf16.msra.mxu0 %v3874
        %4852 = vmatpush.bf16.msra.mxu0 %v3866
        %4853 = vmatpush.bf16.msra.mxu0 %v3858
        %4854 = vmatpush.bf16.msra.mxu0 %v3850
        %4855 = vmatpush.bf16.msra.mxu0 %v3842
        %4856 = vmatpush.bf16.msra.mxu0 %v3834
        %4857 = vmatpush.bf16.msra.mxu0 %v3826
        %4858 = vmatmul.bf16.gmra.mxu0 %v1632
        %v4859 = vpop.f32.mrf.mxu0
        %v4860 = vadd.f32 %v2274, %v4859
        %v4861 = vpop.f32.mrf.mxu0
        %v4862 = vadd.f32 %v2274, %v4861
        %4863 = vmatmul.bf16.gmra.mxu0 %v1640
        %v4864 = vpop.f32.mrf.mxu0
        %v4865 = vadd.f32 %v2274, %v4864
        %v4866 = vpop.f32.mrf.mxu0
        %v4867 = vadd.f32 %v2274, %v4866
        %4868 = vmatmul.bf16.gmra.mxu0 %v1648
        %v4869 = vpop.f32.mrf.mxu0
        %v4870 = vadd.f32 %v2274, %v4869
        %v4871 = vpop.f32.mrf.mxu0
        %v4872 = vadd.f32 %v2274, %v4871
        %4873 = vmatmul.bf16.gmra.mxu0 %v1656
        %v4874 = vpop.f32.mrf.mxu0
        %v4875 = vadd.f32 %v2274, %v4874
        %v4876 = vpop.f32.mrf.mxu0
        %v4877 = vadd.f32 %v2274, %v4876
        %4878 = vmatmul.bf16.gmra.mxu0 %v1664
        %v4879 = vpop.f32.mrf.mxu0
        %v4880 = vadd.f32 %v2274, %v4879
        %v4881 = vpop.f32.mrf.mxu0
        %v4882 = vadd.f32 %v2274, %v4881
        %4883 = vmatmul.bf16.gmra.mxu0 %v1672
        %v4884 = vpop.f32.mrf.mxu0
        %v4885 = vadd.f32 %v2274, %v4884
        %v4886 = vpop.f32.mrf.mxu0
        %v4887 = vadd.f32 %v2274, %v4886
        %4888 = vmatmul.bf16.gmra.mxu0 %v1680
        %v4889 = vpop.f32.mrf.mxu0
        %v4890 = vadd.f32 %v2274, %v4889
        %v4891 = vpop.f32.mrf.mxu0
        %v4892 = vadd.f32 %v2274, %v4891
        %4893 = vmatmul.bf16.gmra.mxu0 %v1688
        %v4894 = vpop.f32.mrf.mxu0
        %v4895 = vadd.f32 %v2274, %v4894
        %v4896 = vpop.f32.mrf.mxu0
        %v4897 = vadd.f32 %v2274, %v4896
        %4898 = vmatmul.bf16.gmra.mxu0 %v1696
        %v4899 = vpop.f32.mrf.mxu0
        %v4900 = vadd.f32 %v2274, %v4899
        %v4901 = vpop.f32.mrf.mxu0
        %v4902 = vadd.f32 %v2274, %v4901
        %4903 = vmatmul.bf16.gmra.mxu0 %v1704
        %v4904 = vpop.f32.mrf.mxu0
        %v4905 = vadd.f32 %v2274, %v4904
        %v4906 = vpop.f32.mrf.mxu0
        %v4907 = vadd.f32 %v2274, %v4906
        %4908 = vmatmul.bf16.gmra.mxu0 %v1712
        %v4909 = vpop.f32.mrf.mxu0
        %v4910 = vadd.f32 %v2274, %v4909
        %v4911 = vpop.f32.mrf.mxu0
        %v4912 = vadd.f32 %v2274, %v4911
        %4913 = vmatmul.bf16.gmra.mxu0 %v1720
        %v4914 = vpop.f32.mrf.mxu0
        %v4915 = vadd.f32 %v2274, %v4914
        %v4916 = vpop.f32.mrf.mxu0
        %v4917 = vadd.f32 %v2274, %v4916
        %4918 = vmatmul.bf16.gmra.mxu0 %v1728
        %v4919 = vpop.f32.mrf.mxu0
        %v4920 = vadd.f32 %v2274, %v4919
        %v4921 = vpop.f32.mrf.mxu0
        %v4922 = vadd.f32 %v2274, %v4921
        %4923 = vmatmul.bf16.gmra.mxu0 %v1736
        %v4924 = vpop.f32.mrf.mxu0
        %v4925 = vadd.f32 %v2274, %v4924
        %v4926 = vpop.f32.mrf.mxu0
        %v4927 = vadd.f32 %v2274, %v4926
        %4928 = vmatmul.bf16.gmra.mxu0 %v1744
        %v4929 = vpop.f32.mrf.mxu0
        %v4930 = vadd.f32 %v2274, %v4929
        %v4931 = vpop.f32.mrf.mxu0
        %v4932 = vadd.f32 %v2274, %v4931
        %4933 = vmatmul.bf16.gmra.mxu0 %v1752
        %v4934 = vpop.f32.mrf.mxu0
        %v4935 = vadd.f32 %v2274, %v4934
        %v4936 = vpop.f32.mrf.mxu0
        %v4937 = vadd.f32 %v2274, %v4936
        %4938 = vdwg.mxu0
        %4939 = vmatpush.bf16.msra.mxu0 %v3946
        %4940 = vmatpush.bf16.msra.mxu0 %v3938
        %4941 = vmatpush.bf16.msra.mxu0 %v3930
        %4942 = vmatpush.bf16.msra.mxu0 %v3922
        %4943 = vmatpush.bf16.msra.mxu0 %v3914
        %4944 = vmatpush.bf16.msra.mxu0 %v3906
        %4945 = vmatpush.bf16.msra.mxu0 %v3898
        %4946 = vmatpush.bf16.msra.mxu0 %v3890
        %4947 = vmatmul.bf16.gmra.mxu0 %v1633
        %v4948 = vpop.f32.mrf.mxu0
        %v4949 = vadd.f32 %v4860, %v4948
        %v4950 = vpop.f32.mrf.mxu0
        %v4951 = vadd.f32 %v4862, %v4950
        %4952 = vmatmul.bf16.gmra.mxu0 %v1641
        %v4953 = vpop.f32.mrf.mxu0
        %v4954 = vadd.f32 %v4865, %v4953
        %v4955 = vpop.f32.mrf.mxu0
        %v4956 = vadd.f32 %v4867, %v4955
        %4957 = vmatmul.bf16.gmra.mxu0 %v1649
        %v4958 = vpop.f32.mrf.mxu0
        %v4959 = vadd.f32 %v4870, %v4958
        %v4960 = vpop.f32.mrf.mxu0
        %v4961 = vadd.f32 %v4872, %v4960
        %4962 = vmatmul.bf16.gmra.mxu0 %v1657
        %v4963 = vpop.f32.mrf.mxu0
        %v4964 = vadd.f32 %v4875, %v4963
        %v4965 = vpop.f32.mrf.mxu0
        %v4966 = vadd.f32 %v4877, %v4965
        %4967 = vmatmul.bf16.gmra.mxu0 %v1665
        %v4968 = vpop.f32.mrf.mxu0
        %v4969 = vadd.f32 %v4880, %v4968
        %v4970 = vpop.f32.mrf.mxu0
        %v4971 = vadd.f32 %v4882, %v4970
        %4972 = vmatmul.bf16.gmra.mxu0 %v1673
        %v4973 = vpop.f32.mrf.mxu0
        %v4974 = vadd.f32 %v4885, %v4973
        %v4975 = vpop.f32.mrf.mxu0
        %v4976 = vadd.f32 %v4887, %v4975
        %4977 = vmatmul.bf16.gmra.mxu0 %v1681
        %v4978 = vpop.f32.mrf.mxu0
        %v4979 = vadd.f32 %v4890, %v4978
        %v4980 = vpop.f32.mrf.mxu0
        %v4981 = vadd.f32 %v4892, %v4980
        %4982 = vmatmul.bf16.gmra.mxu0 %v1689
        %v4983 = vpop.f32.mrf.mxu0
        %v4984 = vadd.f32 %v4895, %v4983
        %v4985 = vpop.f32.mrf.mxu0
        %v4986 = vadd.f32 %v4897, %v4985
        %4987 = vmatmul.bf16.gmra.mxu0 %v1697
        %v4988 = vpop.f32.mrf.mxu0
        %v4989 = vadd.f32 %v4900, %v4988
        %v4990 = vpop.f32.mrf.mxu0
        %v4991 = vadd.f32 %v4902, %v4990
        %4992 = vmatmul.bf16.gmra.mxu0 %v1705
        %v4993 = vpop.f32.mrf.mxu0
        %v4994 = vadd.f32 %v4905, %v4993
        %v4995 = vpop.f32.mrf.mxu0
        %v4996 = vadd.f32 %v4907, %v4995
        %4997 = vmatmul.bf16.gmra.mxu0 %v1713
        %v4998 = vpop.f32.mrf.mxu0
        %v4999 = vadd.f32 %v4910, %v4998
        %v5000 = vpop.f32.mrf.mxu0
        %v5001 = vadd.f32 %v4912, %v5000
        %5002 = vmatmul.bf16.gmra.mxu0 %v1721
        %v5003 = vpop.f32.mrf.mxu0
        %v5004 = vadd.f32 %v4915, %v5003
        %v5005 = vpop.f32.mrf.mxu0
        %v5006 = vadd.f32 %v4917, %v5005
        %5007 = vmatmul.bf16.gmra.mxu0 %v1729
        %v5008 = vpop.f32.mrf.mxu0
        %v5009 = vadd.f32 %v4920, %v5008
        %v5010 = vpop.f32.mrf.mxu0
        %v5011 = vadd.f32 %v4922, %v5010
        %5012 = vmatmul.bf16.gmra.mxu0 %v1737
        %v5013 = vpop.f32.mrf.mxu0
        %v5014 = vadd.f32 %v4925, %v5013
        %v5015 = vpop.f32.mrf.mxu0
        %v5016 = vadd.f32 %v4927, %v5015
        %5017 = vmatmul.bf16.gmra.mxu0 %v1745
        %v5018 = vpop.f32.mrf.mxu0
        %v5019 = vadd.f32 %v4930, %v5018
        %v5020 = vpop.f32.mrf.mxu0
        %v5021 = vadd.f32 %v4932, %v5020
        %5022 = vmatmul.bf16.gmra.mxu0 %v1753
        %v5023 = vpop.f32.mrf.mxu0
        %v5024 = vadd.f32 %v4935, %v5023
        %v5025 = vpop.f32.mrf.mxu0
        %v5026 = vadd.f32 %v4937, %v5025
        %5027 = vdwg.mxu0
        %5028 = vmatpush.bf16.msra.mxu0 %v4010
        %5029 = vmatpush.bf16.msra.mxu0 %v4002
        %5030 = vmatpush.bf16.msra.mxu0 %v3994
        %5031 = vmatpush.bf16.msra.mxu0 %v3986
        %5032 = vmatpush.bf16.msra.mxu0 %v3978
        %5033 = vmatpush.bf16.msra.mxu0 %v3970
        %5034 = vmatpush.bf16.msra.mxu0 %v3962
        %5035 = vmatpush.bf16.msra.mxu0 %v3954
        %5036 = vmatmul.bf16.gmra.mxu0 %v1634
        %v5037 = vpop.f32.mrf.mxu0
        %v5038 = vadd.f32 %v4949, %v5037
        %v5039 = vpop.f32.mrf.mxu0
        %v5040 = vadd.f32 %v4951, %v5039
        %5041 = vmatmul.bf16.gmra.mxu0 %v1642
        %v5042 = vpop.f32.mrf.mxu0
        %v5043 = vadd.f32 %v4954, %v5042
        %v5044 = vpop.f32.mrf.mxu0
        %v5045 = vadd.f32 %v4956, %v5044
        %5046 = vmatmul.bf16.gmra.mxu0 %v1650
        %v5047 = vpop.f32.mrf.mxu0
        %v5048 = vadd.f32 %v4959, %v5047
        %v5049 = vpop.f32.mrf.mxu0
        %v5050 = vadd.f32 %v4961, %v5049
        %5051 = vmatmul.bf16.gmra.mxu0 %v1658
        %v5052 = vpop.f32.mrf.mxu0
        %v5053 = vadd.f32 %v4964, %v5052
        %v5054 = vpop.f32.mrf.mxu0
        %v5055 = vadd.f32 %v4966, %v5054
        %5056 = vmatmul.bf16.gmra.mxu0 %v1666
        %v5057 = vpop.f32.mrf.mxu0
        %v5058 = vadd.f32 %v4969, %v5057
        %v5059 = vpop.f32.mrf.mxu0
        %v5060 = vadd.f32 %v4971, %v5059
        %5061 = vmatmul.bf16.gmra.mxu0 %v1674
        %v5062 = vpop.f32.mrf.mxu0
        %v5063 = vadd.f32 %v4974, %v5062
        %v5064 = vpop.f32.mrf.mxu0
        %v5065 = vadd.f32 %v4976, %v5064
        %5066 = vmatmul.bf16.gmra.mxu0 %v1682
        %v5067 = vpop.f32.mrf.mxu0
        %v5068 = vadd.f32 %v4979, %v5067
        %v5069 = vpop.f32.mrf.mxu0
        %v5070 = vadd.f32 %v4981, %v5069
        %5071 = vmatmul.bf16.gmra.mxu0 %v1690
        %v5072 = vpop.f32.mrf.mxu0
        %v5073 = vadd.f32 %v4984, %v5072
        %v5074 = vpop.f32.mrf.mxu0
        %v5075 = vadd.f32 %v4986, %v5074
        %5076 = vmatmul.bf16.gmra.mxu0 %v1698
        %v5077 = vpop.f32.mrf.mxu0
        %v5078 = vadd.f32 %v4989, %v5077
        %v5079 = vpop.f32.mrf.mxu0
        %v5080 = vadd.f32 %v4991, %v5079
        %5081 = vmatmul.bf16.gmra.mxu0 %v1706
        %v5082 = vpop.f32.mrf.mxu0
        %v5083 = vadd.f32 %v4994, %v5082
        %v5084 = vpop.f32.mrf.mxu0
        %v5085 = vadd.f32 %v4996, %v5084
        %5086 = vmatmul.bf16.gmra.mxu0 %v1714
        %v5087 = vpop.f32.mrf.mxu0
        %v5088 = vadd.f32 %v4999, %v5087
        %v5089 = vpop.f32.mrf.mxu0
        %v5090 = vadd.f32 %v5001, %v5089
        %5091 = vmatmul.bf16.gmra.mxu0 %v1722
        %v5092 = vpop.f32.mrf.mxu0
        %v5093 = vadd.f32 %v5004, %v5092
        %v5094 = vpop.f32.mrf.mxu0
        %v5095 = vadd.f32 %v5006, %v5094
        %5096 = vmatmul.bf16.gmra.mxu0 %v1730
        %v5097 = vpop.f32.mrf.mxu0
        %v5098 = vadd.f32 %v5009, %v5097
        %v5099 = vpop.f32.mrf.mxu0
        %v5100 = vadd.f32 %v5011, %v5099
        %5101 = vmatmul.bf16.gmra.mxu0 %v1738
        %v5102 = vpop.f32.mrf.mxu0
        %v5103 = vadd.f32 %v5014, %v5102
        %v5104 = vpop.f32.mrf.mxu0
        %v5105 = vadd.f32 %v5016, %v5104
        %5106 = vmatmul.bf16.gmra.mxu0 %v1746
        %v5107 = vpop.f32.mrf.mxu0
        %v5108 = vadd.f32 %v5019, %v5107
        %v5109 = vpop.f32.mrf.mxu0
        %v5110 = vadd.f32 %v5021, %v5109
        %5111 = vmatmul.bf16.gmra.mxu0 %v1754
        %v5112 = vpop.f32.mrf.mxu0
        %v5113 = vadd.f32 %v5024, %v5112
        %v5114 = vpop.f32.mrf.mxu0
        %v5115 = vadd.f32 %v5026, %v5114
        %5116 = vdwg.mxu0
        %5117 = vmatpush.bf16.msra.mxu0 %v4074
        %5118 = vmatpush.bf16.msra.mxu0 %v4066
        %5119 = vmatpush.bf16.msra.mxu0 %v4058
        %5120 = vmatpush.bf16.msra.mxu0 %v4050
        %5121 = vmatpush.bf16.msra.mxu0 %v4042
        %5122 = vmatpush.bf16.msra.mxu0 %v4034
        %5123 = vmatpush.bf16.msra.mxu0 %v4026
        %5124 = vmatpush.bf16.msra.mxu0 %v4018
        %5125 = vmatmul.bf16.gmra.mxu0 %v1635
        %v5126 = vpop.f32.mrf.mxu0
        %v5127 = vadd.f32 %v5038, %v5126
        %v5128 = vpop.f32.mrf.mxu0
        %v5129 = vadd.f32 %v5040, %v5128
        %5130 = vmatmul.bf16.gmra.mxu0 %v1643
        %v5131 = vpop.f32.mrf.mxu0
        %v5132 = vadd.f32 %v5043, %v5131
        %v5133 = vpop.f32.mrf.mxu0
        %v5134 = vadd.f32 %v5045, %v5133
        %5135 = vmatmul.bf16.gmra.mxu0 %v1651
        %v5136 = vpop.f32.mrf.mxu0
        %v5137 = vadd.f32 %v5048, %v5136
        %v5138 = vpop.f32.mrf.mxu0
        %v5139 = vadd.f32 %v5050, %v5138
        %5140 = vmatmul.bf16.gmra.mxu0 %v1659
        %v5141 = vpop.f32.mrf.mxu0
        %v5142 = vadd.f32 %v5053, %v5141
        %v5143 = vpop.f32.mrf.mxu0
        %v5144 = vadd.f32 %v5055, %v5143
        %5145 = vmatmul.bf16.gmra.mxu0 %v1667
        %v5146 = vpop.f32.mrf.mxu0
        %v5147 = vadd.f32 %v5058, %v5146
        %v5148 = vpop.f32.mrf.mxu0
        %v5149 = vadd.f32 %v5060, %v5148
        %5150 = vmatmul.bf16.gmra.mxu0 %v1675
        %v5151 = vpop.f32.mrf.mxu0
        %v5152 = vadd.f32 %v5063, %v5151
        %v5153 = vpop.f32.mrf.mxu0
        %v5154 = vadd.f32 %v5065, %v5153
        %5155 = vmatmul.bf16.gmra.mxu0 %v1683
        %v5156 = vpop.f32.mrf.mxu0
        %v5157 = vadd.f32 %v5068, %v5156
        %v5158 = vpop.f32.mrf.mxu0
        %v5159 = vadd.f32 %v5070, %v5158
        %5160 = vmatmul.bf16.gmra.mxu0 %v1691
        %v5161 = vpop.f32.mrf.mxu0
        %v5162 = vadd.f32 %v5073, %v5161
        %v5163 = vpop.f32.mrf.mxu0
        %v5164 = vadd.f32 %v5075, %v5163
        %5165 = vmatmul.bf16.gmra.mxu0 %v1699
        %v5166 = vpop.f32.mrf.mxu0
        %v5167 = vadd.f32 %v5078, %v5166
        %v5168 = vpop.f32.mrf.mxu0
        %v5169 = vadd.f32 %v5080, %v5168
        %5170 = vmatmul.bf16.gmra.mxu0 %v1707
        %v5171 = vpop.f32.mrf.mxu0
        %v5172 = vadd.f32 %v5083, %v5171
        %v5173 = vpop.f32.mrf.mxu0
        %v5174 = vadd.f32 %v5085, %v5173
        %5175 = vmatmul.bf16.gmra.mxu0 %v1715
        %v5176 = vpop.f32.mrf.mxu0
        %v5177 = vadd.f32 %v5088, %v5176
        %v5178 = vpop.f32.mrf.mxu0
        %v5179 = vadd.f32 %v5090, %v5178
        %5180 = vmatmul.bf16.gmra.mxu0 %v1723
        %v5181 = vpop.f32.mrf.mxu0
        %v5182 = vadd.f32 %v5093, %v5181
        %v5183 = vpop.f32.mrf.mxu0
        %v5184 = vadd.f32 %v5095, %v5183
        %5185 = vmatmul.bf16.gmra.mxu0 %v1731
        %v5186 = vpop.f32.mrf.mxu0
        %v5187 = vadd.f32 %v5098, %v5186
        %v5188 = vpop.f32.mrf.mxu0
        %v5189 = vadd.f32 %v5100, %v5188
        %5190 = vmatmul.bf16.gmra.mxu0 %v1739
        %v5191 = vpop.f32.mrf.mxu0
        %v5192 = vadd.f32 %v5103, %v5191
        %v5193 = vpop.f32.mrf.mxu0
        %v5194 = vadd.f32 %v5105, %v5193
        %5195 = vmatmul.bf16.gmra.mxu0 %v1747
        %v5196 = vpop.f32.mrf.mxu0
        %v5197 = vadd.f32 %v5108, %v5196
        %v5198 = vpop.f32.mrf.mxu0
        %v5199 = vadd.f32 %v5110, %v5198
        %5200 = vmatmul.bf16.gmra.mxu0 %v1755
        %v5201 = vpop.f32.mrf.mxu0
        %v5202 = vadd.f32 %v5113, %v5201
        %v5203 = vpop.f32.mrf.mxu0
        %v5204 = vadd.f32 %v5115, %v5203
        %5205 = vdwg.mxu0
        %5206 = vmatpush.bf16.msra.mxu0 %v4138
        %5207 = vmatpush.bf16.msra.mxu0 %v4130
        %5208 = vmatpush.bf16.msra.mxu0 %v4122
        %5209 = vmatpush.bf16.msra.mxu0 %v4114
        %5210 = vmatpush.bf16.msra.mxu0 %v4106
        %5211 = vmatpush.bf16.msra.mxu0 %v4098
        %5212 = vmatpush.bf16.msra.mxu0 %v4090
        %5213 = vmatpush.bf16.msra.mxu0 %v4082
        %5214 = vmatmul.bf16.gmra.mxu0 %v1636
        %v5215 = vpop.f32.mrf.mxu0
        %v5216 = vadd.f32 %v5127, %v5215
        %v5217 = vpop.f32.mrf.mxu0
        %v5218 = vadd.f32 %v5129, %v5217
        %5219 = vmatmul.bf16.gmra.mxu0 %v1644
        %v5220 = vpop.f32.mrf.mxu0
        %v5221 = vadd.f32 %v5132, %v5220
        %v5222 = vpop.f32.mrf.mxu0
        %v5223 = vadd.f32 %v5134, %v5222
        %5224 = vmatmul.bf16.gmra.mxu0 %v1652
        %v5225 = vpop.f32.mrf.mxu0
        %v5226 = vadd.f32 %v5137, %v5225
        %v5227 = vpop.f32.mrf.mxu0
        %v5228 = vadd.f32 %v5139, %v5227
        %5229 = vmatmul.bf16.gmra.mxu0 %v1660
        %v5230 = vpop.f32.mrf.mxu0
        %v5231 = vadd.f32 %v5142, %v5230
        %v5232 = vpop.f32.mrf.mxu0
        %v5233 = vadd.f32 %v5144, %v5232
        %5234 = vmatmul.bf16.gmra.mxu0 %v1668
        %v5235 = vpop.f32.mrf.mxu0
        %v5236 = vadd.f32 %v5147, %v5235
        %v5237 = vpop.f32.mrf.mxu0
        %v5238 = vadd.f32 %v5149, %v5237
        %5239 = vmatmul.bf16.gmra.mxu0 %v1676
        %v5240 = vpop.f32.mrf.mxu0
        %v5241 = vadd.f32 %v5152, %v5240
        %v5242 = vpop.f32.mrf.mxu0
        %v5243 = vadd.f32 %v5154, %v5242
        %5244 = vmatmul.bf16.gmra.mxu0 %v1684
        %v5245 = vpop.f32.mrf.mxu0
        %v5246 = vadd.f32 %v5157, %v5245
        %v5247 = vpop.f32.mrf.mxu0
        %v5248 = vadd.f32 %v5159, %v5247
        %5249 = vmatmul.bf16.gmra.mxu0 %v1692
        %v5250 = vpop.f32.mrf.mxu0
        %v5251 = vadd.f32 %v5162, %v5250
        %v5252 = vpop.f32.mrf.mxu0
        %v5253 = vadd.f32 %v5164, %v5252
        %5254 = vmatmul.bf16.gmra.mxu0 %v1700
        %v5255 = vpop.f32.mrf.mxu0
        %v5256 = vadd.f32 %v5167, %v5255
        %v5257 = vpop.f32.mrf.mxu0
        %v5258 = vadd.f32 %v5169, %v5257
        %5259 = vmatmul.bf16.gmra.mxu0 %v1708
        %v5260 = vpop.f32.mrf.mxu0
        %v5261 = vadd.f32 %v5172, %v5260
        %v5262 = vpop.f32.mrf.mxu0
        %v5263 = vadd.f32 %v5174, %v5262
        %5264 = vmatmul.bf16.gmra.mxu0 %v1716
        %v5265 = vpop.f32.mrf.mxu0
        %v5266 = vadd.f32 %v5177, %v5265
        %v5267 = vpop.f32.mrf.mxu0
        %v5268 = vadd.f32 %v5179, %v5267
        %5269 = vmatmul.bf16.gmra.mxu0 %v1724
        %v5270 = vpop.f32.mrf.mxu0
        %v5271 = vadd.f32 %v5182, %v5270
        %v5272 = vpop.f32.mrf.mxu0
        %v5273 = vadd.f32 %v5184, %v5272
        %5274 = vmatmul.bf16.gmra.mxu0 %v1732
        %v5275 = vpop.f32.mrf.mxu0
        %v5276 = vadd.f32 %v5187, %v5275
        %v5277 = vpop.f32.mrf.mxu0
        %v5278 = vadd.f32 %v5189, %v5277
        %5279 = vmatmul.bf16.gmra.mxu0 %v1740
        %v5280 = vpop.f32.mrf.mxu0
        %v5281 = vadd.f32 %v5192, %v5280
        %v5282 = vpop.f32.mrf.mxu0
        %v5283 = vadd.f32 %v5194, %v5282
        %5284 = vmatmul.bf16.gmra.mxu0 %v1748
        %v5285 = vpop.f32.mrf.mxu0
        %v5286 = vadd.f32 %v5197, %v5285
        %v5287 = vpop.f32.mrf.mxu0
        %v5288 = vadd.f32 %v5199, %v5287
        %5289 = vmatmul.bf16.gmra.mxu0 %v1756
        %v5290 = vpop.f32.mrf.mxu0
        %v5291 = vadd.f32 %v5202, %v5290
        %v5292 = vpop.f32.mrf.mxu0
        %v5293 = vadd.f32 %v5204, %v5292
        %5294 = vdwg.mxu0
        %5295 = vmatpush.bf16.msra.mxu0 %v4202
        %5296 = vmatpush.bf16.msra.mxu0 %v4194
        %5297 = vmatpush.bf16.msra.mxu0 %v4186
        %5298 = vmatpush.bf16.msra.mxu0 %v4178
        %5299 = vmatpush.bf16.msra.mxu0 %v4170
        %5300 = vmatpush.bf16.msra.mxu0 %v4162
        %5301 = vmatpush.bf16.msra.mxu0 %v4154
        %5302 = vmatpush.bf16.msra.mxu0 %v4146
        %5303 = vmatmul.bf16.gmra.mxu0 %v1637
        %v5304 = vpop.f32.mrf.mxu0
        %v5305 = vadd.f32 %v5216, %v5304
        %v5306 = vpop.f32.mrf.mxu0
        %v5307 = vadd.f32 %v5218, %v5306
        %5308 = vmatmul.bf16.gmra.mxu0 %v1645
        %v5309 = vpop.f32.mrf.mxu0
        %v5310 = vadd.f32 %v5221, %v5309
        %v5311 = vpop.f32.mrf.mxu0
        %v5312 = vadd.f32 %v5223, %v5311
        %5313 = vmatmul.bf16.gmra.mxu0 %v1653
        %v5314 = vpop.f32.mrf.mxu0
        %v5315 = vadd.f32 %v5226, %v5314
        %v5316 = vpop.f32.mrf.mxu0
        %v5317 = vadd.f32 %v5228, %v5316
        %5318 = vmatmul.bf16.gmra.mxu0 %v1661
        %v5319 = vpop.f32.mrf.mxu0
        %v5320 = vadd.f32 %v5231, %v5319
        %v5321 = vpop.f32.mrf.mxu0
        %v5322 = vadd.f32 %v5233, %v5321
        %5323 = vmatmul.bf16.gmra.mxu0 %v1669
        %v5324 = vpop.f32.mrf.mxu0
        %v5325 = vadd.f32 %v5236, %v5324
        %v5326 = vpop.f32.mrf.mxu0
        %v5327 = vadd.f32 %v5238, %v5326
        %5328 = vmatmul.bf16.gmra.mxu0 %v1677
        %v5329 = vpop.f32.mrf.mxu0
        %v5330 = vadd.f32 %v5241, %v5329
        %v5331 = vpop.f32.mrf.mxu0
        %v5332 = vadd.f32 %v5243, %v5331
        %5333 = vmatmul.bf16.gmra.mxu0 %v1685
        %v5334 = vpop.f32.mrf.mxu0
        %v5335 = vadd.f32 %v5246, %v5334
        %v5336 = vpop.f32.mrf.mxu0
        %v5337 = vadd.f32 %v5248, %v5336
        %5338 = vmatmul.bf16.gmra.mxu0 %v1693
        %v5339 = vpop.f32.mrf.mxu0
        %v5340 = vadd.f32 %v5251, %v5339
        %v5341 = vpop.f32.mrf.mxu0
        %v5342 = vadd.f32 %v5253, %v5341
        %5343 = vmatmul.bf16.gmra.mxu0 %v1701
        %v5344 = vpop.f32.mrf.mxu0
        %v5345 = vadd.f32 %v5256, %v5344
        %v5346 = vpop.f32.mrf.mxu0
        %v5347 = vadd.f32 %v5258, %v5346
        %5348 = vmatmul.bf16.gmra.mxu0 %v1709
        %v5349 = vpop.f32.mrf.mxu0
        %v5350 = vadd.f32 %v5261, %v5349
        %v5351 = vpop.f32.mrf.mxu0
        %v5352 = vadd.f32 %v5263, %v5351
        %5353 = vmatmul.bf16.gmra.mxu0 %v1717
        %v5354 = vpop.f32.mrf.mxu0
        %v5355 = vadd.f32 %v5266, %v5354
        %v5356 = vpop.f32.mrf.mxu0
        %v5357 = vadd.f32 %v5268, %v5356
        %5358 = vmatmul.bf16.gmra.mxu0 %v1725
        %v5359 = vpop.f32.mrf.mxu0
        %v5360 = vadd.f32 %v5271, %v5359
        %v5361 = vpop.f32.mrf.mxu0
        %v5362 = vadd.f32 %v5273, %v5361
        %5363 = vmatmul.bf16.gmra.mxu0 %v1733
        %v5364 = vpop.f32.mrf.mxu0
        %v5365 = vadd.f32 %v5276, %v5364
        %v5366 = vpop.f32.mrf.mxu0
        %v5367 = vadd.f32 %v5278, %v5366
        %5368 = vmatmul.bf16.gmra.mxu0 %v1741
        %v5369 = vpop.f32.mrf.mxu0
        %v5370 = vadd.f32 %v5281, %v5369
        %v5371 = vpop.f32.mrf.mxu0
        %v5372 = vadd.f32 %v5283, %v5371
        %5373 = vmatmul.bf16.gmra.mxu0 %v1749
        %v5374 = vpop.f32.mrf.mxu0
        %v5375 = vadd.f32 %v5286, %v5374
        %v5376 = vpop.f32.mrf.mxu0
        %v5377 = vadd.f32 %v5288, %v5376
        %5378 = vmatmul.bf16.gmra.mxu0 %v1757
        %v5379 = vpop.f32.mrf.mxu0
        %v5380 = vadd.f32 %v5291, %v5379
        %v5381 = vpop.f32.mrf.mxu0
        %v5382 = vadd.f32 %v5293, %v5381
        %5383 = vdwg.mxu0
        %5384 = vmatpush.bf16.msra.mxu0 %v4266
        %5385 = vmatpush.bf16.msra.mxu0 %v4258
        %5386 = vmatpush.bf16.msra.mxu0 %v4250
        %5387 = vmatpush.bf16.msra.mxu0 %v4242
        %5388 = vmatpush.bf16.msra.mxu0 %v4234
        %5389 = vmatpush.bf16.msra.mxu0 %v4226
        %5390 = vmatpush.bf16.msra.mxu0 %v4218
        %5391 = vmatpush.bf16.msra.mxu0 %v4210
        %5392 = vmatmul.bf16.gmra.mxu0 %v1638
        %v5393 = vpop.f32.mrf.mxu0
        %v5394 = vadd.f32 %v5305, %v5393
        %v5395 = vpop.f32.mrf.mxu0
        %v5396 = vadd.f32 %v5307, %v5395
        %5397 = vmatmul.bf16.gmra.mxu0 %v1646
        %v5398 = vpop.f32.mrf.mxu0
        %v5399 = vadd.f32 %v5310, %v5398
        %v5400 = vpop.f32.mrf.mxu0
        %v5401 = vadd.f32 %v5312, %v5400
        %5402 = vmatmul.bf16.gmra.mxu0 %v1654
        %v5403 = vpop.f32.mrf.mxu0
        %v5404 = vadd.f32 %v5315, %v5403
        %v5405 = vpop.f32.mrf.mxu0
        %v5406 = vadd.f32 %v5317, %v5405
        %5407 = vmatmul.bf16.gmra.mxu0 %v1662
        %v5408 = vpop.f32.mrf.mxu0
        %v5409 = vadd.f32 %v5320, %v5408
        %v5410 = vpop.f32.mrf.mxu0
        %v5411 = vadd.f32 %v5322, %v5410
        %5412 = vmatmul.bf16.gmra.mxu0 %v1670
        %v5413 = vpop.f32.mrf.mxu0
        %v5414 = vadd.f32 %v5325, %v5413
        %v5415 = vpop.f32.mrf.mxu0
        %v5416 = vadd.f32 %v5327, %v5415
        %5417 = vmatmul.bf16.gmra.mxu0 %v1678
        %v5418 = vpop.f32.mrf.mxu0
        %v5419 = vadd.f32 %v5330, %v5418
        %v5420 = vpop.f32.mrf.mxu0
        %v5421 = vadd.f32 %v5332, %v5420
        %5422 = vmatmul.bf16.gmra.mxu0 %v1686
        %v5423 = vpop.f32.mrf.mxu0
        %v5424 = vadd.f32 %v5335, %v5423
        %v5425 = vpop.f32.mrf.mxu0
        %v5426 = vadd.f32 %v5337, %v5425
        %5427 = vmatmul.bf16.gmra.mxu0 %v1694
        %v5428 = vpop.f32.mrf.mxu0
        %v5429 = vadd.f32 %v5340, %v5428
        %v5430 = vpop.f32.mrf.mxu0
        %v5431 = vadd.f32 %v5342, %v5430
        %5432 = vmatmul.bf16.gmra.mxu0 %v1702
        %v5433 = vpop.f32.mrf.mxu0
        %v5434 = vadd.f32 %v5345, %v5433
        %v5435 = vpop.f32.mrf.mxu0
        %v5436 = vadd.f32 %v5347, %v5435
        %5437 = vmatmul.bf16.gmra.mxu0 %v1710
        %v5438 = vpop.f32.mrf.mxu0
        %v5439 = vadd.f32 %v5350, %v5438
        %v5440 = vpop.f32.mrf.mxu0
        %v5441 = vadd.f32 %v5352, %v5440
        %5442 = vmatmul.bf16.gmra.mxu0 %v1718
        %v5443 = vpop.f32.mrf.mxu0
        %v5444 = vadd.f32 %v5355, %v5443
        %v5445 = vpop.f32.mrf.mxu0
        %v5446 = vadd.f32 %v5357, %v5445
        %5447 = vmatmul.bf16.gmra.mxu0 %v1726
        %v5448 = vpop.f32.mrf.mxu0
        %v5449 = vadd.f32 %v5360, %v5448
        %v5450 = vpop.f32.mrf.mxu0
        %v5451 = vadd.f32 %v5362, %v5450
        %5452 = vmatmul.bf16.gmra.mxu0 %v1734
        %v5453 = vpop.f32.mrf.mxu0
        %v5454 = vadd.f32 %v5365, %v5453
        %v5455 = vpop.f32.mrf.mxu0
        %v5456 = vadd.f32 %v5367, %v5455
        %5457 = vmatmul.bf16.gmra.mxu0 %v1742
        %v5458 = vpop.f32.mrf.mxu0
        %v5459 = vadd.f32 %v5370, %v5458
        %v5460 = vpop.f32.mrf.mxu0
        %v5461 = vadd.f32 %v5372, %v5460
        %5462 = vmatmul.bf16.gmra.mxu0 %v1750
        %v5463 = vpop.f32.mrf.mxu0
        %v5464 = vadd.f32 %v5375, %v5463
        %v5465 = vpop.f32.mrf.mxu0
        %v5466 = vadd.f32 %v5377, %v5465
        %5467 = vmatmul.bf16.gmra.mxu0 %v1758
        %v5468 = vpop.f32.mrf.mxu0
        %v5469 = vadd.f32 %v5380, %v5468
        %v5470 = vpop.f32.mrf.mxu0
        %v5471 = vadd.f32 %v5382, %v5470
        %5472 = vdwg.mxu0
        %5473 = vmatpush.bf16.msra.mxu0 %v4330
        %5474 = vmatpush.bf16.msra.mxu0 %v4322
        %5475 = vmatpush.bf16.msra.mxu0 %v4314
        %5476 = vmatpush.bf16.msra.mxu0 %v4306
        %5477 = vmatpush.bf16.msra.mxu0 %v4298
        %5478 = vmatpush.bf16.msra.mxu0 %v4290
        %5479 = vmatpush.bf16.msra.mxu0 %v4282
        %5480 = vmatpush.bf16.msra.mxu0 %v4274
        %5481 = vmatmul.bf16.gmra.mxu0 %v1639
        %v5482 = vpop.f32.mrf.mxu0
        %v5483 = vadd.f32 %v5394, %v5482
        %v5484 = vpop.f32.mrf.mxu0
        %v5485 = vadd.f32 %v5396, %v5484
        %5486 = vmatmul.bf16.gmra.mxu0 %v1647
        %v5487 = vpop.f32.mrf.mxu0
        %v5488 = vadd.f32 %v5399, %v5487
        %v5489 = vpop.f32.mrf.mxu0
        %v5490 = vadd.f32 %v5401, %v5489
        %5491 = vmatmul.bf16.gmra.mxu0 %v1655
        %v5492 = vpop.f32.mrf.mxu0
        %v5493 = vadd.f32 %v5404, %v5492
        %v5494 = vpop.f32.mrf.mxu0
        %v5495 = vadd.f32 %v5406, %v5494
        %5496 = vmatmul.bf16.gmra.mxu0 %v1663
        %v5497 = vpop.f32.mrf.mxu0
        %v5498 = vadd.f32 %v5409, %v5497
        %v5499 = vpop.f32.mrf.mxu0
        %v5500 = vadd.f32 %v5411, %v5499
        %5501 = vmatmul.bf16.gmra.mxu0 %v1671
        %v5502 = vpop.f32.mrf.mxu0
        %v5503 = vadd.f32 %v5414, %v5502
        %v5504 = vpop.f32.mrf.mxu0
        %v5505 = vadd.f32 %v5416, %v5504
        %5506 = vmatmul.bf16.gmra.mxu0 %v1679
        %v5507 = vpop.f32.mrf.mxu0
        %v5508 = vadd.f32 %v5419, %v5507
        %v5509 = vpop.f32.mrf.mxu0
        %v5510 = vadd.f32 %v5421, %v5509
        %5511 = vmatmul.bf16.gmra.mxu0 %v1687
        %v5512 = vpop.f32.mrf.mxu0
        %v5513 = vadd.f32 %v5424, %v5512
        %v5514 = vpop.f32.mrf.mxu0
        %v5515 = vadd.f32 %v5426, %v5514
        %5516 = vmatmul.bf16.gmra.mxu0 %v1695
        %v5517 = vpop.f32.mrf.mxu0
        %v5518 = vadd.f32 %v5429, %v5517
        %v5519 = vpop.f32.mrf.mxu0
        %v5520 = vadd.f32 %v5431, %v5519
        %5521 = vmatmul.bf16.gmra.mxu0 %v1703
        %v5522 = vpop.f32.mrf.mxu0
        %v5523 = vadd.f32 %v5434, %v5522
        %v5524 = vpop.f32.mrf.mxu0
        %v5525 = vadd.f32 %v5436, %v5524
        %5526 = vmatmul.bf16.gmra.mxu0 %v1711
        %v5527 = vpop.f32.mrf.mxu0
        %v5528 = vadd.f32 %v5439, %v5527
        %v5529 = vpop.f32.mrf.mxu0
        %v5530 = vadd.f32 %v5441, %v5529
        %5531 = vmatmul.bf16.gmra.mxu0 %v1719
        %v5532 = vpop.f32.mrf.mxu0
        %v5533 = vadd.f32 %v5444, %v5532
        %v5534 = vpop.f32.mrf.mxu0
        %v5535 = vadd.f32 %v5446, %v5534
        %5536 = vmatmul.bf16.gmra.mxu0 %v1727
        %v5537 = vpop.f32.mrf.mxu0
        %v5538 = vadd.f32 %v5449, %v5537
        %v5539 = vpop.f32.mrf.mxu0
        %v5540 = vadd.f32 %v5451, %v5539
        %5541 = vmatmul.bf16.gmra.mxu0 %v1735
        %v5542 = vpop.f32.mrf.mxu0
        %v5543 = vadd.f32 %v5454, %v5542
        %v5544 = vpop.f32.mrf.mxu0
        %v5545 = vadd.f32 %v5456, %v5544
        %5546 = vmatmul.bf16.gmra.mxu0 %v1743
        %v5547 = vpop.f32.mrf.mxu0
        %v5548 = vadd.f32 %v5459, %v5547
        %v5549 = vpop.f32.mrf.mxu0
        %v5550 = vadd.f32 %v5461, %v5549
        %5551 = vmatmul.bf16.gmra.mxu0 %v1751
        %v5552 = vpop.f32.mrf.mxu0
        %v5553 = vadd.f32 %v5464, %v5552
        %v5554 = vpop.f32.mrf.mxu0
        %v5555 = vadd.f32 %v5466, %v5554
        %5556 = vmatmul.bf16.gmra.mxu0 %v1759
        %v5557 = vpop.f32.mrf.mxu0
        %v5558 = vadd.f32 %v5469, %v5557
        %v5559 = vpop.f32.mrf.mxu0
        %v5560 = vadd.f32 %v5471, %v5559
        %5561 = vdwg.mxu0
        %5562 = vmatpush.bf16.msra.mxu0 %v3883
        %5563 = vmatpush.bf16.msra.mxu0 %v3875
        %5564 = vmatpush.bf16.msra.mxu0 %v3867
        %5565 = vmatpush.bf16.msra.mxu0 %v3859
        %5566 = vmatpush.bf16.msra.mxu0 %v3851
        %5567 = vmatpush.bf16.msra.mxu0 %v3843
        %5568 = vmatpush.bf16.msra.mxu0 %v3835
        %5569 = vmatpush.bf16.msra.mxu0 %v3827
        %5570 = vmatmul.bf16.gmra.mxu0 %v1632
        %v5571 = vpop.f32.mrf.mxu0
        %v5572 = vadd.f32 %v2275, %v5571
        %v5573 = vpop.f32.mrf.mxu0
        %v5574 = vadd.f32 %v2275, %v5573
        %5575 = vmatmul.bf16.gmra.mxu0 %v1640
        %v5576 = vpop.f32.mrf.mxu0
        %v5577 = vadd.f32 %v2275, %v5576
        %v5578 = vpop.f32.mrf.mxu0
        %v5579 = vadd.f32 %v2275, %v5578
        %5580 = vmatmul.bf16.gmra.mxu0 %v1648
        %v5581 = vpop.f32.mrf.mxu0
        %v5582 = vadd.f32 %v2275, %v5581
        %v5583 = vpop.f32.mrf.mxu0
        %v5584 = vadd.f32 %v2275, %v5583
        %5585 = vmatmul.bf16.gmra.mxu0 %v1656
        %v5586 = vpop.f32.mrf.mxu0
        %v5587 = vadd.f32 %v2275, %v5586
        %v5588 = vpop.f32.mrf.mxu0
        %v5589 = vadd.f32 %v2275, %v5588
        %5590 = vmatmul.bf16.gmra.mxu0 %v1664
        %v5591 = vpop.f32.mrf.mxu0
        %v5592 = vadd.f32 %v2275, %v5591
        %v5593 = vpop.f32.mrf.mxu0
        %v5594 = vadd.f32 %v2275, %v5593
        %5595 = vmatmul.bf16.gmra.mxu0 %v1672
        %v5596 = vpop.f32.mrf.mxu0
        %v5597 = vadd.f32 %v2275, %v5596
        %v5598 = vpop.f32.mrf.mxu0
        %v5599 = vadd.f32 %v2275, %v5598
        %5600 = vmatmul.bf16.gmra.mxu0 %v1680
        %v5601 = vpop.f32.mrf.mxu0
        %v5602 = vadd.f32 %v2275, %v5601
        %v5603 = vpop.f32.mrf.mxu0
        %v5604 = vadd.f32 %v2275, %v5603
        %5605 = vmatmul.bf16.gmra.mxu0 %v1688
        %v5606 = vpop.f32.mrf.mxu0
        %v5607 = vadd.f32 %v2275, %v5606
        %v5608 = vpop.f32.mrf.mxu0
        %v5609 = vadd.f32 %v2275, %v5608
        %5610 = vmatmul.bf16.gmra.mxu0 %v1696
        %v5611 = vpop.f32.mrf.mxu0
        %v5612 = vadd.f32 %v2275, %v5611
        %v5613 = vpop.f32.mrf.mxu0
        %v5614 = vadd.f32 %v2275, %v5613
        %5615 = vmatmul.bf16.gmra.mxu0 %v1704
        %v5616 = vpop.f32.mrf.mxu0
        %v5617 = vadd.f32 %v2275, %v5616
        %v5618 = vpop.f32.mrf.mxu0
        %v5619 = vadd.f32 %v2275, %v5618
        %5620 = vmatmul.bf16.gmra.mxu0 %v1712
        %v5621 = vpop.f32.mrf.mxu0
        %v5622 = vadd.f32 %v2275, %v5621
        %v5623 = vpop.f32.mrf.mxu0
        %v5624 = vadd.f32 %v2275, %v5623
        %5625 = vmatmul.bf16.gmra.mxu0 %v1720
        %v5626 = vpop.f32.mrf.mxu0
        %v5627 = vadd.f32 %v2275, %v5626
        %v5628 = vpop.f32.mrf.mxu0
        %v5629 = vadd.f32 %v2275, %v5628
        %5630 = vmatmul.bf16.gmra.mxu0 %v1728
        %v5631 = vpop.f32.mrf.mxu0
        %v5632 = vadd.f32 %v2275, %v5631
        %v5633 = vpop.f32.mrf.mxu0
        %v5634 = vadd.f32 %v2275, %v5633
        %5635 = vmatmul.bf16.gmra.mxu0 %v1736
        %v5636 = vpop.f32.mrf.mxu0
        %v5637 = vadd.f32 %v2275, %v5636
        %v5638 = vpop.f32.mrf.mxu0
        %v5639 = vadd.f32 %v2275, %v5638
        %5640 = vmatmul.bf16.gmra.mxu0 %v1744
        %v5641 = vpop.f32.mrf.mxu0
        %v5642 = vadd.f32 %v2275, %v5641
        %v5643 = vpop.f32.mrf.mxu0
        %v5644 = vadd.f32 %v2275, %v5643
        %5645 = vmatmul.bf16.gmra.mxu0 %v1752
        %v5646 = vpop.f32.mrf.mxu0
        %v5647 = vadd.f32 %v2275, %v5646
        %v5648 = vpop.f32.mrf.mxu0
        %v5649 = vadd.f32 %v2275, %v5648
        %5650 = vdwg.mxu0
        %5651 = vmatpush.bf16.msra.mxu0 %v3947
        %5652 = vmatpush.bf16.msra.mxu0 %v3939
        %5653 = vmatpush.bf16.msra.mxu0 %v3931
        %5654 = vmatpush.bf16.msra.mxu0 %v3923
        %5655 = vmatpush.bf16.msra.mxu0 %v3915
        %5656 = vmatpush.bf16.msra.mxu0 %v3907
        %5657 = vmatpush.bf16.msra.mxu0 %v3899
        %5658 = vmatpush.bf16.msra.mxu0 %v3891
        %5659 = vmatmul.bf16.gmra.mxu0 %v1633
        %v5660 = vpop.f32.mrf.mxu0
        %v5661 = vadd.f32 %v5572, %v5660
        %v5662 = vpop.f32.mrf.mxu0
        %v5663 = vadd.f32 %v5574, %v5662
        %5664 = vmatmul.bf16.gmra.mxu0 %v1641
        %v5665 = vpop.f32.mrf.mxu0
        %v5666 = vadd.f32 %v5577, %v5665
        %v5667 = vpop.f32.mrf.mxu0
        %v5668 = vadd.f32 %v5579, %v5667
        %5669 = vmatmul.bf16.gmra.mxu0 %v1649
        %v5670 = vpop.f32.mrf.mxu0
        %v5671 = vadd.f32 %v5582, %v5670
        %v5672 = vpop.f32.mrf.mxu0
        %v5673 = vadd.f32 %v5584, %v5672
        %5674 = vmatmul.bf16.gmra.mxu0 %v1657
        %v5675 = vpop.f32.mrf.mxu0
        %v5676 = vadd.f32 %v5587, %v5675
        %v5677 = vpop.f32.mrf.mxu0
        %v5678 = vadd.f32 %v5589, %v5677
        %5679 = vmatmul.bf16.gmra.mxu0 %v1665
        %v5680 = vpop.f32.mrf.mxu0
        %v5681 = vadd.f32 %v5592, %v5680
        %v5682 = vpop.f32.mrf.mxu0
        %v5683 = vadd.f32 %v5594, %v5682
        %5684 = vmatmul.bf16.gmra.mxu0 %v1673
        %v5685 = vpop.f32.mrf.mxu0
        %v5686 = vadd.f32 %v5597, %v5685
        %v5687 = vpop.f32.mrf.mxu0
        %v5688 = vadd.f32 %v5599, %v5687
        %5689 = vmatmul.bf16.gmra.mxu0 %v1681
        %v5690 = vpop.f32.mrf.mxu0
        %v5691 = vadd.f32 %v5602, %v5690
        %v5692 = vpop.f32.mrf.mxu0
        %v5693 = vadd.f32 %v5604, %v5692
        %5694 = vmatmul.bf16.gmra.mxu0 %v1689
        %v5695 = vpop.f32.mrf.mxu0
        %v5696 = vadd.f32 %v5607, %v5695
        %v5697 = vpop.f32.mrf.mxu0
        %v5698 = vadd.f32 %v5609, %v5697
        %5699 = vmatmul.bf16.gmra.mxu0 %v1697
        %v5700 = vpop.f32.mrf.mxu0
        %v5701 = vadd.f32 %v5612, %v5700
        %v5702 = vpop.f32.mrf.mxu0
        %v5703 = vadd.f32 %v5614, %v5702
        %5704 = vmatmul.bf16.gmra.mxu0 %v1705
        %v5705 = vpop.f32.mrf.mxu0
        %v5706 = vadd.f32 %v5617, %v5705
        %v5707 = vpop.f32.mrf.mxu0
        %v5708 = vadd.f32 %v5619, %v5707
        %5709 = vmatmul.bf16.gmra.mxu0 %v1713
        %v5710 = vpop.f32.mrf.mxu0
        %v5711 = vadd.f32 %v5622, %v5710
        %v5712 = vpop.f32.mrf.mxu0
        %v5713 = vadd.f32 %v5624, %v5712
        %5714 = vmatmul.bf16.gmra.mxu0 %v1721
        %v5715 = vpop.f32.mrf.mxu0
        %v5716 = vadd.f32 %v5627, %v5715
        %v5717 = vpop.f32.mrf.mxu0
        %v5718 = vadd.f32 %v5629, %v5717
        %5719 = vmatmul.bf16.gmra.mxu0 %v1729
        %v5720 = vpop.f32.mrf.mxu0
        %v5721 = vadd.f32 %v5632, %v5720
        %v5722 = vpop.f32.mrf.mxu0
        %v5723 = vadd.f32 %v5634, %v5722
        %5724 = vmatmul.bf16.gmra.mxu0 %v1737
        %v5725 = vpop.f32.mrf.mxu0
        %v5726 = vadd.f32 %v5637, %v5725
        %v5727 = vpop.f32.mrf.mxu0
        %v5728 = vadd.f32 %v5639, %v5727
        %5729 = vmatmul.bf16.gmra.mxu0 %v1745
        %v5730 = vpop.f32.mrf.mxu0
        %v5731 = vadd.f32 %v5642, %v5730
        %v5732 = vpop.f32.mrf.mxu0
        %v5733 = vadd.f32 %v5644, %v5732
        %5734 = vmatmul.bf16.gmra.mxu0 %v1753
        %v5735 = vpop.f32.mrf.mxu0
        %v5736 = vadd.f32 %v5647, %v5735
        %v5737 = vpop.f32.mrf.mxu0
        %v5738 = vadd.f32 %v5649, %v5737
        %5739 = vdwg.mxu0
        %5740 = vmatpush.bf16.msra.mxu0 %v4011
        %5741 = vmatpush.bf16.msra.mxu0 %v4003
        %5742 = vmatpush.bf16.msra.mxu0 %v3995
        %5743 = vmatpush.bf16.msra.mxu0 %v3987
        %5744 = vmatpush.bf16.msra.mxu0 %v3979
        %5745 = vmatpush.bf16.msra.mxu0 %v3971
        %5746 = vmatpush.bf16.msra.mxu0 %v3963
        %5747 = vmatpush.bf16.msra.mxu0 %v3955
        %5748 = vmatmul.bf16.gmra.mxu0 %v1634
        %v5749 = vpop.f32.mrf.mxu0
        %v5750 = vadd.f32 %v5661, %v5749
        %v5751 = vpop.f32.mrf.mxu0
        %v5752 = vadd.f32 %v5663, %v5751
        %5753 = vmatmul.bf16.gmra.mxu0 %v1642
        %v5754 = vpop.f32.mrf.mxu0
        %v5755 = vadd.f32 %v5666, %v5754
        %v5756 = vpop.f32.mrf.mxu0
        %v5757 = vadd.f32 %v5668, %v5756
        %5758 = vmatmul.bf16.gmra.mxu0 %v1650
        %v5759 = vpop.f32.mrf.mxu0
        %v5760 = vadd.f32 %v5671, %v5759
        %v5761 = vpop.f32.mrf.mxu0
        %v5762 = vadd.f32 %v5673, %v5761
        %5763 = vmatmul.bf16.gmra.mxu0 %v1658
        %v5764 = vpop.f32.mrf.mxu0
        %v5765 = vadd.f32 %v5676, %v5764
        %v5766 = vpop.f32.mrf.mxu0
        %v5767 = vadd.f32 %v5678, %v5766
        %5768 = vmatmul.bf16.gmra.mxu0 %v1666
        %v5769 = vpop.f32.mrf.mxu0
        %v5770 = vadd.f32 %v5681, %v5769
        %v5771 = vpop.f32.mrf.mxu0
        %v5772 = vadd.f32 %v5683, %v5771
        %5773 = vmatmul.bf16.gmra.mxu0 %v1674
        %v5774 = vpop.f32.mrf.mxu0
        %v5775 = vadd.f32 %v5686, %v5774
        %v5776 = vpop.f32.mrf.mxu0
        %v5777 = vadd.f32 %v5688, %v5776
        %5778 = vmatmul.bf16.gmra.mxu0 %v1682
        %v5779 = vpop.f32.mrf.mxu0
        %v5780 = vadd.f32 %v5691, %v5779
        %v5781 = vpop.f32.mrf.mxu0
        %v5782 = vadd.f32 %v5693, %v5781
        %5783 = vmatmul.bf16.gmra.mxu0 %v1690
        %v5784 = vpop.f32.mrf.mxu0
        %v5785 = vadd.f32 %v5696, %v5784
        %v5786 = vpop.f32.mrf.mxu0
        %v5787 = vadd.f32 %v5698, %v5786
        %5788 = vmatmul.bf16.gmra.mxu0 %v1698
        %v5789 = vpop.f32.mrf.mxu0
        %v5790 = vadd.f32 %v5701, %v5789
        %v5791 = vpop.f32.mrf.mxu0
        %v5792 = vadd.f32 %v5703, %v5791
        %5793 = vmatmul.bf16.gmra.mxu0 %v1706
        %v5794 = vpop.f32.mrf.mxu0
        %v5795 = vadd.f32 %v5706, %v5794
        %v5796 = vpop.f32.mrf.mxu0
        %v5797 = vadd.f32 %v5708, %v5796
        %5798 = vmatmul.bf16.gmra.mxu0 %v1714
        %v5799 = vpop.f32.mrf.mxu0
        %v5800 = vadd.f32 %v5711, %v5799
        %v5801 = vpop.f32.mrf.mxu0
        %v5802 = vadd.f32 %v5713, %v5801
        %5803 = vmatmul.bf16.gmra.mxu0 %v1722
        %v5804 = vpop.f32.mrf.mxu0
        %v5805 = vadd.f32 %v5716, %v5804
        %v5806 = vpop.f32.mrf.mxu0
        %v5807 = vadd.f32 %v5718, %v5806
        %5808 = vmatmul.bf16.gmra.mxu0 %v1730
        %v5809 = vpop.f32.mrf.mxu0
        %v5810 = vadd.f32 %v5721, %v5809
        %v5811 = vpop.f32.mrf.mxu0
        %v5812 = vadd.f32 %v5723, %v5811
        %5813 = vmatmul.bf16.gmra.mxu0 %v1738
        %v5814 = vpop.f32.mrf.mxu0
        %v5815 = vadd.f32 %v5726, %v5814
        %v5816 = vpop.f32.mrf.mxu0
        %v5817 = vadd.f32 %v5728, %v5816
        %5818 = vmatmul.bf16.gmra.mxu0 %v1746
        %v5819 = vpop.f32.mrf.mxu0
        %v5820 = vadd.f32 %v5731, %v5819
        %v5821 = vpop.f32.mrf.mxu0
        %v5822 = vadd.f32 %v5733, %v5821
        %5823 = vmatmul.bf16.gmra.mxu0 %v1754
        %v5824 = vpop.f32.mrf.mxu0
        %v5825 = vadd.f32 %v5736, %v5824
        %v5826 = vpop.f32.mrf.mxu0
        %v5827 = vadd.f32 %v5738, %v5826
        %5828 = vdwg.mxu0
        %5829 = vmatpush.bf16.msra.mxu0 %v4075
        %5830 = vmatpush.bf16.msra.mxu0 %v4067
        %5831 = vmatpush.bf16.msra.mxu0 %v4059
        %5832 = vmatpush.bf16.msra.mxu0 %v4051
        %5833 = vmatpush.bf16.msra.mxu0 %v4043
        %5834 = vmatpush.bf16.msra.mxu0 %v4035
        %5835 = vmatpush.bf16.msra.mxu0 %v4027
        %5836 = vmatpush.bf16.msra.mxu0 %v4019
        %5837 = vmatmul.bf16.gmra.mxu0 %v1635
        %v5838 = vpop.f32.mrf.mxu0
        %v5839 = vadd.f32 %v5750, %v5838
        %v5840 = vpop.f32.mrf.mxu0
        %v5841 = vadd.f32 %v5752, %v5840
        %5842 = vmatmul.bf16.gmra.mxu0 %v1643
        %v5843 = vpop.f32.mrf.mxu0
        %v5844 = vadd.f32 %v5755, %v5843
        %v5845 = vpop.f32.mrf.mxu0
        %v5846 = vadd.f32 %v5757, %v5845
        %5847 = vmatmul.bf16.gmra.mxu0 %v1651
        %v5848 = vpop.f32.mrf.mxu0
        %v5849 = vadd.f32 %v5760, %v5848
        %v5850 = vpop.f32.mrf.mxu0
        %v5851 = vadd.f32 %v5762, %v5850
        %5852 = vmatmul.bf16.gmra.mxu0 %v1659
        %v5853 = vpop.f32.mrf.mxu0
        %v5854 = vadd.f32 %v5765, %v5853
        %v5855 = vpop.f32.mrf.mxu0
        %v5856 = vadd.f32 %v5767, %v5855
        %5857 = vmatmul.bf16.gmra.mxu0 %v1667
        %v5858 = vpop.f32.mrf.mxu0
        %v5859 = vadd.f32 %v5770, %v5858
        %v5860 = vpop.f32.mrf.mxu0
        %v5861 = vadd.f32 %v5772, %v5860
        %5862 = vmatmul.bf16.gmra.mxu0 %v1675
        %v5863 = vpop.f32.mrf.mxu0
        %v5864 = vadd.f32 %v5775, %v5863
        %v5865 = vpop.f32.mrf.mxu0
        %v5866 = vadd.f32 %v5777, %v5865
        %5867 = vmatmul.bf16.gmra.mxu0 %v1683
        %v5868 = vpop.f32.mrf.mxu0
        %v5869 = vadd.f32 %v5780, %v5868
        %v5870 = vpop.f32.mrf.mxu0
        %v5871 = vadd.f32 %v5782, %v5870
        %5872 = vmatmul.bf16.gmra.mxu0 %v1691
        %v5873 = vpop.f32.mrf.mxu0
        %v5874 = vadd.f32 %v5785, %v5873
        %v5875 = vpop.f32.mrf.mxu0
        %v5876 = vadd.f32 %v5787, %v5875
        %5877 = vmatmul.bf16.gmra.mxu0 %v1699
        %v5878 = vpop.f32.mrf.mxu0
        %v5879 = vadd.f32 %v5790, %v5878
        %v5880 = vpop.f32.mrf.mxu0
        %v5881 = vadd.f32 %v5792, %v5880
        %5882 = vmatmul.bf16.gmra.mxu0 %v1707
        %v5883 = vpop.f32.mrf.mxu0
        %v5884 = vadd.f32 %v5795, %v5883
        %v5885 = vpop.f32.mrf.mxu0
        %v5886 = vadd.f32 %v5797, %v5885
        %5887 = vmatmul.bf16.gmra.mxu0 %v1715
        %v5888 = vpop.f32.mrf.mxu0
        %v5889 = vadd.f32 %v5800, %v5888
        %v5890 = vpop.f32.mrf.mxu0
        %v5891 = vadd.f32 %v5802, %v5890
        %5892 = vmatmul.bf16.gmra.mxu0 %v1723
        %v5893 = vpop.f32.mrf.mxu0
        %v5894 = vadd.f32 %v5805, %v5893
        %v5895 = vpop.f32.mrf.mxu0
        %v5896 = vadd.f32 %v5807, %v5895
        %5897 = vmatmul.bf16.gmra.mxu0 %v1731
        %v5898 = vpop.f32.mrf.mxu0
        %v5899 = vadd.f32 %v5810, %v5898
        %v5900 = vpop.f32.mrf.mxu0
        %v5901 = vadd.f32 %v5812, %v5900
        %5902 = vmatmul.bf16.gmra.mxu0 %v1739
        %v5903 = vpop.f32.mrf.mxu0
        %v5904 = vadd.f32 %v5815, %v5903
        %v5905 = vpop.f32.mrf.mxu0
        %v5906 = vadd.f32 %v5817, %v5905
        %5907 = vmatmul.bf16.gmra.mxu0 %v1747
        %v5908 = vpop.f32.mrf.mxu0
        %v5909 = vadd.f32 %v5820, %v5908
        %v5910 = vpop.f32.mrf.mxu0
        %v5911 = vadd.f32 %v5822, %v5910
        %5912 = vmatmul.bf16.gmra.mxu0 %v1755
        %v5913 = vpop.f32.mrf.mxu0
        %v5914 = vadd.f32 %v5825, %v5913
        %v5915 = vpop.f32.mrf.mxu0
        %v5916 = vadd.f32 %v5827, %v5915
        %5917 = vdwg.mxu0
        %5918 = vmatpush.bf16.msra.mxu0 %v4139
        %5919 = vmatpush.bf16.msra.mxu0 %v4131
        %5920 = vmatpush.bf16.msra.mxu0 %v4123
        %5921 = vmatpush.bf16.msra.mxu0 %v4115
        %5922 = vmatpush.bf16.msra.mxu0 %v4107
        %5923 = vmatpush.bf16.msra.mxu0 %v4099
        %5924 = vmatpush.bf16.msra.mxu0 %v4091
        %5925 = vmatpush.bf16.msra.mxu0 %v4083
        %5926 = vmatmul.bf16.gmra.mxu0 %v1636
        %v5927 = vpop.f32.mrf.mxu0
        %v5928 = vadd.f32 %v5839, %v5927
        %v5929 = vpop.f32.mrf.mxu0
        %v5930 = vadd.f32 %v5841, %v5929
        %5931 = vmatmul.bf16.gmra.mxu0 %v1644
        %v5932 = vpop.f32.mrf.mxu0
        %v5933 = vadd.f32 %v5844, %v5932
        %v5934 = vpop.f32.mrf.mxu0
        %v5935 = vadd.f32 %v5846, %v5934
        %5936 = vmatmul.bf16.gmra.mxu0 %v1652
        %v5937 = vpop.f32.mrf.mxu0
        %v5938 = vadd.f32 %v5849, %v5937
        %v5939 = vpop.f32.mrf.mxu0
        %v5940 = vadd.f32 %v5851, %v5939
        %5941 = vmatmul.bf16.gmra.mxu0 %v1660
        %v5942 = vpop.f32.mrf.mxu0
        %v5943 = vadd.f32 %v5854, %v5942
        %v5944 = vpop.f32.mrf.mxu0
        %v5945 = vadd.f32 %v5856, %v5944
        %5946 = vmatmul.bf16.gmra.mxu0 %v1668
        %v5947 = vpop.f32.mrf.mxu0
        %v5948 = vadd.f32 %v5859, %v5947
        %v5949 = vpop.f32.mrf.mxu0
        %v5950 = vadd.f32 %v5861, %v5949
        %5951 = vmatmul.bf16.gmra.mxu0 %v1676
        %v5952 = vpop.f32.mrf.mxu0
        %v5953 = vadd.f32 %v5864, %v5952
        %v5954 = vpop.f32.mrf.mxu0
        %v5955 = vadd.f32 %v5866, %v5954
        %5956 = vmatmul.bf16.gmra.mxu0 %v1684
        %v5957 = vpop.f32.mrf.mxu0
        %v5958 = vadd.f32 %v5869, %v5957
        %v5959 = vpop.f32.mrf.mxu0
        %v5960 = vadd.f32 %v5871, %v5959
        %5961 = vmatmul.bf16.gmra.mxu0 %v1692
        %v5962 = vpop.f32.mrf.mxu0
        %v5963 = vadd.f32 %v5874, %v5962
        %v5964 = vpop.f32.mrf.mxu0
        %v5965 = vadd.f32 %v5876, %v5964
        %5966 = vmatmul.bf16.gmra.mxu0 %v1700
        %v5967 = vpop.f32.mrf.mxu0
        %v5968 = vadd.f32 %v5879, %v5967
        %v5969 = vpop.f32.mrf.mxu0
        %v5970 = vadd.f32 %v5881, %v5969
        %5971 = vmatmul.bf16.gmra.mxu0 %v1708
        %v5972 = vpop.f32.mrf.mxu0
        %v5973 = vadd.f32 %v5884, %v5972
        %v5974 = vpop.f32.mrf.mxu0
        %v5975 = vadd.f32 %v5886, %v5974
        %5976 = vmatmul.bf16.gmra.mxu0 %v1716
        %v5977 = vpop.f32.mrf.mxu0
        %v5978 = vadd.f32 %v5889, %v5977
        %v5979 = vpop.f32.mrf.mxu0
        %v5980 = vadd.f32 %v5891, %v5979
        %5981 = vmatmul.bf16.gmra.mxu0 %v1724
        %v5982 = vpop.f32.mrf.mxu0
        %v5983 = vadd.f32 %v5894, %v5982
        %v5984 = vpop.f32.mrf.mxu0
        %v5985 = vadd.f32 %v5896, %v5984
        %5986 = vmatmul.bf16.gmra.mxu0 %v1732
        %v5987 = vpop.f32.mrf.mxu0
        %v5988 = vadd.f32 %v5899, %v5987
        %v5989 = vpop.f32.mrf.mxu0
        %v5990 = vadd.f32 %v5901, %v5989
        %5991 = vmatmul.bf16.gmra.mxu0 %v1740
        %v5992 = vpop.f32.mrf.mxu0
        %v5993 = vadd.f32 %v5904, %v5992
        %v5994 = vpop.f32.mrf.mxu0
        %v5995 = vadd.f32 %v5906, %v5994
        %5996 = vmatmul.bf16.gmra.mxu0 %v1748
        %v5997 = vpop.f32.mrf.mxu0
        %v5998 = vadd.f32 %v5909, %v5997
        %v5999 = vpop.f32.mrf.mxu0
        %v6000 = vadd.f32 %v5911, %v5999
        %6001 = vmatmul.bf16.gmra.mxu0 %v1756
        %v6002 = vpop.f32.mrf.mxu0
        %v6003 = vadd.f32 %v5914, %v6002
        %v6004 = vpop.f32.mrf.mxu0
        %v6005 = vadd.f32 %v5916, %v6004
        %6006 = vdwg.mxu0
        %6007 = vmatpush.bf16.msra.mxu0 %v4203
        %6008 = vmatpush.bf16.msra.mxu0 %v4195
        %6009 = vmatpush.bf16.msra.mxu0 %v4187
        %6010 = vmatpush.bf16.msra.mxu0 %v4179
        %6011 = vmatpush.bf16.msra.mxu0 %v4171
        %6012 = vmatpush.bf16.msra.mxu0 %v4163
        %6013 = vmatpush.bf16.msra.mxu0 %v4155
        %6014 = vmatpush.bf16.msra.mxu0 %v4147
        %6015 = vmatmul.bf16.gmra.mxu0 %v1637
        %v6016 = vpop.f32.mrf.mxu0
        %v6017 = vadd.f32 %v5928, %v6016
        %v6018 = vpop.f32.mrf.mxu0
        %v6019 = vadd.f32 %v5930, %v6018
        %6020 = vmatmul.bf16.gmra.mxu0 %v1645
        %v6021 = vpop.f32.mrf.mxu0
        %v6022 = vadd.f32 %v5933, %v6021
        %v6023 = vpop.f32.mrf.mxu0
        %v6024 = vadd.f32 %v5935, %v6023
        %6025 = vmatmul.bf16.gmra.mxu0 %v1653
        %v6026 = vpop.f32.mrf.mxu0
        %v6027 = vadd.f32 %v5938, %v6026
        %v6028 = vpop.f32.mrf.mxu0
        %v6029 = vadd.f32 %v5940, %v6028
        %6030 = vmatmul.bf16.gmra.mxu0 %v1661
        %v6031 = vpop.f32.mrf.mxu0
        %v6032 = vadd.f32 %v5943, %v6031
        %v6033 = vpop.f32.mrf.mxu0
        %v6034 = vadd.f32 %v5945, %v6033
        %6035 = vmatmul.bf16.gmra.mxu0 %v1669
        %v6036 = vpop.f32.mrf.mxu0
        %v6037 = vadd.f32 %v5948, %v6036
        %v6038 = vpop.f32.mrf.mxu0
        %v6039 = vadd.f32 %v5950, %v6038
        %6040 = vmatmul.bf16.gmra.mxu0 %v1677
        %v6041 = vpop.f32.mrf.mxu0
        %v6042 = vadd.f32 %v5953, %v6041
        %v6043 = vpop.f32.mrf.mxu0
        %v6044 = vadd.f32 %v5955, %v6043
        %6045 = vmatmul.bf16.gmra.mxu0 %v1685
        %v6046 = vpop.f32.mrf.mxu0
        %v6047 = vadd.f32 %v5958, %v6046
        %v6048 = vpop.f32.mrf.mxu0
        %v6049 = vadd.f32 %v5960, %v6048
        %6050 = vmatmul.bf16.gmra.mxu0 %v1693
        %v6051 = vpop.f32.mrf.mxu0
        %v6052 = vadd.f32 %v5963, %v6051
        %v6053 = vpop.f32.mrf.mxu0
        %v6054 = vadd.f32 %v5965, %v6053
        %6055 = vmatmul.bf16.gmra.mxu0 %v1701
        %v6056 = vpop.f32.mrf.mxu0
        %v6057 = vadd.f32 %v5968, %v6056
        %v6058 = vpop.f32.mrf.mxu0
        %v6059 = vadd.f32 %v5970, %v6058
        %6060 = vmatmul.bf16.gmra.mxu0 %v1709
        %v6061 = vpop.f32.mrf.mxu0
        %v6062 = vadd.f32 %v5973, %v6061
        %v6063 = vpop.f32.mrf.mxu0
        %v6064 = vadd.f32 %v5975, %v6063
        %6065 = vmatmul.bf16.gmra.mxu0 %v1717
        %v6066 = vpop.f32.mrf.mxu0
        %v6067 = vadd.f32 %v5978, %v6066
        %v6068 = vpop.f32.mrf.mxu0
        %v6069 = vadd.f32 %v5980, %v6068
        %6070 = vmatmul.bf16.gmra.mxu0 %v1725
        %v6071 = vpop.f32.mrf.mxu0
        %v6072 = vadd.f32 %v5983, %v6071
        %v6073 = vpop.f32.mrf.mxu0
        %v6074 = vadd.f32 %v5985, %v6073
        %6075 = vmatmul.bf16.gmra.mxu0 %v1733
        %v6076 = vpop.f32.mrf.mxu0
        %v6077 = vadd.f32 %v5988, %v6076
        %v6078 = vpop.f32.mrf.mxu0
        %v6079 = vadd.f32 %v5990, %v6078
        %6080 = vmatmul.bf16.gmra.mxu0 %v1741
        %v6081 = vpop.f32.mrf.mxu0
        %v6082 = vadd.f32 %v5993, %v6081
        %v6083 = vpop.f32.mrf.mxu0
        %v6084 = vadd.f32 %v5995, %v6083
        %6085 = vmatmul.bf16.gmra.mxu0 %v1749
        %v6086 = vpop.f32.mrf.mxu0
        %v6087 = vadd.f32 %v5998, %v6086
        %v6088 = vpop.f32.mrf.mxu0
        %v6089 = vadd.f32 %v6000, %v6088
        %6090 = vmatmul.bf16.gmra.mxu0 %v1757
        %v6091 = vpop.f32.mrf.mxu0
        %v6092 = vadd.f32 %v6003, %v6091
        %v6093 = vpop.f32.mrf.mxu0
        %v6094 = vadd.f32 %v6005, %v6093
        %6095 = vdwg.mxu0
        %6096 = vmatpush.bf16.msra.mxu0 %v4267
        %6097 = vmatpush.bf16.msra.mxu0 %v4259
        %6098 = vmatpush.bf16.msra.mxu0 %v4251
        %6099 = vmatpush.bf16.msra.mxu0 %v4243
        %6100 = vmatpush.bf16.msra.mxu0 %v4235
        %6101 = vmatpush.bf16.msra.mxu0 %v4227
        %6102 = vmatpush.bf16.msra.mxu0 %v4219
        %6103 = vmatpush.bf16.msra.mxu0 %v4211
        %6104 = vmatmul.bf16.gmra.mxu0 %v1638
        %v6105 = vpop.f32.mrf.mxu0
        %v6106 = vadd.f32 %v6017, %v6105
        %v6107 = vpop.f32.mrf.mxu0
        %v6108 = vadd.f32 %v6019, %v6107
        %6109 = vmatmul.bf16.gmra.mxu0 %v1646
        %v6110 = vpop.f32.mrf.mxu0
        %v6111 = vadd.f32 %v6022, %v6110
        %v6112 = vpop.f32.mrf.mxu0
        %v6113 = vadd.f32 %v6024, %v6112
        %6114 = vmatmul.bf16.gmra.mxu0 %v1654
        %v6115 = vpop.f32.mrf.mxu0
        %v6116 = vadd.f32 %v6027, %v6115
        %v6117 = vpop.f32.mrf.mxu0
        %v6118 = vadd.f32 %v6029, %v6117
        %6119 = vmatmul.bf16.gmra.mxu0 %v1662
        %v6120 = vpop.f32.mrf.mxu0
        %v6121 = vadd.f32 %v6032, %v6120
        %v6122 = vpop.f32.mrf.mxu0
        %v6123 = vadd.f32 %v6034, %v6122
        %6124 = vmatmul.bf16.gmra.mxu0 %v1670
        %v6125 = vpop.f32.mrf.mxu0
        %v6126 = vadd.f32 %v6037, %v6125
        %v6127 = vpop.f32.mrf.mxu0
        %v6128 = vadd.f32 %v6039, %v6127
        %6129 = vmatmul.bf16.gmra.mxu0 %v1678
        %v6130 = vpop.f32.mrf.mxu0
        %v6131 = vadd.f32 %v6042, %v6130
        %v6132 = vpop.f32.mrf.mxu0
        %v6133 = vadd.f32 %v6044, %v6132
        %6134 = vmatmul.bf16.gmra.mxu0 %v1686
        %v6135 = vpop.f32.mrf.mxu0
        %v6136 = vadd.f32 %v6047, %v6135
        %v6137 = vpop.f32.mrf.mxu0
        %v6138 = vadd.f32 %v6049, %v6137
        %6139 = vmatmul.bf16.gmra.mxu0 %v1694
        %v6140 = vpop.f32.mrf.mxu0
        %v6141 = vadd.f32 %v6052, %v6140
        %v6142 = vpop.f32.mrf.mxu0
        %v6143 = vadd.f32 %v6054, %v6142
        %6144 = vmatmul.bf16.gmra.mxu0 %v1702
        %v6145 = vpop.f32.mrf.mxu0
        %v6146 = vadd.f32 %v6057, %v6145
        %v6147 = vpop.f32.mrf.mxu0
        %v6148 = vadd.f32 %v6059, %v6147
        %6149 = vmatmul.bf16.gmra.mxu0 %v1710
        %v6150 = vpop.f32.mrf.mxu0
        %v6151 = vadd.f32 %v6062, %v6150
        %v6152 = vpop.f32.mrf.mxu0
        %v6153 = vadd.f32 %v6064, %v6152
        %6154 = vmatmul.bf16.gmra.mxu0 %v1718
        %v6155 = vpop.f32.mrf.mxu0
        %v6156 = vadd.f32 %v6067, %v6155
        %v6157 = vpop.f32.mrf.mxu0
        %v6158 = vadd.f32 %v6069, %v6157
        %6159 = vmatmul.bf16.gmra.mxu0 %v1726
        %v6160 = vpop.f32.mrf.mxu0
        %v6161 = vadd.f32 %v6072, %v6160
        %v6162 = vpop.f32.mrf.mxu0
        %v6163 = vadd.f32 %v6074, %v6162
        %6164 = vmatmul.bf16.gmra.mxu0 %v1734
        %v6165 = vpop.f32.mrf.mxu0
        %v6166 = vadd.f32 %v6077, %v6165
        %v6167 = vpop.f32.mrf.mxu0
        %v6168 = vadd.f32 %v6079, %v6167
        %6169 = vmatmul.bf16.gmra.mxu0 %v1742
        %v6170 = vpop.f32.mrf.mxu0
        %v6171 = vadd.f32 %v6082, %v6170
        %v6172 = vpop.f32.mrf.mxu0
        %v6173 = vadd.f32 %v6084, %v6172
        %6174 = vmatmul.bf16.gmra.mxu0 %v1750
        %v6175 = vpop.f32.mrf.mxu0
        %v6176 = vadd.f32 %v6087, %v6175
        %v6177 = vpop.f32.mrf.mxu0
        %v6178 = vadd.f32 %v6089, %v6177
        %6179 = vmatmul.bf16.gmra.mxu0 %v1758
        %v6180 = vpop.f32.mrf.mxu0
        %v6181 = vadd.f32 %v6092, %v6180
        %v6182 = vpop.f32.mrf.mxu0
        %v6183 = vadd.f32 %v6094, %v6182
        %6184 = vdwg.mxu0
        %6185 = vmatpush.bf16.msra.mxu0 %v4331
        %6186 = vmatpush.bf16.msra.mxu0 %v4323
        %6187 = vmatpush.bf16.msra.mxu0 %v4315
        %6188 = vmatpush.bf16.msra.mxu0 %v4307
        %6189 = vmatpush.bf16.msra.mxu0 %v4299
        %6190 = vmatpush.bf16.msra.mxu0 %v4291
        %6191 = vmatpush.bf16.msra.mxu0 %v4283
        %6192 = vmatpush.bf16.msra.mxu0 %v4275
        %6193 = vmatmul.bf16.gmra.mxu0 %v1639
        %v6194 = vpop.f32.mrf.mxu0
        %v6195 = vadd.f32 %v6106, %v6194
        %v6196 = vpop.f32.mrf.mxu0
        %v6197 = vadd.f32 %v6108, %v6196
        %6198 = vmatmul.bf16.gmra.mxu0 %v1647
        %v6199 = vpop.f32.mrf.mxu0
        %v6200 = vadd.f32 %v6111, %v6199
        %v6201 = vpop.f32.mrf.mxu0
        %v6202 = vadd.f32 %v6113, %v6201
        %6203 = vmatmul.bf16.gmra.mxu0 %v1655
        %v6204 = vpop.f32.mrf.mxu0
        %v6205 = vadd.f32 %v6116, %v6204
        %v6206 = vpop.f32.mrf.mxu0
        %v6207 = vadd.f32 %v6118, %v6206
        %6208 = vmatmul.bf16.gmra.mxu0 %v1663
        %v6209 = vpop.f32.mrf.mxu0
        %v6210 = vadd.f32 %v6121, %v6209
        %v6211 = vpop.f32.mrf.mxu0
        %v6212 = vadd.f32 %v6123, %v6211
        %6213 = vmatmul.bf16.gmra.mxu0 %v1671
        %v6214 = vpop.f32.mrf.mxu0
        %v6215 = vadd.f32 %v6126, %v6214
        %v6216 = vpop.f32.mrf.mxu0
        %v6217 = vadd.f32 %v6128, %v6216
        %6218 = vmatmul.bf16.gmra.mxu0 %v1679
        %v6219 = vpop.f32.mrf.mxu0
        %v6220 = vadd.f32 %v6131, %v6219
        %v6221 = vpop.f32.mrf.mxu0
        %v6222 = vadd.f32 %v6133, %v6221
        %6223 = vmatmul.bf16.gmra.mxu0 %v1687
        %v6224 = vpop.f32.mrf.mxu0
        %v6225 = vadd.f32 %v6136, %v6224
        %v6226 = vpop.f32.mrf.mxu0
        %v6227 = vadd.f32 %v6138, %v6226
        %6228 = vmatmul.bf16.gmra.mxu0 %v1695
        %v6229 = vpop.f32.mrf.mxu0
        %v6230 = vadd.f32 %v6141, %v6229
        %v6231 = vpop.f32.mrf.mxu0
        %v6232 = vadd.f32 %v6143, %v6231
        %6233 = vmatmul.bf16.gmra.mxu0 %v1703
        %v6234 = vpop.f32.mrf.mxu0
        %v6235 = vadd.f32 %v6146, %v6234
        %v6236 = vpop.f32.mrf.mxu0
        %v6237 = vadd.f32 %v6148, %v6236
        %6238 = vmatmul.bf16.gmra.mxu0 %v1711
        %v6239 = vpop.f32.mrf.mxu0
        %v6240 = vadd.f32 %v6151, %v6239
        %v6241 = vpop.f32.mrf.mxu0
        %v6242 = vadd.f32 %v6153, %v6241
        %6243 = vmatmul.bf16.gmra.mxu0 %v1719
        %v6244 = vpop.f32.mrf.mxu0
        %v6245 = vadd.f32 %v6156, %v6244
        %v6246 = vpop.f32.mrf.mxu0
        %v6247 = vadd.f32 %v6158, %v6246
        %6248 = vmatmul.bf16.gmra.mxu0 %v1727
        %v6249 = vpop.f32.mrf.mxu0
        %v6250 = vadd.f32 %v6161, %v6249
        %v6251 = vpop.f32.mrf.mxu0
        %v6252 = vadd.f32 %v6163, %v6251
        %6253 = vmatmul.bf16.gmra.mxu0 %v1735
        %v6254 = vpop.f32.mrf.mxu0
        %v6255 = vadd.f32 %v6166, %v6254
        %v6256 = vpop.f32.mrf.mxu0
        %v6257 = vadd.f32 %v6168, %v6256
        %6258 = vmatmul.bf16.gmra.mxu0 %v1743
        %v6259 = vpop.f32.mrf.mxu0
        %v6260 = vadd.f32 %v6171, %v6259
        %v6261 = vpop.f32.mrf.mxu0
        %v6262 = vadd.f32 %v6173, %v6261
        %6263 = vmatmul.bf16.gmra.mxu0 %v1751
        %v6264 = vpop.f32.mrf.mxu0
        %v6265 = vadd.f32 %v6176, %v6264
        %v6266 = vpop.f32.mrf.mxu0
        %v6267 = vadd.f32 %v6178, %v6266
        %6268 = vmatmul.bf16.gmra.mxu0 %v1759
        %v6269 = vpop.f32.mrf.mxu0
        %v6270 = vadd.f32 %v6181, %v6269
        %v6271 = vpop.f32.mrf.mxu0
        %v6272 = vadd.f32 %v6183, %v6271
        %6273 = vdwg.mxu0
        %6274 = vmatpush.bf16.msra.mxu0 %v3884
        %6275 = vmatpush.bf16.msra.mxu0 %v3876
        %6276 = vmatpush.bf16.msra.mxu0 %v3868
        %6277 = vmatpush.bf16.msra.mxu0 %v3860
        %6278 = vmatpush.bf16.msra.mxu0 %v3852
        %6279 = vmatpush.bf16.msra.mxu0 %v3844
        %6280 = vmatpush.bf16.msra.mxu0 %v3836
        %6281 = vmatpush.bf16.msra.mxu0 %v3828
        %6282 = vmatmul.bf16.gmra.mxu0 %v1632
        %v6283 = vpop.f32.mrf.mxu0
        %v6284 = vadd.f32 %v2276, %v6283
        %v6285 = vpop.f32.mrf.mxu0
        %v6286 = vadd.f32 %v2276, %v6285
        %6287 = vmatmul.bf16.gmra.mxu0 %v1640
        %v6288 = vpop.f32.mrf.mxu0
        %v6289 = vadd.f32 %v2276, %v6288
        %v6290 = vpop.f32.mrf.mxu0
        %v6291 = vadd.f32 %v2276, %v6290
        %6292 = vmatmul.bf16.gmra.mxu0 %v1648
        %v6293 = vpop.f32.mrf.mxu0
        %v6294 = vadd.f32 %v2276, %v6293
        %v6295 = vpop.f32.mrf.mxu0
        %v6296 = vadd.f32 %v2276, %v6295
        %6297 = vmatmul.bf16.gmra.mxu0 %v1656
        %v6298 = vpop.f32.mrf.mxu0
        %v6299 = vadd.f32 %v2276, %v6298
        %v6300 = vpop.f32.mrf.mxu0
        %v6301 = vadd.f32 %v2276, %v6300
        %6302 = vmatmul.bf16.gmra.mxu0 %v1664
        %v6303 = vpop.f32.mrf.mxu0
        %v6304 = vadd.f32 %v2276, %v6303
        %v6305 = vpop.f32.mrf.mxu0
        %v6306 = vadd.f32 %v2276, %v6305
        %6307 = vmatmul.bf16.gmra.mxu0 %v1672
        %v6308 = vpop.f32.mrf.mxu0
        %v6309 = vadd.f32 %v2276, %v6308
        %v6310 = vpop.f32.mrf.mxu0
        %v6311 = vadd.f32 %v2276, %v6310
        %6312 = vmatmul.bf16.gmra.mxu0 %v1680
        %v6313 = vpop.f32.mrf.mxu0
        %v6314 = vadd.f32 %v2276, %v6313
        %v6315 = vpop.f32.mrf.mxu0
        %v6316 = vadd.f32 %v2276, %v6315
        %6317 = vmatmul.bf16.gmra.mxu0 %v1688
        %v6318 = vpop.f32.mrf.mxu0
        %v6319 = vadd.f32 %v2276, %v6318
        %v6320 = vpop.f32.mrf.mxu0
        %v6321 = vadd.f32 %v2276, %v6320
        %6322 = vmatmul.bf16.gmra.mxu0 %v1696
        %v6323 = vpop.f32.mrf.mxu0
        %v6324 = vadd.f32 %v2276, %v6323
        %v6325 = vpop.f32.mrf.mxu0
        %v6326 = vadd.f32 %v2276, %v6325
        %6327 = vmatmul.bf16.gmra.mxu0 %v1704
        %v6328 = vpop.f32.mrf.mxu0
        %v6329 = vadd.f32 %v2276, %v6328
        %v6330 = vpop.f32.mrf.mxu0
        %v6331 = vadd.f32 %v2276, %v6330
        %6332 = vmatmul.bf16.gmra.mxu0 %v1712
        %v6333 = vpop.f32.mrf.mxu0
        %v6334 = vadd.f32 %v2276, %v6333
        %v6335 = vpop.f32.mrf.mxu0
        %v6336 = vadd.f32 %v2276, %v6335
        %6337 = vmatmul.bf16.gmra.mxu0 %v1720
        %v6338 = vpop.f32.mrf.mxu0
        %v6339 = vadd.f32 %v2276, %v6338
        %v6340 = vpop.f32.mrf.mxu0
        %v6341 = vadd.f32 %v2276, %v6340
        %6342 = vmatmul.bf16.gmra.mxu0 %v1728
        %v6343 = vpop.f32.mrf.mxu0
        %v6344 = vadd.f32 %v2276, %v6343
        %v6345 = vpop.f32.mrf.mxu0
        %v6346 = vadd.f32 %v2276, %v6345
        %6347 = vmatmul.bf16.gmra.mxu0 %v1736
        %v6348 = vpop.f32.mrf.mxu0
        %v6349 = vadd.f32 %v2276, %v6348
        %v6350 = vpop.f32.mrf.mxu0
        %v6351 = vadd.f32 %v2276, %v6350
        %6352 = vmatmul.bf16.gmra.mxu0 %v1744
        %v6353 = vpop.f32.mrf.mxu0
        %v6354 = vadd.f32 %v2276, %v6353
        %v6355 = vpop.f32.mrf.mxu0
        %v6356 = vadd.f32 %v2276, %v6355
        %6357 = vmatmul.bf16.gmra.mxu0 %v1752
        %v6358 = vpop.f32.mrf.mxu0
        %v6359 = vadd.f32 %v2276, %v6358
        %v6360 = vpop.f32.mrf.mxu0
        %v6361 = vadd.f32 %v2276, %v6360
        %6362 = vdwg.mxu0
        %6363 = vmatpush.bf16.msra.mxu0 %v3948
        %6364 = vmatpush.bf16.msra.mxu0 %v3940
        %6365 = vmatpush.bf16.msra.mxu0 %v3932
        %6366 = vmatpush.bf16.msra.mxu0 %v3924
        %6367 = vmatpush.bf16.msra.mxu0 %v3916
        %6368 = vmatpush.bf16.msra.mxu0 %v3908
        %6369 = vmatpush.bf16.msra.mxu0 %v3900
        %6370 = vmatpush.bf16.msra.mxu0 %v3892
        %6371 = vmatmul.bf16.gmra.mxu0 %v1633
        %v6372 = vpop.f32.mrf.mxu0
        %v6373 = vadd.f32 %v6284, %v6372
        %v6374 = vpop.f32.mrf.mxu0
        %v6375 = vadd.f32 %v6286, %v6374
        %6376 = vmatmul.bf16.gmra.mxu0 %v1641
        %v6377 = vpop.f32.mrf.mxu0
        %v6378 = vadd.f32 %v6289, %v6377
        %v6379 = vpop.f32.mrf.mxu0
        %v6380 = vadd.f32 %v6291, %v6379
        %6381 = vmatmul.bf16.gmra.mxu0 %v1649
        %v6382 = vpop.f32.mrf.mxu0
        %v6383 = vadd.f32 %v6294, %v6382
        %v6384 = vpop.f32.mrf.mxu0
        %v6385 = vadd.f32 %v6296, %v6384
        %6386 = vmatmul.bf16.gmra.mxu0 %v1657
        %v6387 = vpop.f32.mrf.mxu0
        %v6388 = vadd.f32 %v6299, %v6387
        %v6389 = vpop.f32.mrf.mxu0
        %v6390 = vadd.f32 %v6301, %v6389
        %6391 = vmatmul.bf16.gmra.mxu0 %v1665
        %v6392 = vpop.f32.mrf.mxu0
        %v6393 = vadd.f32 %v6304, %v6392
        %v6394 = vpop.f32.mrf.mxu0
        %v6395 = vadd.f32 %v6306, %v6394
        %6396 = vmatmul.bf16.gmra.mxu0 %v1673
        %v6397 = vpop.f32.mrf.mxu0
        %v6398 = vadd.f32 %v6309, %v6397
        %v6399 = vpop.f32.mrf.mxu0
        %v6400 = vadd.f32 %v6311, %v6399
        %6401 = vmatmul.bf16.gmra.mxu0 %v1681
        %v6402 = vpop.f32.mrf.mxu0
        %v6403 = vadd.f32 %v6314, %v6402
        %v6404 = vpop.f32.mrf.mxu0
        %v6405 = vadd.f32 %v6316, %v6404
        %6406 = vmatmul.bf16.gmra.mxu0 %v1689
        %v6407 = vpop.f32.mrf.mxu0
        %v6408 = vadd.f32 %v6319, %v6407
        %v6409 = vpop.f32.mrf.mxu0
        %v6410 = vadd.f32 %v6321, %v6409
        %6411 = vmatmul.bf16.gmra.mxu0 %v1697
        %v6412 = vpop.f32.mrf.mxu0
        %v6413 = vadd.f32 %v6324, %v6412
        %v6414 = vpop.f32.mrf.mxu0
        %v6415 = vadd.f32 %v6326, %v6414
        %6416 = vmatmul.bf16.gmra.mxu0 %v1705
        %v6417 = vpop.f32.mrf.mxu0
        %v6418 = vadd.f32 %v6329, %v6417
        %v6419 = vpop.f32.mrf.mxu0
        %v6420 = vadd.f32 %v6331, %v6419
        %6421 = vmatmul.bf16.gmra.mxu0 %v1713
        %v6422 = vpop.f32.mrf.mxu0
        %v6423 = vadd.f32 %v6334, %v6422
        %v6424 = vpop.f32.mrf.mxu0
        %v6425 = vadd.f32 %v6336, %v6424
        %6426 = vmatmul.bf16.gmra.mxu0 %v1721
        %v6427 = vpop.f32.mrf.mxu0
        %v6428 = vadd.f32 %v6339, %v6427
        %v6429 = vpop.f32.mrf.mxu0
        %v6430 = vadd.f32 %v6341, %v6429
        %6431 = vmatmul.bf16.gmra.mxu0 %v1729
        %v6432 = vpop.f32.mrf.mxu0
        %v6433 = vadd.f32 %v6344, %v6432
        %v6434 = vpop.f32.mrf.mxu0
        %v6435 = vadd.f32 %v6346, %v6434
        %6436 = vmatmul.bf16.gmra.mxu0 %v1737
        %v6437 = vpop.f32.mrf.mxu0
        %v6438 = vadd.f32 %v6349, %v6437
        %v6439 = vpop.f32.mrf.mxu0
        %v6440 = vadd.f32 %v6351, %v6439
        %6441 = vmatmul.bf16.gmra.mxu0 %v1745
        %v6442 = vpop.f32.mrf.mxu0
        %v6443 = vadd.f32 %v6354, %v6442
        %v6444 = vpop.f32.mrf.mxu0
        %v6445 = vadd.f32 %v6356, %v6444
        %6446 = vmatmul.bf16.gmra.mxu0 %v1753
        %v6447 = vpop.f32.mrf.mxu0
        %v6448 = vadd.f32 %v6359, %v6447
        %v6449 = vpop.f32.mrf.mxu0
        %v6450 = vadd.f32 %v6361, %v6449
        %6451 = vdwg.mxu0
        %6452 = vmatpush.bf16.msra.mxu0 %v4012
        %6453 = vmatpush.bf16.msra.mxu0 %v4004
        %6454 = vmatpush.bf16.msra.mxu0 %v3996
        %6455 = vmatpush.bf16.msra.mxu0 %v3988
        %6456 = vmatpush.bf16.msra.mxu0 %v3980
        %6457 = vmatpush.bf16.msra.mxu0 %v3972
        %6458 = vmatpush.bf16.msra.mxu0 %v3964
        %6459 = vmatpush.bf16.msra.mxu0 %v3956
        %6460 = vmatmul.bf16.gmra.mxu0 %v1634
        %v6461 = vpop.f32.mrf.mxu0
        %v6462 = vadd.f32 %v6373, %v6461
        %v6463 = vpop.f32.mrf.mxu0
        %v6464 = vadd.f32 %v6375, %v6463
        %6465 = vmatmul.bf16.gmra.mxu0 %v1642
        %v6466 = vpop.f32.mrf.mxu0
        %v6467 = vadd.f32 %v6378, %v6466
        %v6468 = vpop.f32.mrf.mxu0
        %v6469 = vadd.f32 %v6380, %v6468
        %6470 = vmatmul.bf16.gmra.mxu0 %v1650
        %v6471 = vpop.f32.mrf.mxu0
        %v6472 = vadd.f32 %v6383, %v6471
        %v6473 = vpop.f32.mrf.mxu0
        %v6474 = vadd.f32 %v6385, %v6473
        %6475 = vmatmul.bf16.gmra.mxu0 %v1658
        %v6476 = vpop.f32.mrf.mxu0
        %v6477 = vadd.f32 %v6388, %v6476
        %v6478 = vpop.f32.mrf.mxu0
        %v6479 = vadd.f32 %v6390, %v6478
        %6480 = vmatmul.bf16.gmra.mxu0 %v1666
        %v6481 = vpop.f32.mrf.mxu0
        %v6482 = vadd.f32 %v6393, %v6481
        %v6483 = vpop.f32.mrf.mxu0
        %v6484 = vadd.f32 %v6395, %v6483
        %6485 = vmatmul.bf16.gmra.mxu0 %v1674
        %v6486 = vpop.f32.mrf.mxu0
        %v6487 = vadd.f32 %v6398, %v6486
        %v6488 = vpop.f32.mrf.mxu0
        %v6489 = vadd.f32 %v6400, %v6488
        %6490 = vmatmul.bf16.gmra.mxu0 %v1682
        %v6491 = vpop.f32.mrf.mxu0
        %v6492 = vadd.f32 %v6403, %v6491
        %v6493 = vpop.f32.mrf.mxu0
        %v6494 = vadd.f32 %v6405, %v6493
        %6495 = vmatmul.bf16.gmra.mxu0 %v1690
        %v6496 = vpop.f32.mrf.mxu0
        %v6497 = vadd.f32 %v6408, %v6496
        %v6498 = vpop.f32.mrf.mxu0
        %v6499 = vadd.f32 %v6410, %v6498
        %6500 = vmatmul.bf16.gmra.mxu0 %v1698
        %v6501 = vpop.f32.mrf.mxu0
        %v6502 = vadd.f32 %v6413, %v6501
        %v6503 = vpop.f32.mrf.mxu0
        %v6504 = vadd.f32 %v6415, %v6503
        %6505 = vmatmul.bf16.gmra.mxu0 %v1706
        %v6506 = vpop.f32.mrf.mxu0
        %v6507 = vadd.f32 %v6418, %v6506
        %v6508 = vpop.f32.mrf.mxu0
        %v6509 = vadd.f32 %v6420, %v6508
        %6510 = vmatmul.bf16.gmra.mxu0 %v1714
        %v6511 = vpop.f32.mrf.mxu0
        %v6512 = vadd.f32 %v6423, %v6511
        %v6513 = vpop.f32.mrf.mxu0
        %v6514 = vadd.f32 %v6425, %v6513
        %6515 = vmatmul.bf16.gmra.mxu0 %v1722
        %v6516 = vpop.f32.mrf.mxu0
        %v6517 = vadd.f32 %v6428, %v6516
        %v6518 = vpop.f32.mrf.mxu0
        %v6519 = vadd.f32 %v6430, %v6518
        %6520 = vmatmul.bf16.gmra.mxu0 %v1730
        %v6521 = vpop.f32.mrf.mxu0
        %v6522 = vadd.f32 %v6433, %v6521
        %v6523 = vpop.f32.mrf.mxu0
        %v6524 = vadd.f32 %v6435, %v6523
        %6525 = vmatmul.bf16.gmra.mxu0 %v1738
        %v6526 = vpop.f32.mrf.mxu0
        %v6527 = vadd.f32 %v6438, %v6526
        %v6528 = vpop.f32.mrf.mxu0
        %v6529 = vadd.f32 %v6440, %v6528
        %6530 = vmatmul.bf16.gmra.mxu0 %v1746
        %v6531 = vpop.f32.mrf.mxu0
        %v6532 = vadd.f32 %v6443, %v6531
        %v6533 = vpop.f32.mrf.mxu0
        %v6534 = vadd.f32 %v6445, %v6533
        %6535 = vmatmul.bf16.gmra.mxu0 %v1754
        %v6536 = vpop.f32.mrf.mxu0
        %v6537 = vadd.f32 %v6448, %v6536
        %v6538 = vpop.f32.mrf.mxu0
        %v6539 = vadd.f32 %v6450, %v6538
        %6540 = vdwg.mxu0
        %6541 = vmatpush.bf16.msra.mxu0 %v4076
        %6542 = vmatpush.bf16.msra.mxu0 %v4068
        %6543 = vmatpush.bf16.msra.mxu0 %v4060
        %6544 = vmatpush.bf16.msra.mxu0 %v4052
        %6545 = vmatpush.bf16.msra.mxu0 %v4044
        %6546 = vmatpush.bf16.msra.mxu0 %v4036
        %6547 = vmatpush.bf16.msra.mxu0 %v4028
        %6548 = vmatpush.bf16.msra.mxu0 %v4020
        %6549 = vmatmul.bf16.gmra.mxu0 %v1635
        %v6550 = vpop.f32.mrf.mxu0
        %v6551 = vadd.f32 %v6462, %v6550
        %v6552 = vpop.f32.mrf.mxu0
        %v6553 = vadd.f32 %v6464, %v6552
        %6554 = vmatmul.bf16.gmra.mxu0 %v1643
        %v6555 = vpop.f32.mrf.mxu0
        %v6556 = vadd.f32 %v6467, %v6555
        %v6557 = vpop.f32.mrf.mxu0
        %v6558 = vadd.f32 %v6469, %v6557
        %6559 = vmatmul.bf16.gmra.mxu0 %v1651
        %v6560 = vpop.f32.mrf.mxu0
        %v6561 = vadd.f32 %v6472, %v6560
        %v6562 = vpop.f32.mrf.mxu0
        %v6563 = vadd.f32 %v6474, %v6562
        %6564 = vmatmul.bf16.gmra.mxu0 %v1659
        %v6565 = vpop.f32.mrf.mxu0
        %v6566 = vadd.f32 %v6477, %v6565
        %v6567 = vpop.f32.mrf.mxu0
        %v6568 = vadd.f32 %v6479, %v6567
        %6569 = vmatmul.bf16.gmra.mxu0 %v1667
        %v6570 = vpop.f32.mrf.mxu0
        %v6571 = vadd.f32 %v6482, %v6570
        %v6572 = vpop.f32.mrf.mxu0
        %v6573 = vadd.f32 %v6484, %v6572
        %6574 = vmatmul.bf16.gmra.mxu0 %v1675
        %v6575 = vpop.f32.mrf.mxu0
        %v6576 = vadd.f32 %v6487, %v6575
        %v6577 = vpop.f32.mrf.mxu0
        %v6578 = vadd.f32 %v6489, %v6577
        %6579 = vmatmul.bf16.gmra.mxu0 %v1683
        %v6580 = vpop.f32.mrf.mxu0
        %v6581 = vadd.f32 %v6492, %v6580
        %v6582 = vpop.f32.mrf.mxu0
        %v6583 = vadd.f32 %v6494, %v6582
        %6584 = vmatmul.bf16.gmra.mxu0 %v1691
        %v6585 = vpop.f32.mrf.mxu0
        %v6586 = vadd.f32 %v6497, %v6585
        %v6587 = vpop.f32.mrf.mxu0
        %v6588 = vadd.f32 %v6499, %v6587
        %6589 = vmatmul.bf16.gmra.mxu0 %v1699
        %v6590 = vpop.f32.mrf.mxu0
        %v6591 = vadd.f32 %v6502, %v6590
        %v6592 = vpop.f32.mrf.mxu0
        %v6593 = vadd.f32 %v6504, %v6592
        %6594 = vmatmul.bf16.gmra.mxu0 %v1707
        %v6595 = vpop.f32.mrf.mxu0
        %v6596 = vadd.f32 %v6507, %v6595
        %v6597 = vpop.f32.mrf.mxu0
        %v6598 = vadd.f32 %v6509, %v6597
        %6599 = vmatmul.bf16.gmra.mxu0 %v1715
        %v6600 = vpop.f32.mrf.mxu0
        %v6601 = vadd.f32 %v6512, %v6600
        %v6602 = vpop.f32.mrf.mxu0
        %v6603 = vadd.f32 %v6514, %v6602
        %6604 = vmatmul.bf16.gmra.mxu0 %v1723
        %v6605 = vpop.f32.mrf.mxu0
        %v6606 = vadd.f32 %v6517, %v6605
        %v6607 = vpop.f32.mrf.mxu0
        %v6608 = vadd.f32 %v6519, %v6607
        %6609 = vmatmul.bf16.gmra.mxu0 %v1731
        %v6610 = vpop.f32.mrf.mxu0
        %v6611 = vadd.f32 %v6522, %v6610
        %v6612 = vpop.f32.mrf.mxu0
        %v6613 = vadd.f32 %v6524, %v6612
        %6614 = vmatmul.bf16.gmra.mxu0 %v1739
        %v6615 = vpop.f32.mrf.mxu0
        %v6616 = vadd.f32 %v6527, %v6615
        %v6617 = vpop.f32.mrf.mxu0
        %v6618 = vadd.f32 %v6529, %v6617
        %6619 = vmatmul.bf16.gmra.mxu0 %v1747
        %v6620 = vpop.f32.mrf.mxu0
        %v6621 = vadd.f32 %v6532, %v6620
        %v6622 = vpop.f32.mrf.mxu0
        %v6623 = vadd.f32 %v6534, %v6622
        %6624 = vmatmul.bf16.gmra.mxu0 %v1755
        %v6625 = vpop.f32.mrf.mxu0
        %v6626 = vadd.f32 %v6537, %v6625
        %v6627 = vpop.f32.mrf.mxu0
        %v6628 = vadd.f32 %v6539, %v6627
        %6629 = vdwg.mxu0
        %6630 = vmatpush.bf16.msra.mxu0 %v4140
        %6631 = vmatpush.bf16.msra.mxu0 %v4132
        %6632 = vmatpush.bf16.msra.mxu0 %v4124
        %6633 = vmatpush.bf16.msra.mxu0 %v4116
        %6634 = vmatpush.bf16.msra.mxu0 %v4108
        %6635 = vmatpush.bf16.msra.mxu0 %v4100
        %6636 = vmatpush.bf16.msra.mxu0 %v4092
        %6637 = vmatpush.bf16.msra.mxu0 %v4084
        %6638 = vmatmul.bf16.gmra.mxu0 %v1636
        %v6639 = vpop.f32.mrf.mxu0
        %v6640 = vadd.f32 %v6551, %v6639
        %v6641 = vpop.f32.mrf.mxu0
        %v6642 = vadd.f32 %v6553, %v6641
        %6643 = vmatmul.bf16.gmra.mxu0 %v1644
        %v6644 = vpop.f32.mrf.mxu0
        %v6645 = vadd.f32 %v6556, %v6644
        %v6646 = vpop.f32.mrf.mxu0
        %v6647 = vadd.f32 %v6558, %v6646
        %6648 = vmatmul.bf16.gmra.mxu0 %v1652
        %v6649 = vpop.f32.mrf.mxu0
        %v6650 = vadd.f32 %v6561, %v6649
        %v6651 = vpop.f32.mrf.mxu0
        %v6652 = vadd.f32 %v6563, %v6651
        %6653 = vmatmul.bf16.gmra.mxu0 %v1660
        %v6654 = vpop.f32.mrf.mxu0
        %v6655 = vadd.f32 %v6566, %v6654
        %v6656 = vpop.f32.mrf.mxu0
        %v6657 = vadd.f32 %v6568, %v6656
        %6658 = vmatmul.bf16.gmra.mxu0 %v1668
        %v6659 = vpop.f32.mrf.mxu0
        %v6660 = vadd.f32 %v6571, %v6659
        %v6661 = vpop.f32.mrf.mxu0
        %v6662 = vadd.f32 %v6573, %v6661
        %6663 = vmatmul.bf16.gmra.mxu0 %v1676
        %v6664 = vpop.f32.mrf.mxu0
        %v6665 = vadd.f32 %v6576, %v6664
        %v6666 = vpop.f32.mrf.mxu0
        %v6667 = vadd.f32 %v6578, %v6666
        %6668 = vmatmul.bf16.gmra.mxu0 %v1684
        %v6669 = vpop.f32.mrf.mxu0
        %v6670 = vadd.f32 %v6581, %v6669
        %v6671 = vpop.f32.mrf.mxu0
        %v6672 = vadd.f32 %v6583, %v6671
        %6673 = vmatmul.bf16.gmra.mxu0 %v1692
        %v6674 = vpop.f32.mrf.mxu0
        %v6675 = vadd.f32 %v6586, %v6674
        %v6676 = vpop.f32.mrf.mxu0
        %v6677 = vadd.f32 %v6588, %v6676
        %6678 = vmatmul.bf16.gmra.mxu0 %v1700
        %v6679 = vpop.f32.mrf.mxu0
        %v6680 = vadd.f32 %v6591, %v6679
        %v6681 = vpop.f32.mrf.mxu0
        %v6682 = vadd.f32 %v6593, %v6681
        %6683 = vmatmul.bf16.gmra.mxu0 %v1708
        %v6684 = vpop.f32.mrf.mxu0
        %v6685 = vadd.f32 %v6596, %v6684
        %v6686 = vpop.f32.mrf.mxu0
        %v6687 = vadd.f32 %v6598, %v6686
        %6688 = vmatmul.bf16.gmra.mxu0 %v1716
        %v6689 = vpop.f32.mrf.mxu0
        %v6690 = vadd.f32 %v6601, %v6689
        %v6691 = vpop.f32.mrf.mxu0
        %v6692 = vadd.f32 %v6603, %v6691
        %6693 = vmatmul.bf16.gmra.mxu0 %v1724
        %v6694 = vpop.f32.mrf.mxu0
        %v6695 = vadd.f32 %v6606, %v6694
        %v6696 = vpop.f32.mrf.mxu0
        %v6697 = vadd.f32 %v6608, %v6696
        %6698 = vmatmul.bf16.gmra.mxu0 %v1732
        %v6699 = vpop.f32.mrf.mxu0
        %v6700 = vadd.f32 %v6611, %v6699
        %v6701 = vpop.f32.mrf.mxu0
        %v6702 = vadd.f32 %v6613, %v6701
        %6703 = vmatmul.bf16.gmra.mxu0 %v1740
        %v6704 = vpop.f32.mrf.mxu0
        %v6705 = vadd.f32 %v6616, %v6704
        %v6706 = vpop.f32.mrf.mxu0
        %v6707 = vadd.f32 %v6618, %v6706
        %6708 = vmatmul.bf16.gmra.mxu0 %v1748
        %v6709 = vpop.f32.mrf.mxu0
        %v6710 = vadd.f32 %v6621, %v6709
        %v6711 = vpop.f32.mrf.mxu0
        %v6712 = vadd.f32 %v6623, %v6711
        %6713 = vmatmul.bf16.gmra.mxu0 %v1756
        %v6714 = vpop.f32.mrf.mxu0
        %v6715 = vadd.f32 %v6626, %v6714
        %v6716 = vpop.f32.mrf.mxu0
        %v6717 = vadd.f32 %v6628, %v6716
        %6718 = vdwg.mxu0
        %6719 = vmatpush.bf16.msra.mxu0 %v4204
        %6720 = vmatpush.bf16.msra.mxu0 %v4196
        %6721 = vmatpush.bf16.msra.mxu0 %v4188
        %6722 = vmatpush.bf16.msra.mxu0 %v4180
        %6723 = vmatpush.bf16.msra.mxu0 %v4172
        %6724 = vmatpush.bf16.msra.mxu0 %v4164
        %6725 = vmatpush.bf16.msra.mxu0 %v4156
        %6726 = vmatpush.bf16.msra.mxu0 %v4148
        %6727 = vmatmul.bf16.gmra.mxu0 %v1637
        %v6728 = vpop.f32.mrf.mxu0
        %v6729 = vadd.f32 %v6640, %v6728
        %v6730 = vpop.f32.mrf.mxu0
        %v6731 = vadd.f32 %v6642, %v6730
        %6732 = vmatmul.bf16.gmra.mxu0 %v1645
        %v6733 = vpop.f32.mrf.mxu0
        %v6734 = vadd.f32 %v6645, %v6733
        %v6735 = vpop.f32.mrf.mxu0
        %v6736 = vadd.f32 %v6647, %v6735
        %6737 = vmatmul.bf16.gmra.mxu0 %v1653
        %v6738 = vpop.f32.mrf.mxu0
        %v6739 = vadd.f32 %v6650, %v6738
        %v6740 = vpop.f32.mrf.mxu0
        %v6741 = vadd.f32 %v6652, %v6740
        %6742 = vmatmul.bf16.gmra.mxu0 %v1661
        %v6743 = vpop.f32.mrf.mxu0
        %v6744 = vadd.f32 %v6655, %v6743
        %v6745 = vpop.f32.mrf.mxu0
        %v6746 = vadd.f32 %v6657, %v6745
        %6747 = vmatmul.bf16.gmra.mxu0 %v1669
        %v6748 = vpop.f32.mrf.mxu0
        %v6749 = vadd.f32 %v6660, %v6748
        %v6750 = vpop.f32.mrf.mxu0
        %v6751 = vadd.f32 %v6662, %v6750
        %6752 = vmatmul.bf16.gmra.mxu0 %v1677
        %v6753 = vpop.f32.mrf.mxu0
        %v6754 = vadd.f32 %v6665, %v6753
        %v6755 = vpop.f32.mrf.mxu0
        %v6756 = vadd.f32 %v6667, %v6755
        %6757 = vmatmul.bf16.gmra.mxu0 %v1685
        %v6758 = vpop.f32.mrf.mxu0
        %v6759 = vadd.f32 %v6670, %v6758
        %v6760 = vpop.f32.mrf.mxu0
        %v6761 = vadd.f32 %v6672, %v6760
        %6762 = vmatmul.bf16.gmra.mxu0 %v1693
        %v6763 = vpop.f32.mrf.mxu0
        %v6764 = vadd.f32 %v6675, %v6763
        %v6765 = vpop.f32.mrf.mxu0
        %v6766 = vadd.f32 %v6677, %v6765
        %6767 = vmatmul.bf16.gmra.mxu0 %v1701
        %v6768 = vpop.f32.mrf.mxu0
        %v6769 = vadd.f32 %v6680, %v6768
        %v6770 = vpop.f32.mrf.mxu0
        %v6771 = vadd.f32 %v6682, %v6770
        %6772 = vmatmul.bf16.gmra.mxu0 %v1709
        %v6773 = vpop.f32.mrf.mxu0
        %v6774 = vadd.f32 %v6685, %v6773
        %v6775 = vpop.f32.mrf.mxu0
        %v6776 = vadd.f32 %v6687, %v6775
        %6777 = vmatmul.bf16.gmra.mxu0 %v1717
        %v6778 = vpop.f32.mrf.mxu0
        %v6779 = vadd.f32 %v6690, %v6778
        %v6780 = vpop.f32.mrf.mxu0
        %v6781 = vadd.f32 %v6692, %v6780
        %6782 = vmatmul.bf16.gmra.mxu0 %v1725
        %v6783 = vpop.f32.mrf.mxu0
        %v6784 = vadd.f32 %v6695, %v6783
        %v6785 = vpop.f32.mrf.mxu0
        %v6786 = vadd.f32 %v6697, %v6785
        %6787 = vmatmul.bf16.gmra.mxu0 %v1733
        %v6788 = vpop.f32.mrf.mxu0
        %v6789 = vadd.f32 %v6700, %v6788
        %v6790 = vpop.f32.mrf.mxu0
        %v6791 = vadd.f32 %v6702, %v6790
        %6792 = vmatmul.bf16.gmra.mxu0 %v1741
        %v6793 = vpop.f32.mrf.mxu0
        %v6794 = vadd.f32 %v6705, %v6793
        %v6795 = vpop.f32.mrf.mxu0
        %v6796 = vadd.f32 %v6707, %v6795
        %6797 = vmatmul.bf16.gmra.mxu0 %v1749
        %v6798 = vpop.f32.mrf.mxu0
        %v6799 = vadd.f32 %v6710, %v6798
        %v6800 = vpop.f32.mrf.mxu0
        %v6801 = vadd.f32 %v6712, %v6800
        %6802 = vmatmul.bf16.gmra.mxu0 %v1757
        %v6803 = vpop.f32.mrf.mxu0
        %v6804 = vadd.f32 %v6715, %v6803
        %v6805 = vpop.f32.mrf.mxu0
        %v6806 = vadd.f32 %v6717, %v6805
        %6807 = vdwg.mxu0
        %6808 = vmatpush.bf16.msra.mxu0 %v4268
        %6809 = vmatpush.bf16.msra.mxu0 %v4260
        %6810 = vmatpush.bf16.msra.mxu0 %v4252
        %6811 = vmatpush.bf16.msra.mxu0 %v4244
        %6812 = vmatpush.bf16.msra.mxu0 %v4236
        %6813 = vmatpush.bf16.msra.mxu0 %v4228
        %6814 = vmatpush.bf16.msra.mxu0 %v4220
        %6815 = vmatpush.bf16.msra.mxu0 %v4212
        %6816 = vmatmul.bf16.gmra.mxu0 %v1638
        %v6817 = vpop.f32.mrf.mxu0
        %v6818 = vadd.f32 %v6729, %v6817
        %v6819 = vpop.f32.mrf.mxu0
        %v6820 = vadd.f32 %v6731, %v6819
        %6821 = vmatmul.bf16.gmra.mxu0 %v1646
        %v6822 = vpop.f32.mrf.mxu0
        %v6823 = vadd.f32 %v6734, %v6822
        %v6824 = vpop.f32.mrf.mxu0
        %v6825 = vadd.f32 %v6736, %v6824
        %6826 = vmatmul.bf16.gmra.mxu0 %v1654
        %v6827 = vpop.f32.mrf.mxu0
        %v6828 = vadd.f32 %v6739, %v6827
        %v6829 = vpop.f32.mrf.mxu0
        %v6830 = vadd.f32 %v6741, %v6829
        %6831 = vmatmul.bf16.gmra.mxu0 %v1662
        %v6832 = vpop.f32.mrf.mxu0
        %v6833 = vadd.f32 %v6744, %v6832
        %v6834 = vpop.f32.mrf.mxu0
        %v6835 = vadd.f32 %v6746, %v6834
        %6836 = vmatmul.bf16.gmra.mxu0 %v1670
        %v6837 = vpop.f32.mrf.mxu0
        %v6838 = vadd.f32 %v6749, %v6837
        %v6839 = vpop.f32.mrf.mxu0
        %v6840 = vadd.f32 %v6751, %v6839
        %6841 = vmatmul.bf16.gmra.mxu0 %v1678
        %v6842 = vpop.f32.mrf.mxu0
        %v6843 = vadd.f32 %v6754, %v6842
        %v6844 = vpop.f32.mrf.mxu0
        %v6845 = vadd.f32 %v6756, %v6844
        %6846 = vmatmul.bf16.gmra.mxu0 %v1686
        %v6847 = vpop.f32.mrf.mxu0
        %v6848 = vadd.f32 %v6759, %v6847
        %v6849 = vpop.f32.mrf.mxu0
        %v6850 = vadd.f32 %v6761, %v6849
        %6851 = vmatmul.bf16.gmra.mxu0 %v1694
        %v6852 = vpop.f32.mrf.mxu0
        %v6853 = vadd.f32 %v6764, %v6852
        %v6854 = vpop.f32.mrf.mxu0
        %v6855 = vadd.f32 %v6766, %v6854
        %6856 = vmatmul.bf16.gmra.mxu0 %v1702
        %v6857 = vpop.f32.mrf.mxu0
        %v6858 = vadd.f32 %v6769, %v6857
        %v6859 = vpop.f32.mrf.mxu0
        %v6860 = vadd.f32 %v6771, %v6859
        %6861 = vmatmul.bf16.gmra.mxu0 %v1710
        %v6862 = vpop.f32.mrf.mxu0
        %v6863 = vadd.f32 %v6774, %v6862
        %v6864 = vpop.f32.mrf.mxu0
        %v6865 = vadd.f32 %v6776, %v6864
        %6866 = vmatmul.bf16.gmra.mxu0 %v1718
        %v6867 = vpop.f32.mrf.mxu0
        %v6868 = vadd.f32 %v6779, %v6867
        %v6869 = vpop.f32.mrf.mxu0
        %v6870 = vadd.f32 %v6781, %v6869
        %6871 = vmatmul.bf16.gmra.mxu0 %v1726
        %v6872 = vpop.f32.mrf.mxu0
        %v6873 = vadd.f32 %v6784, %v6872
        %v6874 = vpop.f32.mrf.mxu0
        %v6875 = vadd.f32 %v6786, %v6874
        %6876 = vmatmul.bf16.gmra.mxu0 %v1734
        %v6877 = vpop.f32.mrf.mxu0
        %v6878 = vadd.f32 %v6789, %v6877
        %v6879 = vpop.f32.mrf.mxu0
        %v6880 = vadd.f32 %v6791, %v6879
        %6881 = vmatmul.bf16.gmra.mxu0 %v1742
        %v6882 = vpop.f32.mrf.mxu0
        %v6883 = vadd.f32 %v6794, %v6882
        %v6884 = vpop.f32.mrf.mxu0
        %v6885 = vadd.f32 %v6796, %v6884
        %6886 = vmatmul.bf16.gmra.mxu0 %v1750
        %v6887 = vpop.f32.mrf.mxu0
        %v6888 = vadd.f32 %v6799, %v6887
        %v6889 = vpop.f32.mrf.mxu0
        %v6890 = vadd.f32 %v6801, %v6889
        %6891 = vmatmul.bf16.gmra.mxu0 %v1758
        %v6892 = vpop.f32.mrf.mxu0
        %v6893 = vadd.f32 %v6804, %v6892
        %v6894 = vpop.f32.mrf.mxu0
        %v6895 = vadd.f32 %v6806, %v6894
        %6896 = vdwg.mxu0
        %6897 = vmatpush.bf16.msra.mxu0 %v4332
        %6898 = vmatpush.bf16.msra.mxu0 %v4324
        %6899 = vmatpush.bf16.msra.mxu0 %v4316
        %6900 = vmatpush.bf16.msra.mxu0 %v4308
        %6901 = vmatpush.bf16.msra.mxu0 %v4300
        %6902 = vmatpush.bf16.msra.mxu0 %v4292
        %6903 = vmatpush.bf16.msra.mxu0 %v4284
        %6904 = vmatpush.bf16.msra.mxu0 %v4276
        %6905 = vmatmul.bf16.gmra.mxu0 %v1639
        %v6906 = vpop.f32.mrf.mxu0
        %v6907 = vadd.f32 %v6818, %v6906
        %v6908 = vpop.f32.mrf.mxu0
        %v6909 = vadd.f32 %v6820, %v6908
        %6910 = vmatmul.bf16.gmra.mxu0 %v1647
        %v6911 = vpop.f32.mrf.mxu0
        %v6912 = vadd.f32 %v6823, %v6911
        %v6913 = vpop.f32.mrf.mxu0
        %v6914 = vadd.f32 %v6825, %v6913
        %6915 = vmatmul.bf16.gmra.mxu0 %v1655
        %v6916 = vpop.f32.mrf.mxu0
        %v6917 = vadd.f32 %v6828, %v6916
        %v6918 = vpop.f32.mrf.mxu0
        %v6919 = vadd.f32 %v6830, %v6918
        %6920 = vmatmul.bf16.gmra.mxu0 %v1663
        %v6921 = vpop.f32.mrf.mxu0
        %v6922 = vadd.f32 %v6833, %v6921
        %v6923 = vpop.f32.mrf.mxu0
        %v6924 = vadd.f32 %v6835, %v6923
        %6925 = vmatmul.bf16.gmra.mxu0 %v1671
        %v6926 = vpop.f32.mrf.mxu0
        %v6927 = vadd.f32 %v6838, %v6926
        %v6928 = vpop.f32.mrf.mxu0
        %v6929 = vadd.f32 %v6840, %v6928
        %6930 = vmatmul.bf16.gmra.mxu0 %v1679
        %v6931 = vpop.f32.mrf.mxu0
        %v6932 = vadd.f32 %v6843, %v6931
        %v6933 = vpop.f32.mrf.mxu0
        %v6934 = vadd.f32 %v6845, %v6933
        %6935 = vmatmul.bf16.gmra.mxu0 %v1687
        %v6936 = vpop.f32.mrf.mxu0
        %v6937 = vadd.f32 %v6848, %v6936
        %v6938 = vpop.f32.mrf.mxu0
        %v6939 = vadd.f32 %v6850, %v6938
        %6940 = vmatmul.bf16.gmra.mxu0 %v1695
        %v6941 = vpop.f32.mrf.mxu0
        %v6942 = vadd.f32 %v6853, %v6941
        %v6943 = vpop.f32.mrf.mxu0
        %v6944 = vadd.f32 %v6855, %v6943
        %6945 = vmatmul.bf16.gmra.mxu0 %v1703
        %v6946 = vpop.f32.mrf.mxu0
        %v6947 = vadd.f32 %v6858, %v6946
        %v6948 = vpop.f32.mrf.mxu0
        %v6949 = vadd.f32 %v6860, %v6948
        %6950 = vmatmul.bf16.gmra.mxu0 %v1711
        %v6951 = vpop.f32.mrf.mxu0
        %v6952 = vadd.f32 %v6863, %v6951
        %v6953 = vpop.f32.mrf.mxu0
        %v6954 = vadd.f32 %v6865, %v6953
        %6955 = vmatmul.bf16.gmra.mxu0 %v1719
        %v6956 = vpop.f32.mrf.mxu0
        %v6957 = vadd.f32 %v6868, %v6956
        %v6958 = vpop.f32.mrf.mxu0
        %v6959 = vadd.f32 %v6870, %v6958
        %6960 = vmatmul.bf16.gmra.mxu0 %v1727
        %v6961 = vpop.f32.mrf.mxu0
        %v6962 = vadd.f32 %v6873, %v6961
        %v6963 = vpop.f32.mrf.mxu0
        %v6964 = vadd.f32 %v6875, %v6963
        %6965 = vmatmul.bf16.gmra.mxu0 %v1735
        %v6966 = vpop.f32.mrf.mxu0
        %v6967 = vadd.f32 %v6878, %v6966
        %v6968 = vpop.f32.mrf.mxu0
        %v6969 = vadd.f32 %v6880, %v6968
        %6970 = vmatmul.bf16.gmra.mxu0 %v1743
        %v6971 = vpop.f32.mrf.mxu0
        %v6972 = vadd.f32 %v6883, %v6971
        %v6973 = vpop.f32.mrf.mxu0
        %v6974 = vadd.f32 %v6885, %v6973
        %6975 = vmatmul.bf16.gmra.mxu0 %v1751
        %v6976 = vpop.f32.mrf.mxu0
        %v6977 = vadd.f32 %v6888, %v6976
        %v6978 = vpop.f32.mrf.mxu0
        %v6979 = vadd.f32 %v6890, %v6978
        %6980 = vmatmul.bf16.gmra.mxu0 %v1759
        %v6981 = vpop.f32.mrf.mxu0
        %v6982 = vadd.f32 %v6893, %v6981
        %v6983 = vpop.f32.mrf.mxu0
        %v6984 = vadd.f32 %v6895, %v6983
        %6985 = vdwg.mxu0
        %6986 = vmatpush.bf16.msra.mxu0 %v3885
        %6987 = vmatpush.bf16.msra.mxu0 %v3877
        %6988 = vmatpush.bf16.msra.mxu0 %v3869
        %6989 = vmatpush.bf16.msra.mxu0 %v3861
        %6990 = vmatpush.bf16.msra.mxu0 %v3853
        %6991 = vmatpush.bf16.msra.mxu0 %v3845
        %6992 = vmatpush.bf16.msra.mxu0 %v3837
        %6993 = vmatpush.bf16.msra.mxu0 %v3829
        %6994 = vmatmul.bf16.gmra.mxu0 %v1632
        %v6995 = vpop.f32.mrf.mxu0
        %v6996 = vadd.f32 %v2277, %v6995
        %v6997 = vpop.f32.mrf.mxu0
        %v6998 = vadd.f32 %v2277, %v6997
        %6999 = vmatmul.bf16.gmra.mxu0 %v1640
        %v7000 = vpop.f32.mrf.mxu0
        %v7001 = vadd.f32 %v2277, %v7000
        %v7002 = vpop.f32.mrf.mxu0
        %v7003 = vadd.f32 %v2277, %v7002
        %7004 = vmatmul.bf16.gmra.mxu0 %v1648
        %v7005 = vpop.f32.mrf.mxu0
        %v7006 = vadd.f32 %v2277, %v7005
        %v7007 = vpop.f32.mrf.mxu0
        %v7008 = vadd.f32 %v2277, %v7007
        %7009 = vmatmul.bf16.gmra.mxu0 %v1656
        %v7010 = vpop.f32.mrf.mxu0
        %v7011 = vadd.f32 %v2277, %v7010
        %v7012 = vpop.f32.mrf.mxu0
        %v7013 = vadd.f32 %v2277, %v7012
        %7014 = vmatmul.bf16.gmra.mxu0 %v1664
        %v7015 = vpop.f32.mrf.mxu0
        %v7016 = vadd.f32 %v2277, %v7015
        %v7017 = vpop.f32.mrf.mxu0
        %v7018 = vadd.f32 %v2277, %v7017
        %7019 = vmatmul.bf16.gmra.mxu0 %v1672
        %v7020 = vpop.f32.mrf.mxu0
        %v7021 = vadd.f32 %v2277, %v7020
        %v7022 = vpop.f32.mrf.mxu0
        %v7023 = vadd.f32 %v2277, %v7022
        %7024 = vmatmul.bf16.gmra.mxu0 %v1680
        %v7025 = vpop.f32.mrf.mxu0
        %v7026 = vadd.f32 %v2277, %v7025
        %v7027 = vpop.f32.mrf.mxu0
        %v7028 = vadd.f32 %v2277, %v7027
        %7029 = vmatmul.bf16.gmra.mxu0 %v1688
        %v7030 = vpop.f32.mrf.mxu0
        %v7031 = vadd.f32 %v2277, %v7030
        %v7032 = vpop.f32.mrf.mxu0
        %v7033 = vadd.f32 %v2277, %v7032
        %7034 = vmatmul.bf16.gmra.mxu0 %v1696
        %v7035 = vpop.f32.mrf.mxu0
        %v7036 = vadd.f32 %v2277, %v7035
        %v7037 = vpop.f32.mrf.mxu0
        %v7038 = vadd.f32 %v2277, %v7037
        %7039 = vmatmul.bf16.gmra.mxu0 %v1704
        %v7040 = vpop.f32.mrf.mxu0
        %v7041 = vadd.f32 %v2277, %v7040
        %v7042 = vpop.f32.mrf.mxu0
        %v7043 = vadd.f32 %v2277, %v7042
        %7044 = vmatmul.bf16.gmra.mxu0 %v1712
        %v7045 = vpop.f32.mrf.mxu0
        %v7046 = vadd.f32 %v2277, %v7045
        %v7047 = vpop.f32.mrf.mxu0
        %v7048 = vadd.f32 %v2277, %v7047
        %7049 = vmatmul.bf16.gmra.mxu0 %v1720
        %v7050 = vpop.f32.mrf.mxu0
        %v7051 = vadd.f32 %v2277, %v7050
        %v7052 = vpop.f32.mrf.mxu0
        %v7053 = vadd.f32 %v2277, %v7052
        %7054 = vmatmul.bf16.gmra.mxu0 %v1728
        %v7055 = vpop.f32.mrf.mxu0
        %v7056 = vadd.f32 %v2277, %v7055
        %v7057 = vpop.f32.mrf.mxu0
        %v7058 = vadd.f32 %v2277, %v7057
        %7059 = vmatmul.bf16.gmra.mxu0 %v1736
        %v7060 = vpop.f32.mrf.mxu0
        %v7061 = vadd.f32 %v2277, %v7060
        %v7062 = vpop.f32.mrf.mxu0
        %v7063 = vadd.f32 %v2277, %v7062
        %7064 = vmatmul.bf16.gmra.mxu0 %v1744
        %v7065 = vpop.f32.mrf.mxu0
        %v7066 = vadd.f32 %v2277, %v7065
        %v7067 = vpop.f32.mrf.mxu0
        %v7068 = vadd.f32 %v2277, %v7067
        %7069 = vmatmul.bf16.gmra.mxu0 %v1752
        %v7070 = vpop.f32.mrf.mxu0
        %v7071 = vadd.f32 %v2277, %v7070
        %v7072 = vpop.f32.mrf.mxu0
        %v7073 = vadd.f32 %v2277, %v7072
        %7074 = vdwg.mxu0
        %7075 = vmatpush.bf16.msra.mxu0 %v3949
        %7076 = vmatpush.bf16.msra.mxu0 %v3941
        %7077 = vmatpush.bf16.msra.mxu0 %v3933
        %7078 = vmatpush.bf16.msra.mxu0 %v3925
        %7079 = vmatpush.bf16.msra.mxu0 %v3917
        %7080 = vmatpush.bf16.msra.mxu0 %v3909
        %7081 = vmatpush.bf16.msra.mxu0 %v3901
        %7082 = vmatpush.bf16.msra.mxu0 %v3893
        %7083 = vmatmul.bf16.gmra.mxu0 %v1633
        %v7084 = vpop.f32.mrf.mxu0
        %v7085 = vadd.f32 %v6996, %v7084
        %v7086 = vpop.f32.mrf.mxu0
        %v7087 = vadd.f32 %v6998, %v7086
        %7088 = vmatmul.bf16.gmra.mxu0 %v1641
        %v7089 = vpop.f32.mrf.mxu0
        %v7090 = vadd.f32 %v7001, %v7089
        %v7091 = vpop.f32.mrf.mxu0
        %v7092 = vadd.f32 %v7003, %v7091
        %7093 = vmatmul.bf16.gmra.mxu0 %v1649
        %v7094 = vpop.f32.mrf.mxu0
        %v7095 = vadd.f32 %v7006, %v7094
        %v7096 = vpop.f32.mrf.mxu0
        %v7097 = vadd.f32 %v7008, %v7096
        %7098 = vmatmul.bf16.gmra.mxu0 %v1657
        %v7099 = vpop.f32.mrf.mxu0
        %v7100 = vadd.f32 %v7011, %v7099
        %v7101 = vpop.f32.mrf.mxu0
        %v7102 = vadd.f32 %v7013, %v7101
        %7103 = vmatmul.bf16.gmra.mxu0 %v1665
        %v7104 = vpop.f32.mrf.mxu0
        %v7105 = vadd.f32 %v7016, %v7104
        %v7106 = vpop.f32.mrf.mxu0
        %v7107 = vadd.f32 %v7018, %v7106
        %7108 = vmatmul.bf16.gmra.mxu0 %v1673
        %v7109 = vpop.f32.mrf.mxu0
        %v7110 = vadd.f32 %v7021, %v7109
        %v7111 = vpop.f32.mrf.mxu0
        %v7112 = vadd.f32 %v7023, %v7111
        %7113 = vmatmul.bf16.gmra.mxu0 %v1681
        %v7114 = vpop.f32.mrf.mxu0
        %v7115 = vadd.f32 %v7026, %v7114
        %v7116 = vpop.f32.mrf.mxu0
        %v7117 = vadd.f32 %v7028, %v7116
        %7118 = vmatmul.bf16.gmra.mxu0 %v1689
        %v7119 = vpop.f32.mrf.mxu0
        %v7120 = vadd.f32 %v7031, %v7119
        %v7121 = vpop.f32.mrf.mxu0
        %v7122 = vadd.f32 %v7033, %v7121
        %7123 = vmatmul.bf16.gmra.mxu0 %v1697
        %v7124 = vpop.f32.mrf.mxu0
        %v7125 = vadd.f32 %v7036, %v7124
        %v7126 = vpop.f32.mrf.mxu0
        %v7127 = vadd.f32 %v7038, %v7126
        %7128 = vmatmul.bf16.gmra.mxu0 %v1705
        %v7129 = vpop.f32.mrf.mxu0
        %v7130 = vadd.f32 %v7041, %v7129
        %v7131 = vpop.f32.mrf.mxu0
        %v7132 = vadd.f32 %v7043, %v7131
        %7133 = vmatmul.bf16.gmra.mxu0 %v1713
        %v7134 = vpop.f32.mrf.mxu0
        %v7135 = vadd.f32 %v7046, %v7134
        %v7136 = vpop.f32.mrf.mxu0
        %v7137 = vadd.f32 %v7048, %v7136
        %7138 = vmatmul.bf16.gmra.mxu0 %v1721
        %v7139 = vpop.f32.mrf.mxu0
        %v7140 = vadd.f32 %v7051, %v7139
        %v7141 = vpop.f32.mrf.mxu0
        %v7142 = vadd.f32 %v7053, %v7141
        %7143 = vmatmul.bf16.gmra.mxu0 %v1729
        %v7144 = vpop.f32.mrf.mxu0
        %v7145 = vadd.f32 %v7056, %v7144
        %v7146 = vpop.f32.mrf.mxu0
        %v7147 = vadd.f32 %v7058, %v7146
        %7148 = vmatmul.bf16.gmra.mxu0 %v1737
        %v7149 = vpop.f32.mrf.mxu0
        %v7150 = vadd.f32 %v7061, %v7149
        %v7151 = vpop.f32.mrf.mxu0
        %v7152 = vadd.f32 %v7063, %v7151
        %7153 = vmatmul.bf16.gmra.mxu0 %v1745
        %v7154 = vpop.f32.mrf.mxu0
        %v7155 = vadd.f32 %v7066, %v7154
        %v7156 = vpop.f32.mrf.mxu0
        %v7157 = vadd.f32 %v7068, %v7156
        %7158 = vmatmul.bf16.gmra.mxu0 %v1753
        %v7159 = vpop.f32.mrf.mxu0
        %v7160 = vadd.f32 %v7071, %v7159
        %v7161 = vpop.f32.mrf.mxu0
        %v7162 = vadd.f32 %v7073, %v7161
        %7163 = vdwg.mxu0
        %7164 = vmatpush.bf16.msra.mxu0 %v4013
        %7165 = vmatpush.bf16.msra.mxu0 %v4005
        %7166 = vmatpush.bf16.msra.mxu0 %v3997
        %7167 = vmatpush.bf16.msra.mxu0 %v3989
        %7168 = vmatpush.bf16.msra.mxu0 %v3981
        %7169 = vmatpush.bf16.msra.mxu0 %v3973
        %7170 = vmatpush.bf16.msra.mxu0 %v3965
        %7171 = vmatpush.bf16.msra.mxu0 %v3957
        %7172 = vmatmul.bf16.gmra.mxu0 %v1634
        %v7173 = vpop.f32.mrf.mxu0
        %v7174 = vadd.f32 %v7085, %v7173
        %v7175 = vpop.f32.mrf.mxu0
        %v7176 = vadd.f32 %v7087, %v7175
        %7177 = vmatmul.bf16.gmra.mxu0 %v1642
        %v7178 = vpop.f32.mrf.mxu0
        %v7179 = vadd.f32 %v7090, %v7178
        %v7180 = vpop.f32.mrf.mxu0
        %v7181 = vadd.f32 %v7092, %v7180
        %7182 = vmatmul.bf16.gmra.mxu0 %v1650
        %v7183 = vpop.f32.mrf.mxu0
        %v7184 = vadd.f32 %v7095, %v7183
        %v7185 = vpop.f32.mrf.mxu0
        %v7186 = vadd.f32 %v7097, %v7185
        %7187 = vmatmul.bf16.gmra.mxu0 %v1658
        %v7188 = vpop.f32.mrf.mxu0
        %v7189 = vadd.f32 %v7100, %v7188
        %v7190 = vpop.f32.mrf.mxu0
        %v7191 = vadd.f32 %v7102, %v7190
        %7192 = vmatmul.bf16.gmra.mxu0 %v1666
        %v7193 = vpop.f32.mrf.mxu0
        %v7194 = vadd.f32 %v7105, %v7193
        %v7195 = vpop.f32.mrf.mxu0
        %v7196 = vadd.f32 %v7107, %v7195
        %7197 = vmatmul.bf16.gmra.mxu0 %v1674
        %v7198 = vpop.f32.mrf.mxu0
        %v7199 = vadd.f32 %v7110, %v7198
        %v7200 = vpop.f32.mrf.mxu0
        %v7201 = vadd.f32 %v7112, %v7200
        %7202 = vmatmul.bf16.gmra.mxu0 %v1682
        %v7203 = vpop.f32.mrf.mxu0
        %v7204 = vadd.f32 %v7115, %v7203
        %v7205 = vpop.f32.mrf.mxu0
        %v7206 = vadd.f32 %v7117, %v7205
        %7207 = vmatmul.bf16.gmra.mxu0 %v1690
        %v7208 = vpop.f32.mrf.mxu0
        %v7209 = vadd.f32 %v7120, %v7208
        %v7210 = vpop.f32.mrf.mxu0
        %v7211 = vadd.f32 %v7122, %v7210
        %7212 = vmatmul.bf16.gmra.mxu0 %v1698
        %v7213 = vpop.f32.mrf.mxu0
        %v7214 = vadd.f32 %v7125, %v7213
        %v7215 = vpop.f32.mrf.mxu0
        %v7216 = vadd.f32 %v7127, %v7215
        %7217 = vmatmul.bf16.gmra.mxu0 %v1706
        %v7218 = vpop.f32.mrf.mxu0
        %v7219 = vadd.f32 %v7130, %v7218
        %v7220 = vpop.f32.mrf.mxu0
        %v7221 = vadd.f32 %v7132, %v7220
        %7222 = vmatmul.bf16.gmra.mxu0 %v1714
        %v7223 = vpop.f32.mrf.mxu0
        %v7224 = vadd.f32 %v7135, %v7223
        %v7225 = vpop.f32.mrf.mxu0
        %v7226 = vadd.f32 %v7137, %v7225
        %7227 = vmatmul.bf16.gmra.mxu0 %v1722
        %v7228 = vpop.f32.mrf.mxu0
        %v7229 = vadd.f32 %v7140, %v7228
        %v7230 = vpop.f32.mrf.mxu0
        %v7231 = vadd.f32 %v7142, %v7230
        %7232 = vmatmul.bf16.gmra.mxu0 %v1730
        %v7233 = vpop.f32.mrf.mxu0
        %v7234 = vadd.f32 %v7145, %v7233
        %v7235 = vpop.f32.mrf.mxu0
        %v7236 = vadd.f32 %v7147, %v7235
        %7237 = vmatmul.bf16.gmra.mxu0 %v1738
        %v7238 = vpop.f32.mrf.mxu0
        %v7239 = vadd.f32 %v7150, %v7238
        %v7240 = vpop.f32.mrf.mxu0
        %v7241 = vadd.f32 %v7152, %v7240
        %7242 = vmatmul.bf16.gmra.mxu0 %v1746
        %v7243 = vpop.f32.mrf.mxu0
        %v7244 = vadd.f32 %v7155, %v7243
        %v7245 = vpop.f32.mrf.mxu0
        %v7246 = vadd.f32 %v7157, %v7245
        %7247 = vmatmul.bf16.gmra.mxu0 %v1754
        %v7248 = vpop.f32.mrf.mxu0
        %v7249 = vadd.f32 %v7160, %v7248
        %v7250 = vpop.f32.mrf.mxu0
        %v7251 = vadd.f32 %v7162, %v7250
        %7252 = vdwg.mxu0
        %7253 = vmatpush.bf16.msra.mxu0 %v4077
        %7254 = vmatpush.bf16.msra.mxu0 %v4069
        %7255 = vmatpush.bf16.msra.mxu0 %v4061
        %7256 = vmatpush.bf16.msra.mxu0 %v4053
        %7257 = vmatpush.bf16.msra.mxu0 %v4045
        %7258 = vmatpush.bf16.msra.mxu0 %v4037
        %7259 = vmatpush.bf16.msra.mxu0 %v4029
        %7260 = vmatpush.bf16.msra.mxu0 %v4021
        %7261 = vmatmul.bf16.gmra.mxu0 %v1635
        %v7262 = vpop.f32.mrf.mxu0
        %v7263 = vadd.f32 %v7174, %v7262
        %v7264 = vpop.f32.mrf.mxu0
        %v7265 = vadd.f32 %v7176, %v7264
        %7266 = vmatmul.bf16.gmra.mxu0 %v1643
        %v7267 = vpop.f32.mrf.mxu0
        %v7268 = vadd.f32 %v7179, %v7267
        %v7269 = vpop.f32.mrf.mxu0
        %v7270 = vadd.f32 %v7181, %v7269
        %7271 = vmatmul.bf16.gmra.mxu0 %v1651
        %v7272 = vpop.f32.mrf.mxu0
        %v7273 = vadd.f32 %v7184, %v7272
        %v7274 = vpop.f32.mrf.mxu0
        %v7275 = vadd.f32 %v7186, %v7274
        %7276 = vmatmul.bf16.gmra.mxu0 %v1659
        %v7277 = vpop.f32.mrf.mxu0
        %v7278 = vadd.f32 %v7189, %v7277
        %v7279 = vpop.f32.mrf.mxu0
        %v7280 = vadd.f32 %v7191, %v7279
        %7281 = vmatmul.bf16.gmra.mxu0 %v1667
        %v7282 = vpop.f32.mrf.mxu0
        %v7283 = vadd.f32 %v7194, %v7282
        %v7284 = vpop.f32.mrf.mxu0
        %v7285 = vadd.f32 %v7196, %v7284
        %7286 = vmatmul.bf16.gmra.mxu0 %v1675
        %v7287 = vpop.f32.mrf.mxu0
        %v7288 = vadd.f32 %v7199, %v7287
        %v7289 = vpop.f32.mrf.mxu0
        %v7290 = vadd.f32 %v7201, %v7289
        %7291 = vmatmul.bf16.gmra.mxu0 %v1683
        %v7292 = vpop.f32.mrf.mxu0
        %v7293 = vadd.f32 %v7204, %v7292
        %v7294 = vpop.f32.mrf.mxu0
        %v7295 = vadd.f32 %v7206, %v7294
        %7296 = vmatmul.bf16.gmra.mxu0 %v1691
        %v7297 = vpop.f32.mrf.mxu0
        %v7298 = vadd.f32 %v7209, %v7297
        %v7299 = vpop.f32.mrf.mxu0
        %v7300 = vadd.f32 %v7211, %v7299
        %7301 = vmatmul.bf16.gmra.mxu0 %v1699
        %v7302 = vpop.f32.mrf.mxu0
        %v7303 = vadd.f32 %v7214, %v7302
        %v7304 = vpop.f32.mrf.mxu0
        %v7305 = vadd.f32 %v7216, %v7304
        %7306 = vmatmul.bf16.gmra.mxu0 %v1707
        %v7307 = vpop.f32.mrf.mxu0
        %v7308 = vadd.f32 %v7219, %v7307
        %v7309 = vpop.f32.mrf.mxu0
        %v7310 = vadd.f32 %v7221, %v7309
        %7311 = vmatmul.bf16.gmra.mxu0 %v1715
        %v7312 = vpop.f32.mrf.mxu0
        %v7313 = vadd.f32 %v7224, %v7312
        %v7314 = vpop.f32.mrf.mxu0
        %v7315 = vadd.f32 %v7226, %v7314
        %7316 = vmatmul.bf16.gmra.mxu0 %v1723
        %v7317 = vpop.f32.mrf.mxu0
        %v7318 = vadd.f32 %v7229, %v7317
        %v7319 = vpop.f32.mrf.mxu0
        %v7320 = vadd.f32 %v7231, %v7319
        %7321 = vmatmul.bf16.gmra.mxu0 %v1731
        %v7322 = vpop.f32.mrf.mxu0
        %v7323 = vadd.f32 %v7234, %v7322
        %v7324 = vpop.f32.mrf.mxu0
        %v7325 = vadd.f32 %v7236, %v7324
        %7326 = vmatmul.bf16.gmra.mxu0 %v1739
        %v7327 = vpop.f32.mrf.mxu0
        %v7328 = vadd.f32 %v7239, %v7327
        %v7329 = vpop.f32.mrf.mxu0
        %v7330 = vadd.f32 %v7241, %v7329
        %7331 = vmatmul.bf16.gmra.mxu0 %v1747
        %v7332 = vpop.f32.mrf.mxu0
        %v7333 = vadd.f32 %v7244, %v7332
        %v7334 = vpop.f32.mrf.mxu0
        %v7335 = vadd.f32 %v7246, %v7334
        %7336 = vmatmul.bf16.gmra.mxu0 %v1755
        %v7337 = vpop.f32.mrf.mxu0
        %v7338 = vadd.f32 %v7249, %v7337
        %v7339 = vpop.f32.mrf.mxu0
        %v7340 = vadd.f32 %v7251, %v7339
        %7341 = vdwg.mxu0
        %7342 = vmatpush.bf16.msra.mxu0 %v4141
        %7343 = vmatpush.bf16.msra.mxu0 %v4133
        %7344 = vmatpush.bf16.msra.mxu0 %v4125
        %7345 = vmatpush.bf16.msra.mxu0 %v4117
        %7346 = vmatpush.bf16.msra.mxu0 %v4109
        %7347 = vmatpush.bf16.msra.mxu0 %v4101
        %7348 = vmatpush.bf16.msra.mxu0 %v4093
        %7349 = vmatpush.bf16.msra.mxu0 %v4085
        %7350 = vmatmul.bf16.gmra.mxu0 %v1636
        %v7351 = vpop.f32.mrf.mxu0
        %v7352 = vadd.f32 %v7263, %v7351
        %v7353 = vpop.f32.mrf.mxu0
        %v7354 = vadd.f32 %v7265, %v7353
        %7355 = vmatmul.bf16.gmra.mxu0 %v1644
        %v7356 = vpop.f32.mrf.mxu0
        %v7357 = vadd.f32 %v7268, %v7356
        %v7358 = vpop.f32.mrf.mxu0
        %v7359 = vadd.f32 %v7270, %v7358
        %7360 = vmatmul.bf16.gmra.mxu0 %v1652
        %v7361 = vpop.f32.mrf.mxu0
        %v7362 = vadd.f32 %v7273, %v7361
        %v7363 = vpop.f32.mrf.mxu0
        %v7364 = vadd.f32 %v7275, %v7363
        %7365 = vmatmul.bf16.gmra.mxu0 %v1660
        %v7366 = vpop.f32.mrf.mxu0
        %v7367 = vadd.f32 %v7278, %v7366
        %v7368 = vpop.f32.mrf.mxu0
        %v7369 = vadd.f32 %v7280, %v7368
        %7370 = vmatmul.bf16.gmra.mxu0 %v1668
        %v7371 = vpop.f32.mrf.mxu0
        %v7372 = vadd.f32 %v7283, %v7371
        %v7373 = vpop.f32.mrf.mxu0
        %v7374 = vadd.f32 %v7285, %v7373
        %7375 = vmatmul.bf16.gmra.mxu0 %v1676
        %v7376 = vpop.f32.mrf.mxu0
        %v7377 = vadd.f32 %v7288, %v7376
        %v7378 = vpop.f32.mrf.mxu0
        %v7379 = vadd.f32 %v7290, %v7378
        %7380 = vmatmul.bf16.gmra.mxu0 %v1684
        %v7381 = vpop.f32.mrf.mxu0
        %v7382 = vadd.f32 %v7293, %v7381
        %v7383 = vpop.f32.mrf.mxu0
        %v7384 = vadd.f32 %v7295, %v7383
        %7385 = vmatmul.bf16.gmra.mxu0 %v1692
        %v7386 = vpop.f32.mrf.mxu0
        %v7387 = vadd.f32 %v7298, %v7386
        %v7388 = vpop.f32.mrf.mxu0
        %v7389 = vadd.f32 %v7300, %v7388
        %7390 = vmatmul.bf16.gmra.mxu0 %v1700
        %v7391 = vpop.f32.mrf.mxu0
        %v7392 = vadd.f32 %v7303, %v7391
        %v7393 = vpop.f32.mrf.mxu0
        %v7394 = vadd.f32 %v7305, %v7393
        %7395 = vmatmul.bf16.gmra.mxu0 %v1708
        %v7396 = vpop.f32.mrf.mxu0
        %v7397 = vadd.f32 %v7308, %v7396
        %v7398 = vpop.f32.mrf.mxu0
        %v7399 = vadd.f32 %v7310, %v7398
        %7400 = vmatmul.bf16.gmra.mxu0 %v1716
        %v7401 = vpop.f32.mrf.mxu0
        %v7402 = vadd.f32 %v7313, %v7401
        %v7403 = vpop.f32.mrf.mxu0
        %v7404 = vadd.f32 %v7315, %v7403
        %7405 = vmatmul.bf16.gmra.mxu0 %v1724
        %v7406 = vpop.f32.mrf.mxu0
        %v7407 = vadd.f32 %v7318, %v7406
        %v7408 = vpop.f32.mrf.mxu0
        %v7409 = vadd.f32 %v7320, %v7408
        %7410 = vmatmul.bf16.gmra.mxu0 %v1732
        %v7411 = vpop.f32.mrf.mxu0
        %v7412 = vadd.f32 %v7323, %v7411
        %v7413 = vpop.f32.mrf.mxu0
        %v7414 = vadd.f32 %v7325, %v7413
        %7415 = vmatmul.bf16.gmra.mxu0 %v1740
        %v7416 = vpop.f32.mrf.mxu0
        %v7417 = vadd.f32 %v7328, %v7416
        %v7418 = vpop.f32.mrf.mxu0
        %v7419 = vadd.f32 %v7330, %v7418
        %7420 = vmatmul.bf16.gmra.mxu0 %v1748
        %v7421 = vpop.f32.mrf.mxu0
        %v7422 = vadd.f32 %v7333, %v7421
        %v7423 = vpop.f32.mrf.mxu0
        %v7424 = vadd.f32 %v7335, %v7423
        %7425 = vmatmul.bf16.gmra.mxu0 %v1756
        %v7426 = vpop.f32.mrf.mxu0
        %v7427 = vadd.f32 %v7338, %v7426
        %v7428 = vpop.f32.mrf.mxu0
        %v7429 = vadd.f32 %v7340, %v7428
        %7430 = vdwg.mxu0
        %7431 = vmatpush.bf16.msra.mxu0 %v4205
        %7432 = vmatpush.bf16.msra.mxu0 %v4197
        %7433 = vmatpush.bf16.msra.mxu0 %v4189
        %7434 = vmatpush.bf16.msra.mxu0 %v4181
        %7435 = vmatpush.bf16.msra.mxu0 %v4173
        %7436 = vmatpush.bf16.msra.mxu0 %v4165
        %7437 = vmatpush.bf16.msra.mxu0 %v4157
        %7438 = vmatpush.bf16.msra.mxu0 %v4149
        %7439 = vmatmul.bf16.gmra.mxu0 %v1637
        %v7440 = vpop.f32.mrf.mxu0
        %v7441 = vadd.f32 %v7352, %v7440
        %v7442 = vpop.f32.mrf.mxu0
        %v7443 = vadd.f32 %v7354, %v7442
        %7444 = vmatmul.bf16.gmra.mxu0 %v1645
        %v7445 = vpop.f32.mrf.mxu0
        %v7446 = vadd.f32 %v7357, %v7445
        %v7447 = vpop.f32.mrf.mxu0
        %v7448 = vadd.f32 %v7359, %v7447
        %7449 = vmatmul.bf16.gmra.mxu0 %v1653
        %v7450 = vpop.f32.mrf.mxu0
        %v7451 = vadd.f32 %v7362, %v7450
        %v7452 = vpop.f32.mrf.mxu0
        %v7453 = vadd.f32 %v7364, %v7452
        %7454 = vmatmul.bf16.gmra.mxu0 %v1661
        %v7455 = vpop.f32.mrf.mxu0
        %v7456 = vadd.f32 %v7367, %v7455
        %v7457 = vpop.f32.mrf.mxu0
        %v7458 = vadd.f32 %v7369, %v7457
        %7459 = vmatmul.bf16.gmra.mxu0 %v1669
        %v7460 = vpop.f32.mrf.mxu0
        %v7461 = vadd.f32 %v7372, %v7460
        %v7462 = vpop.f32.mrf.mxu0
        %v7463 = vadd.f32 %v7374, %v7462
        %7464 = vmatmul.bf16.gmra.mxu0 %v1677
        %v7465 = vpop.f32.mrf.mxu0
        %v7466 = vadd.f32 %v7377, %v7465
        %v7467 = vpop.f32.mrf.mxu0
        %v7468 = vadd.f32 %v7379, %v7467
        %7469 = vmatmul.bf16.gmra.mxu0 %v1685
        %v7470 = vpop.f32.mrf.mxu0
        %v7471 = vadd.f32 %v7382, %v7470
        %v7472 = vpop.f32.mrf.mxu0
        %v7473 = vadd.f32 %v7384, %v7472
        %7474 = vmatmul.bf16.gmra.mxu0 %v1693
        %v7475 = vpop.f32.mrf.mxu0
        %v7476 = vadd.f32 %v7387, %v7475
        %v7477 = vpop.f32.mrf.mxu0
        %v7478 = vadd.f32 %v7389, %v7477
        %7479 = vmatmul.bf16.gmra.mxu0 %v1701
        %v7480 = vpop.f32.mrf.mxu0
        %v7481 = vadd.f32 %v7392, %v7480
        %v7482 = vpop.f32.mrf.mxu0
        %v7483 = vadd.f32 %v7394, %v7482
        %7484 = vmatmul.bf16.gmra.mxu0 %v1709
        %v7485 = vpop.f32.mrf.mxu0
        %v7486 = vadd.f32 %v7397, %v7485
        %v7487 = vpop.f32.mrf.mxu0
        %v7488 = vadd.f32 %v7399, %v7487
        %7489 = vmatmul.bf16.gmra.mxu0 %v1717
        %v7490 = vpop.f32.mrf.mxu0
        %v7491 = vadd.f32 %v7402, %v7490
        %v7492 = vpop.f32.mrf.mxu0
        %v7493 = vadd.f32 %v7404, %v7492
        %7494 = vmatmul.bf16.gmra.mxu0 %v1725
        %v7495 = vpop.f32.mrf.mxu0
        %v7496 = vadd.f32 %v7407, %v7495
        %v7497 = vpop.f32.mrf.mxu0
        %v7498 = vadd.f32 %v7409, %v7497
        %7499 = vmatmul.bf16.gmra.mxu0 %v1733
        %v7500 = vpop.f32.mrf.mxu0
        %v7501 = vadd.f32 %v7412, %v7500
        %v7502 = vpop.f32.mrf.mxu0
        %v7503 = vadd.f32 %v7414, %v7502
        %7504 = vmatmul.bf16.gmra.mxu0 %v1741
        %v7505 = vpop.f32.mrf.mxu0
        %v7506 = vadd.f32 %v7417, %v7505
        %v7507 = vpop.f32.mrf.mxu0
        %v7508 = vadd.f32 %v7419, %v7507
        %7509 = vmatmul.bf16.gmra.mxu0 %v1749
        %v7510 = vpop.f32.mrf.mxu0
        %v7511 = vadd.f32 %v7422, %v7510
        %v7512 = vpop.f32.mrf.mxu0
        %v7513 = vadd.f32 %v7424, %v7512
        %7514 = vmatmul.bf16.gmra.mxu0 %v1757
        %v7515 = vpop.f32.mrf.mxu0
        %v7516 = vadd.f32 %v7427, %v7515
        %v7517 = vpop.f32.mrf.mxu0
        %v7518 = vadd.f32 %v7429, %v7517
        %7519 = vdwg.mxu0
        %7520 = vmatpush.bf16.msra.mxu0 %v4269
        %7521 = vmatpush.bf16.msra.mxu0 %v4261
        %7522 = vmatpush.bf16.msra.mxu0 %v4253
        %7523 = vmatpush.bf16.msra.mxu0 %v4245
        %7524 = vmatpush.bf16.msra.mxu0 %v4237
        %7525 = vmatpush.bf16.msra.mxu0 %v4229
        %7526 = vmatpush.bf16.msra.mxu0 %v4221
        %7527 = vmatpush.bf16.msra.mxu0 %v4213
        %7528 = vmatmul.bf16.gmra.mxu0 %v1638
        %v7529 = vpop.f32.mrf.mxu0
        %v7530 = vadd.f32 %v7441, %v7529
        %v7531 = vpop.f32.mrf.mxu0
        %v7532 = vadd.f32 %v7443, %v7531
        %7533 = vmatmul.bf16.gmra.mxu0 %v1646
        %v7534 = vpop.f32.mrf.mxu0
        %v7535 = vadd.f32 %v7446, %v7534
        %v7536 = vpop.f32.mrf.mxu0
        %v7537 = vadd.f32 %v7448, %v7536
        %7538 = vmatmul.bf16.gmra.mxu0 %v1654
        %v7539 = vpop.f32.mrf.mxu0
        %v7540 = vadd.f32 %v7451, %v7539
        %v7541 = vpop.f32.mrf.mxu0
        %v7542 = vadd.f32 %v7453, %v7541
        %7543 = vmatmul.bf16.gmra.mxu0 %v1662
        %v7544 = vpop.f32.mrf.mxu0
        %v7545 = vadd.f32 %v7456, %v7544
        %v7546 = vpop.f32.mrf.mxu0
        %v7547 = vadd.f32 %v7458, %v7546
        %7548 = vmatmul.bf16.gmra.mxu0 %v1670
        %v7549 = vpop.f32.mrf.mxu0
        %v7550 = vadd.f32 %v7461, %v7549
        %v7551 = vpop.f32.mrf.mxu0
        %v7552 = vadd.f32 %v7463, %v7551
        %7553 = vmatmul.bf16.gmra.mxu0 %v1678
        %v7554 = vpop.f32.mrf.mxu0
        %v7555 = vadd.f32 %v7466, %v7554
        %v7556 = vpop.f32.mrf.mxu0
        %v7557 = vadd.f32 %v7468, %v7556
        %7558 = vmatmul.bf16.gmra.mxu0 %v1686
        %v7559 = vpop.f32.mrf.mxu0
        %v7560 = vadd.f32 %v7471, %v7559
        %v7561 = vpop.f32.mrf.mxu0
        %v7562 = vadd.f32 %v7473, %v7561
        %7563 = vmatmul.bf16.gmra.mxu0 %v1694
        %v7564 = vpop.f32.mrf.mxu0
        %v7565 = vadd.f32 %v7476, %v7564
        %v7566 = vpop.f32.mrf.mxu0
        %v7567 = vadd.f32 %v7478, %v7566
        %7568 = vmatmul.bf16.gmra.mxu0 %v1702
        %v7569 = vpop.f32.mrf.mxu0
        %v7570 = vadd.f32 %v7481, %v7569
        %v7571 = vpop.f32.mrf.mxu0
        %v7572 = vadd.f32 %v7483, %v7571
        %7573 = vmatmul.bf16.gmra.mxu0 %v1710
        %v7574 = vpop.f32.mrf.mxu0
        %v7575 = vadd.f32 %v7486, %v7574
        %v7576 = vpop.f32.mrf.mxu0
        %v7577 = vadd.f32 %v7488, %v7576
        %7578 = vmatmul.bf16.gmra.mxu0 %v1718
        %v7579 = vpop.f32.mrf.mxu0
        %v7580 = vadd.f32 %v7491, %v7579
        %v7581 = vpop.f32.mrf.mxu0
        %v7582 = vadd.f32 %v7493, %v7581
        %7583 = vmatmul.bf16.gmra.mxu0 %v1726
        %v7584 = vpop.f32.mrf.mxu0
        %v7585 = vadd.f32 %v7496, %v7584
        %v7586 = vpop.f32.mrf.mxu0
        %v7587 = vadd.f32 %v7498, %v7586
        %7588 = vmatmul.bf16.gmra.mxu0 %v1734
        %v7589 = vpop.f32.mrf.mxu0
        %v7590 = vadd.f32 %v7501, %v7589
        %v7591 = vpop.f32.mrf.mxu0
        %v7592 = vadd.f32 %v7503, %v7591
        %7593 = vmatmul.bf16.gmra.mxu0 %v1742
        %v7594 = vpop.f32.mrf.mxu0
        %v7595 = vadd.f32 %v7506, %v7594
        %v7596 = vpop.f32.mrf.mxu0
        %v7597 = vadd.f32 %v7508, %v7596
        %7598 = vmatmul.bf16.gmra.mxu0 %v1750
        %v7599 = vpop.f32.mrf.mxu0
        %v7600 = vadd.f32 %v7511, %v7599
        %v7601 = vpop.f32.mrf.mxu0
        %v7602 = vadd.f32 %v7513, %v7601
        %7603 = vmatmul.bf16.gmra.mxu0 %v1758
        %v7604 = vpop.f32.mrf.mxu0
        %v7605 = vadd.f32 %v7516, %v7604
        %v7606 = vpop.f32.mrf.mxu0
        %v7607 = vadd.f32 %v7518, %v7606
        %7608 = vdwg.mxu0
        %7609 = vmatpush.bf16.msra.mxu0 %v4333
        %7610 = vmatpush.bf16.msra.mxu0 %v4325
        %7611 = vmatpush.bf16.msra.mxu0 %v4317
        %7612 = vmatpush.bf16.msra.mxu0 %v4309
        %7613 = vmatpush.bf16.msra.mxu0 %v4301
        %7614 = vmatpush.bf16.msra.mxu0 %v4293
        %7615 = vmatpush.bf16.msra.mxu0 %v4285
        %7616 = vmatpush.bf16.msra.mxu0 %v4277
        %7617 = vmatmul.bf16.gmra.mxu0 %v1639
        %v7618 = vpop.f32.mrf.mxu0
        %v7619 = vadd.f32 %v7530, %v7618
        %v7620 = vpop.f32.mrf.mxu0
        %v7621 = vadd.f32 %v7532, %v7620
        %7622 = vmatmul.bf16.gmra.mxu0 %v1647
        %v7623 = vpop.f32.mrf.mxu0
        %v7624 = vadd.f32 %v7535, %v7623
        %v7625 = vpop.f32.mrf.mxu0
        %v7626 = vadd.f32 %v7537, %v7625
        %7627 = vmatmul.bf16.gmra.mxu0 %v1655
        %v7628 = vpop.f32.mrf.mxu0
        %v7629 = vadd.f32 %v7540, %v7628
        %v7630 = vpop.f32.mrf.mxu0
        %v7631 = vadd.f32 %v7542, %v7630
        %7632 = vmatmul.bf16.gmra.mxu0 %v1663
        %v7633 = vpop.f32.mrf.mxu0
        %v7634 = vadd.f32 %v7545, %v7633
        %v7635 = vpop.f32.mrf.mxu0
        %v7636 = vadd.f32 %v7547, %v7635
        %7637 = vmatmul.bf16.gmra.mxu0 %v1671
        %v7638 = vpop.f32.mrf.mxu0
        %v7639 = vadd.f32 %v7550, %v7638
        %v7640 = vpop.f32.mrf.mxu0
        %v7641 = vadd.f32 %v7552, %v7640
        %7642 = vmatmul.bf16.gmra.mxu0 %v1679
        %v7643 = vpop.f32.mrf.mxu0
        %v7644 = vadd.f32 %v7555, %v7643
        %v7645 = vpop.f32.mrf.mxu0
        %v7646 = vadd.f32 %v7557, %v7645
        %7647 = vmatmul.bf16.gmra.mxu0 %v1687
        %v7648 = vpop.f32.mrf.mxu0
        %v7649 = vadd.f32 %v7560, %v7648
        %v7650 = vpop.f32.mrf.mxu0
        %v7651 = vadd.f32 %v7562, %v7650
        %7652 = vmatmul.bf16.gmra.mxu0 %v1695
        %v7653 = vpop.f32.mrf.mxu0
        %v7654 = vadd.f32 %v7565, %v7653
        %v7655 = vpop.f32.mrf.mxu0
        %v7656 = vadd.f32 %v7567, %v7655
        %7657 = vmatmul.bf16.gmra.mxu0 %v1703
        %v7658 = vpop.f32.mrf.mxu0
        %v7659 = vadd.f32 %v7570, %v7658
        %v7660 = vpop.f32.mrf.mxu0
        %v7661 = vadd.f32 %v7572, %v7660
        %7662 = vmatmul.bf16.gmra.mxu0 %v1711
        %v7663 = vpop.f32.mrf.mxu0
        %v7664 = vadd.f32 %v7575, %v7663
        %v7665 = vpop.f32.mrf.mxu0
        %v7666 = vadd.f32 %v7577, %v7665
        %7667 = vmatmul.bf16.gmra.mxu0 %v1719
        %v7668 = vpop.f32.mrf.mxu0
        %v7669 = vadd.f32 %v7580, %v7668
        %v7670 = vpop.f32.mrf.mxu0
        %v7671 = vadd.f32 %v7582, %v7670
        %7672 = vmatmul.bf16.gmra.mxu0 %v1727
        %v7673 = vpop.f32.mrf.mxu0
        %v7674 = vadd.f32 %v7585, %v7673
        %v7675 = vpop.f32.mrf.mxu0
        %v7676 = vadd.f32 %v7587, %v7675
        %7677 = vmatmul.bf16.gmra.mxu0 %v1735
        %v7678 = vpop.f32.mrf.mxu0
        %v7679 = vadd.f32 %v7590, %v7678
        %v7680 = vpop.f32.mrf.mxu0
        %v7681 = vadd.f32 %v7592, %v7680
        %7682 = vmatmul.bf16.gmra.mxu0 %v1743
        %v7683 = vpop.f32.mrf.mxu0
        %v7684 = vadd.f32 %v7595, %v7683
        %v7685 = vpop.f32.mrf.mxu0
        %v7686 = vadd.f32 %v7597, %v7685
        %7687 = vmatmul.bf16.gmra.mxu0 %v1751
        %v7688 = vpop.f32.mrf.mxu0
        %v7689 = vadd.f32 %v7600, %v7688
        %v7690 = vpop.f32.mrf.mxu0
        %v7691 = vadd.f32 %v7602, %v7690
        %7692 = vmatmul.bf16.gmra.mxu0 %v1759
        %v7693 = vpop.f32.mrf.mxu0
        %v7694 = vadd.f32 %v7605, %v7693
        %v7695 = vpop.f32.mrf.mxu0
        %v7696 = vadd.f32 %v7607, %v7695
        %7697 = vdwg.mxu0
        %7698 = vmatpush.bf16.msra.mxu0 %v3886
        %7699 = vmatpush.bf16.msra.mxu0 %v3878
        %7700 = vmatpush.bf16.msra.mxu0 %v3870
        %7701 = vmatpush.bf16.msra.mxu0 %v3862
        %7702 = vmatpush.bf16.msra.mxu0 %v3854
        %7703 = vmatpush.bf16.msra.mxu0 %v3846
        %7704 = vmatpush.bf16.msra.mxu0 %v3838
        %7705 = vmatpush.bf16.msra.mxu0 %v3830
        %7706 = vmatmul.bf16.gmra.mxu0 %v1632
        %v7707 = vpop.f32.mrf.mxu0
        %v7708 = vadd.f32 %v2278, %v7707
        %v7709 = vpop.f32.mrf.mxu0
        %v7710 = vadd.f32 %v2278, %v7709
        %7711 = vmatmul.bf16.gmra.mxu0 %v1640
        %v7712 = vpop.f32.mrf.mxu0
        %v7713 = vadd.f32 %v2278, %v7712
        %v7714 = vpop.f32.mrf.mxu0
        %v7715 = vadd.f32 %v2278, %v7714
        %7716 = vmatmul.bf16.gmra.mxu0 %v1648
        %v7717 = vpop.f32.mrf.mxu0
        %v7718 = vadd.f32 %v2278, %v7717
        %v7719 = vpop.f32.mrf.mxu0
        %v7720 = vadd.f32 %v2278, %v7719
        %7721 = vmatmul.bf16.gmra.mxu0 %v1656
        %v7722 = vpop.f32.mrf.mxu0
        %v7723 = vadd.f32 %v2278, %v7722
        %v7724 = vpop.f32.mrf.mxu0
        %v7725 = vadd.f32 %v2278, %v7724
        %7726 = vmatmul.bf16.gmra.mxu0 %v1664
        %v7727 = vpop.f32.mrf.mxu0
        %v7728 = vadd.f32 %v2278, %v7727
        %v7729 = vpop.f32.mrf.mxu0
        %v7730 = vadd.f32 %v2278, %v7729
        %7731 = vmatmul.bf16.gmra.mxu0 %v1672
        %v7732 = vpop.f32.mrf.mxu0
        %v7733 = vadd.f32 %v2278, %v7732
        %v7734 = vpop.f32.mrf.mxu0
        %v7735 = vadd.f32 %v2278, %v7734
        %7736 = vmatmul.bf16.gmra.mxu0 %v1680
        %v7737 = vpop.f32.mrf.mxu0
        %v7738 = vadd.f32 %v2278, %v7737
        %v7739 = vpop.f32.mrf.mxu0
        %v7740 = vadd.f32 %v2278, %v7739
        %7741 = vmatmul.bf16.gmra.mxu0 %v1688
        %v7742 = vpop.f32.mrf.mxu0
        %v7743 = vadd.f32 %v2278, %v7742
        %v7744 = vpop.f32.mrf.mxu0
        %v7745 = vadd.f32 %v2278, %v7744
        %7746 = vmatmul.bf16.gmra.mxu0 %v1696
        %v7747 = vpop.f32.mrf.mxu0
        %v7748 = vadd.f32 %v2278, %v7747
        %v7749 = vpop.f32.mrf.mxu0
        %v7750 = vadd.f32 %v2278, %v7749
        %7751 = vmatmul.bf16.gmra.mxu0 %v1704
        %v7752 = vpop.f32.mrf.mxu0
        %v7753 = vadd.f32 %v2278, %v7752
        %v7754 = vpop.f32.mrf.mxu0
        %v7755 = vadd.f32 %v2278, %v7754
        %7756 = vmatmul.bf16.gmra.mxu0 %v1712
        %v7757 = vpop.f32.mrf.mxu0
        %v7758 = vadd.f32 %v2278, %v7757
        %v7759 = vpop.f32.mrf.mxu0
        %v7760 = vadd.f32 %v2278, %v7759
        %7761 = vmatmul.bf16.gmra.mxu0 %v1720
        %v7762 = vpop.f32.mrf.mxu0
        %v7763 = vadd.f32 %v2278, %v7762
        %v7764 = vpop.f32.mrf.mxu0
        %v7765 = vadd.f32 %v2278, %v7764
        %7766 = vmatmul.bf16.gmra.mxu0 %v1728
        %v7767 = vpop.f32.mrf.mxu0
        %v7768 = vadd.f32 %v2278, %v7767
        %v7769 = vpop.f32.mrf.mxu0
        %v7770 = vadd.f32 %v2278, %v7769
        %7771 = vmatmul.bf16.gmra.mxu0 %v1736
        %v7772 = vpop.f32.mrf.mxu0
        %v7773 = vadd.f32 %v2278, %v7772
        %v7774 = vpop.f32.mrf.mxu0
        %v7775 = vadd.f32 %v2278, %v7774
        %7776 = vmatmul.bf16.gmra.mxu0 %v1744
        %v7777 = vpop.f32.mrf.mxu0
        %v7778 = vadd.f32 %v2278, %v7777
        %v7779 = vpop.f32.mrf.mxu0
        %v7780 = vadd.f32 %v2278, %v7779
        %7781 = vmatmul.bf16.gmra.mxu0 %v1752
        %v7782 = vpop.f32.mrf.mxu0
        %v7783 = vadd.f32 %v2278, %v7782
        %v7784 = vpop.f32.mrf.mxu0
        %v7785 = vadd.f32 %v2278, %v7784
        %7786 = vdwg.mxu0
        %7787 = vmatpush.bf16.msra.mxu0 %v3950
        %7788 = vmatpush.bf16.msra.mxu0 %v3942
        %7789 = vmatpush.bf16.msra.mxu0 %v3934
        %7790 = vmatpush.bf16.msra.mxu0 %v3926
        %7791 = vmatpush.bf16.msra.mxu0 %v3918
        %7792 = vmatpush.bf16.msra.mxu0 %v3910
        %7793 = vmatpush.bf16.msra.mxu0 %v3902
        %7794 = vmatpush.bf16.msra.mxu0 %v3894
        %7795 = vmatmul.bf16.gmra.mxu0 %v1633
        %v7796 = vpop.f32.mrf.mxu0
        %v7797 = vadd.f32 %v7708, %v7796
        %v7798 = vpop.f32.mrf.mxu0
        %v7799 = vadd.f32 %v7710, %v7798
        %7800 = vmatmul.bf16.gmra.mxu0 %v1641
        %v7801 = vpop.f32.mrf.mxu0
        %v7802 = vadd.f32 %v7713, %v7801
        %v7803 = vpop.f32.mrf.mxu0
        %v7804 = vadd.f32 %v7715, %v7803
        %7805 = vmatmul.bf16.gmra.mxu0 %v1649
        %v7806 = vpop.f32.mrf.mxu0
        %v7807 = vadd.f32 %v7718, %v7806
        %v7808 = vpop.f32.mrf.mxu0
        %v7809 = vadd.f32 %v7720, %v7808
        %7810 = vmatmul.bf16.gmra.mxu0 %v1657
        %v7811 = vpop.f32.mrf.mxu0
        %v7812 = vadd.f32 %v7723, %v7811
        %v7813 = vpop.f32.mrf.mxu0
        %v7814 = vadd.f32 %v7725, %v7813
        %7815 = vmatmul.bf16.gmra.mxu0 %v1665
        %v7816 = vpop.f32.mrf.mxu0
        %v7817 = vadd.f32 %v7728, %v7816
        %v7818 = vpop.f32.mrf.mxu0
        %v7819 = vadd.f32 %v7730, %v7818
        %7820 = vmatmul.bf16.gmra.mxu0 %v1673
        %v7821 = vpop.f32.mrf.mxu0
        %v7822 = vadd.f32 %v7733, %v7821
        %v7823 = vpop.f32.mrf.mxu0
        %v7824 = vadd.f32 %v7735, %v7823
        %7825 = vmatmul.bf16.gmra.mxu0 %v1681
        %v7826 = vpop.f32.mrf.mxu0
        %v7827 = vadd.f32 %v7738, %v7826
        %v7828 = vpop.f32.mrf.mxu0
        %v7829 = vadd.f32 %v7740, %v7828
        %7830 = vmatmul.bf16.gmra.mxu0 %v1689
        %v7831 = vpop.f32.mrf.mxu0
        %v7832 = vadd.f32 %v7743, %v7831
        %v7833 = vpop.f32.mrf.mxu0
        %v7834 = vadd.f32 %v7745, %v7833
        %7835 = vmatmul.bf16.gmra.mxu0 %v1697
        %v7836 = vpop.f32.mrf.mxu0
        %v7837 = vadd.f32 %v7748, %v7836
        %v7838 = vpop.f32.mrf.mxu0
        %v7839 = vadd.f32 %v7750, %v7838
        %7840 = vmatmul.bf16.gmra.mxu0 %v1705
        %v7841 = vpop.f32.mrf.mxu0
        %v7842 = vadd.f32 %v7753, %v7841
        %v7843 = vpop.f32.mrf.mxu0
        %v7844 = vadd.f32 %v7755, %v7843
        %7845 = vmatmul.bf16.gmra.mxu0 %v1713
        %v7846 = vpop.f32.mrf.mxu0
        %v7847 = vadd.f32 %v7758, %v7846
        %v7848 = vpop.f32.mrf.mxu0
        %v7849 = vadd.f32 %v7760, %v7848
        %7850 = vmatmul.bf16.gmra.mxu0 %v1721
        %v7851 = vpop.f32.mrf.mxu0
        %v7852 = vadd.f32 %v7763, %v7851
        %v7853 = vpop.f32.mrf.mxu0
        %v7854 = vadd.f32 %v7765, %v7853
        %7855 = vmatmul.bf16.gmra.mxu0 %v1729
        %v7856 = vpop.f32.mrf.mxu0
        %v7857 = vadd.f32 %v7768, %v7856
        %v7858 = vpop.f32.mrf.mxu0
        %v7859 = vadd.f32 %v7770, %v7858
        %7860 = vmatmul.bf16.gmra.mxu0 %v1737
        %v7861 = vpop.f32.mrf.mxu0
        %v7862 = vadd.f32 %v7773, %v7861
        %v7863 = vpop.f32.mrf.mxu0
        %v7864 = vadd.f32 %v7775, %v7863
        %7865 = vmatmul.bf16.gmra.mxu0 %v1745
        %v7866 = vpop.f32.mrf.mxu0
        %v7867 = vadd.f32 %v7778, %v7866
        %v7868 = vpop.f32.mrf.mxu0
        %v7869 = vadd.f32 %v7780, %v7868
        %7870 = vmatmul.bf16.gmra.mxu0 %v1753
        %v7871 = vpop.f32.mrf.mxu0
        %v7872 = vadd.f32 %v7783, %v7871
        %v7873 = vpop.f32.mrf.mxu0
        %v7874 = vadd.f32 %v7785, %v7873
        %7875 = vdwg.mxu0
        %7876 = vmatpush.bf16.msra.mxu0 %v4014
        %7877 = vmatpush.bf16.msra.mxu0 %v4006
        %7878 = vmatpush.bf16.msra.mxu0 %v3998
        %7879 = vmatpush.bf16.msra.mxu0 %v3990
        %7880 = vmatpush.bf16.msra.mxu0 %v3982
        %7881 = vmatpush.bf16.msra.mxu0 %v3974
        %7882 = vmatpush.bf16.msra.mxu0 %v3966
        %7883 = vmatpush.bf16.msra.mxu0 %v3958
        %7884 = vmatmul.bf16.gmra.mxu0 %v1634
        %v7885 = vpop.f32.mrf.mxu0
        %v7886 = vadd.f32 %v7797, %v7885
        %v7887 = vpop.f32.mrf.mxu0
        %v7888 = vadd.f32 %v7799, %v7887
        %7889 = vmatmul.bf16.gmra.mxu0 %v1642
        %v7890 = vpop.f32.mrf.mxu0
        %v7891 = vadd.f32 %v7802, %v7890
        %v7892 = vpop.f32.mrf.mxu0
        %v7893 = vadd.f32 %v7804, %v7892
        %7894 = vmatmul.bf16.gmra.mxu0 %v1650
        %v7895 = vpop.f32.mrf.mxu0
        %v7896 = vadd.f32 %v7807, %v7895
        %v7897 = vpop.f32.mrf.mxu0
        %v7898 = vadd.f32 %v7809, %v7897
        %7899 = vmatmul.bf16.gmra.mxu0 %v1658
        %v7900 = vpop.f32.mrf.mxu0
        %v7901 = vadd.f32 %v7812, %v7900
        %v7902 = vpop.f32.mrf.mxu0
        %v7903 = vadd.f32 %v7814, %v7902
        %7904 = vmatmul.bf16.gmra.mxu0 %v1666
        %v7905 = vpop.f32.mrf.mxu0
        %v7906 = vadd.f32 %v7817, %v7905
        %v7907 = vpop.f32.mrf.mxu0
        %v7908 = vadd.f32 %v7819, %v7907
        %7909 = vmatmul.bf16.gmra.mxu0 %v1674
        %v7910 = vpop.f32.mrf.mxu0
        %v7911 = vadd.f32 %v7822, %v7910
        %v7912 = vpop.f32.mrf.mxu0
        %v7913 = vadd.f32 %v7824, %v7912
        %7914 = vmatmul.bf16.gmra.mxu0 %v1682
        %v7915 = vpop.f32.mrf.mxu0
        %v7916 = vadd.f32 %v7827, %v7915
        %v7917 = vpop.f32.mrf.mxu0
        %v7918 = vadd.f32 %v7829, %v7917
        %7919 = vmatmul.bf16.gmra.mxu0 %v1690
        %v7920 = vpop.f32.mrf.mxu0
        %v7921 = vadd.f32 %v7832, %v7920
        %v7922 = vpop.f32.mrf.mxu0
        %v7923 = vadd.f32 %v7834, %v7922
        %7924 = vmatmul.bf16.gmra.mxu0 %v1698
        %v7925 = vpop.f32.mrf.mxu0
        %v7926 = vadd.f32 %v7837, %v7925
        %v7927 = vpop.f32.mrf.mxu0
        %v7928 = vadd.f32 %v7839, %v7927
        %7929 = vmatmul.bf16.gmra.mxu0 %v1706
        %v7930 = vpop.f32.mrf.mxu0
        %v7931 = vadd.f32 %v7842, %v7930
        %v7932 = vpop.f32.mrf.mxu0
        %v7933 = vadd.f32 %v7844, %v7932
        %7934 = vmatmul.bf16.gmra.mxu0 %v1714
        %v7935 = vpop.f32.mrf.mxu0
        %v7936 = vadd.f32 %v7847, %v7935
        %v7937 = vpop.f32.mrf.mxu0
        %v7938 = vadd.f32 %v7849, %v7937
        %7939 = vmatmul.bf16.gmra.mxu0 %v1722
        %v7940 = vpop.f32.mrf.mxu0
        %v7941 = vadd.f32 %v7852, %v7940
        %v7942 = vpop.f32.mrf.mxu0
        %v7943 = vadd.f32 %v7854, %v7942
        %7944 = vmatmul.bf16.gmra.mxu0 %v1730
        %v7945 = vpop.f32.mrf.mxu0
        %v7946 = vadd.f32 %v7857, %v7945
        %v7947 = vpop.f32.mrf.mxu0
        %v7948 = vadd.f32 %v7859, %v7947
        %7949 = vmatmul.bf16.gmra.mxu0 %v1738
        %v7950 = vpop.f32.mrf.mxu0
        %v7951 = vadd.f32 %v7862, %v7950
        %v7952 = vpop.f32.mrf.mxu0
        %v7953 = vadd.f32 %v7864, %v7952
        %7954 = vmatmul.bf16.gmra.mxu0 %v1746
        %v7955 = vpop.f32.mrf.mxu0
        %v7956 = vadd.f32 %v7867, %v7955
        %v7957 = vpop.f32.mrf.mxu0
        %v7958 = vadd.f32 %v7869, %v7957
        %7959 = vmatmul.bf16.gmra.mxu0 %v1754
        %v7960 = vpop.f32.mrf.mxu0
        %v7961 = vadd.f32 %v7872, %v7960
        %v7962 = vpop.f32.mrf.mxu0
        %v7963 = vadd.f32 %v7874, %v7962
        %7964 = vdwg.mxu0
        %7965 = vmatpush.bf16.msra.mxu0 %v4078
        %7966 = vmatpush.bf16.msra.mxu0 %v4070
        %7967 = vmatpush.bf16.msra.mxu0 %v4062
        %7968 = vmatpush.bf16.msra.mxu0 %v4054
        %7969 = vmatpush.bf16.msra.mxu0 %v4046
        %7970 = vmatpush.bf16.msra.mxu0 %v4038
        %7971 = vmatpush.bf16.msra.mxu0 %v4030
        %7972 = vmatpush.bf16.msra.mxu0 %v4022
        %7973 = vmatmul.bf16.gmra.mxu0 %v1635
        %v7974 = vpop.f32.mrf.mxu0
        %v7975 = vadd.f32 %v7886, %v7974
        %v7976 = vpop.f32.mrf.mxu0
        %v7977 = vadd.f32 %v7888, %v7976
        %7978 = vmatmul.bf16.gmra.mxu0 %v1643
        %v7979 = vpop.f32.mrf.mxu0
        %v7980 = vadd.f32 %v7891, %v7979
        %v7981 = vpop.f32.mrf.mxu0
        %v7982 = vadd.f32 %v7893, %v7981
        %7983 = vmatmul.bf16.gmra.mxu0 %v1651
        %v7984 = vpop.f32.mrf.mxu0
        %v7985 = vadd.f32 %v7896, %v7984
        %v7986 = vpop.f32.mrf.mxu0
        %v7987 = vadd.f32 %v7898, %v7986
        %7988 = vmatmul.bf16.gmra.mxu0 %v1659
        %v7989 = vpop.f32.mrf.mxu0
        %v7990 = vadd.f32 %v7901, %v7989
        %v7991 = vpop.f32.mrf.mxu0
        %v7992 = vadd.f32 %v7903, %v7991
        %7993 = vmatmul.bf16.gmra.mxu0 %v1667
        %v7994 = vpop.f32.mrf.mxu0
        %v7995 = vadd.f32 %v7906, %v7994
        %v7996 = vpop.f32.mrf.mxu0
        %v7997 = vadd.f32 %v7908, %v7996
        %7998 = vmatmul.bf16.gmra.mxu0 %v1675
        %v7999 = vpop.f32.mrf.mxu0
        %v8000 = vadd.f32 %v7911, %v7999
        %v8001 = vpop.f32.mrf.mxu0
        %v8002 = vadd.f32 %v7913, %v8001
        %8003 = vmatmul.bf16.gmra.mxu0 %v1683
        %v8004 = vpop.f32.mrf.mxu0
        %v8005 = vadd.f32 %v7916, %v8004
        %v8006 = vpop.f32.mrf.mxu0
        %v8007 = vadd.f32 %v7918, %v8006
        %8008 = vmatmul.bf16.gmra.mxu0 %v1691
        %v8009 = vpop.f32.mrf.mxu0
        %v8010 = vadd.f32 %v7921, %v8009
        %v8011 = vpop.f32.mrf.mxu0
        %v8012 = vadd.f32 %v7923, %v8011
        %8013 = vmatmul.bf16.gmra.mxu0 %v1699
        %v8014 = vpop.f32.mrf.mxu0
        %v8015 = vadd.f32 %v7926, %v8014
        %v8016 = vpop.f32.mrf.mxu0
        %v8017 = vadd.f32 %v7928, %v8016
        %8018 = vmatmul.bf16.gmra.mxu0 %v1707
        %v8019 = vpop.f32.mrf.mxu0
        %v8020 = vadd.f32 %v7931, %v8019
        %v8021 = vpop.f32.mrf.mxu0
        %v8022 = vadd.f32 %v7933, %v8021
        %8023 = vmatmul.bf16.gmra.mxu0 %v1715
        %v8024 = vpop.f32.mrf.mxu0
        %v8025 = vadd.f32 %v7936, %v8024
        %v8026 = vpop.f32.mrf.mxu0
        %v8027 = vadd.f32 %v7938, %v8026
        %8028 = vmatmul.bf16.gmra.mxu0 %v1723
        %v8029 = vpop.f32.mrf.mxu0
        %v8030 = vadd.f32 %v7941, %v8029
        %v8031 = vpop.f32.mrf.mxu0
        %v8032 = vadd.f32 %v7943, %v8031
        %8033 = vmatmul.bf16.gmra.mxu0 %v1731
        %v8034 = vpop.f32.mrf.mxu0
        %v8035 = vadd.f32 %v7946, %v8034
        %v8036 = vpop.f32.mrf.mxu0
        %v8037 = vadd.f32 %v7948, %v8036
        %8038 = vmatmul.bf16.gmra.mxu0 %v1739
        %v8039 = vpop.f32.mrf.mxu0
        %v8040 = vadd.f32 %v7951, %v8039
        %v8041 = vpop.f32.mrf.mxu0
        %v8042 = vadd.f32 %v7953, %v8041
        %8043 = vmatmul.bf16.gmra.mxu0 %v1747
        %v8044 = vpop.f32.mrf.mxu0
        %v8045 = vadd.f32 %v7956, %v8044
        %v8046 = vpop.f32.mrf.mxu0
        %v8047 = vadd.f32 %v7958, %v8046
        %8048 = vmatmul.bf16.gmra.mxu0 %v1755
        %v8049 = vpop.f32.mrf.mxu0
        %v8050 = vadd.f32 %v7961, %v8049
        %v8051 = vpop.f32.mrf.mxu0
        %v8052 = vadd.f32 %v7963, %v8051
        %8053 = vdwg.mxu0
        %8054 = vmatpush.bf16.msra.mxu0 %v4142
        %8055 = vmatpush.bf16.msra.mxu0 %v4134
        %8056 = vmatpush.bf16.msra.mxu0 %v4126
        %8057 = vmatpush.bf16.msra.mxu0 %v4118
        %8058 = vmatpush.bf16.msra.mxu0 %v4110
        %8059 = vmatpush.bf16.msra.mxu0 %v4102
        %8060 = vmatpush.bf16.msra.mxu0 %v4094
        %8061 = vmatpush.bf16.msra.mxu0 %v4086
        %8062 = vmatmul.bf16.gmra.mxu0 %v1636
        %v8063 = vpop.f32.mrf.mxu0
        %v8064 = vadd.f32 %v7975, %v8063
        %v8065 = vpop.f32.mrf.mxu0
        %v8066 = vadd.f32 %v7977, %v8065
        %8067 = vmatmul.bf16.gmra.mxu0 %v1644
        %v8068 = vpop.f32.mrf.mxu0
        %v8069 = vadd.f32 %v7980, %v8068
        %v8070 = vpop.f32.mrf.mxu0
        %v8071 = vadd.f32 %v7982, %v8070
        %8072 = vmatmul.bf16.gmra.mxu0 %v1652
        %v8073 = vpop.f32.mrf.mxu0
        %v8074 = vadd.f32 %v7985, %v8073
        %v8075 = vpop.f32.mrf.mxu0
        %v8076 = vadd.f32 %v7987, %v8075
        %8077 = vmatmul.bf16.gmra.mxu0 %v1660
        %v8078 = vpop.f32.mrf.mxu0
        %v8079 = vadd.f32 %v7990, %v8078
        %v8080 = vpop.f32.mrf.mxu0
        %v8081 = vadd.f32 %v7992, %v8080
        %8082 = vmatmul.bf16.gmra.mxu0 %v1668
        %v8083 = vpop.f32.mrf.mxu0
        %v8084 = vadd.f32 %v7995, %v8083
        %v8085 = vpop.f32.mrf.mxu0
        %v8086 = vadd.f32 %v7997, %v8085
        %8087 = vmatmul.bf16.gmra.mxu0 %v1676
        %v8088 = vpop.f32.mrf.mxu0
        %v8089 = vadd.f32 %v8000, %v8088
        %v8090 = vpop.f32.mrf.mxu0
        %v8091 = vadd.f32 %v8002, %v8090
        %8092 = vmatmul.bf16.gmra.mxu0 %v1684
        %v8093 = vpop.f32.mrf.mxu0
        %v8094 = vadd.f32 %v8005, %v8093
        %v8095 = vpop.f32.mrf.mxu0
        %v8096 = vadd.f32 %v8007, %v8095
        %8097 = vmatmul.bf16.gmra.mxu0 %v1692
        %v8098 = vpop.f32.mrf.mxu0
        %v8099 = vadd.f32 %v8010, %v8098
        %v8100 = vpop.f32.mrf.mxu0
        %v8101 = vadd.f32 %v8012, %v8100
        %8102 = vmatmul.bf16.gmra.mxu0 %v1700
        %v8103 = vpop.f32.mrf.mxu0
        %v8104 = vadd.f32 %v8015, %v8103
        %v8105 = vpop.f32.mrf.mxu0
        %v8106 = vadd.f32 %v8017, %v8105
        %8107 = vmatmul.bf16.gmra.mxu0 %v1708
        %v8108 = vpop.f32.mrf.mxu0
        %v8109 = vadd.f32 %v8020, %v8108
        %v8110 = vpop.f32.mrf.mxu0
        %v8111 = vadd.f32 %v8022, %v8110
        %8112 = vmatmul.bf16.gmra.mxu0 %v1716
        %v8113 = vpop.f32.mrf.mxu0
        %v8114 = vadd.f32 %v8025, %v8113
        %v8115 = vpop.f32.mrf.mxu0
        %v8116 = vadd.f32 %v8027, %v8115
        %8117 = vmatmul.bf16.gmra.mxu0 %v1724
        %v8118 = vpop.f32.mrf.mxu0
        %v8119 = vadd.f32 %v8030, %v8118
        %v8120 = vpop.f32.mrf.mxu0
        %v8121 = vadd.f32 %v8032, %v8120
        %8122 = vmatmul.bf16.gmra.mxu0 %v1732
        %v8123 = vpop.f32.mrf.mxu0
        %v8124 = vadd.f32 %v8035, %v8123
        %v8125 = vpop.f32.mrf.mxu0
        %v8126 = vadd.f32 %v8037, %v8125
        %8127 = vmatmul.bf16.gmra.mxu0 %v1740
        %v8128 = vpop.f32.mrf.mxu0
        %v8129 = vadd.f32 %v8040, %v8128
        %v8130 = vpop.f32.mrf.mxu0
        %v8131 = vadd.f32 %v8042, %v8130
        %8132 = vmatmul.bf16.gmra.mxu0 %v1748
        %v8133 = vpop.f32.mrf.mxu0
        %v8134 = vadd.f32 %v8045, %v8133
        %v8135 = vpop.f32.mrf.mxu0
        %v8136 = vadd.f32 %v8047, %v8135
        %8137 = vmatmul.bf16.gmra.mxu0 %v1756
        %v8138 = vpop.f32.mrf.mxu0
        %v8139 = vadd.f32 %v8050, %v8138
        %v8140 = vpop.f32.mrf.mxu0
        %v8141 = vadd.f32 %v8052, %v8140
        %8142 = vdwg.mxu0
        %8143 = vmatpush.bf16.msra.mxu0 %v4206
        %8144 = vmatpush.bf16.msra.mxu0 %v4198
        %8145 = vmatpush.bf16.msra.mxu0 %v4190
        %8146 = vmatpush.bf16.msra.mxu0 %v4182
        %8147 = vmatpush.bf16.msra.mxu0 %v4174
        %8148 = vmatpush.bf16.msra.mxu0 %v4166
        %8149 = vmatpush.bf16.msra.mxu0 %v4158
        %8150 = vmatpush.bf16.msra.mxu0 %v4150
        %8151 = vmatmul.bf16.gmra.mxu0 %v1637
        %v8152 = vpop.f32.mrf.mxu0
        %v8153 = vadd.f32 %v8064, %v8152
        %v8154 = vpop.f32.mrf.mxu0
        %v8155 = vadd.f32 %v8066, %v8154
        %8156 = vmatmul.bf16.gmra.mxu0 %v1645
        %v8157 = vpop.f32.mrf.mxu0
        %v8158 = vadd.f32 %v8069, %v8157
        %v8159 = vpop.f32.mrf.mxu0
        %v8160 = vadd.f32 %v8071, %v8159
        %8161 = vmatmul.bf16.gmra.mxu0 %v1653
        %v8162 = vpop.f32.mrf.mxu0
        %v8163 = vadd.f32 %v8074, %v8162
        %v8164 = vpop.f32.mrf.mxu0
        %v8165 = vadd.f32 %v8076, %v8164
        %8166 = vmatmul.bf16.gmra.mxu0 %v1661
        %v8167 = vpop.f32.mrf.mxu0
        %v8168 = vadd.f32 %v8079, %v8167
        %v8169 = vpop.f32.mrf.mxu0
        %v8170 = vadd.f32 %v8081, %v8169
        %8171 = vmatmul.bf16.gmra.mxu0 %v1669
        %v8172 = vpop.f32.mrf.mxu0
        %v8173 = vadd.f32 %v8084, %v8172
        %v8174 = vpop.f32.mrf.mxu0
        %v8175 = vadd.f32 %v8086, %v8174
        %8176 = vmatmul.bf16.gmra.mxu0 %v1677
        %v8177 = vpop.f32.mrf.mxu0
        %v8178 = vadd.f32 %v8089, %v8177
        %v8179 = vpop.f32.mrf.mxu0
        %v8180 = vadd.f32 %v8091, %v8179
        %8181 = vmatmul.bf16.gmra.mxu0 %v1685
        %v8182 = vpop.f32.mrf.mxu0
        %v8183 = vadd.f32 %v8094, %v8182
        %v8184 = vpop.f32.mrf.mxu0
        %v8185 = vadd.f32 %v8096, %v8184
        %8186 = vmatmul.bf16.gmra.mxu0 %v1693
        %v8187 = vpop.f32.mrf.mxu0
        %v8188 = vadd.f32 %v8099, %v8187
        %v8189 = vpop.f32.mrf.mxu0
        %v8190 = vadd.f32 %v8101, %v8189
        %8191 = vmatmul.bf16.gmra.mxu0 %v1701
        %v8192 = vpop.f32.mrf.mxu0
        %v8193 = vadd.f32 %v8104, %v8192
        %v8194 = vpop.f32.mrf.mxu0
        %v8195 = vadd.f32 %v8106, %v8194
        %8196 = vmatmul.bf16.gmra.mxu0 %v1709
        %v8197 = vpop.f32.mrf.mxu0
        %v8198 = vadd.f32 %v8109, %v8197
        %v8199 = vpop.f32.mrf.mxu0
        %v8200 = vadd.f32 %v8111, %v8199
        %8201 = vmatmul.bf16.gmra.mxu0 %v1717
        %v8202 = vpop.f32.mrf.mxu0
        %v8203 = vadd.f32 %v8114, %v8202
        %v8204 = vpop.f32.mrf.mxu0
        %v8205 = vadd.f32 %v8116, %v8204
        %8206 = vmatmul.bf16.gmra.mxu0 %v1725
        %v8207 = vpop.f32.mrf.mxu0
        %v8208 = vadd.f32 %v8119, %v8207
        %v8209 = vpop.f32.mrf.mxu0
        %v8210 = vadd.f32 %v8121, %v8209
        %8211 = vmatmul.bf16.gmra.mxu0 %v1733
        %v8212 = vpop.f32.mrf.mxu0
        %v8213 = vadd.f32 %v8124, %v8212
        %v8214 = vpop.f32.mrf.mxu0
        %v8215 = vadd.f32 %v8126, %v8214
        %8216 = vmatmul.bf16.gmra.mxu0 %v1741
        %v8217 = vpop.f32.mrf.mxu0
        %v8218 = vadd.f32 %v8129, %v8217
        %v8219 = vpop.f32.mrf.mxu0
        %v8220 = vadd.f32 %v8131, %v8219
        %8221 = vmatmul.bf16.gmra.mxu0 %v1749
        %v8222 = vpop.f32.mrf.mxu0
        %v8223 = vadd.f32 %v8134, %v8222
        %v8224 = vpop.f32.mrf.mxu0
        %v8225 = vadd.f32 %v8136, %v8224
        %8226 = vmatmul.bf16.gmra.mxu0 %v1757
        %v8227 = vpop.f32.mrf.mxu0
        %v8228 = vadd.f32 %v8139, %v8227
        %v8229 = vpop.f32.mrf.mxu0
        %v8230 = vadd.f32 %v8141, %v8229
        %8231 = vdwg.mxu0
        %8232 = vmatpush.bf16.msra.mxu0 %v4270
        %8233 = vmatpush.bf16.msra.mxu0 %v4262
        %8234 = vmatpush.bf16.msra.mxu0 %v4254
        %8235 = vmatpush.bf16.msra.mxu0 %v4246
        %8236 = vmatpush.bf16.msra.mxu0 %v4238
        %8237 = vmatpush.bf16.msra.mxu0 %v4230
        %8238 = vmatpush.bf16.msra.mxu0 %v4222
        %8239 = vmatpush.bf16.msra.mxu0 %v4214
        %8240 = vmatmul.bf16.gmra.mxu0 %v1638
        %v8241 = vpop.f32.mrf.mxu0
        %v8242 = vadd.f32 %v8153, %v8241
        %v8243 = vpop.f32.mrf.mxu0
        %v8244 = vadd.f32 %v8155, %v8243
        %8245 = vmatmul.bf16.gmra.mxu0 %v1646
        %v8246 = vpop.f32.mrf.mxu0
        %v8247 = vadd.f32 %v8158, %v8246
        %v8248 = vpop.f32.mrf.mxu0
        %v8249 = vadd.f32 %v8160, %v8248
        %8250 = vmatmul.bf16.gmra.mxu0 %v1654
        %v8251 = vpop.f32.mrf.mxu0
        %v8252 = vadd.f32 %v8163, %v8251
        %v8253 = vpop.f32.mrf.mxu0
        %v8254 = vadd.f32 %v8165, %v8253
        %8255 = vmatmul.bf16.gmra.mxu0 %v1662
        %v8256 = vpop.f32.mrf.mxu0
        %v8257 = vadd.f32 %v8168, %v8256
        %v8258 = vpop.f32.mrf.mxu0
        %v8259 = vadd.f32 %v8170, %v8258
        %8260 = vmatmul.bf16.gmra.mxu0 %v1670
        %v8261 = vpop.f32.mrf.mxu0
        %v8262 = vadd.f32 %v8173, %v8261
        %v8263 = vpop.f32.mrf.mxu0
        %v8264 = vadd.f32 %v8175, %v8263
        %8265 = vmatmul.bf16.gmra.mxu0 %v1678
        %v8266 = vpop.f32.mrf.mxu0
        %v8267 = vadd.f32 %v8178, %v8266
        %v8268 = vpop.f32.mrf.mxu0
        %v8269 = vadd.f32 %v8180, %v8268
        %8270 = vmatmul.bf16.gmra.mxu0 %v1686
        %v8271 = vpop.f32.mrf.mxu0
        %v8272 = vadd.f32 %v8183, %v8271
        %v8273 = vpop.f32.mrf.mxu0
        %v8274 = vadd.f32 %v8185, %v8273
        %8275 = vmatmul.bf16.gmra.mxu0 %v1694
        %v8276 = vpop.f32.mrf.mxu0
        %v8277 = vadd.f32 %v8188, %v8276
        %v8278 = vpop.f32.mrf.mxu0
        %v8279 = vadd.f32 %v8190, %v8278
        %8280 = vmatmul.bf16.gmra.mxu0 %v1702
        %v8281 = vpop.f32.mrf.mxu0
        %v8282 = vadd.f32 %v8193, %v8281
        %v8283 = vpop.f32.mrf.mxu0
        %v8284 = vadd.f32 %v8195, %v8283
        %8285 = vmatmul.bf16.gmra.mxu0 %v1710
        %v8286 = vpop.f32.mrf.mxu0
        %v8287 = vadd.f32 %v8198, %v8286
        %v8288 = vpop.f32.mrf.mxu0
        %v8289 = vadd.f32 %v8200, %v8288
        %8290 = vmatmul.bf16.gmra.mxu0 %v1718
        %v8291 = vpop.f32.mrf.mxu0
        %v8292 = vadd.f32 %v8203, %v8291
        %v8293 = vpop.f32.mrf.mxu0
        %v8294 = vadd.f32 %v8205, %v8293
        %8295 = vmatmul.bf16.gmra.mxu0 %v1726
        %v8296 = vpop.f32.mrf.mxu0
        %v8297 = vadd.f32 %v8208, %v8296
        %v8298 = vpop.f32.mrf.mxu0
        %v8299 = vadd.f32 %v8210, %v8298
        %8300 = vmatmul.bf16.gmra.mxu0 %v1734
        %v8301 = vpop.f32.mrf.mxu0
        %v8302 = vadd.f32 %v8213, %v8301
        %v8303 = vpop.f32.mrf.mxu0
        %v8304 = vadd.f32 %v8215, %v8303
        %8305 = vmatmul.bf16.gmra.mxu0 %v1742
        %v8306 = vpop.f32.mrf.mxu0
        %v8307 = vadd.f32 %v8218, %v8306
        %v8308 = vpop.f32.mrf.mxu0
        %v8309 = vadd.f32 %v8220, %v8308
        %8310 = vmatmul.bf16.gmra.mxu0 %v1750
        %v8311 = vpop.f32.mrf.mxu0
        %v8312 = vadd.f32 %v8223, %v8311
        %v8313 = vpop.f32.mrf.mxu0
        %v8314 = vadd.f32 %v8225, %v8313
        %8315 = vmatmul.bf16.gmra.mxu0 %v1758
        %v8316 = vpop.f32.mrf.mxu0
        %v8317 = vadd.f32 %v8228, %v8316
        %v8318 = vpop.f32.mrf.mxu0
        %v8319 = vadd.f32 %v8230, %v8318
        %8320 = vdwg.mxu0
        %8321 = vmatpush.bf16.msra.mxu0 %v4334
        %8322 = vmatpush.bf16.msra.mxu0 %v4326
        %8323 = vmatpush.bf16.msra.mxu0 %v4318
        %8324 = vmatpush.bf16.msra.mxu0 %v4310
        %8325 = vmatpush.bf16.msra.mxu0 %v4302
        %8326 = vmatpush.bf16.msra.mxu0 %v4294
        %8327 = vmatpush.bf16.msra.mxu0 %v4286
        %8328 = vmatpush.bf16.msra.mxu0 %v4278
        %8329 = vmatmul.bf16.gmra.mxu0 %v1639
        %v8330 = vpop.f32.mrf.mxu0
        %v8331 = vadd.f32 %v8242, %v8330
        %v8332 = vpop.f32.mrf.mxu0
        %v8333 = vadd.f32 %v8244, %v8332
        %8334 = vmatmul.bf16.gmra.mxu0 %v1647
        %v8335 = vpop.f32.mrf.mxu0
        %v8336 = vadd.f32 %v8247, %v8335
        %v8337 = vpop.f32.mrf.mxu0
        %v8338 = vadd.f32 %v8249, %v8337
        %8339 = vmatmul.bf16.gmra.mxu0 %v1655
        %v8340 = vpop.f32.mrf.mxu0
        %v8341 = vadd.f32 %v8252, %v8340
        %v8342 = vpop.f32.mrf.mxu0
        %v8343 = vadd.f32 %v8254, %v8342
        %8344 = vmatmul.bf16.gmra.mxu0 %v1663
        %v8345 = vpop.f32.mrf.mxu0
        %v8346 = vadd.f32 %v8257, %v8345
        %v8347 = vpop.f32.mrf.mxu0
        %v8348 = vadd.f32 %v8259, %v8347
        %8349 = vmatmul.bf16.gmra.mxu0 %v1671
        %v8350 = vpop.f32.mrf.mxu0
        %v8351 = vadd.f32 %v8262, %v8350
        %v8352 = vpop.f32.mrf.mxu0
        %v8353 = vadd.f32 %v8264, %v8352
        %8354 = vmatmul.bf16.gmra.mxu0 %v1679
        %v8355 = vpop.f32.mrf.mxu0
        %v8356 = vadd.f32 %v8267, %v8355
        %v8357 = vpop.f32.mrf.mxu0
        %v8358 = vadd.f32 %v8269, %v8357
        %8359 = vmatmul.bf16.gmra.mxu0 %v1687
        %v8360 = vpop.f32.mrf.mxu0
        %v8361 = vadd.f32 %v8272, %v8360
        %v8362 = vpop.f32.mrf.mxu0
        %v8363 = vadd.f32 %v8274, %v8362
        %8364 = vmatmul.bf16.gmra.mxu0 %v1695
        %v8365 = vpop.f32.mrf.mxu0
        %v8366 = vadd.f32 %v8277, %v8365
        %v8367 = vpop.f32.mrf.mxu0
        %v8368 = vadd.f32 %v8279, %v8367
        %8369 = vmatmul.bf16.gmra.mxu0 %v1703
        %v8370 = vpop.f32.mrf.mxu0
        %v8371 = vadd.f32 %v8282, %v8370
        %v8372 = vpop.f32.mrf.mxu0
        %v8373 = vadd.f32 %v8284, %v8372
        %8374 = vmatmul.bf16.gmra.mxu0 %v1711
        %v8375 = vpop.f32.mrf.mxu0
        %v8376 = vadd.f32 %v8287, %v8375
        %v8377 = vpop.f32.mrf.mxu0
        %v8378 = vadd.f32 %v8289, %v8377
        %8379 = vmatmul.bf16.gmra.mxu0 %v1719
        %v8380 = vpop.f32.mrf.mxu0
        %v8381 = vadd.f32 %v8292, %v8380
        %v8382 = vpop.f32.mrf.mxu0
        %v8383 = vadd.f32 %v8294, %v8382
        %8384 = vmatmul.bf16.gmra.mxu0 %v1727
        %v8385 = vpop.f32.mrf.mxu0
        %v8386 = vadd.f32 %v8297, %v8385
        %v8387 = vpop.f32.mrf.mxu0
        %v8388 = vadd.f32 %v8299, %v8387
        %8389 = vmatmul.bf16.gmra.mxu0 %v1735
        %v8390 = vpop.f32.mrf.mxu0
        %v8391 = vadd.f32 %v8302, %v8390
        %v8392 = vpop.f32.mrf.mxu0
        %v8393 = vadd.f32 %v8304, %v8392
        %8394 = vmatmul.bf16.gmra.mxu0 %v1743
        %v8395 = vpop.f32.mrf.mxu0
        %v8396 = vadd.f32 %v8307, %v8395
        %v8397 = vpop.f32.mrf.mxu0
        %v8398 = vadd.f32 %v8309, %v8397
        %8399 = vmatmul.bf16.gmra.mxu0 %v1751
        %v8400 = vpop.f32.mrf.mxu0
        %v8401 = vadd.f32 %v8312, %v8400
        %v8402 = vpop.f32.mrf.mxu0
        %v8403 = vadd.f32 %v8314, %v8402
        %8404 = vmatmul.bf16.gmra.mxu0 %v1759
        %v8405 = vpop.f32.mrf.mxu0
        %v8406 = vadd.f32 %v8317, %v8405
        %v8407 = vpop.f32.mrf.mxu0
        %v8408 = vadd.f32 %v8319, %v8407
        %8409 = vdwg.mxu0
        %8410 = vmatpush.bf16.msra.mxu0 %v3887
        %8411 = vmatpush.bf16.msra.mxu0 %v3879
        %8412 = vmatpush.bf16.msra.mxu0 %v3871
        %8413 = vmatpush.bf16.msra.mxu0 %v3863
        %8414 = vmatpush.bf16.msra.mxu0 %v3855
        %8415 = vmatpush.bf16.msra.mxu0 %v3847
        %8416 = vmatpush.bf16.msra.mxu0 %v3839
        %8417 = vmatpush.bf16.msra.mxu0 %v3831
        %8418 = vmatmul.bf16.gmra.mxu0 %v1632
        %v8419 = vpop.f32.mrf.mxu0
        %v8420 = vadd.f32 %v2279, %v8419
        %v8421 = vpop.f32.mrf.mxu0
        %v8422 = vadd.f32 %v2279, %v8421
        %8423 = vmatmul.bf16.gmra.mxu0 %v1640
        %v8424 = vpop.f32.mrf.mxu0
        %v8425 = vadd.f32 %v2279, %v8424
        %v8426 = vpop.f32.mrf.mxu0
        %v8427 = vadd.f32 %v2279, %v8426
        %8428 = vmatmul.bf16.gmra.mxu0 %v1648
        %v8429 = vpop.f32.mrf.mxu0
        %v8430 = vadd.f32 %v2279, %v8429
        %v8431 = vpop.f32.mrf.mxu0
        %v8432 = vadd.f32 %v2279, %v8431
        %8433 = vmatmul.bf16.gmra.mxu0 %v1656
        %v8434 = vpop.f32.mrf.mxu0
        %v8435 = vadd.f32 %v2279, %v8434
        %v8436 = vpop.f32.mrf.mxu0
        %v8437 = vadd.f32 %v2279, %v8436
        %8438 = vmatmul.bf16.gmra.mxu0 %v1664
        %v8439 = vpop.f32.mrf.mxu0
        %v8440 = vadd.f32 %v2279, %v8439
        %v8441 = vpop.f32.mrf.mxu0
        %v8442 = vadd.f32 %v2279, %v8441
        %8443 = vmatmul.bf16.gmra.mxu0 %v1672
        %v8444 = vpop.f32.mrf.mxu0
        %v8445 = vadd.f32 %v2279, %v8444
        %v8446 = vpop.f32.mrf.mxu0
        %v8447 = vadd.f32 %v2279, %v8446
        %8448 = vmatmul.bf16.gmra.mxu0 %v1680
        %v8449 = vpop.f32.mrf.mxu0
        %v8450 = vadd.f32 %v2279, %v8449
        %v8451 = vpop.f32.mrf.mxu0
        %v8452 = vadd.f32 %v2279, %v8451
        %8453 = vmatmul.bf16.gmra.mxu0 %v1688
        %v8454 = vpop.f32.mrf.mxu0
        %v8455 = vadd.f32 %v2279, %v8454
        %v8456 = vpop.f32.mrf.mxu0
        %v8457 = vadd.f32 %v2279, %v8456
        %8458 = vmatmul.bf16.gmra.mxu0 %v1696
        %v8459 = vpop.f32.mrf.mxu0
        %v8460 = vadd.f32 %v2279, %v8459
        %v8461 = vpop.f32.mrf.mxu0
        %v8462 = vadd.f32 %v2279, %v8461
        %8463 = vmatmul.bf16.gmra.mxu0 %v1704
        %v8464 = vpop.f32.mrf.mxu0
        %v8465 = vadd.f32 %v2279, %v8464
        %v8466 = vpop.f32.mrf.mxu0
        %v8467 = vadd.f32 %v2279, %v8466
        %8468 = vmatmul.bf16.gmra.mxu0 %v1712
        %v8469 = vpop.f32.mrf.mxu0
        %v8470 = vadd.f32 %v2279, %v8469
        %v8471 = vpop.f32.mrf.mxu0
        %v8472 = vadd.f32 %v2279, %v8471
        %8473 = vmatmul.bf16.gmra.mxu0 %v1720
        %v8474 = vpop.f32.mrf.mxu0
        %v8475 = vadd.f32 %v2279, %v8474
        %v8476 = vpop.f32.mrf.mxu0
        %v8477 = vadd.f32 %v2279, %v8476
        %8478 = vmatmul.bf16.gmra.mxu0 %v1728
        %v8479 = vpop.f32.mrf.mxu0
        %v8480 = vadd.f32 %v2279, %v8479
        %v8481 = vpop.f32.mrf.mxu0
        %v8482 = vadd.f32 %v2279, %v8481
        %8483 = vmatmul.bf16.gmra.mxu0 %v1736
        %v8484 = vpop.f32.mrf.mxu0
        %v8485 = vadd.f32 %v2279, %v8484
        %v8486 = vpop.f32.mrf.mxu0
        %v8487 = vadd.f32 %v2279, %v8486
        %8488 = vmatmul.bf16.gmra.mxu0 %v1744
        %v8489 = vpop.f32.mrf.mxu0
        %v8490 = vadd.f32 %v2279, %v8489
        %v8491 = vpop.f32.mrf.mxu0
        %v8492 = vadd.f32 %v2279, %v8491
        %8493 = vmatmul.bf16.gmra.mxu0 %v1752
        %v8494 = vpop.f32.mrf.mxu0
        %v8495 = vadd.f32 %v2279, %v8494
        %v8496 = vpop.f32.mrf.mxu0
        %v8497 = vadd.f32 %v2279, %v8496
        %8498 = vdwg.mxu0
        %8499 = vmatpush.bf16.msra.mxu0 %v3951
        %8500 = vmatpush.bf16.msra.mxu0 %v3943
        %8501 = vmatpush.bf16.msra.mxu0 %v3935
        %8502 = vmatpush.bf16.msra.mxu0 %v3927
        %8503 = vmatpush.bf16.msra.mxu0 %v3919
        %8504 = vmatpush.bf16.msra.mxu0 %v3911
        %8505 = vmatpush.bf16.msra.mxu0 %v3903
        %8506 = vmatpush.bf16.msra.mxu0 %v3895
        %8507 = vmatmul.bf16.gmra.mxu0 %v1633
        %v8508 = vpop.f32.mrf.mxu0
        %v8509 = vadd.f32 %v8420, %v8508
        %v8510 = vpop.f32.mrf.mxu0
        %v8511 = vadd.f32 %v8422, %v8510
        %8512 = vmatmul.bf16.gmra.mxu0 %v1641
        %v8513 = vpop.f32.mrf.mxu0
        %v8514 = vadd.f32 %v8425, %v8513
        %v8515 = vpop.f32.mrf.mxu0
        %v8516 = vadd.f32 %v8427, %v8515
        %8517 = vmatmul.bf16.gmra.mxu0 %v1649
        %v8518 = vpop.f32.mrf.mxu0
        %v8519 = vadd.f32 %v8430, %v8518
        %v8520 = vpop.f32.mrf.mxu0
        %v8521 = vadd.f32 %v8432, %v8520
        %8522 = vmatmul.bf16.gmra.mxu0 %v1657
        %v8523 = vpop.f32.mrf.mxu0
        %v8524 = vadd.f32 %v8435, %v8523
        %v8525 = vpop.f32.mrf.mxu0
        %v8526 = vadd.f32 %v8437, %v8525
        %8527 = vmatmul.bf16.gmra.mxu0 %v1665
        %v8528 = vpop.f32.mrf.mxu0
        %v8529 = vadd.f32 %v8440, %v8528
        %v8530 = vpop.f32.mrf.mxu0
        %v8531 = vadd.f32 %v8442, %v8530
        %8532 = vmatmul.bf16.gmra.mxu0 %v1673
        %v8533 = vpop.f32.mrf.mxu0
        %v8534 = vadd.f32 %v8445, %v8533
        %v8535 = vpop.f32.mrf.mxu0
        %v8536 = vadd.f32 %v8447, %v8535
        %8537 = vmatmul.bf16.gmra.mxu0 %v1681
        %v8538 = vpop.f32.mrf.mxu0
        %v8539 = vadd.f32 %v8450, %v8538
        %v8540 = vpop.f32.mrf.mxu0
        %v8541 = vadd.f32 %v8452, %v8540
        %8542 = vmatmul.bf16.gmra.mxu0 %v1689
        %v8543 = vpop.f32.mrf.mxu0
        %v8544 = vadd.f32 %v8455, %v8543
        %v8545 = vpop.f32.mrf.mxu0
        %v8546 = vadd.f32 %v8457, %v8545
        %8547 = vmatmul.bf16.gmra.mxu0 %v1697
        %v8548 = vpop.f32.mrf.mxu0
        %v8549 = vadd.f32 %v8460, %v8548
        %v8550 = vpop.f32.mrf.mxu0
        %v8551 = vadd.f32 %v8462, %v8550
        %8552 = vmatmul.bf16.gmra.mxu0 %v1705
        %v8553 = vpop.f32.mrf.mxu0
        %v8554 = vadd.f32 %v8465, %v8553
        %v8555 = vpop.f32.mrf.mxu0
        %v8556 = vadd.f32 %v8467, %v8555
        %8557 = vmatmul.bf16.gmra.mxu0 %v1713
        %v8558 = vpop.f32.mrf.mxu0
        %v8559 = vadd.f32 %v8470, %v8558
        %v8560 = vpop.f32.mrf.mxu0
        %v8561 = vadd.f32 %v8472, %v8560
        %8562 = vmatmul.bf16.gmra.mxu0 %v1721
        %v8563 = vpop.f32.mrf.mxu0
        %v8564 = vadd.f32 %v8475, %v8563
        %v8565 = vpop.f32.mrf.mxu0
        %v8566 = vadd.f32 %v8477, %v8565
        %8567 = vmatmul.bf16.gmra.mxu0 %v1729
        %v8568 = vpop.f32.mrf.mxu0
        %v8569 = vadd.f32 %v8480, %v8568
        %v8570 = vpop.f32.mrf.mxu0
        %v8571 = vadd.f32 %v8482, %v8570
        %8572 = vmatmul.bf16.gmra.mxu0 %v1737
        %v8573 = vpop.f32.mrf.mxu0
        %v8574 = vadd.f32 %v8485, %v8573
        %v8575 = vpop.f32.mrf.mxu0
        %v8576 = vadd.f32 %v8487, %v8575
        %8577 = vmatmul.bf16.gmra.mxu0 %v1745
        %v8578 = vpop.f32.mrf.mxu0
        %v8579 = vadd.f32 %v8490, %v8578
        %v8580 = vpop.f32.mrf.mxu0
        %v8581 = vadd.f32 %v8492, %v8580
        %8582 = vmatmul.bf16.gmra.mxu0 %v1753
        %v8583 = vpop.f32.mrf.mxu0
        %v8584 = vadd.f32 %v8495, %v8583
        %v8585 = vpop.f32.mrf.mxu0
        %v8586 = vadd.f32 %v8497, %v8585
        %8587 = vdwg.mxu0
        %8588 = vmatpush.bf16.msra.mxu0 %v4015
        %8589 = vmatpush.bf16.msra.mxu0 %v4007
        %8590 = vmatpush.bf16.msra.mxu0 %v3999
        %8591 = vmatpush.bf16.msra.mxu0 %v3991
        %8592 = vmatpush.bf16.msra.mxu0 %v3983
        %8593 = vmatpush.bf16.msra.mxu0 %v3975
        %8594 = vmatpush.bf16.msra.mxu0 %v3967
        %8595 = vmatpush.bf16.msra.mxu0 %v3959
        %8596 = vmatmul.bf16.gmra.mxu0 %v1634
        %v8597 = vpop.f32.mrf.mxu0
        %v8598 = vadd.f32 %v8509, %v8597
        %v8599 = vpop.f32.mrf.mxu0
        %v8600 = vadd.f32 %v8511, %v8599
        %8601 = vmatmul.bf16.gmra.mxu0 %v1642
        %v8602 = vpop.f32.mrf.mxu0
        %v8603 = vadd.f32 %v8514, %v8602
        %v8604 = vpop.f32.mrf.mxu0
        %v8605 = vadd.f32 %v8516, %v8604
        %8606 = vmatmul.bf16.gmra.mxu0 %v1650
        %v8607 = vpop.f32.mrf.mxu0
        %v8608 = vadd.f32 %v8519, %v8607
        %v8609 = vpop.f32.mrf.mxu0
        %v8610 = vadd.f32 %v8521, %v8609
        %8611 = vmatmul.bf16.gmra.mxu0 %v1658
        %v8612 = vpop.f32.mrf.mxu0
        %v8613 = vadd.f32 %v8524, %v8612
        %v8614 = vpop.f32.mrf.mxu0
        %v8615 = vadd.f32 %v8526, %v8614
        %8616 = vmatmul.bf16.gmra.mxu0 %v1666
        %v8617 = vpop.f32.mrf.mxu0
        %v8618 = vadd.f32 %v8529, %v8617
        %v8619 = vpop.f32.mrf.mxu0
        %v8620 = vadd.f32 %v8531, %v8619
        %8621 = vmatmul.bf16.gmra.mxu0 %v1674
        %v8622 = vpop.f32.mrf.mxu0
        %v8623 = vadd.f32 %v8534, %v8622
        %v8624 = vpop.f32.mrf.mxu0
        %v8625 = vadd.f32 %v8536, %v8624
        %8626 = vmatmul.bf16.gmra.mxu0 %v1682
        %v8627 = vpop.f32.mrf.mxu0
        %v8628 = vadd.f32 %v8539, %v8627
        %v8629 = vpop.f32.mrf.mxu0
        %v8630 = vadd.f32 %v8541, %v8629
        %8631 = vmatmul.bf16.gmra.mxu0 %v1690
        %v8632 = vpop.f32.mrf.mxu0
        %v8633 = vadd.f32 %v8544, %v8632
        %v8634 = vpop.f32.mrf.mxu0
        %v8635 = vadd.f32 %v8546, %v8634
        %8636 = vmatmul.bf16.gmra.mxu0 %v1698
        %v8637 = vpop.f32.mrf.mxu0
        %v8638 = vadd.f32 %v8549, %v8637
        %v8639 = vpop.f32.mrf.mxu0
        %v8640 = vadd.f32 %v8551, %v8639
        %8641 = vmatmul.bf16.gmra.mxu0 %v1706
        %v8642 = vpop.f32.mrf.mxu0
        %v8643 = vadd.f32 %v8554, %v8642
        %v8644 = vpop.f32.mrf.mxu0
        %v8645 = vadd.f32 %v8556, %v8644
        %8646 = vmatmul.bf16.gmra.mxu0 %v1714
        %v8647 = vpop.f32.mrf.mxu0
        %v8648 = vadd.f32 %v8559, %v8647
        %v8649 = vpop.f32.mrf.mxu0
        %v8650 = vadd.f32 %v8561, %v8649
        %8651 = vmatmul.bf16.gmra.mxu0 %v1722
        %v8652 = vpop.f32.mrf.mxu0
        %v8653 = vadd.f32 %v8564, %v8652
        %v8654 = vpop.f32.mrf.mxu0
        %v8655 = vadd.f32 %v8566, %v8654
        %8656 = vmatmul.bf16.gmra.mxu0 %v1730
        %v8657 = vpop.f32.mrf.mxu0
        %v8658 = vadd.f32 %v8569, %v8657
        %v8659 = vpop.f32.mrf.mxu0
        %v8660 = vadd.f32 %v8571, %v8659
        %8661 = vmatmul.bf16.gmra.mxu0 %v1738
        %v8662 = vpop.f32.mrf.mxu0
        %v8663 = vadd.f32 %v8574, %v8662
        %v8664 = vpop.f32.mrf.mxu0
        %v8665 = vadd.f32 %v8576, %v8664
        %8666 = vmatmul.bf16.gmra.mxu0 %v1746
        %v8667 = vpop.f32.mrf.mxu0
        %v8668 = vadd.f32 %v8579, %v8667
        %v8669 = vpop.f32.mrf.mxu0
        %v8670 = vadd.f32 %v8581, %v8669
        %8671 = vmatmul.bf16.gmra.mxu0 %v1754
        %v8672 = vpop.f32.mrf.mxu0
        %v8673 = vadd.f32 %v8584, %v8672
        %v8674 = vpop.f32.mrf.mxu0
        %v8675 = vadd.f32 %v8586, %v8674
        %8676 = vdwg.mxu0
        %8677 = vmatpush.bf16.msra.mxu0 %v4079
        %8678 = vmatpush.bf16.msra.mxu0 %v4071
        %8679 = vmatpush.bf16.msra.mxu0 %v4063
        %8680 = vmatpush.bf16.msra.mxu0 %v4055
        %8681 = vmatpush.bf16.msra.mxu0 %v4047
        %8682 = vmatpush.bf16.msra.mxu0 %v4039
        %8683 = vmatpush.bf16.msra.mxu0 %v4031
        %8684 = vmatpush.bf16.msra.mxu0 %v4023
        %8685 = vmatmul.bf16.gmra.mxu0 %v1635
        %v8686 = vpop.f32.mrf.mxu0
        %v8687 = vadd.f32 %v8598, %v8686
        %v8688 = vpop.f32.mrf.mxu0
        %v8689 = vadd.f32 %v8600, %v8688
        %8690 = vmatmul.bf16.gmra.mxu0 %v1643
        %v8691 = vpop.f32.mrf.mxu0
        %v8692 = vadd.f32 %v8603, %v8691
        %v8693 = vpop.f32.mrf.mxu0
        %v8694 = vadd.f32 %v8605, %v8693
        %8695 = vmatmul.bf16.gmra.mxu0 %v1651
        %v8696 = vpop.f32.mrf.mxu0
        %v8697 = vadd.f32 %v8608, %v8696
        %v8698 = vpop.f32.mrf.mxu0
        %v8699 = vadd.f32 %v8610, %v8698
        %8700 = vmatmul.bf16.gmra.mxu0 %v1659
        %v8701 = vpop.f32.mrf.mxu0
        %v8702 = vadd.f32 %v8613, %v8701
        %v8703 = vpop.f32.mrf.mxu0
        %v8704 = vadd.f32 %v8615, %v8703
        %8705 = vmatmul.bf16.gmra.mxu0 %v1667
        %v8706 = vpop.f32.mrf.mxu0
        %v8707 = vadd.f32 %v8618, %v8706
        %v8708 = vpop.f32.mrf.mxu0
        %v8709 = vadd.f32 %v8620, %v8708
        %8710 = vmatmul.bf16.gmra.mxu0 %v1675
        %v8711 = vpop.f32.mrf.mxu0
        %v8712 = vadd.f32 %v8623, %v8711
        %v8713 = vpop.f32.mrf.mxu0
        %v8714 = vadd.f32 %v8625, %v8713
        %8715 = vmatmul.bf16.gmra.mxu0 %v1683
        %v8716 = vpop.f32.mrf.mxu0
        %v8717 = vadd.f32 %v8628, %v8716
        %v8718 = vpop.f32.mrf.mxu0
        %v8719 = vadd.f32 %v8630, %v8718
        %8720 = vmatmul.bf16.gmra.mxu0 %v1691
        %v8721 = vpop.f32.mrf.mxu0
        %v8722 = vadd.f32 %v8633, %v8721
        %v8723 = vpop.f32.mrf.mxu0
        %v8724 = vadd.f32 %v8635, %v8723
        %8725 = vmatmul.bf16.gmra.mxu0 %v1699
        %v8726 = vpop.f32.mrf.mxu0
        %v8727 = vadd.f32 %v8638, %v8726
        %v8728 = vpop.f32.mrf.mxu0
        %v8729 = vadd.f32 %v8640, %v8728
        %8730 = vmatmul.bf16.gmra.mxu0 %v1707
        %v8731 = vpop.f32.mrf.mxu0
        %v8732 = vadd.f32 %v8643, %v8731
        %v8733 = vpop.f32.mrf.mxu0
        %v8734 = vadd.f32 %v8645, %v8733
        %8735 = vmatmul.bf16.gmra.mxu0 %v1715
        %v8736 = vpop.f32.mrf.mxu0
        %v8737 = vadd.f32 %v8648, %v8736
        %v8738 = vpop.f32.mrf.mxu0
        %v8739 = vadd.f32 %v8650, %v8738
        %8740 = vmatmul.bf16.gmra.mxu0 %v1723
        %v8741 = vpop.f32.mrf.mxu0
        %v8742 = vadd.f32 %v8653, %v8741
        %v8743 = vpop.f32.mrf.mxu0
        %v8744 = vadd.f32 %v8655, %v8743
        %8745 = vmatmul.bf16.gmra.mxu0 %v1731
        %v8746 = vpop.f32.mrf.mxu0
        %v8747 = vadd.f32 %v8658, %v8746
        %v8748 = vpop.f32.mrf.mxu0
        %v8749 = vadd.f32 %v8660, %v8748
        %8750 = vmatmul.bf16.gmra.mxu0 %v1739
        %v8751 = vpop.f32.mrf.mxu0
        %v8752 = vadd.f32 %v8663, %v8751
        %v8753 = vpop.f32.mrf.mxu0
        %v8754 = vadd.f32 %v8665, %v8753
        %8755 = vmatmul.bf16.gmra.mxu0 %v1747
        %v8756 = vpop.f32.mrf.mxu0
        %v8757 = vadd.f32 %v8668, %v8756
        %v8758 = vpop.f32.mrf.mxu0
        %v8759 = vadd.f32 %v8670, %v8758
        %8760 = vmatmul.bf16.gmra.mxu0 %v1755
        %v8761 = vpop.f32.mrf.mxu0
        %v8762 = vadd.f32 %v8673, %v8761
        %v8763 = vpop.f32.mrf.mxu0
        %v8764 = vadd.f32 %v8675, %v8763
        %8765 = vdwg.mxu0
        %8766 = vmatpush.bf16.msra.mxu0 %v4143
        %8767 = vmatpush.bf16.msra.mxu0 %v4135
        %8768 = vmatpush.bf16.msra.mxu0 %v4127
        %8769 = vmatpush.bf16.msra.mxu0 %v4119
        %8770 = vmatpush.bf16.msra.mxu0 %v4111
        %8771 = vmatpush.bf16.msra.mxu0 %v4103
        %8772 = vmatpush.bf16.msra.mxu0 %v4095
        %8773 = vmatpush.bf16.msra.mxu0 %v4087
        %8774 = vmatmul.bf16.gmra.mxu0 %v1636
        %v8775 = vpop.f32.mrf.mxu0
        %v8776 = vadd.f32 %v8687, %v8775
        %v8777 = vpop.f32.mrf.mxu0
        %v8778 = vadd.f32 %v8689, %v8777
        %8779 = vmatmul.bf16.gmra.mxu0 %v1644
        %v8780 = vpop.f32.mrf.mxu0
        %v8781 = vadd.f32 %v8692, %v8780
        %v8782 = vpop.f32.mrf.mxu0
        %v8783 = vadd.f32 %v8694, %v8782
        %8784 = vmatmul.bf16.gmra.mxu0 %v1652
        %v8785 = vpop.f32.mrf.mxu0
        %v8786 = vadd.f32 %v8697, %v8785
        %v8787 = vpop.f32.mrf.mxu0
        %v8788 = vadd.f32 %v8699, %v8787
        %8789 = vmatmul.bf16.gmra.mxu0 %v1660
        %v8790 = vpop.f32.mrf.mxu0
        %v8791 = vadd.f32 %v8702, %v8790
        %v8792 = vpop.f32.mrf.mxu0
        %v8793 = vadd.f32 %v8704, %v8792
        %8794 = vmatmul.bf16.gmra.mxu0 %v1668
        %v8795 = vpop.f32.mrf.mxu0
        %v8796 = vadd.f32 %v8707, %v8795
        %v8797 = vpop.f32.mrf.mxu0
        %v8798 = vadd.f32 %v8709, %v8797
        %8799 = vmatmul.bf16.gmra.mxu0 %v1676
        %v8800 = vpop.f32.mrf.mxu0
        %v8801 = vadd.f32 %v8712, %v8800
        %v8802 = vpop.f32.mrf.mxu0
        %v8803 = vadd.f32 %v8714, %v8802
        %8804 = vmatmul.bf16.gmra.mxu0 %v1684
        %v8805 = vpop.f32.mrf.mxu0
        %v8806 = vadd.f32 %v8717, %v8805
        %v8807 = vpop.f32.mrf.mxu0
        %v8808 = vadd.f32 %v8719, %v8807
        %8809 = vmatmul.bf16.gmra.mxu0 %v1692
        %v8810 = vpop.f32.mrf.mxu0
        %v8811 = vadd.f32 %v8722, %v8810
        %v8812 = vpop.f32.mrf.mxu0
        %v8813 = vadd.f32 %v8724, %v8812
        %8814 = vmatmul.bf16.gmra.mxu0 %v1700
        %v8815 = vpop.f32.mrf.mxu0
        %v8816 = vadd.f32 %v8727, %v8815
        %v8817 = vpop.f32.mrf.mxu0
        %v8818 = vadd.f32 %v8729, %v8817
        %8819 = vmatmul.bf16.gmra.mxu0 %v1708
        %v8820 = vpop.f32.mrf.mxu0
        %v8821 = vadd.f32 %v8732, %v8820
        %v8822 = vpop.f32.mrf.mxu0
        %v8823 = vadd.f32 %v8734, %v8822
        %8824 = vmatmul.bf16.gmra.mxu0 %v1716
        %v8825 = vpop.f32.mrf.mxu0
        %v8826 = vadd.f32 %v8737, %v8825
        %v8827 = vpop.f32.mrf.mxu0
        %v8828 = vadd.f32 %v8739, %v8827
        %8829 = vmatmul.bf16.gmra.mxu0 %v1724
        %v8830 = vpop.f32.mrf.mxu0
        %v8831 = vadd.f32 %v8742, %v8830
        %v8832 = vpop.f32.mrf.mxu0
        %v8833 = vadd.f32 %v8744, %v8832
        %8834 = vmatmul.bf16.gmra.mxu0 %v1732
        %v8835 = vpop.f32.mrf.mxu0
        %v8836 = vadd.f32 %v8747, %v8835
        %v8837 = vpop.f32.mrf.mxu0
        %v8838 = vadd.f32 %v8749, %v8837
        %8839 = vmatmul.bf16.gmra.mxu0 %v1740
        %v8840 = vpop.f32.mrf.mxu0
        %v8841 = vadd.f32 %v8752, %v8840
        %v8842 = vpop.f32.mrf.mxu0
        %v8843 = vadd.f32 %v8754, %v8842
        %8844 = vmatmul.bf16.gmra.mxu0 %v1748
        %v8845 = vpop.f32.mrf.mxu0
        %v8846 = vadd.f32 %v8757, %v8845
        %v8847 = vpop.f32.mrf.mxu0
        %v8848 = vadd.f32 %v8759, %v8847
        %8849 = vmatmul.bf16.gmra.mxu0 %v1756
        %v8850 = vpop.f32.mrf.mxu0
        %v8851 = vadd.f32 %v8762, %v8850
        %v8852 = vpop.f32.mrf.mxu0
        %v8853 = vadd.f32 %v8764, %v8852
        %8854 = vdwg.mxu0
        %8855 = vmatpush.bf16.msra.mxu0 %v4207
        %8856 = vmatpush.bf16.msra.mxu0 %v4199
        %8857 = vmatpush.bf16.msra.mxu0 %v4191
        %8858 = vmatpush.bf16.msra.mxu0 %v4183
        %8859 = vmatpush.bf16.msra.mxu0 %v4175
        %8860 = vmatpush.bf16.msra.mxu0 %v4167
        %8861 = vmatpush.bf16.msra.mxu0 %v4159
        %8862 = vmatpush.bf16.msra.mxu0 %v4151
        %8863 = vmatmul.bf16.gmra.mxu0 %v1637
        %v8864 = vpop.f32.mrf.mxu0
        %v8865 = vadd.f32 %v8776, %v8864
        %v8866 = vpop.f32.mrf.mxu0
        %v8867 = vadd.f32 %v8778, %v8866
        %8868 = vmatmul.bf16.gmra.mxu0 %v1645
        %v8869 = vpop.f32.mrf.mxu0
        %v8870 = vadd.f32 %v8781, %v8869
        %v8871 = vpop.f32.mrf.mxu0
        %v8872 = vadd.f32 %v8783, %v8871
        %8873 = vmatmul.bf16.gmra.mxu0 %v1653
        %v8874 = vpop.f32.mrf.mxu0
        %v8875 = vadd.f32 %v8786, %v8874
        %v8876 = vpop.f32.mrf.mxu0
        %v8877 = vadd.f32 %v8788, %v8876
        %8878 = vmatmul.bf16.gmra.mxu0 %v1661
        %v8879 = vpop.f32.mrf.mxu0
        %v8880 = vadd.f32 %v8791, %v8879
        %v8881 = vpop.f32.mrf.mxu0
        %v8882 = vadd.f32 %v8793, %v8881
        %8883 = vmatmul.bf16.gmra.mxu0 %v1669
        %v8884 = vpop.f32.mrf.mxu0
        %v8885 = vadd.f32 %v8796, %v8884
        %v8886 = vpop.f32.mrf.mxu0
        %v8887 = vadd.f32 %v8798, %v8886
        %8888 = vmatmul.bf16.gmra.mxu0 %v1677
        %v8889 = vpop.f32.mrf.mxu0
        %v8890 = vadd.f32 %v8801, %v8889
        %v8891 = vpop.f32.mrf.mxu0
        %v8892 = vadd.f32 %v8803, %v8891
        %8893 = vmatmul.bf16.gmra.mxu0 %v1685
        %v8894 = vpop.f32.mrf.mxu0
        %v8895 = vadd.f32 %v8806, %v8894
        %v8896 = vpop.f32.mrf.mxu0
        %v8897 = vadd.f32 %v8808, %v8896
        %8898 = vmatmul.bf16.gmra.mxu0 %v1693
        %v8899 = vpop.f32.mrf.mxu0
        %v8900 = vadd.f32 %v8811, %v8899
        %v8901 = vpop.f32.mrf.mxu0
        %v8902 = vadd.f32 %v8813, %v8901
        %8903 = vmatmul.bf16.gmra.mxu0 %v1701
        %v8904 = vpop.f32.mrf.mxu0
        %v8905 = vadd.f32 %v8816, %v8904
        %v8906 = vpop.f32.mrf.mxu0
        %v8907 = vadd.f32 %v8818, %v8906
        %8908 = vmatmul.bf16.gmra.mxu0 %v1709
        %v8909 = vpop.f32.mrf.mxu0
        %v8910 = vadd.f32 %v8821, %v8909
        %v8911 = vpop.f32.mrf.mxu0
        %v8912 = vadd.f32 %v8823, %v8911
        %8913 = vmatmul.bf16.gmra.mxu0 %v1717
        %v8914 = vpop.f32.mrf.mxu0
        %v8915 = vadd.f32 %v8826, %v8914
        %v8916 = vpop.f32.mrf.mxu0
        %v8917 = vadd.f32 %v8828, %v8916
        %8918 = vmatmul.bf16.gmra.mxu0 %v1725
        %v8919 = vpop.f32.mrf.mxu0
        %v8920 = vadd.f32 %v8831, %v8919
        %v8921 = vpop.f32.mrf.mxu0
        %v8922 = vadd.f32 %v8833, %v8921
        %8923 = vmatmul.bf16.gmra.mxu0 %v1733
        %v8924 = vpop.f32.mrf.mxu0
        %v8925 = vadd.f32 %v8836, %v8924
        %v8926 = vpop.f32.mrf.mxu0
        %v8927 = vadd.f32 %v8838, %v8926
        %8928 = vmatmul.bf16.gmra.mxu0 %v1741
        %v8929 = vpop.f32.mrf.mxu0
        %v8930 = vadd.f32 %v8841, %v8929
        %v8931 = vpop.f32.mrf.mxu0
        %v8932 = vadd.f32 %v8843, %v8931
        %8933 = vmatmul.bf16.gmra.mxu0 %v1749
        %v8934 = vpop.f32.mrf.mxu0
        %v8935 = vadd.f32 %v8846, %v8934
        %v8936 = vpop.f32.mrf.mxu0
        %v8937 = vadd.f32 %v8848, %v8936
        %8938 = vmatmul.bf16.gmra.mxu0 %v1757
        %v8939 = vpop.f32.mrf.mxu0
        %v8940 = vadd.f32 %v8851, %v8939
        %v8941 = vpop.f32.mrf.mxu0
        %v8942 = vadd.f32 %v8853, %v8941
        %8943 = vdwg.mxu0
        %8944 = vmatpush.bf16.msra.mxu0 %v4271
        %8945 = vmatpush.bf16.msra.mxu0 %v4263
        %8946 = vmatpush.bf16.msra.mxu0 %v4255
        %8947 = vmatpush.bf16.msra.mxu0 %v4247
        %8948 = vmatpush.bf16.msra.mxu0 %v4239
        %8949 = vmatpush.bf16.msra.mxu0 %v4231
        %8950 = vmatpush.bf16.msra.mxu0 %v4223
        %8951 = vmatpush.bf16.msra.mxu0 %v4215
        %8952 = vmatmul.bf16.gmra.mxu0 %v1638
        %v8953 = vpop.f32.mrf.mxu0
        %v8954 = vadd.f32 %v8865, %v8953
        %v8955 = vpop.f32.mrf.mxu0
        %v8956 = vadd.f32 %v8867, %v8955
        %8957 = vmatmul.bf16.gmra.mxu0 %v1646
        %v8958 = vpop.f32.mrf.mxu0
        %v8959 = vadd.f32 %v8870, %v8958
        %v8960 = vpop.f32.mrf.mxu0
        %v8961 = vadd.f32 %v8872, %v8960
        %8962 = vmatmul.bf16.gmra.mxu0 %v1654
        %v8963 = vpop.f32.mrf.mxu0
        %v8964 = vadd.f32 %v8875, %v8963
        %v8965 = vpop.f32.mrf.mxu0
        %v8966 = vadd.f32 %v8877, %v8965
        %8967 = vmatmul.bf16.gmra.mxu0 %v1662
        %v8968 = vpop.f32.mrf.mxu0
        %v8969 = vadd.f32 %v8880, %v8968
        %v8970 = vpop.f32.mrf.mxu0
        %v8971 = vadd.f32 %v8882, %v8970
        %8972 = vmatmul.bf16.gmra.mxu0 %v1670
        %v8973 = vpop.f32.mrf.mxu0
        %v8974 = vadd.f32 %v8885, %v8973
        %v8975 = vpop.f32.mrf.mxu0
        %v8976 = vadd.f32 %v8887, %v8975
        %8977 = vmatmul.bf16.gmra.mxu0 %v1678
        %v8978 = vpop.f32.mrf.mxu0
        %v8979 = vadd.f32 %v8890, %v8978
        %v8980 = vpop.f32.mrf.mxu0
        %v8981 = vadd.f32 %v8892, %v8980
        %8982 = vmatmul.bf16.gmra.mxu0 %v1686
        %v8983 = vpop.f32.mrf.mxu0
        %v8984 = vadd.f32 %v8895, %v8983
        %v8985 = vpop.f32.mrf.mxu0
        %v8986 = vadd.f32 %v8897, %v8985
        %8987 = vmatmul.bf16.gmra.mxu0 %v1694
        %v8988 = vpop.f32.mrf.mxu0
        %v8989 = vadd.f32 %v8900, %v8988
        %v8990 = vpop.f32.mrf.mxu0
        %v8991 = vadd.f32 %v8902, %v8990
        %8992 = vmatmul.bf16.gmra.mxu0 %v1702
        %v8993 = vpop.f32.mrf.mxu0
        %v8994 = vadd.f32 %v8905, %v8993
        %v8995 = vpop.f32.mrf.mxu0
        %v8996 = vadd.f32 %v8907, %v8995
        %8997 = vmatmul.bf16.gmra.mxu0 %v1710
        %v8998 = vpop.f32.mrf.mxu0
        %v8999 = vadd.f32 %v8910, %v8998
        %v9000 = vpop.f32.mrf.mxu0
        %v9001 = vadd.f32 %v8912, %v9000
        %9002 = vmatmul.bf16.gmra.mxu0 %v1718
        %v9003 = vpop.f32.mrf.mxu0
        %v9004 = vadd.f32 %v8915, %v9003
        %v9005 = vpop.f32.mrf.mxu0
        %v9006 = vadd.f32 %v8917, %v9005
        %9007 = vmatmul.bf16.gmra.mxu0 %v1726
        %v9008 = vpop.f32.mrf.mxu0
        %v9009 = vadd.f32 %v8920, %v9008
        %v9010 = vpop.f32.mrf.mxu0
        %v9011 = vadd.f32 %v8922, %v9010
        %9012 = vmatmul.bf16.gmra.mxu0 %v1734
        %v9013 = vpop.f32.mrf.mxu0
        %v9014 = vadd.f32 %v8925, %v9013
        %v9015 = vpop.f32.mrf.mxu0
        %v9016 = vadd.f32 %v8927, %v9015
        %9017 = vmatmul.bf16.gmra.mxu0 %v1742
        %v9018 = vpop.f32.mrf.mxu0
        %v9019 = vadd.f32 %v8930, %v9018
        %v9020 = vpop.f32.mrf.mxu0
        %v9021 = vadd.f32 %v8932, %v9020
        %9022 = vmatmul.bf16.gmra.mxu0 %v1750
        %v9023 = vpop.f32.mrf.mxu0
        %v9024 = vadd.f32 %v8935, %v9023
        %v9025 = vpop.f32.mrf.mxu0
        %v9026 = vadd.f32 %v8937, %v9025
        %9027 = vmatmul.bf16.gmra.mxu0 %v1758
        %v9028 = vpop.f32.mrf.mxu0
        %v9029 = vadd.f32 %v8940, %v9028
        %v9030 = vpop.f32.mrf.mxu0
        %v9031 = vadd.f32 %v8942, %v9030
        %9032 = vdwg.mxu0
        %9033 = vmatpush.bf16.msra.mxu0 %v4335
        %9034 = vmatpush.bf16.msra.mxu0 %v4327
        %9035 = vmatpush.bf16.msra.mxu0 %v4319
        %9036 = vmatpush.bf16.msra.mxu0 %v4311
        %9037 = vmatpush.bf16.msra.mxu0 %v4303
        %9038 = vmatpush.bf16.msra.mxu0 %v4295
        %9039 = vmatpush.bf16.msra.mxu0 %v4287
        %9040 = vmatpush.bf16.msra.mxu0 %v4279
        %9041 = vmatmul.bf16.gmra.mxu0 %v1639
        %v9042 = vpop.f32.mrf.mxu0
        %v9043 = vadd.f32 %v8954, %v9042
        %v9044 = vpop.f32.mrf.mxu0
        %v9045 = vadd.f32 %v8956, %v9044
        %9046 = vmatmul.bf16.gmra.mxu0 %v1647
        %v9047 = vpop.f32.mrf.mxu0
        %v9048 = vadd.f32 %v8959, %v9047
        %v9049 = vpop.f32.mrf.mxu0
        %v9050 = vadd.f32 %v8961, %v9049
        %9051 = vmatmul.bf16.gmra.mxu0 %v1655
        %v9052 = vpop.f32.mrf.mxu0
        %v9053 = vadd.f32 %v8964, %v9052
        %v9054 = vpop.f32.mrf.mxu0
        %v9055 = vadd.f32 %v8966, %v9054
        %9056 = vmatmul.bf16.gmra.mxu0 %v1663
        %v9057 = vpop.f32.mrf.mxu0
        %v9058 = vadd.f32 %v8969, %v9057
        %v9059 = vpop.f32.mrf.mxu0
        %v9060 = vadd.f32 %v8971, %v9059
        %9061 = vmatmul.bf16.gmra.mxu0 %v1671
        %v9062 = vpop.f32.mrf.mxu0
        %v9063 = vadd.f32 %v8974, %v9062
        %v9064 = vpop.f32.mrf.mxu0
        %v9065 = vadd.f32 %v8976, %v9064
        %9066 = vmatmul.bf16.gmra.mxu0 %v1679
        %v9067 = vpop.f32.mrf.mxu0
        %v9068 = vadd.f32 %v8979, %v9067
        %v9069 = vpop.f32.mrf.mxu0
        %v9070 = vadd.f32 %v8981, %v9069
        %9071 = vmatmul.bf16.gmra.mxu0 %v1687
        %v9072 = vpop.f32.mrf.mxu0
        %v9073 = vadd.f32 %v8984, %v9072
        %v9074 = vpop.f32.mrf.mxu0
        %v9075 = vadd.f32 %v8986, %v9074
        %9076 = vmatmul.bf16.gmra.mxu0 %v1695
        %v9077 = vpop.f32.mrf.mxu0
        %v9078 = vadd.f32 %v8989, %v9077
        %v9079 = vpop.f32.mrf.mxu0
        %v9080 = vadd.f32 %v8991, %v9079
        %9081 = vmatmul.bf16.gmra.mxu0 %v1703
        %v9082 = vpop.f32.mrf.mxu0
        %v9083 = vadd.f32 %v8994, %v9082
        %v9084 = vpop.f32.mrf.mxu0
        %v9085 = vadd.f32 %v8996, %v9084
        %9086 = vmatmul.bf16.gmra.mxu0 %v1711
        %v9087 = vpop.f32.mrf.mxu0
        %v9088 = vadd.f32 %v8999, %v9087
        %v9089 = vpop.f32.mrf.mxu0
        %v9090 = vadd.f32 %v9001, %v9089
        %9091 = vmatmul.bf16.gmra.mxu0 %v1719
        %v9092 = vpop.f32.mrf.mxu0
        %v9093 = vadd.f32 %v9004, %v9092
        %v9094 = vpop.f32.mrf.mxu0
        %v9095 = vadd.f32 %v9006, %v9094
        %9096 = vmatmul.bf16.gmra.mxu0 %v1727
        %v9097 = vpop.f32.mrf.mxu0
        %v9098 = vadd.f32 %v9009, %v9097
        %v9099 = vpop.f32.mrf.mxu0
        %v9100 = vadd.f32 %v9011, %v9099
        %9101 = vmatmul.bf16.gmra.mxu0 %v1735
        %v9102 = vpop.f32.mrf.mxu0
        %v9103 = vadd.f32 %v9014, %v9102
        %v9104 = vpop.f32.mrf.mxu0
        %v9105 = vadd.f32 %v9016, %v9104
        %9106 = vmatmul.bf16.gmra.mxu0 %v1743
        %v9107 = vpop.f32.mrf.mxu0
        %v9108 = vadd.f32 %v9019, %v9107
        %v9109 = vpop.f32.mrf.mxu0
        %v9110 = vadd.f32 %v9021, %v9109
        %9111 = vmatmul.bf16.gmra.mxu0 %v1751
        %v9112 = vpop.f32.mrf.mxu0
        %v9113 = vadd.f32 %v9024, %v9112
        %v9114 = vpop.f32.mrf.mxu0
        %v9115 = vadd.f32 %v9026, %v9114
        %9116 = vmatmul.bf16.gmra.mxu0 %v1759
        %v9117 = vpop.f32.mrf.mxu0
        %v9118 = vadd.f32 %v9029, %v9117
        %v9119 = vpop.f32.mrf.mxu0
        %v9120 = vadd.f32 %v9031, %v9119
        %9121 = vdwg.mxu0
        %9122 = vmatpush.bf16.msra.mxu0 %v3888
        %9123 = vmatpush.bf16.msra.mxu0 %v3880
        %9124 = vmatpush.bf16.msra.mxu0 %v3872
        %9125 = vmatpush.bf16.msra.mxu0 %v3864
        %9126 = vmatpush.bf16.msra.mxu0 %v3856
        %9127 = vmatpush.bf16.msra.mxu0 %v3848
        %9128 = vmatpush.bf16.msra.mxu0 %v3840
        %9129 = vmatpush.bf16.msra.mxu0 %v3832
        %9130 = vmatmul.bf16.gmra.mxu0 %v1632
        %v9131 = vpop.f32.mrf.mxu0
        %v9132 = vadd.f32 %v2280, %v9131
        %v9133 = vpop.f32.mrf.mxu0
        %v9134 = vadd.f32 %v2280, %v9133
        %9135 = vmatmul.bf16.gmra.mxu0 %v1640
        %v9136 = vpop.f32.mrf.mxu0
        %v9137 = vadd.f32 %v2280, %v9136
        %v9138 = vpop.f32.mrf.mxu0
        %v9139 = vadd.f32 %v2280, %v9138
        %9140 = vmatmul.bf16.gmra.mxu0 %v1648
        %v9141 = vpop.f32.mrf.mxu0
        %v9142 = vadd.f32 %v2280, %v9141
        %v9143 = vpop.f32.mrf.mxu0
        %v9144 = vadd.f32 %v2280, %v9143
        %9145 = vmatmul.bf16.gmra.mxu0 %v1656
        %v9146 = vpop.f32.mrf.mxu0
        %v9147 = vadd.f32 %v2280, %v9146
        %v9148 = vpop.f32.mrf.mxu0
        %v9149 = vadd.f32 %v2280, %v9148
        %9150 = vmatmul.bf16.gmra.mxu0 %v1664
        %v9151 = vpop.f32.mrf.mxu0
        %v9152 = vadd.f32 %v2280, %v9151
        %v9153 = vpop.f32.mrf.mxu0
        %v9154 = vadd.f32 %v2280, %v9153
        %9155 = vmatmul.bf16.gmra.mxu0 %v1672
        %v9156 = vpop.f32.mrf.mxu0
        %v9157 = vadd.f32 %v2280, %v9156
        %v9158 = vpop.f32.mrf.mxu0
        %v9159 = vadd.f32 %v2280, %v9158
        %9160 = vmatmul.bf16.gmra.mxu0 %v1680
        %v9161 = vpop.f32.mrf.mxu0
        %v9162 = vadd.f32 %v2280, %v9161
        %v9163 = vpop.f32.mrf.mxu0
        %v9164 = vadd.f32 %v2280, %v9163
        %9165 = vmatmul.bf16.gmra.mxu0 %v1688
        %v9166 = vpop.f32.mrf.mxu0
        %v9167 = vadd.f32 %v2280, %v9166
        %v9168 = vpop.f32.mrf.mxu0
        %v9169 = vadd.f32 %v2280, %v9168
        %9170 = vmatmul.bf16.gmra.mxu0 %v1696
        %v9171 = vpop.f32.mrf.mxu0
        %v9172 = vadd.f32 %v2280, %v9171
        %v9173 = vpop.f32.mrf.mxu0
        %v9174 = vadd.f32 %v2280, %v9173
        %9175 = vmatmul.bf16.gmra.mxu0 %v1704
        %v9176 = vpop.f32.mrf.mxu0
        %v9177 = vadd.f32 %v2280, %v9176
        %v9178 = vpop.f32.mrf.mxu0
        %v9179 = vadd.f32 %v2280, %v9178
        %9180 = vmatmul.bf16.gmra.mxu0 %v1712
        %v9181 = vpop.f32.mrf.mxu0
        %v9182 = vadd.f32 %v2280, %v9181
        %v9183 = vpop.f32.mrf.mxu0
        %v9184 = vadd.f32 %v2280, %v9183
        %9185 = vmatmul.bf16.gmra.mxu0 %v1720
        %v9186 = vpop.f32.mrf.mxu0
        %v9187 = vadd.f32 %v2280, %v9186
        %v9188 = vpop.f32.mrf.mxu0
        %v9189 = vadd.f32 %v2280, %v9188
        %9190 = vmatmul.bf16.gmra.mxu0 %v1728
        %v9191 = vpop.f32.mrf.mxu0
        %v9192 = vadd.f32 %v2280, %v9191
        %v9193 = vpop.f32.mrf.mxu0
        %v9194 = vadd.f32 %v2280, %v9193
        %9195 = vmatmul.bf16.gmra.mxu0 %v1736
        %v9196 = vpop.f32.mrf.mxu0
        %v9197 = vadd.f32 %v2280, %v9196
        %v9198 = vpop.f32.mrf.mxu0
        %v9199 = vadd.f32 %v2280, %v9198
        %9200 = vmatmul.bf16.gmra.mxu0 %v1744
        %v9201 = vpop.f32.mrf.mxu0
        %v9202 = vadd.f32 %v2280, %v9201
        %v9203 = vpop.f32.mrf.mxu0
        %v9204 = vadd.f32 %v2280, %v9203
        %9205 = vmatmul.bf16.gmra.mxu0 %v1752
        %v9206 = vpop.f32.mrf.mxu0
        %v9207 = vadd.f32 %v2280, %v9206
        %v9208 = vpop.f32.mrf.mxu0
        %v9209 = vadd.f32 %v2280, %v9208
        %9210 = vdwg.mxu0
        %9211 = vmatpush.bf16.msra.mxu0 %v3952
        %9212 = vmatpush.bf16.msra.mxu0 %v3944
        %9213 = vmatpush.bf16.msra.mxu0 %v3936
        %9214 = vmatpush.bf16.msra.mxu0 %v3928
        %9215 = vmatpush.bf16.msra.mxu0 %v3920
        %9216 = vmatpush.bf16.msra.mxu0 %v3912
        %9217 = vmatpush.bf16.msra.mxu0 %v3904
        %9218 = vmatpush.bf16.msra.mxu0 %v3896
        %9219 = vmatmul.bf16.gmra.mxu0 %v1633
        %v9220 = vpop.f32.mrf.mxu0
        %v9221 = vadd.f32 %v9132, %v9220
        %v9222 = vpop.f32.mrf.mxu0
        %v9223 = vadd.f32 %v9134, %v9222
        %9224 = vmatmul.bf16.gmra.mxu0 %v1641
        %v9225 = vpop.f32.mrf.mxu0
        %v9226 = vadd.f32 %v9137, %v9225
        %v9227 = vpop.f32.mrf.mxu0
        %v9228 = vadd.f32 %v9139, %v9227
        %9229 = vmatmul.bf16.gmra.mxu0 %v1649
        %v9230 = vpop.f32.mrf.mxu0
        %v9231 = vadd.f32 %v9142, %v9230
        %v9232 = vpop.f32.mrf.mxu0
        %v9233 = vadd.f32 %v9144, %v9232
        %9234 = vmatmul.bf16.gmra.mxu0 %v1657
        %v9235 = vpop.f32.mrf.mxu0
        %v9236 = vadd.f32 %v9147, %v9235
        %v9237 = vpop.f32.mrf.mxu0
        %v9238 = vadd.f32 %v9149, %v9237
        %9239 = vmatmul.bf16.gmra.mxu0 %v1665
        %v9240 = vpop.f32.mrf.mxu0
        %v9241 = vadd.f32 %v9152, %v9240
        %v9242 = vpop.f32.mrf.mxu0
        %v9243 = vadd.f32 %v9154, %v9242
        %9244 = vmatmul.bf16.gmra.mxu0 %v1673
        %v9245 = vpop.f32.mrf.mxu0
        %v9246 = vadd.f32 %v9157, %v9245
        %v9247 = vpop.f32.mrf.mxu0
        %v9248 = vadd.f32 %v9159, %v9247
        %9249 = vmatmul.bf16.gmra.mxu0 %v1681
        %v9250 = vpop.f32.mrf.mxu0
        %v9251 = vadd.f32 %v9162, %v9250
        %v9252 = vpop.f32.mrf.mxu0
        %v9253 = vadd.f32 %v9164, %v9252
        %9254 = vmatmul.bf16.gmra.mxu0 %v1689
        %v9255 = vpop.f32.mrf.mxu0
        %v9256 = vadd.f32 %v9167, %v9255
        %v9257 = vpop.f32.mrf.mxu0
        %v9258 = vadd.f32 %v9169, %v9257
        %9259 = vmatmul.bf16.gmra.mxu0 %v1697
        %v9260 = vpop.f32.mrf.mxu0
        %v9261 = vadd.f32 %v9172, %v9260
        %v9262 = vpop.f32.mrf.mxu0
        %v9263 = vadd.f32 %v9174, %v9262
        %9264 = vmatmul.bf16.gmra.mxu0 %v1705
        %v9265 = vpop.f32.mrf.mxu0
        %v9266 = vadd.f32 %v9177, %v9265
        %v9267 = vpop.f32.mrf.mxu0
        %v9268 = vadd.f32 %v9179, %v9267
        %9269 = vmatmul.bf16.gmra.mxu0 %v1713
        %v9270 = vpop.f32.mrf.mxu0
        %v9271 = vadd.f32 %v9182, %v9270
        %v9272 = vpop.f32.mrf.mxu0
        %v9273 = vadd.f32 %v9184, %v9272
        %9274 = vmatmul.bf16.gmra.mxu0 %v1721
        %v9275 = vpop.f32.mrf.mxu0
        %v9276 = vadd.f32 %v9187, %v9275
        %v9277 = vpop.f32.mrf.mxu0
        %v9278 = vadd.f32 %v9189, %v9277
        %9279 = vmatmul.bf16.gmra.mxu0 %v1729
        %v9280 = vpop.f32.mrf.mxu0
        %v9281 = vadd.f32 %v9192, %v9280
        %v9282 = vpop.f32.mrf.mxu0
        %v9283 = vadd.f32 %v9194, %v9282
        %9284 = vmatmul.bf16.gmra.mxu0 %v1737
        %v9285 = vpop.f32.mrf.mxu0
        %v9286 = vadd.f32 %v9197, %v9285
        %v9287 = vpop.f32.mrf.mxu0
        %v9288 = vadd.f32 %v9199, %v9287
        %9289 = vmatmul.bf16.gmra.mxu0 %v1745
        %v9290 = vpop.f32.mrf.mxu0
        %v9291 = vadd.f32 %v9202, %v9290
        %v9292 = vpop.f32.mrf.mxu0
        %v9293 = vadd.f32 %v9204, %v9292
        %9294 = vmatmul.bf16.gmra.mxu0 %v1753
        %v9295 = vpop.f32.mrf.mxu0
        %v9296 = vadd.f32 %v9207, %v9295
        %v9297 = vpop.f32.mrf.mxu0
        %v9298 = vadd.f32 %v9209, %v9297
        %9299 = vdwg.mxu0
        %9300 = vmatpush.bf16.msra.mxu0 %v4016
        %9301 = vmatpush.bf16.msra.mxu0 %v4008
        %9302 = vmatpush.bf16.msra.mxu0 %v4000
        %9303 = vmatpush.bf16.msra.mxu0 %v3992
        %9304 = vmatpush.bf16.msra.mxu0 %v3984
        %9305 = vmatpush.bf16.msra.mxu0 %v3976
        %9306 = vmatpush.bf16.msra.mxu0 %v3968
        %9307 = vmatpush.bf16.msra.mxu0 %v3960
        %9308 = vmatmul.bf16.gmra.mxu0 %v1634
        %v9309 = vpop.f32.mrf.mxu0
        %v9310 = vadd.f32 %v9221, %v9309
        %v9311 = vpop.f32.mrf.mxu0
        %v9312 = vadd.f32 %v9223, %v9311
        %9313 = vmatmul.bf16.gmra.mxu0 %v1642
        %v9314 = vpop.f32.mrf.mxu0
        %v9315 = vadd.f32 %v9226, %v9314
        %v9316 = vpop.f32.mrf.mxu0
        %v9317 = vadd.f32 %v9228, %v9316
        %9318 = vmatmul.bf16.gmra.mxu0 %v1650
        %v9319 = vpop.f32.mrf.mxu0
        %v9320 = vadd.f32 %v9231, %v9319
        %v9321 = vpop.f32.mrf.mxu0
        %v9322 = vadd.f32 %v9233, %v9321
        %9323 = vmatmul.bf16.gmra.mxu0 %v1658
        %v9324 = vpop.f32.mrf.mxu0
        %v9325 = vadd.f32 %v9236, %v9324
        %v9326 = vpop.f32.mrf.mxu0
        %v9327 = vadd.f32 %v9238, %v9326
        %9328 = vmatmul.bf16.gmra.mxu0 %v1666
        %v9329 = vpop.f32.mrf.mxu0
        %v9330 = vadd.f32 %v9241, %v9329
        %v9331 = vpop.f32.mrf.mxu0
        %v9332 = vadd.f32 %v9243, %v9331
        %9333 = vmatmul.bf16.gmra.mxu0 %v1674
        %v9334 = vpop.f32.mrf.mxu0
        %v9335 = vadd.f32 %v9246, %v9334
        %v9336 = vpop.f32.mrf.mxu0
        %v9337 = vadd.f32 %v9248, %v9336
        %9338 = vmatmul.bf16.gmra.mxu0 %v1682
        %v9339 = vpop.f32.mrf.mxu0
        %v9340 = vadd.f32 %v9251, %v9339
        %v9341 = vpop.f32.mrf.mxu0
        %v9342 = vadd.f32 %v9253, %v9341
        %9343 = vmatmul.bf16.gmra.mxu0 %v1690
        %v9344 = vpop.f32.mrf.mxu0
        %v9345 = vadd.f32 %v9256, %v9344
        %v9346 = vpop.f32.mrf.mxu0
        %v9347 = vadd.f32 %v9258, %v9346
        %9348 = vmatmul.bf16.gmra.mxu0 %v1698
        %v9349 = vpop.f32.mrf.mxu0
        %v9350 = vadd.f32 %v9261, %v9349
        %v9351 = vpop.f32.mrf.mxu0
        %v9352 = vadd.f32 %v9263, %v9351
        %9353 = vmatmul.bf16.gmra.mxu0 %v1706
        %v9354 = vpop.f32.mrf.mxu0
        %v9355 = vadd.f32 %v9266, %v9354
        %v9356 = vpop.f32.mrf.mxu0
        %v9357 = vadd.f32 %v9268, %v9356
        %9358 = vmatmul.bf16.gmra.mxu0 %v1714
        %v9359 = vpop.f32.mrf.mxu0
        %v9360 = vadd.f32 %v9271, %v9359
        %v9361 = vpop.f32.mrf.mxu0
        %v9362 = vadd.f32 %v9273, %v9361
        %9363 = vmatmul.bf16.gmra.mxu0 %v1722
        %v9364 = vpop.f32.mrf.mxu0
        %v9365 = vadd.f32 %v9276, %v9364
        %v9366 = vpop.f32.mrf.mxu0
        %v9367 = vadd.f32 %v9278, %v9366
        %9368 = vmatmul.bf16.gmra.mxu0 %v1730
        %v9369 = vpop.f32.mrf.mxu0
        %v9370 = vadd.f32 %v9281, %v9369
        %v9371 = vpop.f32.mrf.mxu0
        %v9372 = vadd.f32 %v9283, %v9371
        %9373 = vmatmul.bf16.gmra.mxu0 %v1738
        %v9374 = vpop.f32.mrf.mxu0
        %v9375 = vadd.f32 %v9286, %v9374
        %v9376 = vpop.f32.mrf.mxu0
        %v9377 = vadd.f32 %v9288, %v9376
        %9378 = vmatmul.bf16.gmra.mxu0 %v1746
        %v9379 = vpop.f32.mrf.mxu0
        %v9380 = vadd.f32 %v9291, %v9379
        %v9381 = vpop.f32.mrf.mxu0
        %v9382 = vadd.f32 %v9293, %v9381
        %9383 = vmatmul.bf16.gmra.mxu0 %v1754
        %v9384 = vpop.f32.mrf.mxu0
        %v9385 = vadd.f32 %v9296, %v9384
        %v9386 = vpop.f32.mrf.mxu0
        %v9387 = vadd.f32 %v9298, %v9386
        %9388 = vdwg.mxu0
        %9389 = vmatpush.bf16.msra.mxu0 %v4080
        %9390 = vmatpush.bf16.msra.mxu0 %v4072
        %9391 = vmatpush.bf16.msra.mxu0 %v4064
        %9392 = vmatpush.bf16.msra.mxu0 %v4056
        %9393 = vmatpush.bf16.msra.mxu0 %v4048
        %9394 = vmatpush.bf16.msra.mxu0 %v4040
        %9395 = vmatpush.bf16.msra.mxu0 %v4032
        %9396 = vmatpush.bf16.msra.mxu0 %v4024
        %9397 = vmatmul.bf16.gmra.mxu0 %v1635
        %v9398 = vpop.f32.mrf.mxu0
        %v9399 = vadd.f32 %v9310, %v9398
        %v9400 = vpop.f32.mrf.mxu0
        %v9401 = vadd.f32 %v9312, %v9400
        %9402 = vmatmul.bf16.gmra.mxu0 %v1643
        %v9403 = vpop.f32.mrf.mxu0
        %v9404 = vadd.f32 %v9315, %v9403
        %v9405 = vpop.f32.mrf.mxu0
        %v9406 = vadd.f32 %v9317, %v9405
        %9407 = vmatmul.bf16.gmra.mxu0 %v1651
        %v9408 = vpop.f32.mrf.mxu0
        %v9409 = vadd.f32 %v9320, %v9408
        %v9410 = vpop.f32.mrf.mxu0
        %v9411 = vadd.f32 %v9322, %v9410
        %9412 = vmatmul.bf16.gmra.mxu0 %v1659
        %v9413 = vpop.f32.mrf.mxu0
        %v9414 = vadd.f32 %v9325, %v9413
        %v9415 = vpop.f32.mrf.mxu0
        %v9416 = vadd.f32 %v9327, %v9415
        %9417 = vmatmul.bf16.gmra.mxu0 %v1667
        %v9418 = vpop.f32.mrf.mxu0
        %v9419 = vadd.f32 %v9330, %v9418
        %v9420 = vpop.f32.mrf.mxu0
        %v9421 = vadd.f32 %v9332, %v9420
        %9422 = vmatmul.bf16.gmra.mxu0 %v1675
        %v9423 = vpop.f32.mrf.mxu0
        %v9424 = vadd.f32 %v9335, %v9423
        %v9425 = vpop.f32.mrf.mxu0
        %v9426 = vadd.f32 %v9337, %v9425
        %9427 = vmatmul.bf16.gmra.mxu0 %v1683
        %v9428 = vpop.f32.mrf.mxu0
        %v9429 = vadd.f32 %v9340, %v9428
        %v9430 = vpop.f32.mrf.mxu0
        %v9431 = vadd.f32 %v9342, %v9430
        %9432 = vmatmul.bf16.gmra.mxu0 %v1691
        %v9433 = vpop.f32.mrf.mxu0
        %v9434 = vadd.f32 %v9345, %v9433
        %v9435 = vpop.f32.mrf.mxu0
        %v9436 = vadd.f32 %v9347, %v9435
        %9437 = vmatmul.bf16.gmra.mxu0 %v1699
        %v9438 = vpop.f32.mrf.mxu0
        %v9439 = vadd.f32 %v9350, %v9438
        %v9440 = vpop.f32.mrf.mxu0
        %v9441 = vadd.f32 %v9352, %v9440
        %9442 = vmatmul.bf16.gmra.mxu0 %v1707
        %v9443 = vpop.f32.mrf.mxu0
        %v9444 = vadd.f32 %v9355, %v9443
        %v9445 = vpop.f32.mrf.mxu0
        %v9446 = vadd.f32 %v9357, %v9445
        %9447 = vmatmul.bf16.gmra.mxu0 %v1715
        %v9448 = vpop.f32.mrf.mxu0
        %v9449 = vadd.f32 %v9360, %v9448
        %v9450 = vpop.f32.mrf.mxu0
        %v9451 = vadd.f32 %v9362, %v9450
        %9452 = vmatmul.bf16.gmra.mxu0 %v1723
        %v9453 = vpop.f32.mrf.mxu0
        %v9454 = vadd.f32 %v9365, %v9453
        %v9455 = vpop.f32.mrf.mxu0
        %v9456 = vadd.f32 %v9367, %v9455
        %9457 = vmatmul.bf16.gmra.mxu0 %v1731
        %v9458 = vpop.f32.mrf.mxu0
        %v9459 = vadd.f32 %v9370, %v9458
        %v9460 = vpop.f32.mrf.mxu0
        %v9461 = vadd.f32 %v9372, %v9460
        %9462 = vmatmul.bf16.gmra.mxu0 %v1739
        %v9463 = vpop.f32.mrf.mxu0
        %v9464 = vadd.f32 %v9375, %v9463
        %v9465 = vpop.f32.mrf.mxu0
        %v9466 = vadd.f32 %v9377, %v9465
        %9467 = vmatmul.bf16.gmra.mxu0 %v1747
        %v9468 = vpop.f32.mrf.mxu0
        %v9469 = vadd.f32 %v9380, %v9468
        %v9470 = vpop.f32.mrf.mxu0
        %v9471 = vadd.f32 %v9382, %v9470
        %9472 = vmatmul.bf16.gmra.mxu0 %v1755
        %v9473 = vpop.f32.mrf.mxu0
        %v9474 = vadd.f32 %v9385, %v9473
        %v9475 = vpop.f32.mrf.mxu0
        %v9476 = vadd.f32 %v9387, %v9475
        %9477 = vdwg.mxu0
        %9478 = vmatpush.bf16.msra.mxu0 %v4144
        %9479 = vmatpush.bf16.msra.mxu0 %v4136
        %9480 = vmatpush.bf16.msra.mxu0 %v4128
        %9481 = vmatpush.bf16.msra.mxu0 %v4120
        %9482 = vmatpush.bf16.msra.mxu0 %v4112
        %9483 = vmatpush.bf16.msra.mxu0 %v4104
        %9484 = vmatpush.bf16.msra.mxu0 %v4096
        %9485 = vmatpush.bf16.msra.mxu0 %v4088
        %9486 = vmatmul.bf16.gmra.mxu0 %v1636
        %v9487 = vpop.f32.mrf.mxu0
        %v9488 = vadd.f32 %v9399, %v9487
        %v9489 = vpop.f32.mrf.mxu0
        %v9490 = vadd.f32 %v9401, %v9489
        %9491 = vmatmul.bf16.gmra.mxu0 %v1644
        %v9492 = vpop.f32.mrf.mxu0
        %v9493 = vadd.f32 %v9404, %v9492
        %v9494 = vpop.f32.mrf.mxu0
        %v9495 = vadd.f32 %v9406, %v9494
        %9496 = vmatmul.bf16.gmra.mxu0 %v1652
        %v9497 = vpop.f32.mrf.mxu0
        %v9498 = vadd.f32 %v9409, %v9497
        %v9499 = vpop.f32.mrf.mxu0
        %v9500 = vadd.f32 %v9411, %v9499
        %9501 = vmatmul.bf16.gmra.mxu0 %v1660
        %v9502 = vpop.f32.mrf.mxu0
        %v9503 = vadd.f32 %v9414, %v9502
        %v9504 = vpop.f32.mrf.mxu0
        %v9505 = vadd.f32 %v9416, %v9504
        %9506 = vmatmul.bf16.gmra.mxu0 %v1668
        %v9507 = vpop.f32.mrf.mxu0
        %v9508 = vadd.f32 %v9419, %v9507
        %v9509 = vpop.f32.mrf.mxu0
        %v9510 = vadd.f32 %v9421, %v9509
        %9511 = vmatmul.bf16.gmra.mxu0 %v1676
        %v9512 = vpop.f32.mrf.mxu0
        %v9513 = vadd.f32 %v9424, %v9512
        %v9514 = vpop.f32.mrf.mxu0
        %v9515 = vadd.f32 %v9426, %v9514
        %9516 = vmatmul.bf16.gmra.mxu0 %v1684
        %v9517 = vpop.f32.mrf.mxu0
        %v9518 = vadd.f32 %v9429, %v9517
        %v9519 = vpop.f32.mrf.mxu0
        %v9520 = vadd.f32 %v9431, %v9519
        %9521 = vmatmul.bf16.gmra.mxu0 %v1692
        %v9522 = vpop.f32.mrf.mxu0
        %v9523 = vadd.f32 %v9434, %v9522
        %v9524 = vpop.f32.mrf.mxu0
        %v9525 = vadd.f32 %v9436, %v9524
        %9526 = vmatmul.bf16.gmra.mxu0 %v1700
        %v9527 = vpop.f32.mrf.mxu0
        %v9528 = vadd.f32 %v9439, %v9527
        %v9529 = vpop.f32.mrf.mxu0
        %v9530 = vadd.f32 %v9441, %v9529
        %9531 = vmatmul.bf16.gmra.mxu0 %v1708
        %v9532 = vpop.f32.mrf.mxu0
        %v9533 = vadd.f32 %v9444, %v9532
        %v9534 = vpop.f32.mrf.mxu0
        %v9535 = vadd.f32 %v9446, %v9534
        %9536 = vmatmul.bf16.gmra.mxu0 %v1716
        %v9537 = vpop.f32.mrf.mxu0
        %v9538 = vadd.f32 %v9449, %v9537
        %v9539 = vpop.f32.mrf.mxu0
        %v9540 = vadd.f32 %v9451, %v9539
        %9541 = vmatmul.bf16.gmra.mxu0 %v1724
        %v9542 = vpop.f32.mrf.mxu0
        %v9543 = vadd.f32 %v9454, %v9542
        %v9544 = vpop.f32.mrf.mxu0
        %v9545 = vadd.f32 %v9456, %v9544
        %9546 = vmatmul.bf16.gmra.mxu0 %v1732
        %v9547 = vpop.f32.mrf.mxu0
        %v9548 = vadd.f32 %v9459, %v9547
        %v9549 = vpop.f32.mrf.mxu0
        %v9550 = vadd.f32 %v9461, %v9549
        %9551 = vmatmul.bf16.gmra.mxu0 %v1740
        %v9552 = vpop.f32.mrf.mxu0
        %v9553 = vadd.f32 %v9464, %v9552
        %v9554 = vpop.f32.mrf.mxu0
        %v9555 = vadd.f32 %v9466, %v9554
        %9556 = vmatmul.bf16.gmra.mxu0 %v1748
        %v9557 = vpop.f32.mrf.mxu0
        %v9558 = vadd.f32 %v9469, %v9557
        %v9559 = vpop.f32.mrf.mxu0
        %v9560 = vadd.f32 %v9471, %v9559
        %9561 = vmatmul.bf16.gmra.mxu0 %v1756
        %v9562 = vpop.f32.mrf.mxu0
        %v9563 = vadd.f32 %v9474, %v9562
        %v9564 = vpop.f32.mrf.mxu0
        %v9565 = vadd.f32 %v9476, %v9564
        %9566 = vdwg.mxu0
        %9567 = vmatpush.bf16.msra.mxu0 %v4208
        %9568 = vmatpush.bf16.msra.mxu0 %v4200
        %9569 = vmatpush.bf16.msra.mxu0 %v4192
        %9570 = vmatpush.bf16.msra.mxu0 %v4184
        %9571 = vmatpush.bf16.msra.mxu0 %v4176
        %9572 = vmatpush.bf16.msra.mxu0 %v4168
        %9573 = vmatpush.bf16.msra.mxu0 %v4160
        %9574 = vmatpush.bf16.msra.mxu0 %v4152
        %9575 = vmatmul.bf16.gmra.mxu0 %v1637
        %v9576 = vpop.f32.mrf.mxu0
        %v9577 = vadd.f32 %v9488, %v9576
        %v9578 = vpop.f32.mrf.mxu0
        %v9579 = vadd.f32 %v9490, %v9578
        %9580 = vmatmul.bf16.gmra.mxu0 %v1645
        %v9581 = vpop.f32.mrf.mxu0
        %v9582 = vadd.f32 %v9493, %v9581
        %v9583 = vpop.f32.mrf.mxu0
        %v9584 = vadd.f32 %v9495, %v9583
        %9585 = vmatmul.bf16.gmra.mxu0 %v1653
        %v9586 = vpop.f32.mrf.mxu0
        %v9587 = vadd.f32 %v9498, %v9586
        %v9588 = vpop.f32.mrf.mxu0
        %v9589 = vadd.f32 %v9500, %v9588
        %9590 = vmatmul.bf16.gmra.mxu0 %v1661
        %v9591 = vpop.f32.mrf.mxu0
        %v9592 = vadd.f32 %v9503, %v9591
        %v9593 = vpop.f32.mrf.mxu0
        %v9594 = vadd.f32 %v9505, %v9593
        %9595 = vmatmul.bf16.gmra.mxu0 %v1669
        %v9596 = vpop.f32.mrf.mxu0
        %v9597 = vadd.f32 %v9508, %v9596
        %v9598 = vpop.f32.mrf.mxu0
        %v9599 = vadd.f32 %v9510, %v9598
        %9600 = vmatmul.bf16.gmra.mxu0 %v1677
        %v9601 = vpop.f32.mrf.mxu0
        %v9602 = vadd.f32 %v9513, %v9601
        %v9603 = vpop.f32.mrf.mxu0
        %v9604 = vadd.f32 %v9515, %v9603
        %9605 = vmatmul.bf16.gmra.mxu0 %v1685
        %v9606 = vpop.f32.mrf.mxu0
        %v9607 = vadd.f32 %v9518, %v9606
        %v9608 = vpop.f32.mrf.mxu0
        %v9609 = vadd.f32 %v9520, %v9608
        %9610 = vmatmul.bf16.gmra.mxu0 %v1693
        %v9611 = vpop.f32.mrf.mxu0
        %v9612 = vadd.f32 %v9523, %v9611
        %v9613 = vpop.f32.mrf.mxu0
        %v9614 = vadd.f32 %v9525, %v9613
        %9615 = vmatmul.bf16.gmra.mxu0 %v1701
        %v9616 = vpop.f32.mrf.mxu0
        %v9617 = vadd.f32 %v9528, %v9616
        %v9618 = vpop.f32.mrf.mxu0
        %v9619 = vadd.f32 %v9530, %v9618
        %9620 = vmatmul.bf16.gmra.mxu0 %v1709
        %v9621 = vpop.f32.mrf.mxu0
        %v9622 = vadd.f32 %v9533, %v9621
        %v9623 = vpop.f32.mrf.mxu0
        %v9624 = vadd.f32 %v9535, %v9623
        %9625 = vmatmul.bf16.gmra.mxu0 %v1717
        %v9626 = vpop.f32.mrf.mxu0
        %v9627 = vadd.f32 %v9538, %v9626
        %v9628 = vpop.f32.mrf.mxu0
        %v9629 = vadd.f32 %v9540, %v9628
        %9630 = vmatmul.bf16.gmra.mxu0 %v1725
        %v9631 = vpop.f32.mrf.mxu0
        %v9632 = vadd.f32 %v9543, %v9631
        %v9633 = vpop.f32.mrf.mxu0
        %v9634 = vadd.f32 %v9545, %v9633
        %9635 = vmatmul.bf16.gmra.mxu0 %v1733
        %v9636 = vpop.f32.mrf.mxu0
        %v9637 = vadd.f32 %v9548, %v9636
        %v9638 = vpop.f32.mrf.mxu0
        %v9639 = vadd.f32 %v9550, %v9638
        %9640 = vmatmul.bf16.gmra.mxu0 %v1741
        %v9641 = vpop.f32.mrf.mxu0
        %v9642 = vadd.f32 %v9553, %v9641
        %v9643 = vpop.f32.mrf.mxu0
        %v9644 = vadd.f32 %v9555, %v9643
        %9645 = vmatmul.bf16.gmra.mxu0 %v1749
        %v9646 = vpop.f32.mrf.mxu0
        %v9647 = vadd.f32 %v9558, %v9646
        %v9648 = vpop.f32.mrf.mxu0
        %v9649 = vadd.f32 %v9560, %v9648
        %9650 = vmatmul.bf16.gmra.mxu0 %v1757
        %v9651 = vpop.f32.mrf.mxu0
        %v9652 = vadd.f32 %v9563, %v9651
        %v9653 = vpop.f32.mrf.mxu0
        %v9654 = vadd.f32 %v9565, %v9653
        %9655 = vdwg.mxu0
        %9656 = vmatpush.bf16.msra.mxu0 %v4272
        %9657 = vmatpush.bf16.msra.mxu0 %v4264
        %9658 = vmatpush.bf16.msra.mxu0 %v4256
        %9659 = vmatpush.bf16.msra.mxu0 %v4248
        %9660 = vmatpush.bf16.msra.mxu0 %v4240
        %9661 = vmatpush.bf16.msra.mxu0 %v4232
        %9662 = vmatpush.bf16.msra.mxu0 %v4224
        %9663 = vmatpush.bf16.msra.mxu0 %v4216
        %9664 = vmatmul.bf16.gmra.mxu0 %v1638
        %v9665 = vpop.f32.mrf.mxu0
        %v9666 = vadd.f32 %v9577, %v9665
        %v9667 = vpop.f32.mrf.mxu0
        %v9668 = vadd.f32 %v9579, %v9667
        %9669 = vmatmul.bf16.gmra.mxu0 %v1646
        %v9670 = vpop.f32.mrf.mxu0
        %v9671 = vadd.f32 %v9582, %v9670
        %v9672 = vpop.f32.mrf.mxu0
        %v9673 = vadd.f32 %v9584, %v9672
        %9674 = vmatmul.bf16.gmra.mxu0 %v1654
        %v9675 = vpop.f32.mrf.mxu0
        %v9676 = vadd.f32 %v9587, %v9675
        %v9677 = vpop.f32.mrf.mxu0
        %v9678 = vadd.f32 %v9589, %v9677
        %9679 = vmatmul.bf16.gmra.mxu0 %v1662
        %v9680 = vpop.f32.mrf.mxu0
        %v9681 = vadd.f32 %v9592, %v9680
        %v9682 = vpop.f32.mrf.mxu0
        %v9683 = vadd.f32 %v9594, %v9682
        %9684 = vmatmul.bf16.gmra.mxu0 %v1670
        %v9685 = vpop.f32.mrf.mxu0
        %v9686 = vadd.f32 %v9597, %v9685
        %v9687 = vpop.f32.mrf.mxu0
        %v9688 = vadd.f32 %v9599, %v9687
        %9689 = vmatmul.bf16.gmra.mxu0 %v1678
        %v9690 = vpop.f32.mrf.mxu0
        %v9691 = vadd.f32 %v9602, %v9690
        %v9692 = vpop.f32.mrf.mxu0
        %v9693 = vadd.f32 %v9604, %v9692
        %9694 = vmatmul.bf16.gmra.mxu0 %v1686
        %v9695 = vpop.f32.mrf.mxu0
        %v9696 = vadd.f32 %v9607, %v9695
        %v9697 = vpop.f32.mrf.mxu0
        %v9698 = vadd.f32 %v9609, %v9697
        %9699 = vmatmul.bf16.gmra.mxu0 %v1694
        %v9700 = vpop.f32.mrf.mxu0
        %v9701 = vadd.f32 %v9612, %v9700
        %v9702 = vpop.f32.mrf.mxu0
        %v9703 = vadd.f32 %v9614, %v9702
        %9704 = vmatmul.bf16.gmra.mxu0 %v1702
        %v9705 = vpop.f32.mrf.mxu0
        %v9706 = vadd.f32 %v9617, %v9705
        %v9707 = vpop.f32.mrf.mxu0
        %v9708 = vadd.f32 %v9619, %v9707
        %9709 = vmatmul.bf16.gmra.mxu0 %v1710
        %v9710 = vpop.f32.mrf.mxu0
        %v9711 = vadd.f32 %v9622, %v9710
        %v9712 = vpop.f32.mrf.mxu0
        %v9713 = vadd.f32 %v9624, %v9712
        %9714 = vmatmul.bf16.gmra.mxu0 %v1718
        %v9715 = vpop.f32.mrf.mxu0
        %v9716 = vadd.f32 %v9627, %v9715
        %v9717 = vpop.f32.mrf.mxu0
        %v9718 = vadd.f32 %v9629, %v9717
        %9719 = vmatmul.bf16.gmra.mxu0 %v1726
        %v9720 = vpop.f32.mrf.mxu0
        %v9721 = vadd.f32 %v9632, %v9720
        %v9722 = vpop.f32.mrf.mxu0
        %v9723 = vadd.f32 %v9634, %v9722
        %9724 = vmatmul.bf16.gmra.mxu0 %v1734
        %v9725 = vpop.f32.mrf.mxu0
        %v9726 = vadd.f32 %v9637, %v9725
        %v9727 = vpop.f32.mrf.mxu0
        %v9728 = vadd.f32 %v9639, %v9727
        %9729 = vmatmul.bf16.gmra.mxu0 %v1742
        %v9730 = vpop.f32.mrf.mxu0
        %v9731 = vadd.f32 %v9642, %v9730
        %v9732 = vpop.f32.mrf.mxu0
        %v9733 = vadd.f32 %v9644, %v9732
        %9734 = vmatmul.bf16.gmra.mxu0 %v1750
        %v9735 = vpop.f32.mrf.mxu0
        %v9736 = vadd.f32 %v9647, %v9735
        %v9737 = vpop.f32.mrf.mxu0
        %v9738 = vadd.f32 %v9649, %v9737
        %9739 = vmatmul.bf16.gmra.mxu0 %v1758
        %v9740 = vpop.f32.mrf.mxu0
        %v9741 = vadd.f32 %v9652, %v9740
        %v9742 = vpop.f32.mrf.mxu0
        %v9743 = vadd.f32 %v9654, %v9742
        %9744 = vdwg.mxu0
        %9745 = vmatpush.bf16.msra.mxu0 %v4336
        %9746 = vmatpush.bf16.msra.mxu0 %v4328
        %9747 = vmatpush.bf16.msra.mxu0 %v4320
        %9748 = vmatpush.bf16.msra.mxu0 %v4312
        %9749 = vmatpush.bf16.msra.mxu0 %v4304
        %9750 = vmatpush.bf16.msra.mxu0 %v4296
        %9751 = vmatpush.bf16.msra.mxu0 %v4288
        %9752 = vmatpush.bf16.msra.mxu0 %v4280
        %9753 = vmatmul.bf16.gmra.mxu0 %v1639
        %v9754 = vpop.f32.mrf.mxu0
        %v9755 = vadd.f32 %v9666, %v9754
        %v9756 = vpop.f32.mrf.mxu0
        %v9757 = vadd.f32 %v9668, %v9756
        %9758 = vmatmul.bf16.gmra.mxu0 %v1647
        %v9759 = vpop.f32.mrf.mxu0
        %v9760 = vadd.f32 %v9671, %v9759
        %v9761 = vpop.f32.mrf.mxu0
        %v9762 = vadd.f32 %v9673, %v9761
        %9763 = vmatmul.bf16.gmra.mxu0 %v1655
        %v9764 = vpop.f32.mrf.mxu0
        %v9765 = vadd.f32 %v9676, %v9764
        %v9766 = vpop.f32.mrf.mxu0
        %v9767 = vadd.f32 %v9678, %v9766
        %9768 = vmatmul.bf16.gmra.mxu0 %v1663
        %v9769 = vpop.f32.mrf.mxu0
        %v9770 = vadd.f32 %v9681, %v9769
        %v9771 = vpop.f32.mrf.mxu0
        %v9772 = vadd.f32 %v9683, %v9771
        %9773 = vmatmul.bf16.gmra.mxu0 %v1671
        %v9774 = vpop.f32.mrf.mxu0
        %v9775 = vadd.f32 %v9686, %v9774
        %v9776 = vpop.f32.mrf.mxu0
        %v9777 = vadd.f32 %v9688, %v9776
        %9778 = vmatmul.bf16.gmra.mxu0 %v1679
        %v9779 = vpop.f32.mrf.mxu0
        %v9780 = vadd.f32 %v9691, %v9779
        %v9781 = vpop.f32.mrf.mxu0
        %v9782 = vadd.f32 %v9693, %v9781
        %9783 = vmatmul.bf16.gmra.mxu0 %v1687
        %v9784 = vpop.f32.mrf.mxu0
        %v9785 = vadd.f32 %v9696, %v9784
        %v9786 = vpop.f32.mrf.mxu0
        %v9787 = vadd.f32 %v9698, %v9786
        %9788 = vmatmul.bf16.gmra.mxu0 %v1695
        %v9789 = vpop.f32.mrf.mxu0
        %v9790 = vadd.f32 %v9701, %v9789
        %v9791 = vpop.f32.mrf.mxu0
        %v9792 = vadd.f32 %v9703, %v9791
        %9793 = vmatmul.bf16.gmra.mxu0 %v1703
        %v9794 = vpop.f32.mrf.mxu0
        %v9795 = vadd.f32 %v9706, %v9794
        %v9796 = vpop.f32.mrf.mxu0
        %v9797 = vadd.f32 %v9708, %v9796
        %9798 = vmatmul.bf16.gmra.mxu0 %v1711
        %v9799 = vpop.f32.mrf.mxu0
        %v9800 = vadd.f32 %v9711, %v9799
        %v9801 = vpop.f32.mrf.mxu0
        %v9802 = vadd.f32 %v9713, %v9801
        %9803 = vmatmul.bf16.gmra.mxu0 %v1719
        %v9804 = vpop.f32.mrf.mxu0
        %v9805 = vadd.f32 %v9716, %v9804
        %v9806 = vpop.f32.mrf.mxu0
        %v9807 = vadd.f32 %v9718, %v9806
        %9808 = vmatmul.bf16.gmra.mxu0 %v1727
        %v9809 = vpop.f32.mrf.mxu0
        %v9810 = vadd.f32 %v9721, %v9809
        %v9811 = vpop.f32.mrf.mxu0
        %v9812 = vadd.f32 %v9723, %v9811
        %9813 = vmatmul.bf16.gmra.mxu0 %v1735
        %v9814 = vpop.f32.mrf.mxu0
        %v9815 = vadd.f32 %v9726, %v9814
        %v9816 = vpop.f32.mrf.mxu0
        %v9817 = vadd.f32 %v9728, %v9816
        %9818 = vmatmul.bf16.gmra.mxu0 %v1743
        %v9819 = vpop.f32.mrf.mxu0
        %v9820 = vadd.f32 %v9731, %v9819
        %v9821 = vpop.f32.mrf.mxu0
        %v9822 = vadd.f32 %v9733, %v9821
        %9823 = vmatmul.bf16.gmra.mxu0 %v1751
        %v9824 = vpop.f32.mrf.mxu0
        %v9825 = vadd.f32 %v9736, %v9824
        %v9826 = vpop.f32.mrf.mxu0
        %v9827 = vadd.f32 %v9738, %v9826
        %9828 = vmatmul.bf16.gmra.mxu0 %v1759
        %v9829 = vpop.f32.mrf.mxu0
        %v9830 = vadd.f32 %v9741, %v9829
        %v9831 = vpop.f32.mrf.mxu0
        %v9832 = vadd.f32 %v9743, %v9831
        %9833 = vdwg.mxu0
        %9834 = vmatpush.bf16.msra.mxu0 %v3889
        %9835 = vmatpush.bf16.msra.mxu0 %v3881
        %9836 = vmatpush.bf16.msra.mxu0 %v3873
        %9837 = vmatpush.bf16.msra.mxu0 %v3865
        %9838 = vmatpush.bf16.msra.mxu0 %v3857
        %9839 = vmatpush.bf16.msra.mxu0 %v3849
        %9840 = vmatpush.bf16.msra.mxu0 %v3841
        %9841 = vmatpush.bf16.msra.mxu0 %v3833
        %9842 = vmatmul.bf16.gmra.mxu0 %v1632
        %v9843 = vpop.f32.mrf.mxu0
        %v9844 = vadd.f32 %v2281, %v9843
        %v9845 = vpop.f32.mrf.mxu0
        %v9846 = vadd.f32 %v2281, %v9845
        %9847 = vmatmul.bf16.gmra.mxu0 %v1640
        %v9848 = vpop.f32.mrf.mxu0
        %v9849 = vadd.f32 %v2281, %v9848
        %v9850 = vpop.f32.mrf.mxu0
        %v9851 = vadd.f32 %v2281, %v9850
        %9852 = vmatmul.bf16.gmra.mxu0 %v1648
        %v9853 = vpop.f32.mrf.mxu0
        %v9854 = vadd.f32 %v2281, %v9853
        %v9855 = vpop.f32.mrf.mxu0
        %v9856 = vadd.f32 %v2281, %v9855
        %9857 = vmatmul.bf16.gmra.mxu0 %v1656
        %v9858 = vpop.f32.mrf.mxu0
        %v9859 = vadd.f32 %v2281, %v9858
        %v9860 = vpop.f32.mrf.mxu0
        %v9861 = vadd.f32 %v2281, %v9860
        %9862 = vmatmul.bf16.gmra.mxu0 %v1664
        %v9863 = vpop.f32.mrf.mxu0
        %v9864 = vadd.f32 %v2281, %v9863
        %v9865 = vpop.f32.mrf.mxu0
        %v9866 = vadd.f32 %v2281, %v9865
        %9867 = vmatmul.bf16.gmra.mxu0 %v1672
        %v9868 = vpop.f32.mrf.mxu0
        %v9869 = vadd.f32 %v2281, %v9868
        %v9870 = vpop.f32.mrf.mxu0
        %v9871 = vadd.f32 %v2281, %v9870
        %9872 = vmatmul.bf16.gmra.mxu0 %v1680
        %v9873 = vpop.f32.mrf.mxu0
        %v9874 = vadd.f32 %v2281, %v9873
        %v9875 = vpop.f32.mrf.mxu0
        %v9876 = vadd.f32 %v2281, %v9875
        %9877 = vmatmul.bf16.gmra.mxu0 %v1688
        %v9878 = vpop.f32.mrf.mxu0
        %v9879 = vadd.f32 %v2281, %v9878
        %v9880 = vpop.f32.mrf.mxu0
        %v9881 = vadd.f32 %v2281, %v9880
        %9882 = vmatmul.bf16.gmra.mxu0 %v1696
        %v9883 = vpop.f32.mrf.mxu0
        %v9884 = vadd.f32 %v2281, %v9883
        %v9885 = vpop.f32.mrf.mxu0
        %v9886 = vadd.f32 %v2281, %v9885
        %9887 = vmatmul.bf16.gmra.mxu0 %v1704
        %v9888 = vpop.f32.mrf.mxu0
        %v9889 = vadd.f32 %v2281, %v9888
        %v9890 = vpop.f32.mrf.mxu0
        %v9891 = vadd.f32 %v2281, %v9890
        %9892 = vmatmul.bf16.gmra.mxu0 %v1712
        %v9893 = vpop.f32.mrf.mxu0
        %v9894 = vadd.f32 %v2281, %v9893
        %v9895 = vpop.f32.mrf.mxu0
        %v9896 = vadd.f32 %v2281, %v9895
        %9897 = vmatmul.bf16.gmra.mxu0 %v1720
        %v9898 = vpop.f32.mrf.mxu0
        %v9899 = vadd.f32 %v2281, %v9898
        %v9900 = vpop.f32.mrf.mxu0
        %v9901 = vadd.f32 %v2281, %v9900
        %9902 = vmatmul.bf16.gmra.mxu0 %v1728
        %v9903 = vpop.f32.mrf.mxu0
        %v9904 = vadd.f32 %v2281, %v9903
        %v9905 = vpop.f32.mrf.mxu0
        %v9906 = vadd.f32 %v2281, %v9905
        %9907 = vmatmul.bf16.gmra.mxu0 %v1736
        %v9908 = vpop.f32.mrf.mxu0
        %v9909 = vadd.f32 %v2281, %v9908
        %v9910 = vpop.f32.mrf.mxu0
        %v9911 = vadd.f32 %v2281, %v9910
        %9912 = vmatmul.bf16.gmra.mxu0 %v1744
        %v9913 = vpop.f32.mrf.mxu0
        %v9914 = vadd.f32 %v2281, %v9913
        %v9915 = vpop.f32.mrf.mxu0
        %v9916 = vadd.f32 %v2281, %v9915
        %9917 = vmatmul.bf16.gmra.mxu0 %v1752
        %v9918 = vpop.f32.mrf.mxu0
        %v9919 = vadd.f32 %v2281, %v9918
        %v9920 = vpop.f32.mrf.mxu0
        %v9921 = vadd.f32 %v2281, %v9920
        %9922 = vdwg.mxu0
        %9923 = vmatpush.bf16.msra.mxu0 %v3953
        %9924 = vmatpush.bf16.msra.mxu0 %v3945
        %9925 = vmatpush.bf16.msra.mxu0 %v3937
        %9926 = vmatpush.bf16.msra.mxu0 %v3929
        %9927 = vmatpush.bf16.msra.mxu0 %v3921
        %9928 = vmatpush.bf16.msra.mxu0 %v3913
        %9929 = vmatpush.bf16.msra.mxu0 %v3905
        %9930 = vmatpush.bf16.msra.mxu0 %v3897
        %9931 = vmatmul.bf16.gmra.mxu0 %v1633
        %v9932 = vpop.f32.mrf.mxu0
        %v9933 = vadd.f32 %v9844, %v9932
        %v9934 = vpop.f32.mrf.mxu0
        %v9935 = vadd.f32 %v9846, %v9934
        %9936 = vmatmul.bf16.gmra.mxu0 %v1641
        %v9937 = vpop.f32.mrf.mxu0
        %v9938 = vadd.f32 %v9849, %v9937
        %v9939 = vpop.f32.mrf.mxu0
        %v9940 = vadd.f32 %v9851, %v9939
        %9941 = vmatmul.bf16.gmra.mxu0 %v1649
        %v9942 = vpop.f32.mrf.mxu0
        %v9943 = vadd.f32 %v9854, %v9942
        %v9944 = vpop.f32.mrf.mxu0
        %v9945 = vadd.f32 %v9856, %v9944
        %9946 = vmatmul.bf16.gmra.mxu0 %v1657
        %v9947 = vpop.f32.mrf.mxu0
        %v9948 = vadd.f32 %v9859, %v9947
        %v9949 = vpop.f32.mrf.mxu0
        %v9950 = vadd.f32 %v9861, %v9949
        %9951 = vmatmul.bf16.gmra.mxu0 %v1665
        %v9952 = vpop.f32.mrf.mxu0
        %v9953 = vadd.f32 %v9864, %v9952
        %v9954 = vpop.f32.mrf.mxu0
        %v9955 = vadd.f32 %v9866, %v9954
        %9956 = vmatmul.bf16.gmra.mxu0 %v1673
        %v9957 = vpop.f32.mrf.mxu0
        %v9958 = vadd.f32 %v9869, %v9957
        %v9959 = vpop.f32.mrf.mxu0
        %v9960 = vadd.f32 %v9871, %v9959
        %9961 = vmatmul.bf16.gmra.mxu0 %v1681
        %v9962 = vpop.f32.mrf.mxu0
        %v9963 = vadd.f32 %v9874, %v9962
        %v9964 = vpop.f32.mrf.mxu0
        %v9965 = vadd.f32 %v9876, %v9964
        %9966 = vmatmul.bf16.gmra.mxu0 %v1689
        %v9967 = vpop.f32.mrf.mxu0
        %v9968 = vadd.f32 %v9879, %v9967
        %v9969 = vpop.f32.mrf.mxu0
        %v9970 = vadd.f32 %v9881, %v9969
        %9971 = vmatmul.bf16.gmra.mxu0 %v1697
        %v9972 = vpop.f32.mrf.mxu0
        %v9973 = vadd.f32 %v9884, %v9972
        %v9974 = vpop.f32.mrf.mxu0
        %v9975 = vadd.f32 %v9886, %v9974
        %9976 = vmatmul.bf16.gmra.mxu0 %v1705
        %v9977 = vpop.f32.mrf.mxu0
        %v9978 = vadd.f32 %v9889, %v9977
        %v9979 = vpop.f32.mrf.mxu0
        %v9980 = vadd.f32 %v9891, %v9979
        %9981 = vmatmul.bf16.gmra.mxu0 %v1713
        %v9982 = vpop.f32.mrf.mxu0
        %v9983 = vadd.f32 %v9894, %v9982
        %v9984 = vpop.f32.mrf.mxu0
        %v9985 = vadd.f32 %v9896, %v9984
        %9986 = vmatmul.bf16.gmra.mxu0 %v1721
        %v9987 = vpop.f32.mrf.mxu0
        %v9988 = vadd.f32 %v9899, %v9987
        %v9989 = vpop.f32.mrf.mxu0
        %v9990 = vadd.f32 %v9901, %v9989
        %9991 = vmatmul.bf16.gmra.mxu0 %v1729
        %v9992 = vpop.f32.mrf.mxu0
        %v9993 = vadd.f32 %v9904, %v9992
        %v9994 = vpop.f32.mrf.mxu0
        %v9995 = vadd.f32 %v9906, %v9994
        %9996 = vmatmul.bf16.gmra.mxu0 %v1737
        %v9997 = vpop.f32.mrf.mxu0
        %v9998 = vadd.f32 %v9909, %v9997
        %v9999 = vpop.f32.mrf.mxu0
        %v10000 = vadd.f32 %v9911, %v9999
        %10001 = vmatmul.bf16.gmra.mxu0 %v1745
        %v10002 = vpop.f32.mrf.mxu0
        %v10003 = vadd.f32 %v9914, %v10002
        %v10004 = vpop.f32.mrf.mxu0
        %v10005 = vadd.f32 %v9916, %v10004
        %10006 = vmatmul.bf16.gmra.mxu0 %v1753
        %v10007 = vpop.f32.mrf.mxu0
        %v10008 = vadd.f32 %v9919, %v10007
        %v10009 = vpop.f32.mrf.mxu0
        %v10010 = vadd.f32 %v9921, %v10009
        %10011 = vdwg.mxu0
        %10012 = vmatpush.bf16.msra.mxu0 %v4017
        %10013 = vmatpush.bf16.msra.mxu0 %v4009
        %10014 = vmatpush.bf16.msra.mxu0 %v4001
        %10015 = vmatpush.bf16.msra.mxu0 %v3993
        %10016 = vmatpush.bf16.msra.mxu0 %v3985
        %10017 = vmatpush.bf16.msra.mxu0 %v3977
        %10018 = vmatpush.bf16.msra.mxu0 %v3969
        %10019 = vmatpush.bf16.msra.mxu0 %v3961
        %10020 = vmatmul.bf16.gmra.mxu0 %v1634
        %v10021 = vpop.f32.mrf.mxu0
        %v10022 = vadd.f32 %v9933, %v10021
        %v10023 = vpop.f32.mrf.mxu0
        %v10024 = vadd.f32 %v9935, %v10023
        %10025 = vmatmul.bf16.gmra.mxu0 %v1642
        %v10026 = vpop.f32.mrf.mxu0
        %v10027 = vadd.f32 %v9938, %v10026
        %v10028 = vpop.f32.mrf.mxu0
        %v10029 = vadd.f32 %v9940, %v10028
        %10030 = vmatmul.bf16.gmra.mxu0 %v1650
        %v10031 = vpop.f32.mrf.mxu0
        %v10032 = vadd.f32 %v9943, %v10031
        %v10033 = vpop.f32.mrf.mxu0
        %v10034 = vadd.f32 %v9945, %v10033
        %10035 = vmatmul.bf16.gmra.mxu0 %v1658
        %v10036 = vpop.f32.mrf.mxu0
        %v10037 = vadd.f32 %v9948, %v10036
        %v10038 = vpop.f32.mrf.mxu0
        %v10039 = vadd.f32 %v9950, %v10038
        %10040 = vmatmul.bf16.gmra.mxu0 %v1666
        %v10041 = vpop.f32.mrf.mxu0
        %v10042 = vadd.f32 %v9953, %v10041
        %v10043 = vpop.f32.mrf.mxu0
        %v10044 = vadd.f32 %v9955, %v10043
        %10045 = vmatmul.bf16.gmra.mxu0 %v1674
        %v10046 = vpop.f32.mrf.mxu0
        %v10047 = vadd.f32 %v9958, %v10046
        %v10048 = vpop.f32.mrf.mxu0
        %v10049 = vadd.f32 %v9960, %v10048
        %10050 = vmatmul.bf16.gmra.mxu0 %v1682
        %v10051 = vpop.f32.mrf.mxu0
        %v10052 = vadd.f32 %v9963, %v10051
        %v10053 = vpop.f32.mrf.mxu0
        %v10054 = vadd.f32 %v9965, %v10053
        %10055 = vmatmul.bf16.gmra.mxu0 %v1690
        %v10056 = vpop.f32.mrf.mxu0
        %v10057 = vadd.f32 %v9968, %v10056
        %v10058 = vpop.f32.mrf.mxu0
        %v10059 = vadd.f32 %v9970, %v10058
        %10060 = vmatmul.bf16.gmra.mxu0 %v1698
        %v10061 = vpop.f32.mrf.mxu0
        %v10062 = vadd.f32 %v9973, %v10061
        %v10063 = vpop.f32.mrf.mxu0
        %v10064 = vadd.f32 %v9975, %v10063
        %10065 = vmatmul.bf16.gmra.mxu0 %v1706
        %v10066 = vpop.f32.mrf.mxu0
        %v10067 = vadd.f32 %v9978, %v10066
        %v10068 = vpop.f32.mrf.mxu0
        %v10069 = vadd.f32 %v9980, %v10068
        %10070 = vmatmul.bf16.gmra.mxu0 %v1714
        %v10071 = vpop.f32.mrf.mxu0
        %v10072 = vadd.f32 %v9983, %v10071
        %v10073 = vpop.f32.mrf.mxu0
        %v10074 = vadd.f32 %v9985, %v10073
        %10075 = vmatmul.bf16.gmra.mxu0 %v1722
        %v10076 = vpop.f32.mrf.mxu0
        %v10077 = vadd.f32 %v9988, %v10076
        %v10078 = vpop.f32.mrf.mxu0
        %v10079 = vadd.f32 %v9990, %v10078
        %10080 = vmatmul.bf16.gmra.mxu0 %v1730
        %v10081 = vpop.f32.mrf.mxu0
        %v10082 = vadd.f32 %v9993, %v10081
        %v10083 = vpop.f32.mrf.mxu0
        %v10084 = vadd.f32 %v9995, %v10083
        %10085 = vmatmul.bf16.gmra.mxu0 %v1738
        %v10086 = vpop.f32.mrf.mxu0
        %v10087 = vadd.f32 %v9998, %v10086
        %v10088 = vpop.f32.mrf.mxu0
        %v10089 = vadd.f32 %v10000, %v10088
        %10090 = vmatmul.bf16.gmra.mxu0 %v1746
        %v10091 = vpop.f32.mrf.mxu0
        %v10092 = vadd.f32 %v10003, %v10091
        %v10093 = vpop.f32.mrf.mxu0
        %v10094 = vadd.f32 %v10005, %v10093
        %10095 = vmatmul.bf16.gmra.mxu0 %v1754
        %v10096 = vpop.f32.mrf.mxu0
        %v10097 = vadd.f32 %v10008, %v10096
        %v10098 = vpop.f32.mrf.mxu0
        %v10099 = vadd.f32 %v10010, %v10098
        %10100 = vdwg.mxu0
        %10101 = vmatpush.bf16.msra.mxu0 %v4081
        %10102 = vmatpush.bf16.msra.mxu0 %v4073
        %10103 = vmatpush.bf16.msra.mxu0 %v4065
        %10104 = vmatpush.bf16.msra.mxu0 %v4057
        %10105 = vmatpush.bf16.msra.mxu0 %v4049
        %10106 = vmatpush.bf16.msra.mxu0 %v4041
        %10107 = vmatpush.bf16.msra.mxu0 %v4033
        %10108 = vmatpush.bf16.msra.mxu0 %v4025
        %10109 = vmatmul.bf16.gmra.mxu0 %v1635
        %v10110 = vpop.f32.mrf.mxu0
        %v10111 = vadd.f32 %v10022, %v10110
        %v10112 = vpop.f32.mrf.mxu0
        %v10113 = vadd.f32 %v10024, %v10112
        %10114 = vmatmul.bf16.gmra.mxu0 %v1643
        %v10115 = vpop.f32.mrf.mxu0
        %v10116 = vadd.f32 %v10027, %v10115
        %v10117 = vpop.f32.mrf.mxu0
        %v10118 = vadd.f32 %v10029, %v10117
        %10119 = vmatmul.bf16.gmra.mxu0 %v1651
        %v10120 = vpop.f32.mrf.mxu0
        %v10121 = vadd.f32 %v10032, %v10120
        %v10122 = vpop.f32.mrf.mxu0
        %v10123 = vadd.f32 %v10034, %v10122
        %10124 = vmatmul.bf16.gmra.mxu0 %v1659
        %v10125 = vpop.f32.mrf.mxu0
        %v10126 = vadd.f32 %v10037, %v10125
        %v10127 = vpop.f32.mrf.mxu0
        %v10128 = vadd.f32 %v10039, %v10127
        %10129 = vmatmul.bf16.gmra.mxu0 %v1667
        %v10130 = vpop.f32.mrf.mxu0
        %v10131 = vadd.f32 %v10042, %v10130
        %v10132 = vpop.f32.mrf.mxu0
        %v10133 = vadd.f32 %v10044, %v10132
        %10134 = vmatmul.bf16.gmra.mxu0 %v1675
        %v10135 = vpop.f32.mrf.mxu0
        %v10136 = vadd.f32 %v10047, %v10135
        %v10137 = vpop.f32.mrf.mxu0
        %v10138 = vadd.f32 %v10049, %v10137
        %10139 = vmatmul.bf16.gmra.mxu0 %v1683
        %v10140 = vpop.f32.mrf.mxu0
        %v10141 = vadd.f32 %v10052, %v10140
        %v10142 = vpop.f32.mrf.mxu0
        %v10143 = vadd.f32 %v10054, %v10142
        %10144 = vmatmul.bf16.gmra.mxu0 %v1691
        %v10145 = vpop.f32.mrf.mxu0
        %v10146 = vadd.f32 %v10057, %v10145
        %v10147 = vpop.f32.mrf.mxu0
        %v10148 = vadd.f32 %v10059, %v10147
        %10149 = vmatmul.bf16.gmra.mxu0 %v1699
        %v10150 = vpop.f32.mrf.mxu0
        %v10151 = vadd.f32 %v10062, %v10150
        %v10152 = vpop.f32.mrf.mxu0
        %v10153 = vadd.f32 %v10064, %v10152
        %10154 = vmatmul.bf16.gmra.mxu0 %v1707
        %v10155 = vpop.f32.mrf.mxu0
        %v10156 = vadd.f32 %v10067, %v10155
        %v10157 = vpop.f32.mrf.mxu0
        %v10158 = vadd.f32 %v10069, %v10157
        %10159 = vmatmul.bf16.gmra.mxu0 %v1715
        %v10160 = vpop.f32.mrf.mxu0
        %v10161 = vadd.f32 %v10072, %v10160
        %v10162 = vpop.f32.mrf.mxu0
        %v10163 = vadd.f32 %v10074, %v10162
        %10164 = vmatmul.bf16.gmra.mxu0 %v1723
        %v10165 = vpop.f32.mrf.mxu0
        %v10166 = vadd.f32 %v10077, %v10165
        %v10167 = vpop.f32.mrf.mxu0
        %v10168 = vadd.f32 %v10079, %v10167
        %10169 = vmatmul.bf16.gmra.mxu0 %v1731
        %v10170 = vpop.f32.mrf.mxu0
        %v10171 = vadd.f32 %v10082, %v10170
        %v10172 = vpop.f32.mrf.mxu0
        %v10173 = vadd.f32 %v10084, %v10172
        %10174 = vmatmul.bf16.gmra.mxu0 %v1739
        %v10175 = vpop.f32.mrf.mxu0
        %v10176 = vadd.f32 %v10087, %v10175
        %v10177 = vpop.f32.mrf.mxu0
        %v10178 = vadd.f32 %v10089, %v10177
        %10179 = vmatmul.bf16.gmra.mxu0 %v1747
        %v10180 = vpop.f32.mrf.mxu0
        %v10181 = vadd.f32 %v10092, %v10180
        %v10182 = vpop.f32.mrf.mxu0
        %v10183 = vadd.f32 %v10094, %v10182
        %10184 = vmatmul.bf16.gmra.mxu0 %v1755
        %v10185 = vpop.f32.mrf.mxu0
        %v10186 = vadd.f32 %v10097, %v10185
        %v10187 = vpop.f32.mrf.mxu0
        %v10188 = vadd.f32 %v10099, %v10187
        %10189 = vdwg.mxu0
        %10190 = vmatpush.bf16.msra.mxu0 %v4145
        %10191 = vmatpush.bf16.msra.mxu0 %v4137
        %10192 = vmatpush.bf16.msra.mxu0 %v4129
        %10193 = vmatpush.bf16.msra.mxu0 %v4121
        %10194 = vmatpush.bf16.msra.mxu0 %v4113
        %10195 = vmatpush.bf16.msra.mxu0 %v4105
        %10196 = vmatpush.bf16.msra.mxu0 %v4097
        %10197 = vmatpush.bf16.msra.mxu0 %v4089
        %10198 = vmatmul.bf16.gmra.mxu0 %v1636
        %v10199 = vpop.f32.mrf.mxu0
        %v10200 = vadd.f32 %v10111, %v10199
        %v10201 = vpop.f32.mrf.mxu0
        %v10202 = vadd.f32 %v10113, %v10201
        %10203 = vmatmul.bf16.gmra.mxu0 %v1644
        %v10204 = vpop.f32.mrf.mxu0
        %v10205 = vadd.f32 %v10116, %v10204
        %v10206 = vpop.f32.mrf.mxu0
        %v10207 = vadd.f32 %v10118, %v10206
        %10208 = vmatmul.bf16.gmra.mxu0 %v1652
        %v10209 = vpop.f32.mrf.mxu0
        %v10210 = vadd.f32 %v10121, %v10209
        %v10211 = vpop.f32.mrf.mxu0
        %v10212 = vadd.f32 %v10123, %v10211
        %10213 = vmatmul.bf16.gmra.mxu0 %v1660
        %v10214 = vpop.f32.mrf.mxu0
        %v10215 = vadd.f32 %v10126, %v10214
        %v10216 = vpop.f32.mrf.mxu0
        %v10217 = vadd.f32 %v10128, %v10216
        %10218 = vmatmul.bf16.gmra.mxu0 %v1668
        %v10219 = vpop.f32.mrf.mxu0
        %v10220 = vadd.f32 %v10131, %v10219
        %v10221 = vpop.f32.mrf.mxu0
        %v10222 = vadd.f32 %v10133, %v10221
        %10223 = vmatmul.bf16.gmra.mxu0 %v1676
        %v10224 = vpop.f32.mrf.mxu0
        %v10225 = vadd.f32 %v10136, %v10224
        %v10226 = vpop.f32.mrf.mxu0
        %v10227 = vadd.f32 %v10138, %v10226
        %10228 = vmatmul.bf16.gmra.mxu0 %v1684
        %v10229 = vpop.f32.mrf.mxu0
        %v10230 = vadd.f32 %v10141, %v10229
        %v10231 = vpop.f32.mrf.mxu0
        %v10232 = vadd.f32 %v10143, %v10231
        %10233 = vmatmul.bf16.gmra.mxu0 %v1692
        %v10234 = vpop.f32.mrf.mxu0
        %v10235 = vadd.f32 %v10146, %v10234
        %v10236 = vpop.f32.mrf.mxu0
        %v10237 = vadd.f32 %v10148, %v10236
        %10238 = vmatmul.bf16.gmra.mxu0 %v1700
        %v10239 = vpop.f32.mrf.mxu0
        %v10240 = vadd.f32 %v10151, %v10239
        %v10241 = vpop.f32.mrf.mxu0
        %v10242 = vadd.f32 %v10153, %v10241
        %10243 = vmatmul.bf16.gmra.mxu0 %v1708
        %v10244 = vpop.f32.mrf.mxu0
        %v10245 = vadd.f32 %v10156, %v10244
        %v10246 = vpop.f32.mrf.mxu0
        %v10247 = vadd.f32 %v10158, %v10246
        %10248 = vmatmul.bf16.gmra.mxu0 %v1716
        %v10249 = vpop.f32.mrf.mxu0
        %v10250 = vadd.f32 %v10161, %v10249
        %v10251 = vpop.f32.mrf.mxu0
        %v10252 = vadd.f32 %v10163, %v10251
        %10253 = vmatmul.bf16.gmra.mxu0 %v1724
        %v10254 = vpop.f32.mrf.mxu0
        %v10255 = vadd.f32 %v10166, %v10254
        %v10256 = vpop.f32.mrf.mxu0
        %v10257 = vadd.f32 %v10168, %v10256
        %10258 = vmatmul.bf16.gmra.mxu0 %v1732
        %v10259 = vpop.f32.mrf.mxu0
        %v10260 = vadd.f32 %v10171, %v10259
        %v10261 = vpop.f32.mrf.mxu0
        %v10262 = vadd.f32 %v10173, %v10261
        %10263 = vmatmul.bf16.gmra.mxu0 %v1740
        %v10264 = vpop.f32.mrf.mxu0
        %v10265 = vadd.f32 %v10176, %v10264
        %v10266 = vpop.f32.mrf.mxu0
        %v10267 = vadd.f32 %v10178, %v10266
        %10268 = vmatmul.bf16.gmra.mxu0 %v1748
        %v10269 = vpop.f32.mrf.mxu0
        %v10270 = vadd.f32 %v10181, %v10269
        %v10271 = vpop.f32.mrf.mxu0
        %v10272 = vadd.f32 %v10183, %v10271
        %10273 = vmatmul.bf16.gmra.mxu0 %v1756
        %v10274 = vpop.f32.mrf.mxu0
        %v10275 = vadd.f32 %v10186, %v10274
        %v10276 = vpop.f32.mrf.mxu0
        %v10277 = vadd.f32 %v10188, %v10276
        %10278 = vdwg.mxu0
        %10279 = vmatpush.bf16.msra.mxu0 %v4209
        %10280 = vmatpush.bf16.msra.mxu0 %v4201
        %10281 = vmatpush.bf16.msra.mxu0 %v4193
        %10282 = vmatpush.bf16.msra.mxu0 %v4185
        %10283 = vmatpush.bf16.msra.mxu0 %v4177
        %10284 = vmatpush.bf16.msra.mxu0 %v4169
        %10285 = vmatpush.bf16.msra.mxu0 %v4161
        %10286 = vmatpush.bf16.msra.mxu0 %v4153
        %10287 = vmatmul.bf16.gmra.mxu0 %v1637
        %v10288 = vpop.f32.mrf.mxu0
        %v10289 = vadd.f32 %v10200, %v10288
        %v10290 = vpop.f32.mrf.mxu0
        %v10291 = vadd.f32 %v10202, %v10290
        %10292 = vmatmul.bf16.gmra.mxu0 %v1645
        %v10293 = vpop.f32.mrf.mxu0
        %v10294 = vadd.f32 %v10205, %v10293
        %v10295 = vpop.f32.mrf.mxu0
        %v10296 = vadd.f32 %v10207, %v10295
        %10297 = vmatmul.bf16.gmra.mxu0 %v1653
        %v10298 = vpop.f32.mrf.mxu0
        %v10299 = vadd.f32 %v10210, %v10298
        %v10300 = vpop.f32.mrf.mxu0
        %v10301 = vadd.f32 %v10212, %v10300
        %10302 = vmatmul.bf16.gmra.mxu0 %v1661
        %v10303 = vpop.f32.mrf.mxu0
        %v10304 = vadd.f32 %v10215, %v10303
        %v10305 = vpop.f32.mrf.mxu0
        %v10306 = vadd.f32 %v10217, %v10305
        %10307 = vmatmul.bf16.gmra.mxu0 %v1669
        %v10308 = vpop.f32.mrf.mxu0
        %v10309 = vadd.f32 %v10220, %v10308
        %v10310 = vpop.f32.mrf.mxu0
        %v10311 = vadd.f32 %v10222, %v10310
        %10312 = vmatmul.bf16.gmra.mxu0 %v1677
        %v10313 = vpop.f32.mrf.mxu0
        %v10314 = vadd.f32 %v10225, %v10313
        %v10315 = vpop.f32.mrf.mxu0
        %v10316 = vadd.f32 %v10227, %v10315
        %10317 = vmatmul.bf16.gmra.mxu0 %v1685
        %v10318 = vpop.f32.mrf.mxu0
        %v10319 = vadd.f32 %v10230, %v10318
        %v10320 = vpop.f32.mrf.mxu0
        %v10321 = vadd.f32 %v10232, %v10320
        %10322 = vmatmul.bf16.gmra.mxu0 %v1693
        %v10323 = vpop.f32.mrf.mxu0
        %v10324 = vadd.f32 %v10235, %v10323
        %v10325 = vpop.f32.mrf.mxu0
        %v10326 = vadd.f32 %v10237, %v10325
        %10327 = vmatmul.bf16.gmra.mxu0 %v1701
        %v10328 = vpop.f32.mrf.mxu0
        %v10329 = vadd.f32 %v10240, %v10328
        %v10330 = vpop.f32.mrf.mxu0
        %v10331 = vadd.f32 %v10242, %v10330
        %10332 = vmatmul.bf16.gmra.mxu0 %v1709
        %v10333 = vpop.f32.mrf.mxu0
        %v10334 = vadd.f32 %v10245, %v10333
        %v10335 = vpop.f32.mrf.mxu0
        %v10336 = vadd.f32 %v10247, %v10335
        %10337 = vmatmul.bf16.gmra.mxu0 %v1717
        %v10338 = vpop.f32.mrf.mxu0
        %v10339 = vadd.f32 %v10250, %v10338
        %v10340 = vpop.f32.mrf.mxu0
        %v10341 = vadd.f32 %v10252, %v10340
        %10342 = vmatmul.bf16.gmra.mxu0 %v1725
        %v10343 = vpop.f32.mrf.mxu0
        %v10344 = vadd.f32 %v10255, %v10343
        %v10345 = vpop.f32.mrf.mxu0
        %v10346 = vadd.f32 %v10257, %v10345
        %10347 = vmatmul.bf16.gmra.mxu0 %v1733
        %v10348 = vpop.f32.mrf.mxu0
        %v10349 = vadd.f32 %v10260, %v10348
        %v10350 = vpop.f32.mrf.mxu0
        %v10351 = vadd.f32 %v10262, %v10350
        %10352 = vmatmul.bf16.gmra.mxu0 %v1741
        %v10353 = vpop.f32.mrf.mxu0
        %v10354 = vadd.f32 %v10265, %v10353
        %v10355 = vpop.f32.mrf.mxu0
        %v10356 = vadd.f32 %v10267, %v10355
        %10357 = vmatmul.bf16.gmra.mxu0 %v1749
        %v10358 = vpop.f32.mrf.mxu0
        %v10359 = vadd.f32 %v10270, %v10358
        %v10360 = vpop.f32.mrf.mxu0
        %v10361 = vadd.f32 %v10272, %v10360
        %10362 = vmatmul.bf16.gmra.mxu0 %v1757
        %v10363 = vpop.f32.mrf.mxu0
        %v10364 = vadd.f32 %v10275, %v10363
        %v10365 = vpop.f32.mrf.mxu0
        %v10366 = vadd.f32 %v10277, %v10365
        %10367 = vdwg.mxu0
        %10368 = vmatpush.bf16.msra.mxu0 %v4273
        %10369 = vmatpush.bf16.msra.mxu0 %v4265
        %10370 = vmatpush.bf16.msra.mxu0 %v4257
        %10371 = vmatpush.bf16.msra.mxu0 %v4249
        %10372 = vmatpush.bf16.msra.mxu0 %v4241
        %10373 = vmatpush.bf16.msra.mxu0 %v4233
        %10374 = vmatpush.bf16.msra.mxu0 %v4225
        %10375 = vmatpush.bf16.msra.mxu0 %v4217
        %10376 = vmatmul.bf16.gmra.mxu0 %v1638
        %v10377 = vpop.f32.mrf.mxu0
        %v10378 = vadd.f32 %v10289, %v10377
        %v10379 = vpop.f32.mrf.mxu0
        %v10380 = vadd.f32 %v10291, %v10379
        %10381 = vmatmul.bf16.gmra.mxu0 %v1646
        %v10382 = vpop.f32.mrf.mxu0
        %v10383 = vadd.f32 %v10294, %v10382
        %v10384 = vpop.f32.mrf.mxu0
        %v10385 = vadd.f32 %v10296, %v10384
        %10386 = vmatmul.bf16.gmra.mxu0 %v1654
        %v10387 = vpop.f32.mrf.mxu0
        %v10388 = vadd.f32 %v10299, %v10387
        %v10389 = vpop.f32.mrf.mxu0
        %v10390 = vadd.f32 %v10301, %v10389
        %10391 = vmatmul.bf16.gmra.mxu0 %v1662
        %v10392 = vpop.f32.mrf.mxu0
        %v10393 = vadd.f32 %v10304, %v10392
        %v10394 = vpop.f32.mrf.mxu0
        %v10395 = vadd.f32 %v10306, %v10394
        %10396 = vmatmul.bf16.gmra.mxu0 %v1670
        %v10397 = vpop.f32.mrf.mxu0
        %v10398 = vadd.f32 %v10309, %v10397
        %v10399 = vpop.f32.mrf.mxu0
        %v10400 = vadd.f32 %v10311, %v10399
        %10401 = vmatmul.bf16.gmra.mxu0 %v1678
        %v10402 = vpop.f32.mrf.mxu0
        %v10403 = vadd.f32 %v10314, %v10402
        %v10404 = vpop.f32.mrf.mxu0
        %v10405 = vadd.f32 %v10316, %v10404
        %10406 = vmatmul.bf16.gmra.mxu0 %v1686
        %v10407 = vpop.f32.mrf.mxu0
        %v10408 = vadd.f32 %v10319, %v10407
        %v10409 = vpop.f32.mrf.mxu0
        %v10410 = vadd.f32 %v10321, %v10409
        %10411 = vmatmul.bf16.gmra.mxu0 %v1694
        %v10412 = vpop.f32.mrf.mxu0
        %v10413 = vadd.f32 %v10324, %v10412
        %v10414 = vpop.f32.mrf.mxu0
        %v10415 = vadd.f32 %v10326, %v10414
        %10416 = vmatmul.bf16.gmra.mxu0 %v1702
        %v10417 = vpop.f32.mrf.mxu0
        %v10418 = vadd.f32 %v10329, %v10417
        %v10419 = vpop.f32.mrf.mxu0
        %v10420 = vadd.f32 %v10331, %v10419
        %10421 = vmatmul.bf16.gmra.mxu0 %v1710
        %v10422 = vpop.f32.mrf.mxu0
        %v10423 = vadd.f32 %v10334, %v10422
        %v10424 = vpop.f32.mrf.mxu0
        %v10425 = vadd.f32 %v10336, %v10424
        %10426 = vmatmul.bf16.gmra.mxu0 %v1718
        %v10427 = vpop.f32.mrf.mxu0
        %v10428 = vadd.f32 %v10339, %v10427
        %v10429 = vpop.f32.mrf.mxu0
        %v10430 = vadd.f32 %v10341, %v10429
        %10431 = vmatmul.bf16.gmra.mxu0 %v1726
        %v10432 = vpop.f32.mrf.mxu0
        %v10433 = vadd.f32 %v10344, %v10432
        %v10434 = vpop.f32.mrf.mxu0
        %v10435 = vadd.f32 %v10346, %v10434
        %10436 = vmatmul.bf16.gmra.mxu0 %v1734
        %v10437 = vpop.f32.mrf.mxu0
        %v10438 = vadd.f32 %v10349, %v10437
        %v10439 = vpop.f32.mrf.mxu0
        %v10440 = vadd.f32 %v10351, %v10439
        %10441 = vmatmul.bf16.gmra.mxu0 %v1742
        %v10442 = vpop.f32.mrf.mxu0
        %v10443 = vadd.f32 %v10354, %v10442
        %v10444 = vpop.f32.mrf.mxu0
        %v10445 = vadd.f32 %v10356, %v10444
        %10446 = vmatmul.bf16.gmra.mxu0 %v1750
        %v10447 = vpop.f32.mrf.mxu0
        %v10448 = vadd.f32 %v10359, %v10447
        %v10449 = vpop.f32.mrf.mxu0
        %v10450 = vadd.f32 %v10361, %v10449
        %10451 = vmatmul.bf16.gmra.mxu0 %v1758
        %v10452 = vpop.f32.mrf.mxu0
        %v10453 = vadd.f32 %v10364, %v10452
        %v10454 = vpop.f32.mrf.mxu0
        %v10455 = vadd.f32 %v10366, %v10454
        %10456 = vdwg.mxu0
        %10457 = vmatpush.bf16.msra.mxu0 %v4337
        %10458 = vmatpush.bf16.msra.mxu0 %v4329
        %10459 = vmatpush.bf16.msra.mxu0 %v4321
        %10460 = vmatpush.bf16.msra.mxu0 %v4313
        %10461 = vmatpush.bf16.msra.mxu0 %v4305
        %10462 = vmatpush.bf16.msra.mxu0 %v4297
        %10463 = vmatpush.bf16.msra.mxu0 %v4289
        %10464 = vmatpush.bf16.msra.mxu0 %v4281
        %10465 = vmatmul.bf16.gmra.mxu0 %v1639
        %v10466 = vpop.f32.mrf.mxu0
        %v10467 = vadd.f32 %v10378, %v10466
        %v10468 = vpop.f32.mrf.mxu0
        %v10469 = vadd.f32 %v10380, %v10468
        %10470 = vmatmul.bf16.gmra.mxu0 %v1647
        %v10471 = vpop.f32.mrf.mxu0
        %v10472 = vadd.f32 %v10383, %v10471
        %v10473 = vpop.f32.mrf.mxu0
        %v10474 = vadd.f32 %v10385, %v10473
        %10475 = vmatmul.bf16.gmra.mxu0 %v1655
        %v10476 = vpop.f32.mrf.mxu0
        %v10477 = vadd.f32 %v10388, %v10476
        %v10478 = vpop.f32.mrf.mxu0
        %v10479 = vadd.f32 %v10390, %v10478
        %10480 = vmatmul.bf16.gmra.mxu0 %v1663
        %v10481 = vpop.f32.mrf.mxu0
        %v10482 = vadd.f32 %v10393, %v10481
        %v10483 = vpop.f32.mrf.mxu0
        %v10484 = vadd.f32 %v10395, %v10483
        %10485 = vmatmul.bf16.gmra.mxu0 %v1671
        %v10486 = vpop.f32.mrf.mxu0
        %v10487 = vadd.f32 %v10398, %v10486
        %v10488 = vpop.f32.mrf.mxu0
        %v10489 = vadd.f32 %v10400, %v10488
        %10490 = vmatmul.bf16.gmra.mxu0 %v1679
        %v10491 = vpop.f32.mrf.mxu0
        %v10492 = vadd.f32 %v10403, %v10491
        %v10493 = vpop.f32.mrf.mxu0
        %v10494 = vadd.f32 %v10405, %v10493
        %10495 = vmatmul.bf16.gmra.mxu0 %v1687
        %v10496 = vpop.f32.mrf.mxu0
        %v10497 = vadd.f32 %v10408, %v10496
        %v10498 = vpop.f32.mrf.mxu0
        %v10499 = vadd.f32 %v10410, %v10498
        %10500 = vmatmul.bf16.gmra.mxu0 %v1695
        %v10501 = vpop.f32.mrf.mxu0
        %v10502 = vadd.f32 %v10413, %v10501
        %v10503 = vpop.f32.mrf.mxu0
        %v10504 = vadd.f32 %v10415, %v10503
        %10505 = vmatmul.bf16.gmra.mxu0 %v1703
        %v10506 = vpop.f32.mrf.mxu0
        %v10507 = vadd.f32 %v10418, %v10506
        %v10508 = vpop.f32.mrf.mxu0
        %v10509 = vadd.f32 %v10420, %v10508
        %10510 = vmatmul.bf16.gmra.mxu0 %v1711
        %v10511 = vpop.f32.mrf.mxu0
        %v10512 = vadd.f32 %v10423, %v10511
        %v10513 = vpop.f32.mrf.mxu0
        %v10514 = vadd.f32 %v10425, %v10513
        %10515 = vmatmul.bf16.gmra.mxu0 %v1719
        %v10516 = vpop.f32.mrf.mxu0
        %v10517 = vadd.f32 %v10428, %v10516
        %v10518 = vpop.f32.mrf.mxu0
        %v10519 = vadd.f32 %v10430, %v10518
        %10520 = vmatmul.bf16.gmra.mxu0 %v1727
        %v10521 = vpop.f32.mrf.mxu0
        %v10522 = vadd.f32 %v10433, %v10521
        %v10523 = vpop.f32.mrf.mxu0
        %v10524 = vadd.f32 %v10435, %v10523
        %10525 = vmatmul.bf16.gmra.mxu0 %v1735
        %v10526 = vpop.f32.mrf.mxu0
        %v10527 = vadd.f32 %v10438, %v10526
        %v10528 = vpop.f32.mrf.mxu0
        %v10529 = vadd.f32 %v10440, %v10528
        %10530 = vmatmul.bf16.gmra.mxu0 %v1743
        %v10531 = vpop.f32.mrf.mxu0
        %v10532 = vadd.f32 %v10443, %v10531
        %v10533 = vpop.f32.mrf.mxu0
        %v10534 = vadd.f32 %v10445, %v10533
        %10535 = vmatmul.bf16.gmra.mxu0 %v1751
        %v10536 = vpop.f32.mrf.mxu0
        %v10537 = vadd.f32 %v10448, %v10536
        %v10538 = vpop.f32.mrf.mxu0
        %v10539 = vadd.f32 %v10450, %v10538
        %10540 = vmatmul.bf16.gmra.mxu0 %v1759
        %v10541 = vpop.f32.mrf.mxu0
        %v10542 = vadd.f32 %v10453, %v10541
        %v10543 = vpop.f32.mrf.mxu0
        %v10544 = vadd.f32 %v10455, %v10543
        %10545 = vdwg.mxu0
        %v10546 = vmax.f32 %v5483, 0.0
        %v10547 = vmax.f32 %v6195, 0.0
        %v10548 = vmax.f32 %v6907, 0.0
        %v10549 = vmax.f32 %v7619, 0.0
        %v10550 = vmax.f32 %v8331, 0.0
        %v10551 = vmax.f32 %v9043, 0.0
        %v10552 = vmax.f32 %v9755, 0.0
        %v10553 = vmax.f32 %v10467, 0.0
        %v10554 = vmax.f32 %v5485, 0.0
        %v10555 = vmax.f32 %v6197, 0.0
        %v10556 = vmax.f32 %v6909, 0.0
        %v10557 = vmax.f32 %v7621, 0.0
        %v10558 = vmax.f32 %v8333, 0.0
        %v10559 = vmax.f32 %v9045, 0.0
        %v10560 = vmax.f32 %v9757, 0.0
        %v10561 = vmax.f32 %v10469, 0.0
        %v10562 = vmax.f32 %v5488, 0.0
        %v10563 = vmax.f32 %v6200, 0.0
        %v10564 = vmax.f32 %v6912, 0.0
        %v10565 = vmax.f32 %v7624, 0.0
        %v10566 = vmax.f32 %v8336, 0.0
        %v10567 = vmax.f32 %v9048, 0.0
        %v10568 = vmax.f32 %v9760, 0.0
        %v10569 = vmax.f32 %v10472, 0.0
        %v10570 = vmax.f32 %v5490, 0.0
        %v10571 = vmax.f32 %v6202, 0.0
        %v10572 = vmax.f32 %v6914, 0.0
        %v10573 = vmax.f32 %v7626, 0.0
        %v10574 = vmax.f32 %v8338, 0.0
        %v10575 = vmax.f32 %v9050, 0.0
        %v10576 = vmax.f32 %v9762, 0.0
        %v10577 = vmax.f32 %v10474, 0.0
        %v10578 = vmax.f32 %v5493, 0.0
        %v10579 = vmax.f32 %v6205, 0.0
        %v10580 = vmax.f32 %v6917, 0.0
        %v10581 = vmax.f32 %v7629, 0.0
        %v10582 = vmax.f32 %v8341, 0.0
        %v10583 = vmax.f32 %v9053, 0.0
        %v10584 = vmax.f32 %v9765, 0.0
        %v10585 = vmax.f32 %v10477, 0.0
        %v10586 = vmax.f32 %v5495, 0.0
        %v10587 = vmax.f32 %v6207, 0.0
        %v10588 = vmax.f32 %v6919, 0.0
        %v10589 = vmax.f32 %v7631, 0.0
        %v10590 = vmax.f32 %v8343, 0.0
        %v10591 = vmax.f32 %v9055, 0.0
        %v10592 = vmax.f32 %v9767, 0.0
        %v10593 = vmax.f32 %v10479, 0.0
        %v10594 = vmax.f32 %v5498, 0.0
        %v10595 = vmax.f32 %v6210, 0.0
        %v10596 = vmax.f32 %v6922, 0.0
        %v10597 = vmax.f32 %v7634, 0.0
        %v10598 = vmax.f32 %v8346, 0.0
        %v10599 = vmax.f32 %v9058, 0.0
        %v10600 = vmax.f32 %v9770, 0.0
        %v10601 = vmax.f32 %v10482, 0.0
        %v10602 = vmax.f32 %v5500, 0.0
        %v10603 = vmax.f32 %v6212, 0.0
        %v10604 = vmax.f32 %v6924, 0.0
        %v10605 = vmax.f32 %v7636, 0.0
        %v10606 = vmax.f32 %v8348, 0.0
        %v10607 = vmax.f32 %v9060, 0.0
        %v10608 = vmax.f32 %v9772, 0.0
        %v10609 = vmax.f32 %v10484, 0.0
        %v10610 = vmax.f32 %v5503, 0.0
        %v10611 = vmax.f32 %v6215, 0.0
        %v10612 = vmax.f32 %v6927, 0.0
        %v10613 = vmax.f32 %v7639, 0.0
        %v10614 = vmax.f32 %v8351, 0.0
        %v10615 = vmax.f32 %v9063, 0.0
        %v10616 = vmax.f32 %v9775, 0.0
        %v10617 = vmax.f32 %v10487, 0.0
        %v10618 = vmax.f32 %v5505, 0.0
        %v10619 = vmax.f32 %v6217, 0.0
        %v10620 = vmax.f32 %v6929, 0.0
        %v10621 = vmax.f32 %v7641, 0.0
        %v10622 = vmax.f32 %v8353, 0.0
        %v10623 = vmax.f32 %v9065, 0.0
        %v10624 = vmax.f32 %v9777, 0.0
        %v10625 = vmax.f32 %v10489, 0.0
        %v10626 = vmax.f32 %v5508, 0.0
        %v10627 = vmax.f32 %v6220, 0.0
        %v10628 = vmax.f32 %v6932, 0.0
        %v10629 = vmax.f32 %v7644, 0.0
        %v10630 = vmax.f32 %v8356, 0.0
        %v10631 = vmax.f32 %v9068, 0.0
        %v10632 = vmax.f32 %v9780, 0.0
        %v10633 = vmax.f32 %v10492, 0.0
        %v10634 = vmax.f32 %v5510, 0.0
        %v10635 = vmax.f32 %v6222, 0.0
        %v10636 = vmax.f32 %v6934, 0.0
        %v10637 = vmax.f32 %v7646, 0.0
        %v10638 = vmax.f32 %v8358, 0.0
        %v10639 = vmax.f32 %v9070, 0.0
        %v10640 = vmax.f32 %v9782, 0.0
        %v10641 = vmax.f32 %v10494, 0.0
        %v10642 = vmax.f32 %v5513, 0.0
        %v10643 = vmax.f32 %v6225, 0.0
        %v10644 = vmax.f32 %v6937, 0.0
        %v10645 = vmax.f32 %v7649, 0.0
        %v10646 = vmax.f32 %v8361, 0.0
        %v10647 = vmax.f32 %v9073, 0.0
        %v10648 = vmax.f32 %v9785, 0.0
        %v10649 = vmax.f32 %v10497, 0.0
        %v10650 = vmax.f32 %v5515, 0.0
        %v10651 = vmax.f32 %v6227, 0.0
        %v10652 = vmax.f32 %v6939, 0.0
        %v10653 = vmax.f32 %v7651, 0.0
        %v10654 = vmax.f32 %v8363, 0.0
        %v10655 = vmax.f32 %v9075, 0.0
        %v10656 = vmax.f32 %v9787, 0.0
        %v10657 = vmax.f32 %v10499, 0.0
        %v10658 = vmax.f32 %v5518, 0.0
        %v10659 = vmax.f32 %v6230, 0.0
        %v10660 = vmax.f32 %v6942, 0.0
        %v10661 = vmax.f32 %v7654, 0.0
        %v10662 = vmax.f32 %v8366, 0.0
        %v10663 = vmax.f32 %v9078, 0.0
        %v10664 = vmax.f32 %v9790, 0.0
        %v10665 = vmax.f32 %v10502, 0.0
        %v10666 = vmax.f32 %v5520, 0.0
        %v10667 = vmax.f32 %v6232, 0.0
        %v10668 = vmax.f32 %v6944, 0.0
        %v10669 = vmax.f32 %v7656, 0.0
        %v10670 = vmax.f32 %v8368, 0.0
        %v10671 = vmax.f32 %v9080, 0.0
        %v10672 = vmax.f32 %v9792, 0.0
        %v10673 = vmax.f32 %v10504, 0.0
        %v10674 = vmax.f32 %v5523, 0.0
        %v10675 = vmax.f32 %v6235, 0.0
        %v10676 = vmax.f32 %v6947, 0.0
        %v10677 = vmax.f32 %v7659, 0.0
        %v10678 = vmax.f32 %v8371, 0.0
        %v10679 = vmax.f32 %v9083, 0.0
        %v10680 = vmax.f32 %v9795, 0.0
        %v10681 = vmax.f32 %v10507, 0.0
        %v10682 = vmax.f32 %v5525, 0.0
        %v10683 = vmax.f32 %v6237, 0.0
        %v10684 = vmax.f32 %v6949, 0.0
        %v10685 = vmax.f32 %v7661, 0.0
        %v10686 = vmax.f32 %v8373, 0.0
        %v10687 = vmax.f32 %v9085, 0.0
        %v10688 = vmax.f32 %v9797, 0.0
        %v10689 = vmax.f32 %v10509, 0.0
        %v10690 = vmax.f32 %v5528, 0.0
        %v10691 = vmax.f32 %v6240, 0.0
        %v10692 = vmax.f32 %v6952, 0.0
        %v10693 = vmax.f32 %v7664, 0.0
        %v10694 = vmax.f32 %v8376, 0.0
        %v10695 = vmax.f32 %v9088, 0.0
        %v10696 = vmax.f32 %v9800, 0.0
        %v10697 = vmax.f32 %v10512, 0.0
        %v10698 = vmax.f32 %v5530, 0.0
        %v10699 = vmax.f32 %v6242, 0.0
        %v10700 = vmax.f32 %v6954, 0.0
        %v10701 = vmax.f32 %v7666, 0.0
        %v10702 = vmax.f32 %v8378, 0.0
        %v10703 = vmax.f32 %v9090, 0.0
        %v10704 = vmax.f32 %v9802, 0.0
        %v10705 = vmax.f32 %v10514, 0.0
        %v10706 = vmax.f32 %v5533, 0.0
        %v10707 = vmax.f32 %v6245, 0.0
        %v10708 = vmax.f32 %v6957, 0.0
        %v10709 = vmax.f32 %v7669, 0.0
        %v10710 = vmax.f32 %v8381, 0.0
        %v10711 = vmax.f32 %v9093, 0.0
        %v10712 = vmax.f32 %v9805, 0.0
        %v10713 = vmax.f32 %v10517, 0.0
        %v10714 = vmax.f32 %v5535, 0.0
        %v10715 = vmax.f32 %v6247, 0.0
        %v10716 = vmax.f32 %v6959, 0.0
        %v10717 = vmax.f32 %v7671, 0.0
        %v10718 = vmax.f32 %v8383, 0.0
        %v10719 = vmax.f32 %v9095, 0.0
        %v10720 = vmax.f32 %v9807, 0.0
        %v10721 = vmax.f32 %v10519, 0.0
        %v10722 = vmax.f32 %v5538, 0.0
        %v10723 = vmax.f32 %v6250, 0.0
        %v10724 = vmax.f32 %v6962, 0.0
        %v10725 = vmax.f32 %v7674, 0.0
        %v10726 = vmax.f32 %v8386, 0.0
        %v10727 = vmax.f32 %v9098, 0.0
        %v10728 = vmax.f32 %v9810, 0.0
        %v10729 = vmax.f32 %v10522, 0.0
        %v10730 = vmax.f32 %v5540, 0.0
        %v10731 = vmax.f32 %v6252, 0.0
        %v10732 = vmax.f32 %v6964, 0.0
        %v10733 = vmax.f32 %v7676, 0.0
        %v10734 = vmax.f32 %v8388, 0.0
        %v10735 = vmax.f32 %v9100, 0.0
        %v10736 = vmax.f32 %v9812, 0.0
        %v10737 = vmax.f32 %v10524, 0.0
        %v10738 = vmax.f32 %v5543, 0.0
        %v10739 = vmax.f32 %v6255, 0.0
        %v10740 = vmax.f32 %v6967, 0.0
        %v10741 = vmax.f32 %v7679, 0.0
        %v10742 = vmax.f32 %v8391, 0.0
        %v10743 = vmax.f32 %v9103, 0.0
        %v10744 = vmax.f32 %v9815, 0.0
        %v10745 = vmax.f32 %v10527, 0.0
        %v10746 = vmax.f32 %v5545, 0.0
        %v10747 = vmax.f32 %v6257, 0.0
        %v10748 = vmax.f32 %v6969, 0.0
        %v10749 = vmax.f32 %v7681, 0.0
        %v10750 = vmax.f32 %v8393, 0.0
        %v10751 = vmax.f32 %v9105, 0.0
        %v10752 = vmax.f32 %v9817, 0.0
        %v10753 = vmax.f32 %v10529, 0.0
        %v10754 = vmax.f32 %v5548, 0.0
        %v10755 = vmax.f32 %v6260, 0.0
        %v10756 = vmax.f32 %v6972, 0.0
        %v10757 = vmax.f32 %v7684, 0.0
        %v10758 = vmax.f32 %v8396, 0.0
        %v10759 = vmax.f32 %v9108, 0.0
        %v10760 = vmax.f32 %v9820, 0.0
        %v10761 = vmax.f32 %v10532, 0.0
        %v10762 = vmax.f32 %v5550, 0.0
        %v10763 = vmax.f32 %v6262, 0.0
        %v10764 = vmax.f32 %v6974, 0.0
        %v10765 = vmax.f32 %v7686, 0.0
        %v10766 = vmax.f32 %v8398, 0.0
        %v10767 = vmax.f32 %v9110, 0.0
        %v10768 = vmax.f32 %v9822, 0.0
        %v10769 = vmax.f32 %v10534, 0.0
        %v10770 = vmax.f32 %v5553, 0.0
        %v10771 = vmax.f32 %v6265, 0.0
        %v10772 = vmax.f32 %v6977, 0.0
        %v10773 = vmax.f32 %v7689, 0.0
        %v10774 = vmax.f32 %v8401, 0.0
        %v10775 = vmax.f32 %v9113, 0.0
        %v10776 = vmax.f32 %v9825, 0.0
        %v10777 = vmax.f32 %v10537, 0.0
        %v10778 = vmax.f32 %v5555, 0.0
        %v10779 = vmax.f32 %v6267, 0.0
        %v10780 = vmax.f32 %v6979, 0.0
        %v10781 = vmax.f32 %v7691, 0.0
        %v10782 = vmax.f32 %v8403, 0.0
        %v10783 = vmax.f32 %v9115, 0.0
        %v10784 = vmax.f32 %v9827, 0.0
        %v10785 = vmax.f32 %v10539, 0.0
        %v10786 = vmax.f32 %v5558, 0.0
        %v10787 = vmax.f32 %v6270, 0.0
        %v10788 = vmax.f32 %v6982, 0.0
        %v10789 = vmax.f32 %v7694, 0.0
        %v10790 = vmax.f32 %v8406, 0.0
        %v10791 = vmax.f32 %v9118, 0.0
        %v10792 = vmax.f32 %v9830, 0.0
        %v10793 = vmax.f32 %v10542, 0.0
        %v10794 = vmax.f32 %v5560, 0.0
        %v10795 = vmax.f32 %v6272, 0.0
        %v10796 = vmax.f32 %v6984, 0.0
        %v10797 = vmax.f32 %v7696, 0.0
        %v10798 = vmax.f32 %v8408, 0.0
        %v10799 = vmax.f32 %v9120, 0.0
        %v10800 = vmax.f32 %v9832, 0.0
        %v10801 = vmax.f32 %v10544, 0.0
        %v10802 = vpack.c.bf16 %v10554, %v10546
        %v10803 = vpack.c.bf16 %v10555, %v10547
        %v10804 = vpack.c.bf16 %v10556, %v10548
        %v10805 = vpack.c.bf16 %v10557, %v10549
        %v10806 = vpack.c.bf16 %v10558, %v10550
        %v10807 = vpack.c.bf16 %v10559, %v10551
        %v10808 = vpack.c.bf16 %v10560, %v10552
        %v10809 = vpack.c.bf16 %v10561, %v10553
        %v10810 = vpack.c.bf16 %v10570, %v10562
        %v10811 = vpack.c.bf16 %v10571, %v10563
        %v10812 = vpack.c.bf16 %v10572, %v10564
        %v10813 = vpack.c.bf16 %v10573, %v10565
        %v10814 = vpack.c.bf16 %v10574, %v10566
        %v10815 = vpack.c.bf16 %v10575, %v10567
        %v10816 = vpack.c.bf16 %v10576, %v10568
        %v10817 = vpack.c.bf16 %v10577, %v10569
        %v10818 = vpack.c.bf16 %v10586, %v10578
        %v10819 = vpack.c.bf16 %v10587, %v10579
        %v10820 = vpack.c.bf16 %v10588, %v10580
        %v10821 = vpack.c.bf16 %v10589, %v10581
        %v10822 = vpack.c.bf16 %v10590, %v10582
        %v10823 = vpack.c.bf16 %v10591, %v10583
        %v10824 = vpack.c.bf16 %v10592, %v10584
        %v10825 = vpack.c.bf16 %v10593, %v10585
        %v10826 = vpack.c.bf16 %v10602, %v10594
        %v10827 = vpack.c.bf16 %v10603, %v10595
        %v10828 = vpack.c.bf16 %v10604, %v10596
        %v10829 = vpack.c.bf16 %v10605, %v10597
        %v10830 = vpack.c.bf16 %v10606, %v10598
        %v10831 = vpack.c.bf16 %v10607, %v10599
        %v10832 = vpack.c.bf16 %v10608, %v10600
        %v10833 = vpack.c.bf16 %v10609, %v10601
        %v10834 = vpack.c.bf16 %v10618, %v10610
        %v10835 = vpack.c.bf16 %v10619, %v10611
        %v10836 = vpack.c.bf16 %v10620, %v10612
        %v10837 = vpack.c.bf16 %v10621, %v10613
        %v10838 = vpack.c.bf16 %v10622, %v10614
        %v10839 = vpack.c.bf16 %v10623, %v10615
        %v10840 = vpack.c.bf16 %v10624, %v10616
        %v10841 = vpack.c.bf16 %v10625, %v10617
        %v10842 = vpack.c.bf16 %v10634, %v10626
        %v10843 = vpack.c.bf16 %v10635, %v10627
        %v10844 = vpack.c.bf16 %v10636, %v10628
        %v10845 = vpack.c.bf16 %v10637, %v10629
        %v10846 = vpack.c.bf16 %v10638, %v10630
        %v10847 = vpack.c.bf16 %v10639, %v10631
        %v10848 = vpack.c.bf16 %v10640, %v10632
        %v10849 = vpack.c.bf16 %v10641, %v10633
        %v10850 = vpack.c.bf16 %v10650, %v10642
        %v10851 = vpack.c.bf16 %v10651, %v10643
        %v10852 = vpack.c.bf16 %v10652, %v10644
        %v10853 = vpack.c.bf16 %v10653, %v10645
        %v10854 = vpack.c.bf16 %v10654, %v10646
        %v10855 = vpack.c.bf16 %v10655, %v10647
        %v10856 = vpack.c.bf16 %v10656, %v10648
        %v10857 = vpack.c.bf16 %v10657, %v10649
        %v10858 = vpack.c.bf16 %v10666, %v10658
        %v10859 = vpack.c.bf16 %v10667, %v10659
        %v10860 = vpack.c.bf16 %v10668, %v10660
        %v10861 = vpack.c.bf16 %v10669, %v10661
        %v10862 = vpack.c.bf16 %v10670, %v10662
        %v10863 = vpack.c.bf16 %v10671, %v10663
        %v10864 = vpack.c.bf16 %v10672, %v10664
        %v10865 = vpack.c.bf16 %v10673, %v10665
        %v10866 = vpack.c.bf16 %v10682, %v10674
        %v10867 = vpack.c.bf16 %v10683, %v10675
        %v10868 = vpack.c.bf16 %v10684, %v10676
        %v10869 = vpack.c.bf16 %v10685, %v10677
        %v10870 = vpack.c.bf16 %v10686, %v10678
        %v10871 = vpack.c.bf16 %v10687, %v10679
        %v10872 = vpack.c.bf16 %v10688, %v10680
        %v10873 = vpack.c.bf16 %v10689, %v10681
        %v10874 = vpack.c.bf16 %v10698, %v10690
        %v10875 = vpack.c.bf16 %v10699, %v10691
        %v10876 = vpack.c.bf16 %v10700, %v10692
        %v10877 = vpack.c.bf16 %v10701, %v10693
        %v10878 = vpack.c.bf16 %v10702, %v10694
        %v10879 = vpack.c.bf16 %v10703, %v10695
        %v10880 = vpack.c.bf16 %v10704, %v10696
        %v10881 = vpack.c.bf16 %v10705, %v10697
        %v10882 = vpack.c.bf16 %v10714, %v10706
        %v10883 = vpack.c.bf16 %v10715, %v10707
        %v10884 = vpack.c.bf16 %v10716, %v10708
        %v10885 = vpack.c.bf16 %v10717, %v10709
        %v10886 = vpack.c.bf16 %v10718, %v10710
        %v10887 = vpack.c.bf16 %v10719, %v10711
        %v10888 = vpack.c.bf16 %v10720, %v10712
        %v10889 = vpack.c.bf16 %v10721, %v10713
        %v10890 = vpack.c.bf16 %v10730, %v10722
        %v10891 = vpack.c.bf16 %v10731, %v10723
        %v10892 = vpack.c.bf16 %v10732, %v10724
        %v10893 = vpack.c.bf16 %v10733, %v10725
        %v10894 = vpack.c.bf16 %v10734, %v10726
        %v10895 = vpack.c.bf16 %v10735, %v10727
        %v10896 = vpack.c.bf16 %v10736, %v10728
        %v10897 = vpack.c.bf16 %v10737, %v10729
        %v10898 = vpack.c.bf16 %v10746, %v10738
        %v10899 = vpack.c.bf16 %v10747, %v10739
        %v10900 = vpack.c.bf16 %v10748, %v10740
        %v10901 = vpack.c.bf16 %v10749, %v10741
        %v10902 = vpack.c.bf16 %v10750, %v10742
        %v10903 = vpack.c.bf16 %v10751, %v10743
        %v10904 = vpack.c.bf16 %v10752, %v10744
        %v10905 = vpack.c.bf16 %v10753, %v10745
        %v10906 = vpack.c.bf16 %v10762, %v10754
        %v10907 = vpack.c.bf16 %v10763, %v10755
        %v10908 = vpack.c.bf16 %v10764, %v10756
        %v10909 = vpack.c.bf16 %v10765, %v10757
        %v10910 = vpack.c.bf16 %v10766, %v10758
        %v10911 = vpack.c.bf16 %v10767, %v10759
        %v10912 = vpack.c.bf16 %v10768, %v10760
        %v10913 = vpack.c.bf16 %v10769, %v10761
        %v10914 = vpack.c.bf16 %v10778, %v10770
        %v10915 = vpack.c.bf16 %v10779, %v10771
        %v10916 = vpack.c.bf16 %v10780, %v10772
        %v10917 = vpack.c.bf16 %v10781, %v10773
        %v10918 = vpack.c.bf16 %v10782, %v10774
        %v10919 = vpack.c.bf16 %v10783, %v10775
        %v10920 = vpack.c.bf16 %v10784, %v10776
        %v10921 = vpack.c.bf16 %v10785, %v10777
        %v10922 = vpack.c.bf16 %v10794, %v10786
        %v10923 = vpack.c.bf16 %v10795, %v10787
        %v10924 = vpack.c.bf16 %v10796, %v10788
        %v10925 = vpack.c.bf16 %v10797, %v10789
        %v10926 = vpack.c.bf16 %v10798, %v10790
        %v10927 = vpack.c.bf16 %v10799, %v10791
        %v10928 = vpack.c.bf16 %v10800, %v10792
        %v10929 = vpack.c.bf16 %v10801, %v10793
        %v10930 = vld [vmem:[%s5] sm:$0xf]
        %v10931 = vld [vmem:[%s5 + $0x4] sm:$0xf]
        %v10932 = vld [vmem:[%s5 + $0x8] sm:$0xf]
        %v10933 = vld [vmem:[%s5 + $0xc] sm:$0xf]
        %v10934 = vld [vmem:[%s5 + $0x10] sm:$0xf]
        %v10935 = vld [vmem:[%s5 + $0x14] sm:$0xf]
        %v10936 = vld [vmem:[%s5 + $0x18] sm:$0xf]
        %v10937 = vld [vmem:[%s5 + $0x1c] sm:$0xf]
        %v10938 = vld [vmem:[%s5 + $0x20] sm:$0xf]
        %v10939 = vld [vmem:[%s5 + $0x24] sm:$0xf]
        %v10940 = vld [vmem:[%s5 + $0x28] sm:$0xf]
        %v10941 = vld [vmem:[%s5 + $0x2c] sm:$0xf]
        %v10942 = vld [vmem:[%s5 + $0x30] sm:$0xf]
        %v10943 = vld [vmem:[%s5 + $0x34] sm:$0xf]
        %v10944 = vld [vmem:[%s5 + $0x38] sm:$0xf]
        %v10945 = vld [vmem:[%s5 + $0x3c] sm:$0xf]
        %v10946 = vld [vmem:[%s5 + $0x40] sm:$0xf]
        %v10947 = vld [vmem:[%s5 + $0x44] sm:$0xf]
        %v10948 = vld [vmem:[%s5 + $0x48] sm:$0xf]
        %v10949 = vld [vmem:[%s5 + $0x4c] sm:$0xf]
        %v10950 = vld [vmem:[%s5 + $0x50] sm:$0xf]
        %v10951 = vld [vmem:[%s5 + $0x54] sm:$0xf]
        %v10952 = vld [vmem:[%s5 + $0x58] sm:$0xf]
        %v10953 = vld [vmem:[%s5 + $0x5c] sm:$0xf]
        %v10954 = vld [vmem:[%s5 + $0x60] sm:$0xf]
        %v10955 = vld [vmem:[%s5 + $0x64] sm:$0xf]
        %v10956 = vld [vmem:[%s5 + $0x68] sm:$0xf]
        %v10957 = vld [vmem:[%s5 + $0x6c] sm:$0xf]
        %v10958 = vld [vmem:[%s5 + $0x70] sm:$0xf]
        %v10959 = vld [vmem:[%s5 + $0x74] sm:$0xf]
        %v10960 = vld [vmem:[%s5 + $0x78] sm:$0xf]
        %v10961 = vld [vmem:[%s5 + $0x7c] sm:$0xf]
        %v10962 = vld [vmem:[%s5 + $0x80] sm:$0xf]
        %v10963 = vld [vmem:[%s5 + $0x84] sm:$0xf]
        %v10964 = vld [vmem:[%s5 + $0x88] sm:$0xf]
        %v10965 = vld [vmem:[%s5 + $0x8c] sm:$0xf]
        %v10966 = vld [vmem:[%s5 + $0x90] sm:$0xf]
        %v10967 = vld [vmem:[%s5 + $0x94] sm:$0xf]
        %v10968 = vld [vmem:[%s5 + $0x98] sm:$0xf]
        %v10969 = vld [vmem:[%s5 + $0x9c] sm:$0xf]
        %v10970 = vld [vmem:[%s5 + $0xa0] sm:$0xf]
        %v10971 = vld [vmem:[%s5 + $0xa4] sm:$0xf]
        %v10972 = vld [vmem:[%s5 + $0xa8] sm:$0xf]
        %v10973 = vld [vmem:[%s5 + $0xac] sm:$0xf]
        %v10974 = vld [vmem:[%s5 + $0xb0] sm:$0xf]
        %v10975 = vld [vmem:[%s5 + $0xb4] sm:$0xf]
        %v10976 = vld [vmem:[%s5 + $0xb8] sm:$0xf]
        %v10977 = vld [vmem:[%s5 + $0xbc] sm:$0xf]
        %v10978 = vld [vmem:[%s5 + $0xc0] sm:$0xf]
        %v10979 = vld [vmem:[%s5 + $0xc4] sm:$0xf]
        %v10980 = vld [vmem:[%s5 + $0xc8] sm:$0xf]
        %v10981 = vld [vmem:[%s5 + $0xcc] sm:$0xf]
        %v10982 = vld [vmem:[%s5 + $0xd0] sm:$0xf]
        %v10983 = vld [vmem:[%s5 + $0xd4] sm:$0xf]
        %v10984 = vld [vmem:[%s5 + $0xd8] sm:$0xf]
        %v10985 = vld [vmem:[%s5 + $0xdc] sm:$0xf]
        %v10986 = vld [vmem:[%s5 + $0xe0] sm:$0xf]
        %v10987 = vld [vmem:[%s5 + $0xe4] sm:$0xf]
        %v10988 = vld [vmem:[%s5 + $0xe8] sm:$0xf]
        %v10989 = vld [vmem:[%s5 + $0xec] sm:$0xf]
        %v10990 = vld [vmem:[%s5 + $0xf0] sm:$0xf]
        %v10991 = vld [vmem:[%s5 + $0xf4] sm:$0xf]
        %v10992 = vld [vmem:[%s5 + $0xf8] sm:$0xf]
        %v10993 = vld [vmem:[%s5 + $0xfc] sm:$0xf]
        %v10994 = vld [vmem:[%s5 + $0x100] sm:$0xf]
        %v10995 = vld [vmem:[%s5 + $0x104] sm:$0xf]
        %v10996 = vld [vmem:[%s5 + $0x108] sm:$0xf]
        %v10997 = vld [vmem:[%s5 + $0x10c] sm:$0xf]
        %v10998 = vld [vmem:[%s5 + $0x110] sm:$0xf]
        %v10999 = vld [vmem:[%s5 + $0x114] sm:$0xf]
        %v11000 = vld [vmem:[%s5 + $0x118] sm:$0xf]
        %v11001 = vld [vmem:[%s5 + $0x11c] sm:$0xf]
        %v11002 = vld [vmem:[%s5 + $0x120] sm:$0xf]
        %v11003 = vld [vmem:[%s5 + $0x124] sm:$0xf]
        %v11004 = vld [vmem:[%s5 + $0x128] sm:$0xf]
        %v11005 = vld [vmem:[%s5 + $0x12c] sm:$0xf]
        %v11006 = vld [vmem:[%s5 + $0x130] sm:$0xf]
        %v11007 = vld [vmem:[%s5 + $0x134] sm:$0xf]
        %v11008 = vld [vmem:[%s5 + $0x138] sm:$0xf]
        %v11009 = vld [vmem:[%s5 + $0x13c] sm:$0xf]
        %v11010 = vld [vmem:[%s5 + $0x140] sm:$0xf]
        %v11011 = vld [vmem:[%s5 + $0x144] sm:$0xf]
        %v11012 = vld [vmem:[%s5 + $0x148] sm:$0xf]
        %v11013 = vld [vmem:[%s5 + $0x14c] sm:$0xf]
        %v11014 = vld [vmem:[%s5 + $0x150] sm:$0xf]
        %v11015 = vld [vmem:[%s5 + $0x154] sm:$0xf]
        %v11016 = vld [vmem:[%s5 + $0x158] sm:$0xf]
        %v11017 = vld [vmem:[%s5 + $0x15c] sm:$0xf]
        %v11018 = vld [vmem:[%s5 + $0x160] sm:$0xf]
        %v11019 = vld [vmem:[%s5 + $0x164] sm:$0xf]
        %v11020 = vld [vmem:[%s5 + $0x168] sm:$0xf]
        %v11021 = vld [vmem:[%s5 + $0x16c] sm:$0xf]
        %v11022 = vld [vmem:[%s5 + $0x170] sm:$0xf]
        %v11023 = vld [vmem:[%s5 + $0x174] sm:$0xf]
        %v11024 = vld [vmem:[%s5 + $0x178] sm:$0xf]
        %v11025 = vld [vmem:[%s5 + $0x17c] sm:$0xf]
        %v11026 = vld [vmem:[%s5 + $0x180] sm:$0xf]
        %v11027 = vld [vmem:[%s5 + $0x184] sm:$0xf]
        %v11028 = vld [vmem:[%s5 + $0x188] sm:$0xf]
        %v11029 = vld [vmem:[%s5 + $0x18c] sm:$0xf]
        %v11030 = vld [vmem:[%s5 + $0x190] sm:$0xf]
        %v11031 = vld [vmem:[%s5 + $0x194] sm:$0xf]
        %v11032 = vld [vmem:[%s5 + $0x198] sm:$0xf]
        %v11033 = vld [vmem:[%s5 + $0x19c] sm:$0xf]
        %v11034 = vld [vmem:[%s5 + $0x1a0] sm:$0xf]
        %v11035 = vld [vmem:[%s5 + $0x1a4] sm:$0xf]
        %v11036 = vld [vmem:[%s5 + $0x1a8] sm:$0xf]
        %v11037 = vld [vmem:[%s5 + $0x1ac] sm:$0xf]
        %v11038 = vld [vmem:[%s5 + $0x1b0] sm:$0xf]
        %v11039 = vld [vmem:[%s5 + $0x1b4] sm:$0xf]
        %v11040 = vld [vmem:[%s5 + $0x1b8] sm:$0xf]
        %v11041 = vld [vmem:[%s5 + $0x1bc] sm:$0xf]
        %v11042 = vld [vmem:[%s5 + $0x1c0] sm:$0xf]
        %v11043 = vld [vmem:[%s5 + $0x1c4] sm:$0xf]
        %v11044 = vld [vmem:[%s5 + $0x1c8] sm:$0xf]
        %v11045 = vld [vmem:[%s5 + $0x1cc] sm:$0xf]
        %v11046 = vld [vmem:[%s5 + $0x1d0] sm:$0xf]
        %v11047 = vld [vmem:[%s5 + $0x1d4] sm:$0xf]
        %v11048 = vld [vmem:[%s5 + $0x1d8] sm:$0xf]
        %v11049 = vld [vmem:[%s5 + $0x1dc] sm:$0xf]
        %v11050 = vld [vmem:[%s5 + $0x1e0] sm:$0xf]
        %v11051 = vld [vmem:[%s5 + $0x1e4] sm:$0xf]
        %v11052 = vld [vmem:[%s5 + $0x1e8] sm:$0xf]
        %v11053 = vld [vmem:[%s5 + $0x1ec] sm:$0xf]
        %v11054 = vld [vmem:[%s5 + $0x1f0] sm:$0xf]
        %v11055 = vld [vmem:[%s5 + $0x1f4] sm:$0xf]
        %v11056 = vld [vmem:[%s5 + $0x1f8] sm:$0xf]
        %v11057 = vld [vmem:[%s5 + $0x1fc] sm:$0xf]
        %v11058 = vld [vmem:[%s6] sm:$0x1]
        %v11060 = vperm.slane %v11058, 0
        %v11190 = vunpack.c.l.b16 %v10930
        %v11191 = vunpack.c.l.b16 %v10931
        %v11192 = vunpack.c.l.b16 %v10932
        %v11193 = vunpack.c.l.b16 %v10933
        %v11194 = vunpack.c.l.b16 %v10934
        %v11195 = vunpack.c.l.b16 %v10935
        %v11196 = vunpack.c.l.b16 %v10936
        %v11197 = vunpack.c.l.b16 %v10937
        %v11198 = vunpack.c.l.b16 %v10938
        %v11199 = vunpack.c.l.b16 %v10939
        %v11200 = vunpack.c.l.b16 %v10940
        %v11201 = vunpack.c.l.b16 %v10941
        %v11202 = vunpack.c.l.b16 %v10942
        %v11203 = vunpack.c.l.b16 %v10943
        %v11204 = vunpack.c.l.b16 %v10944
        %v11205 = vunpack.c.l.b16 %v10945
        %v11206 = vunpack.c.l.b16 %v10946
        %v11207 = vunpack.c.l.b16 %v10947
        %v11208 = vunpack.c.l.b16 %v10948
        %v11209 = vunpack.c.l.b16 %v10949
        %v11210 = vunpack.c.l.b16 %v10950
        %v11211 = vunpack.c.l.b16 %v10951
        %v11212 = vunpack.c.l.b16 %v10952
        %v11213 = vunpack.c.l.b16 %v10953
        %v11214 = vunpack.c.l.b16 %v10954
        %v11215 = vunpack.c.l.b16 %v10955
        %v11216 = vunpack.c.l.b16 %v10956
        %v11217 = vunpack.c.l.b16 %v10957
        %v11218 = vunpack.c.l.b16 %v10958
        %v11219 = vunpack.c.l.b16 %v10959
        %v11220 = vunpack.c.l.b16 %v10960
        %v11221 = vunpack.c.l.b16 %v10961
        %v11222 = vunpack.c.l.b16 %v10962
        %v11223 = vunpack.c.l.b16 %v10963
        %v11224 = vunpack.c.l.b16 %v10964
        %v11225 = vunpack.c.l.b16 %v10965
        %v11226 = vunpack.c.l.b16 %v10966
        %v11227 = vunpack.c.l.b16 %v10967
        %v11228 = vunpack.c.l.b16 %v10968
        %v11229 = vunpack.c.l.b16 %v10969
        %v11230 = vunpack.c.l.b16 %v10970
        %v11231 = vunpack.c.l.b16 %v10971
        %v11232 = vunpack.c.l.b16 %v10972
        %v11233 = vunpack.c.l.b16 %v10973
        %v11234 = vunpack.c.l.b16 %v10974
        %v11235 = vunpack.c.l.b16 %v10975
        %v11236 = vunpack.c.l.b16 %v10976
        %v11237 = vunpack.c.l.b16 %v10977
        %v11238 = vunpack.c.l.b16 %v10978
        %v11239 = vunpack.c.l.b16 %v10979
        %v11240 = vunpack.c.l.b16 %v10980
        %v11241 = vunpack.c.l.b16 %v10981
        %v11242 = vunpack.c.l.b16 %v10982
        %v11243 = vunpack.c.l.b16 %v10983
        %v11244 = vunpack.c.l.b16 %v10984
        %v11245 = vunpack.c.l.b16 %v10985
        %v11246 = vunpack.c.l.b16 %v10986
        %v11247 = vunpack.c.l.b16 %v10987
        %v11248 = vunpack.c.l.b16 %v10988
        %v11249 = vunpack.c.l.b16 %v10989
        %v11250 = vunpack.c.l.b16 %v10990
        %v11251 = vunpack.c.l.b16 %v10991
        %v11252 = vunpack.c.l.b16 %v10992
        %v11253 = vunpack.c.l.b16 %v10993
        %v11254 = vunpack.c.l.b16 %v10994
        %v11255 = vunpack.c.l.b16 %v10995
        %v11256 = vunpack.c.l.b16 %v10996
        %v11257 = vunpack.c.l.b16 %v10997
        %v11258 = vunpack.c.l.b16 %v10998
        %v11259 = vunpack.c.l.b16 %v10999
        %v11260 = vunpack.c.l.b16 %v11000
        %v11261 = vunpack.c.l.b16 %v11001
        %v11262 = vunpack.c.l.b16 %v11002
        %v11263 = vunpack.c.l.b16 %v11003
        %v11264 = vunpack.c.l.b16 %v11004
        %v11265 = vunpack.c.l.b16 %v11005
        %v11266 = vunpack.c.l.b16 %v11006
        %v11267 = vunpack.c.l.b16 %v11007
        %v11268 = vunpack.c.l.b16 %v11008
        %v11269 = vunpack.c.l.b16 %v11009
        %v11270 = vunpack.c.l.b16 %v11010
        %v11271 = vunpack.c.l.b16 %v11011
        %v11272 = vunpack.c.l.b16 %v11012
        %v11273 = vunpack.c.l.b16 %v11013
        %v11274 = vunpack.c.l.b16 %v11014
        %v11275 = vunpack.c.l.b16 %v11015
        %v11276 = vunpack.c.l.b16 %v11016
        %v11277 = vunpack.c.l.b16 %v11017
        %v11278 = vunpack.c.l.b16 %v11018
        %v11279 = vunpack.c.l.b16 %v11019
        %v11280 = vunpack.c.l.b16 %v11020
        %v11281 = vunpack.c.l.b16 %v11021
        %v11282 = vunpack.c.l.b16 %v11022
        %v11283 = vunpack.c.l.b16 %v11023
        %v11284 = vunpack.c.l.b16 %v11024
        %v11285 = vunpack.c.l.b16 %v11025
        %v11286 = vunpack.c.l.b16 %v11026
        %v11287 = vunpack.c.l.b16 %v11027
        %v11288 = vunpack.c.l.b16 %v11028
        %v11289 = vunpack.c.l.b16 %v11029
        %v11290 = vunpack.c.l.b16 %v11030
        %v11291 = vunpack.c.l.b16 %v11031
        %v11292 = vunpack.c.l.b16 %v11032
        %v11293 = vunpack.c.l.b16 %v11033
        %v11294 = vunpack.c.l.b16 %v11034
        %v11295 = vunpack.c.l.b16 %v11035
        %v11296 = vunpack.c.l.b16 %v11036
        %v11297 = vunpack.c.l.b16 %v11037
        %v11298 = vunpack.c.l.b16 %v11038
        %v11299 = vunpack.c.l.b16 %v11039
        %v11300 = vunpack.c.l.b16 %v11040
        %v11301 = vunpack.c.l.b16 %v11041
        %v11302 = vunpack.c.l.b16 %v11042
        %v11303 = vunpack.c.l.b16 %v11043
        %v11304 = vunpack.c.l.b16 %v11044
        %v11305 = vunpack.c.l.b16 %v11045
        %v11306 = vunpack.c.l.b16 %v11046
        %v11307 = vunpack.c.l.b16 %v11047
        %v11308 = vunpack.c.l.b16 %v11048
        %v11309 = vunpack.c.l.b16 %v11049
        %v11310 = vunpack.c.l.b16 %v11050
        %v11311 = vunpack.c.l.b16 %v11051
        %v11312 = vunpack.c.l.b16 %v11052
        %v11313 = vunpack.c.l.b16 %v11053
        %v11314 = vunpack.c.l.b16 %v11054
        %v11315 = vunpack.c.l.b16 %v11055
        %v11316 = vunpack.c.l.b16 %v11056
        %v11317 = vunpack.c.l.b16 %v11057
        %v11318 = vpack.c.b16 %v11191, %v11190
        %v11319 = vpack.c.b16 %v11193, %v11192
        %v11320 = vpack.c.b16 %v11195, %v11194
        %v11321 = vpack.c.b16 %v11197, %v11196
        %v11322 = vpack.c.b16 %v11199, %v11198
        %v11323 = vpack.c.b16 %v11201, %v11200
        %v11324 = vpack.c.b16 %v11203, %v11202
        %v11325 = vpack.c.b16 %v11205, %v11204
        %v11326 = vpack.c.b16 %v11207, %v11206
        %v11327 = vpack.c.b16 %v11209, %v11208
        %v11328 = vpack.c.b16 %v11211, %v11210
        %v11329 = vpack.c.b16 %v11213, %v11212
        %v11330 = vpack.c.b16 %v11215, %v11214
        %v11331 = vpack.c.b16 %v11217, %v11216
        %v11332 = vpack.c.b16 %v11219, %v11218
        %v11333 = vpack.c.b16 %v11221, %v11220
        %v11334 = vpack.c.b16 %v11223, %v11222
        %v11335 = vpack.c.b16 %v11225, %v11224
        %v11336 = vpack.c.b16 %v11227, %v11226
        %v11337 = vpack.c.b16 %v11229, %v11228
        %v11338 = vpack.c.b16 %v11231, %v11230
        %v11339 = vpack.c.b16 %v11233, %v11232
        %v11340 = vpack.c.b16 %v11235, %v11234
        %v11341 = vpack.c.b16 %v11237, %v11236
        %v11342 = vpack.c.b16 %v11239, %v11238
        %v11343 = vpack.c.b16 %v11241, %v11240
        %v11344 = vpack.c.b16 %v11243, %v11242
        %v11345 = vpack.c.b16 %v11245, %v11244
        %v11346 = vpack.c.b16 %v11247, %v11246
        %v11347 = vpack.c.b16 %v11249, %v11248
        %v11348 = vpack.c.b16 %v11251, %v11250
        %v11349 = vpack.c.b16 %v11253, %v11252
        %v11350 = vpack.c.b16 %v11255, %v11254
        %v11351 = vpack.c.b16 %v11257, %v11256
        %v11352 = vpack.c.b16 %v11259, %v11258
        %v11353 = vpack.c.b16 %v11261, %v11260
        %v11354 = vpack.c.b16 %v11263, %v11262
        %v11355 = vpack.c.b16 %v11265, %v11264
        %v11356 = vpack.c.b16 %v11267, %v11266
        %v11357 = vpack.c.b16 %v11269, %v11268
        %v11358 = vpack.c.b16 %v11271, %v11270
        %v11359 = vpack.c.b16 %v11273, %v11272
        %v11360 = vpack.c.b16 %v11275, %v11274
        %v11361 = vpack.c.b16 %v11277, %v11276
        %v11362 = vpack.c.b16 %v11279, %v11278
        %v11363 = vpack.c.b16 %v11281, %v11280
        %v11364 = vpack.c.b16 %v11283, %v11282
        %v11365 = vpack.c.b16 %v11285, %v11284
        %v11366 = vpack.c.b16 %v11287, %v11286
        %v11367 = vpack.c.b16 %v11289, %v11288
        %v11368 = vpack.c.b16 %v11291, %v11290
        %v11369 = vpack.c.b16 %v11293, %v11292
        %v11370 = vpack.c.b16 %v11295, %v11294
        %v11371 = vpack.c.b16 %v11297, %v11296
        %v11372 = vpack.c.b16 %v11299, %v11298
        %v11373 = vpack.c.b16 %v11301, %v11300
        %v11374 = vpack.c.b16 %v11303, %v11302
        %v11375 = vpack.c.b16 %v11305, %v11304
        %v11376 = vpack.c.b16 %v11307, %v11306
        %v11377 = vpack.c.b16 %v11309, %v11308
        %v11378 = vpack.c.b16 %v11311, %v11310
        %v11379 = vpack.c.b16 %v11313, %v11312
        %v11380 = vpack.c.b16 %v11315, %v11314
        %v11381 = vpack.c.b16 %v11317, %v11316
        %11446 = vmatpush.bf16.msra.mxu0 %v11325
        %11447 = vmatpush.bf16.msra.mxu0 %v11324
        %11448 = vmatpush.bf16.msra.mxu0 %v11323
        %11449 = vmatpush.bf16.msra.mxu0 %v11322
        %11450 = vmatpush.bf16.msra.mxu0 %v11321
        %11451 = vmatpush.bf16.msra.mxu0 %v11320
        %11452 = vmatpush.bf16.msra.mxu0 %v11319
        %11453 = vmatpush.bf16.msra.mxu0 %v11318
        %11454 = vmatmul.bf16.gmra.mxu0 %v10802
        %v11455 = vpop.f32.mrf.mxu0
        %v11456 = vadd.f32 %v11060, %v11455
        %v11457 = vpop.f32.mrf.mxu0
        %v11458 = vadd.f32 %v11060, %v11457
        %11459 = vmatmul.bf16.gmra.mxu0 %v10810
        %v11460 = vpop.f32.mrf.mxu0
        %v11461 = vadd.f32 %v11060, %v11460
        %v11462 = vpop.f32.mrf.mxu0
        %v11463 = vadd.f32 %v11060, %v11462
        %11464 = vmatmul.bf16.gmra.mxu0 %v10818
        %v11465 = vpop.f32.mrf.mxu0
        %v11466 = vadd.f32 %v11060, %v11465
        %v11467 = vpop.f32.mrf.mxu0
        %v11468 = vadd.f32 %v11060, %v11467
        %11469 = vmatmul.bf16.gmra.mxu0 %v10826
        %v11470 = vpop.f32.mrf.mxu0
        %v11471 = vadd.f32 %v11060, %v11470
        %v11472 = vpop.f32.mrf.mxu0
        %v11473 = vadd.f32 %v11060, %v11472
        %11474 = vmatmul.bf16.gmra.mxu0 %v10834
        %v11475 = vpop.f32.mrf.mxu0
        %v11476 = vadd.f32 %v11060, %v11475
        %v11477 = vpop.f32.mrf.mxu0
        %v11478 = vadd.f32 %v11060, %v11477
        %11479 = vmatmul.bf16.gmra.mxu0 %v10842
        %v11480 = vpop.f32.mrf.mxu0
        %v11481 = vadd.f32 %v11060, %v11480
        %v11482 = vpop.f32.mrf.mxu0
        %v11483 = vadd.f32 %v11060, %v11482
        %11484 = vmatmul.bf16.gmra.mxu0 %v10850
        %v11485 = vpop.f32.mrf.mxu0
        %v11486 = vadd.f32 %v11060, %v11485
        %v11487 = vpop.f32.mrf.mxu0
        %v11488 = vadd.f32 %v11060, %v11487
        %11489 = vmatmul.bf16.gmra.mxu0 %v10858
        %v11490 = vpop.f32.mrf.mxu0
        %v11491 = vadd.f32 %v11060, %v11490
        %v11492 = vpop.f32.mrf.mxu0
        %v11493 = vadd.f32 %v11060, %v11492
        %11494 = vmatmul.bf16.gmra.mxu0 %v10866
        %v11495 = vpop.f32.mrf.mxu0
        %v11496 = vadd.f32 %v11060, %v11495
        %v11497 = vpop.f32.mrf.mxu0
        %v11498 = vadd.f32 %v11060, %v11497
        %11499 = vmatmul.bf16.gmra.mxu0 %v10874
        %v11500 = vpop.f32.mrf.mxu0
        %v11501 = vadd.f32 %v11060, %v11500
        %v11502 = vpop.f32.mrf.mxu0
        %v11503 = vadd.f32 %v11060, %v11502
        %11504 = vmatmul.bf16.gmra.mxu0 %v10882
        %v11505 = vpop.f32.mrf.mxu0
        %v11506 = vadd.f32 %v11060, %v11505
        %v11507 = vpop.f32.mrf.mxu0
        %v11508 = vadd.f32 %v11060, %v11507
        %11509 = vmatmul.bf16.gmra.mxu0 %v10890
        %v11510 = vpop.f32.mrf.mxu0
        %v11511 = vadd.f32 %v11060, %v11510
        %v11512 = vpop.f32.mrf.mxu0
        %v11513 = vadd.f32 %v11060, %v11512
        %11514 = vmatmul.bf16.gmra.mxu0 %v10898
        %v11515 = vpop.f32.mrf.mxu0
        %v11516 = vadd.f32 %v11060, %v11515
        %v11517 = vpop.f32.mrf.mxu0
        %v11518 = vadd.f32 %v11060, %v11517
        %11519 = vmatmul.bf16.gmra.mxu0 %v10906
        %v11520 = vpop.f32.mrf.mxu0
        %v11521 = vadd.f32 %v11060, %v11520
        %v11522 = vpop.f32.mrf.mxu0
        %v11523 = vadd.f32 %v11060, %v11522
        %11524 = vmatmul.bf16.gmra.mxu0 %v10914
        %v11525 = vpop.f32.mrf.mxu0
        %v11526 = vadd.f32 %v11060, %v11525
        %v11527 = vpop.f32.mrf.mxu0
        %v11528 = vadd.f32 %v11060, %v11527
        %11529 = vmatmul.bf16.gmra.mxu0 %v10922
        %v11530 = vpop.f32.mrf.mxu0
        %v11531 = vadd.f32 %v11060, %v11530
        %v11532 = vpop.f32.mrf.mxu0
        %v11533 = vadd.f32 %v11060, %v11532
        %11534 = vdwg.mxu0
        %11535 = vmatpush.bf16.msra.mxu0 %v11333
        %11536 = vmatpush.bf16.msra.mxu0 %v11332
        %11537 = vmatpush.bf16.msra.mxu0 %v11331
        %11538 = vmatpush.bf16.msra.mxu0 %v11330
        %11539 = vmatpush.bf16.msra.mxu0 %v11329
        %11540 = vmatpush.bf16.msra.mxu0 %v11328
        %11541 = vmatpush.bf16.msra.mxu0 %v11327
        %11542 = vmatpush.bf16.msra.mxu0 %v11326
        %11543 = vmatmul.bf16.gmra.mxu0 %v10803
        %v11544 = vpop.f32.mrf.mxu0
        %v11545 = vadd.f32 %v11456, %v11544
        %v11546 = vpop.f32.mrf.mxu0
        %v11547 = vadd.f32 %v11458, %v11546
        %11548 = vmatmul.bf16.gmra.mxu0 %v10811
        %v11549 = vpop.f32.mrf.mxu0
        %v11550 = vadd.f32 %v11461, %v11549
        %v11551 = vpop.f32.mrf.mxu0
        %v11552 = vadd.f32 %v11463, %v11551
        %11553 = vmatmul.bf16.gmra.mxu0 %v10819
        %v11554 = vpop.f32.mrf.mxu0
        %v11555 = vadd.f32 %v11466, %v11554
        %v11556 = vpop.f32.mrf.mxu0
        %v11557 = vadd.f32 %v11468, %v11556
        %11558 = vmatmul.bf16.gmra.mxu0 %v10827
        %v11559 = vpop.f32.mrf.mxu0
        %v11560 = vadd.f32 %v11471, %v11559
        %v11561 = vpop.f32.mrf.mxu0
        %v11562 = vadd.f32 %v11473, %v11561
        %11563 = vmatmul.bf16.gmra.mxu0 %v10835
        %v11564 = vpop.f32.mrf.mxu0
        %v11565 = vadd.f32 %v11476, %v11564
        %v11566 = vpop.f32.mrf.mxu0
        %v11567 = vadd.f32 %v11478, %v11566
        %11568 = vmatmul.bf16.gmra.mxu0 %v10843
        %v11569 = vpop.f32.mrf.mxu0
        %v11570 = vadd.f32 %v11481, %v11569
        %v11571 = vpop.f32.mrf.mxu0
        %v11572 = vadd.f32 %v11483, %v11571
        %11573 = vmatmul.bf16.gmra.mxu0 %v10851
        %v11574 = vpop.f32.mrf.mxu0
        %v11575 = vadd.f32 %v11486, %v11574
        %v11576 = vpop.f32.mrf.mxu0
        %v11577 = vadd.f32 %v11488, %v11576
        %11578 = vmatmul.bf16.gmra.mxu0 %v10859
        %v11579 = vpop.f32.mrf.mxu0
        %v11580 = vadd.f32 %v11491, %v11579
        %v11581 = vpop.f32.mrf.mxu0
        %v11582 = vadd.f32 %v11493, %v11581
        %11583 = vmatmul.bf16.gmra.mxu0 %v10867
        %v11584 = vpop.f32.mrf.mxu0
        %v11585 = vadd.f32 %v11496, %v11584
        %v11586 = vpop.f32.mrf.mxu0
        %v11587 = vadd.f32 %v11498, %v11586
        %11588 = vmatmul.bf16.gmra.mxu0 %v10875
        %v11589 = vpop.f32.mrf.mxu0
        %v11590 = vadd.f32 %v11501, %v11589
        %v11591 = vpop.f32.mrf.mxu0
        %v11592 = vadd.f32 %v11503, %v11591
        %11593 = vmatmul.bf16.gmra.mxu0 %v10883
        %v11594 = vpop.f32.mrf.mxu0
        %v11595 = vadd.f32 %v11506, %v11594
        %v11596 = vpop.f32.mrf.mxu0
        %v11597 = vadd.f32 %v11508, %v11596
        %11598 = vmatmul.bf16.gmra.mxu0 %v10891
        %v11599 = vpop.f32.mrf.mxu0
        %v11600 = vadd.f32 %v11511, %v11599
        %v11601 = vpop.f32.mrf.mxu0
        %v11602 = vadd.f32 %v11513, %v11601
        %11603 = vmatmul.bf16.gmra.mxu0 %v10899
        %v11604 = vpop.f32.mrf.mxu0
        %v11605 = vadd.f32 %v11516, %v11604
        %v11606 = vpop.f32.mrf.mxu0
        %v11607 = vadd.f32 %v11518, %v11606
        %11608 = vmatmul.bf16.gmra.mxu0 %v10907
        %v11609 = vpop.f32.mrf.mxu0
        %v11610 = vadd.f32 %v11521, %v11609
        %v11611 = vpop.f32.mrf.mxu0
        %v11612 = vadd.f32 %v11523, %v11611
        %11613 = vmatmul.bf16.gmra.mxu0 %v10915
        %v11614 = vpop.f32.mrf.mxu0
        %v11615 = vadd.f32 %v11526, %v11614
        %v11616 = vpop.f32.mrf.mxu0
        %v11617 = vadd.f32 %v11528, %v11616
        %11618 = vmatmul.bf16.gmra.mxu0 %v10923
        %v11619 = vpop.f32.mrf.mxu0
        %v11620 = vadd.f32 %v11531, %v11619
        %v11621 = vpop.f32.mrf.mxu0
        %v11622 = vadd.f32 %v11533, %v11621
        %11623 = vdwg.mxu0
        %11624 = vmatpush.bf16.msra.mxu0 %v11341
        %11625 = vmatpush.bf16.msra.mxu0 %v11340
        %11626 = vmatpush.bf16.msra.mxu0 %v11339
        %11627 = vmatpush.bf16.msra.mxu0 %v11338
        %11628 = vmatpush.bf16.msra.mxu0 %v11337
        %11629 = vmatpush.bf16.msra.mxu0 %v11336
        %11630 = vmatpush.bf16.msra.mxu0 %v11335
        %11631 = vmatpush.bf16.msra.mxu0 %v11334
        %11632 = vmatmul.bf16.gmra.mxu0 %v10804
        %v11633 = vpop.f32.mrf.mxu0
        %v11634 = vadd.f32 %v11545, %v11633
        %v11635 = vpop.f32.mrf.mxu0
        %v11636 = vadd.f32 %v11547, %v11635
        %11637 = vmatmul.bf16.gmra.mxu0 %v10812
        %v11638 = vpop.f32.mrf.mxu0
        %v11639 = vadd.f32 %v11550, %v11638
        %v11640 = vpop.f32.mrf.mxu0
        %v11641 = vadd.f32 %v11552, %v11640
        %11642 = vmatmul.bf16.gmra.mxu0 %v10820
        %v11643 = vpop.f32.mrf.mxu0
        %v11644 = vadd.f32 %v11555, %v11643
        %v11645 = vpop.f32.mrf.mxu0
        %v11646 = vadd.f32 %v11557, %v11645
        %11647 = vmatmul.bf16.gmra.mxu0 %v10828
        %v11648 = vpop.f32.mrf.mxu0
        %v11649 = vadd.f32 %v11560, %v11648
        %v11650 = vpop.f32.mrf.mxu0
        %v11651 = vadd.f32 %v11562, %v11650
        %11652 = vmatmul.bf16.gmra.mxu0 %v10836
        %v11653 = vpop.f32.mrf.mxu0
        %v11654 = vadd.f32 %v11565, %v11653
        %v11655 = vpop.f32.mrf.mxu0
        %v11656 = vadd.f32 %v11567, %v11655
        %11657 = vmatmul.bf16.gmra.mxu0 %v10844
        %v11658 = vpop.f32.mrf.mxu0
        %v11659 = vadd.f32 %v11570, %v11658
        %v11660 = vpop.f32.mrf.mxu0
        %v11661 = vadd.f32 %v11572, %v11660
        %11662 = vmatmul.bf16.gmra.mxu0 %v10852
        %v11663 = vpop.f32.mrf.mxu0
        %v11664 = vadd.f32 %v11575, %v11663
        %v11665 = vpop.f32.mrf.mxu0
        %v11666 = vadd.f32 %v11577, %v11665
        %11667 = vmatmul.bf16.gmra.mxu0 %v10860
        %v11668 = vpop.f32.mrf.mxu0
        %v11669 = vadd.f32 %v11580, %v11668
        %v11670 = vpop.f32.mrf.mxu0
        %v11671 = vadd.f32 %v11582, %v11670
        %11672 = vmatmul.bf16.gmra.mxu0 %v10868
        %v11673 = vpop.f32.mrf.mxu0
        %v11674 = vadd.f32 %v11585, %v11673
        %v11675 = vpop.f32.mrf.mxu0
        %v11676 = vadd.f32 %v11587, %v11675
        %11677 = vmatmul.bf16.gmra.mxu0 %v10876
        %v11678 = vpop.f32.mrf.mxu0
        %v11679 = vadd.f32 %v11590, %v11678
        %v11680 = vpop.f32.mrf.mxu0
        %v11681 = vadd.f32 %v11592, %v11680
        %11682 = vmatmul.bf16.gmra.mxu0 %v10884
        %v11683 = vpop.f32.mrf.mxu0
        %v11684 = vadd.f32 %v11595, %v11683
        %v11685 = vpop.f32.mrf.mxu0
        %v11686 = vadd.f32 %v11597, %v11685
        %11687 = vmatmul.bf16.gmra.mxu0 %v10892
        %v11688 = vpop.f32.mrf.mxu0
        %v11689 = vadd.f32 %v11600, %v11688
        %v11690 = vpop.f32.mrf.mxu0
        %v11691 = vadd.f32 %v11602, %v11690
        %11692 = vmatmul.bf16.gmra.mxu0 %v10900
        %v11693 = vpop.f32.mrf.mxu0
        %v11694 = vadd.f32 %v11605, %v11693
        %v11695 = vpop.f32.mrf.mxu0
        %v11696 = vadd.f32 %v11607, %v11695
        %11697 = vmatmul.bf16.gmra.mxu0 %v10908
        %v11698 = vpop.f32.mrf.mxu0
        %v11699 = vadd.f32 %v11610, %v11698
        %v11700 = vpop.f32.mrf.mxu0
        %v11701 = vadd.f32 %v11612, %v11700
        %11702 = vmatmul.bf16.gmra.mxu0 %v10916
        %v11703 = vpop.f32.mrf.mxu0
        %v11704 = vadd.f32 %v11615, %v11703
        %v11705 = vpop.f32.mrf.mxu0
        %v11706 = vadd.f32 %v11617, %v11705
        %11707 = vmatmul.bf16.gmra.mxu0 %v10924
        %v11708 = vpop.f32.mrf.mxu0
        %v11709 = vadd.f32 %v11620, %v11708
        %v11710 = vpop.f32.mrf.mxu0
        %v11711 = vadd.f32 %v11622, %v11710
        %11712 = vdwg.mxu0
        %11713 = vmatpush.bf16.msra.mxu0 %v11349
        %11714 = vmatpush.bf16.msra.mxu0 %v11348
        %11715 = vmatpush.bf16.msra.mxu0 %v11347
        %11716 = vmatpush.bf16.msra.mxu0 %v11346
        %11717 = vmatpush.bf16.msra.mxu0 %v11345
        %11718 = vmatpush.bf16.msra.mxu0 %v11344
        %11719 = vmatpush.bf16.msra.mxu0 %v11343
        %11720 = vmatpush.bf16.msra.mxu0 %v11342
        %11721 = vmatmul.bf16.gmra.mxu0 %v10805
        %v11722 = vpop.f32.mrf.mxu0
        %v11723 = vadd.f32 %v11634, %v11722
        %v11724 = vpop.f32.mrf.mxu0
        %v11725 = vadd.f32 %v11636, %v11724
        %11726 = vmatmul.bf16.gmra.mxu0 %v10813
        %v11727 = vpop.f32.mrf.mxu0
        %v11728 = vadd.f32 %v11639, %v11727
        %v11729 = vpop.f32.mrf.mxu0
        %v11730 = vadd.f32 %v11641, %v11729
        %11731 = vmatmul.bf16.gmra.mxu0 %v10821
        %v11732 = vpop.f32.mrf.mxu0
        %v11733 = vadd.f32 %v11644, %v11732
        %v11734 = vpop.f32.mrf.mxu0
        %v11735 = vadd.f32 %v11646, %v11734
        %11736 = vmatmul.bf16.gmra.mxu0 %v10829
        %v11737 = vpop.f32.mrf.mxu0
        %v11738 = vadd.f32 %v11649, %v11737
        %v11739 = vpop.f32.mrf.mxu0
        %v11740 = vadd.f32 %v11651, %v11739
        %11741 = vmatmul.bf16.gmra.mxu0 %v10837
        %v11742 = vpop.f32.mrf.mxu0
        %v11743 = vadd.f32 %v11654, %v11742
        %v11744 = vpop.f32.mrf.mxu0
        %v11745 = vadd.f32 %v11656, %v11744
        %11746 = vmatmul.bf16.gmra.mxu0 %v10845
        %v11747 = vpop.f32.mrf.mxu0
        %v11748 = vadd.f32 %v11659, %v11747
        %v11749 = vpop.f32.mrf.mxu0
        %v11750 = vadd.f32 %v11661, %v11749
        %11751 = vmatmul.bf16.gmra.mxu0 %v10853
        %v11752 = vpop.f32.mrf.mxu0
        %v11753 = vadd.f32 %v11664, %v11752
        %v11754 = vpop.f32.mrf.mxu0
        %v11755 = vadd.f32 %v11666, %v11754
        %11756 = vmatmul.bf16.gmra.mxu0 %v10861
        %v11757 = vpop.f32.mrf.mxu0
        %v11758 = vadd.f32 %v11669, %v11757
        %v11759 = vpop.f32.mrf.mxu0
        %v11760 = vadd.f32 %v11671, %v11759
        %11761 = vmatmul.bf16.gmra.mxu0 %v10869
        %v11762 = vpop.f32.mrf.mxu0
        %v11763 = vadd.f32 %v11674, %v11762
        %v11764 = vpop.f32.mrf.mxu0
        %v11765 = vadd.f32 %v11676, %v11764
        %11766 = vmatmul.bf16.gmra.mxu0 %v10877
        %v11767 = vpop.f32.mrf.mxu0
        %v11768 = vadd.f32 %v11679, %v11767
        %v11769 = vpop.f32.mrf.mxu0
        %v11770 = vadd.f32 %v11681, %v11769
        %11771 = vmatmul.bf16.gmra.mxu0 %v10885
        %v11772 = vpop.f32.mrf.mxu0
        %v11773 = vadd.f32 %v11684, %v11772
        %v11774 = vpop.f32.mrf.mxu0
        %v11775 = vadd.f32 %v11686, %v11774
        %11776 = vmatmul.bf16.gmra.mxu0 %v10893
        %v11777 = vpop.f32.mrf.mxu0
        %v11778 = vadd.f32 %v11689, %v11777
        %v11779 = vpop.f32.mrf.mxu0
        %v11780 = vadd.f32 %v11691, %v11779
        %11781 = vmatmul.bf16.gmra.mxu0 %v10901
        %v11782 = vpop.f32.mrf.mxu0
        %v11783 = vadd.f32 %v11694, %v11782
        %v11784 = vpop.f32.mrf.mxu0
        %v11785 = vadd.f32 %v11696, %v11784
        %11786 = vmatmul.bf16.gmra.mxu0 %v10909
        %v11787 = vpop.f32.mrf.mxu0
        %v11788 = vadd.f32 %v11699, %v11787
        %v11789 = vpop.f32.mrf.mxu0
        %v11790 = vadd.f32 %v11701, %v11789
        %11791 = vmatmul.bf16.gmra.mxu0 %v10917
        %v11792 = vpop.f32.mrf.mxu0
        %v11793 = vadd.f32 %v11704, %v11792
        %v11794 = vpop.f32.mrf.mxu0
        %v11795 = vadd.f32 %v11706, %v11794
        %11796 = vmatmul.bf16.gmra.mxu0 %v10925
        %v11797 = vpop.f32.mrf.mxu0
        %v11798 = vadd.f32 %v11709, %v11797
        %v11799 = vpop.f32.mrf.mxu0
        %v11800 = vadd.f32 %v11711, %v11799
        %11801 = vdwg.mxu0
        %11802 = vmatpush.bf16.msra.mxu0 %v11357
        %11803 = vmatpush.bf16.msra.mxu0 %v11356
        %11804 = vmatpush.bf16.msra.mxu0 %v11355
        %11805 = vmatpush.bf16.msra.mxu0 %v11354
        %11806 = vmatpush.bf16.msra.mxu0 %v11353
        %11807 = vmatpush.bf16.msra.mxu0 %v11352
        %11808 = vmatpush.bf16.msra.mxu0 %v11351
        %11809 = vmatpush.bf16.msra.mxu0 %v11350
        %11810 = vmatmul.bf16.gmra.mxu0 %v10806
        %v11811 = vpop.f32.mrf.mxu0
        %v11812 = vadd.f32 %v11723, %v11811
        %v11813 = vpop.f32.mrf.mxu0
        %v11814 = vadd.f32 %v11725, %v11813
        %11815 = vmatmul.bf16.gmra.mxu0 %v10814
        %v11816 = vpop.f32.mrf.mxu0
        %v11817 = vadd.f32 %v11728, %v11816
        %v11818 = vpop.f32.mrf.mxu0
        %v11819 = vadd.f32 %v11730, %v11818
        %11820 = vmatmul.bf16.gmra.mxu0 %v10822
        %v11821 = vpop.f32.mrf.mxu0
        %v11822 = vadd.f32 %v11733, %v11821
        %v11823 = vpop.f32.mrf.mxu0
        %v11824 = vadd.f32 %v11735, %v11823
        %11825 = vmatmul.bf16.gmra.mxu0 %v10830
        %v11826 = vpop.f32.mrf.mxu0
        %v11827 = vadd.f32 %v11738, %v11826
        %v11828 = vpop.f32.mrf.mxu0
        %v11829 = vadd.f32 %v11740, %v11828
        %11830 = vmatmul.bf16.gmra.mxu0 %v10838
        %v11831 = vpop.f32.mrf.mxu0
        %v11832 = vadd.f32 %v11743, %v11831
        %v11833 = vpop.f32.mrf.mxu0
        %v11834 = vadd.f32 %v11745, %v11833
        %11835 = vmatmul.bf16.gmra.mxu0 %v10846
        %v11836 = vpop.f32.mrf.mxu0
        %v11837 = vadd.f32 %v11748, %v11836
        %v11838 = vpop.f32.mrf.mxu0
        %v11839 = vadd.f32 %v11750, %v11838
        %11840 = vmatmul.bf16.gmra.mxu0 %v10854
        %v11841 = vpop.f32.mrf.mxu0
        %v11842 = vadd.f32 %v11753, %v11841
        %v11843 = vpop.f32.mrf.mxu0
        %v11844 = vadd.f32 %v11755, %v11843
        %11845 = vmatmul.bf16.gmra.mxu0 %v10862
        %v11846 = vpop.f32.mrf.mxu0
        %v11847 = vadd.f32 %v11758, %v11846
        %v11848 = vpop.f32.mrf.mxu0
        %v11849 = vadd.f32 %v11760, %v11848
        %11850 = vmatmul.bf16.gmra.mxu0 %v10870
        %v11851 = vpop.f32.mrf.mxu0
        %v11852 = vadd.f32 %v11763, %v11851
        %v11853 = vpop.f32.mrf.mxu0
        %v11854 = vadd.f32 %v11765, %v11853
        %11855 = vmatmul.bf16.gmra.mxu0 %v10878
        %v11856 = vpop.f32.mrf.mxu0
        %v11857 = vadd.f32 %v11768, %v11856
        %v11858 = vpop.f32.mrf.mxu0
        %v11859 = vadd.f32 %v11770, %v11858
        %11860 = vmatmul.bf16.gmra.mxu0 %v10886
        %v11861 = vpop.f32.mrf.mxu0
        %v11862 = vadd.f32 %v11773, %v11861
        %v11863 = vpop.f32.mrf.mxu0
        %v11864 = vadd.f32 %v11775, %v11863
        %11865 = vmatmul.bf16.gmra.mxu0 %v10894
        %v11866 = vpop.f32.mrf.mxu0
        %v11867 = vadd.f32 %v11778, %v11866
        %v11868 = vpop.f32.mrf.mxu0
        %v11869 = vadd.f32 %v11780, %v11868
        %11870 = vmatmul.bf16.gmra.mxu0 %v10902
        %v11871 = vpop.f32.mrf.mxu0
        %v11872 = vadd.f32 %v11783, %v11871
        %v11873 = vpop.f32.mrf.mxu0
        %v11874 = vadd.f32 %v11785, %v11873
        %11875 = vmatmul.bf16.gmra.mxu0 %v10910
        %v11876 = vpop.f32.mrf.mxu0
        %v11877 = vadd.f32 %v11788, %v11876
        %v11878 = vpop.f32.mrf.mxu0
        %v11879 = vadd.f32 %v11790, %v11878
        %11880 = vmatmul.bf16.gmra.mxu0 %v10918
        %v11881 = vpop.f32.mrf.mxu0
        %v11882 = vadd.f32 %v11793, %v11881
        %v11883 = vpop.f32.mrf.mxu0
        %v11884 = vadd.f32 %v11795, %v11883
        %11885 = vmatmul.bf16.gmra.mxu0 %v10926
        %v11886 = vpop.f32.mrf.mxu0
        %v11887 = vadd.f32 %v11798, %v11886
        %v11888 = vpop.f32.mrf.mxu0
        %v11889 = vadd.f32 %v11800, %v11888
        %11890 = vdwg.mxu0
        %11891 = vmatpush.bf16.msra.mxu0 %v11365
        %11892 = vmatpush.bf16.msra.mxu0 %v11364
        %11893 = vmatpush.bf16.msra.mxu0 %v11363
        %11894 = vmatpush.bf16.msra.mxu0 %v11362
        %11895 = vmatpush.bf16.msra.mxu0 %v11361
        %11896 = vmatpush.bf16.msra.mxu0 %v11360
        %11897 = vmatpush.bf16.msra.mxu0 %v11359
        %11898 = vmatpush.bf16.msra.mxu0 %v11358
        %11899 = vmatmul.bf16.gmra.mxu0 %v10807
        %v11900 = vpop.f32.mrf.mxu0
        %v11901 = vadd.f32 %v11812, %v11900
        %v11902 = vpop.f32.mrf.mxu0
        %v11903 = vadd.f32 %v11814, %v11902
        %11904 = vmatmul.bf16.gmra.mxu0 %v10815
        %v11905 = vpop.f32.mrf.mxu0
        %v11906 = vadd.f32 %v11817, %v11905
        %v11907 = vpop.f32.mrf.mxu0
        %v11908 = vadd.f32 %v11819, %v11907
        %11909 = vmatmul.bf16.gmra.mxu0 %v10823
        %v11910 = vpop.f32.mrf.mxu0
        %v11911 = vadd.f32 %v11822, %v11910
        %v11912 = vpop.f32.mrf.mxu0
        %v11913 = vadd.f32 %v11824, %v11912
        %11914 = vmatmul.bf16.gmra.mxu0 %v10831
        %v11915 = vpop.f32.mrf.mxu0
        %v11916 = vadd.f32 %v11827, %v11915
        %v11917 = vpop.f32.mrf.mxu0
        %v11918 = vadd.f32 %v11829, %v11917
        %11919 = vmatmul.bf16.gmra.mxu0 %v10839
        %v11920 = vpop.f32.mrf.mxu0
        %v11921 = vadd.f32 %v11832, %v11920
        %v11922 = vpop.f32.mrf.mxu0
        %v11923 = vadd.f32 %v11834, %v11922
        %11924 = vmatmul.bf16.gmra.mxu0 %v10847
        %v11925 = vpop.f32.mrf.mxu0
        %v11926 = vadd.f32 %v11837, %v11925
        %v11927 = vpop.f32.mrf.mxu0
        %v11928 = vadd.f32 %v11839, %v11927
        %11929 = vmatmul.bf16.gmra.mxu0 %v10855
        %v11930 = vpop.f32.mrf.mxu0
        %v11931 = vadd.f32 %v11842, %v11930
        %v11932 = vpop.f32.mrf.mxu0
        %v11933 = vadd.f32 %v11844, %v11932
        %11934 = vmatmul.bf16.gmra.mxu0 %v10863
        %v11935 = vpop.f32.mrf.mxu0
        %v11936 = vadd.f32 %v11847, %v11935
        %v11937 = vpop.f32.mrf.mxu0
        %v11938 = vadd.f32 %v11849, %v11937
        %11939 = vmatmul.bf16.gmra.mxu0 %v10871
        %v11940 = vpop.f32.mrf.mxu0
        %v11941 = vadd.f32 %v11852, %v11940
        %v11942 = vpop.f32.mrf.mxu0
        %v11943 = vadd.f32 %v11854, %v11942
        %11944 = vmatmul.bf16.gmra.mxu0 %v10879
        %v11945 = vpop.f32.mrf.mxu0
        %v11946 = vadd.f32 %v11857, %v11945
        %v11947 = vpop.f32.mrf.mxu0
        %v11948 = vadd.f32 %v11859, %v11947
        %11949 = vmatmul.bf16.gmra.mxu0 %v10887
        %v11950 = vpop.f32.mrf.mxu0
        %v11951 = vadd.f32 %v11862, %v11950
        %v11952 = vpop.f32.mrf.mxu0
        %v11953 = vadd.f32 %v11864, %v11952
        %11954 = vmatmul.bf16.gmra.mxu0 %v10895
        %v11955 = vpop.f32.mrf.mxu0
        %v11956 = vadd.f32 %v11867, %v11955
        %v11957 = vpop.f32.mrf.mxu0
        %v11958 = vadd.f32 %v11869, %v11957
        %11959 = vmatmul.bf16.gmra.mxu0 %v10903
        %v11960 = vpop.f32.mrf.mxu0
        %v11961 = vadd.f32 %v11872, %v11960
        %v11962 = vpop.f32.mrf.mxu0
        %v11963 = vadd.f32 %v11874, %v11962
        %11964 = vmatmul.bf16.gmra.mxu0 %v10911
        %v11965 = vpop.f32.mrf.mxu0
        %v11966 = vadd.f32 %v11877, %v11965
        %v11967 = vpop.f32.mrf.mxu0
        %v11968 = vadd.f32 %v11879, %v11967
        %11969 = vmatmul.bf16.gmra.mxu0 %v10919
        %v11970 = vpop.f32.mrf.mxu0
        %v11971 = vadd.f32 %v11882, %v11970
        %v11972 = vpop.f32.mrf.mxu0
        %v11973 = vadd.f32 %v11884, %v11972
        %11974 = vmatmul.bf16.gmra.mxu0 %v10927
        %v11975 = vpop.f32.mrf.mxu0
        %v11976 = vadd.f32 %v11887, %v11975
        %v11977 = vpop.f32.mrf.mxu0
        %v11978 = vadd.f32 %v11889, %v11977
        %11979 = vdwg.mxu0
        %11980 = vmatpush.bf16.msra.mxu0 %v11373
        %11981 = vmatpush.bf16.msra.mxu0 %v11372
        %11982 = vmatpush.bf16.msra.mxu0 %v11371
        %11983 = vmatpush.bf16.msra.mxu0 %v11370
        %11984 = vmatpush.bf16.msra.mxu0 %v11369
        %11985 = vmatpush.bf16.msra.mxu0 %v11368
        %11986 = vmatpush.bf16.msra.mxu0 %v11367
        %11987 = vmatpush.bf16.msra.mxu0 %v11366
        %11988 = vmatmul.bf16.gmra.mxu0 %v10808
        %v11989 = vpop.f32.mrf.mxu0
        %v11990 = vadd.f32 %v11901, %v11989
        %v11991 = vpop.f32.mrf.mxu0
        %v11992 = vadd.f32 %v11903, %v11991
        %11993 = vmatmul.bf16.gmra.mxu0 %v10816
        %v11994 = vpop.f32.mrf.mxu0
        %v11995 = vadd.f32 %v11906, %v11994
        %v11996 = vpop.f32.mrf.mxu0
        %v11997 = vadd.f32 %v11908, %v11996
        %11998 = vmatmul.bf16.gmra.mxu0 %v10824
        %v11999 = vpop.f32.mrf.mxu0
        %v12000 = vadd.f32 %v11911, %v11999
        %v12001 = vpop.f32.mrf.mxu0
        %v12002 = vadd.f32 %v11913, %v12001
        %12003 = vmatmul.bf16.gmra.mxu0 %v10832
        %v12004 = vpop.f32.mrf.mxu0
        %v12005 = vadd.f32 %v11916, %v12004
        %v12006 = vpop.f32.mrf.mxu0
        %v12007 = vadd.f32 %v11918, %v12006
        %12008 = vmatmul.bf16.gmra.mxu0 %v10840
        %v12009 = vpop.f32.mrf.mxu0
        %v12010 = vadd.f32 %v11921, %v12009
        %v12011 = vpop.f32.mrf.mxu0
        %v12012 = vadd.f32 %v11923, %v12011
        %12013 = vmatmul.bf16.gmra.mxu0 %v10848
        %v12014 = vpop.f32.mrf.mxu0
        %v12015 = vadd.f32 %v11926, %v12014
        %v12016 = vpop.f32.mrf.mxu0
        %v12017 = vadd.f32 %v11928, %v12016
        %12018 = vmatmul.bf16.gmra.mxu0 %v10856
        %v12019 = vpop.f32.mrf.mxu0
        %v12020 = vadd.f32 %v11931, %v12019
        %v12021 = vpop.f32.mrf.mxu0
        %v12022 = vadd.f32 %v11933, %v12021
        %12023 = vmatmul.bf16.gmra.mxu0 %v10864
        %v12024 = vpop.f32.mrf.mxu0
        %v12025 = vadd.f32 %v11936, %v12024
        %v12026 = vpop.f32.mrf.mxu0
        %v12027 = vadd.f32 %v11938, %v12026
        %12028 = vmatmul.bf16.gmra.mxu0 %v10872
        %v12029 = vpop.f32.mrf.mxu0
        %v12030 = vadd.f32 %v11941, %v12029
        %v12031 = vpop.f32.mrf.mxu0
        %v12032 = vadd.f32 %v11943, %v12031
        %12033 = vmatmul.bf16.gmra.mxu0 %v10880
        %v12034 = vpop.f32.mrf.mxu0
        %v12035 = vadd.f32 %v11946, %v12034
        %v12036 = vpop.f32.mrf.mxu0
        %v12037 = vadd.f32 %v11948, %v12036
        %12038 = vmatmul.bf16.gmra.mxu0 %v10888
        %v12039 = vpop.f32.mrf.mxu0
        %v12040 = vadd.f32 %v11951, %v12039
        %v12041 = vpop.f32.mrf.mxu0
        %v12042 = vadd.f32 %v11953, %v12041
        %12043 = vmatmul.bf16.gmra.mxu0 %v10896
        %v12044 = vpop.f32.mrf.mxu0
        %v12045 = vadd.f32 %v11956, %v12044
        %v12046 = vpop.f32.mrf.mxu0
        %v12047 = vadd.f32 %v11958, %v12046
        %12048 = vmatmul.bf16.gmra.mxu0 %v10904
        %v12049 = vpop.f32.mrf.mxu0
        %v12050 = vadd.f32 %v11961, %v12049
        %v12051 = vpop.f32.mrf.mxu0
        %v12052 = vadd.f32 %v11963, %v12051
        %12053 = vmatmul.bf16.gmra.mxu0 %v10912
        %v12054 = vpop.f32.mrf.mxu0
        %v12055 = vadd.f32 %v11966, %v12054
        %v12056 = vpop.f32.mrf.mxu0
        %v12057 = vadd.f32 %v11968, %v12056
        %12058 = vmatmul.bf16.gmra.mxu0 %v10920
        %v12059 = vpop.f32.mrf.mxu0
        %v12060 = vadd.f32 %v11971, %v12059
        %v12061 = vpop.f32.mrf.mxu0
        %v12062 = vadd.f32 %v11973, %v12061
        %12063 = vmatmul.bf16.gmra.mxu0 %v10928
        %v12064 = vpop.f32.mrf.mxu0
        %v12065 = vadd.f32 %v11976, %v12064
        %v12066 = vpop.f32.mrf.mxu0
        %v12067 = vadd.f32 %v11978, %v12066
        %12068 = vdwg.mxu0
        %12069 = vmatpush.bf16.msra.mxu0 %v11381
        %12070 = vmatpush.bf16.msra.mxu0 %v11380
        %12071 = vmatpush.bf16.msra.mxu0 %v11379
        %12072 = vmatpush.bf16.msra.mxu0 %v11378
        %12073 = vmatpush.bf16.msra.mxu0 %v11377
        %12074 = vmatpush.bf16.msra.mxu0 %v11376
        %12075 = vmatpush.bf16.msra.mxu0 %v11375
        %12076 = vmatpush.bf16.msra.mxu0 %v11374
        %12077 = vmatmul.bf16.gmra.mxu0 %v10809
        %v12078 = vpop.f32.mrf.mxu0
        %v12079 = vadd.f32 %v11990, %v12078
        %v12080 = vpop.f32.mrf.mxu0
        %v12081 = vadd.f32 %v11992, %v12080
        %12082 = vmatmul.bf16.gmra.mxu0 %v10817
        %v12083 = vpop.f32.mrf.mxu0
        %v12084 = vadd.f32 %v11995, %v12083
        %v12085 = vpop.f32.mrf.mxu0
        %v12086 = vadd.f32 %v11997, %v12085
        %12087 = vmatmul.bf16.gmra.mxu0 %v10825
        %v12088 = vpop.f32.mrf.mxu0
        %v12089 = vadd.f32 %v12000, %v12088
        %v12090 = vpop.f32.mrf.mxu0
        %v12091 = vadd.f32 %v12002, %v12090
        %12092 = vmatmul.bf16.gmra.mxu0 %v10833
        %v12093 = vpop.f32.mrf.mxu0
        %v12094 = vadd.f32 %v12005, %v12093
        %v12095 = vpop.f32.mrf.mxu0
        %v12096 = vadd.f32 %v12007, %v12095
        %12097 = vmatmul.bf16.gmra.mxu0 %v10841
        %v12098 = vpop.f32.mrf.mxu0
        %v12099 = vadd.f32 %v12010, %v12098
        %v12100 = vpop.f32.mrf.mxu0
        %v12101 = vadd.f32 %v12012, %v12100
        %12102 = vmatmul.bf16.gmra.mxu0 %v10849
        %v12103 = vpop.f32.mrf.mxu0
        %v12104 = vadd.f32 %v12015, %v12103
        %v12105 = vpop.f32.mrf.mxu0
        %v12106 = vadd.f32 %v12017, %v12105
        %12107 = vmatmul.bf16.gmra.mxu0 %v10857
        %v12108 = vpop.f32.mrf.mxu0
        %v12109 = vadd.f32 %v12020, %v12108
        %v12110 = vpop.f32.mrf.mxu0
        %v12111 = vadd.f32 %v12022, %v12110
        %12112 = vmatmul.bf16.gmra.mxu0 %v10865
        %v12113 = vpop.f32.mrf.mxu0
        %v12114 = vadd.f32 %v12025, %v12113
        %v12115 = vpop.f32.mrf.mxu0
        %v12116 = vadd.f32 %v12027, %v12115
        %12117 = vmatmul.bf16.gmra.mxu0 %v10873
        %v12118 = vpop.f32.mrf.mxu0
        %v12119 = vadd.f32 %v12030, %v12118
        %v12120 = vpop.f32.mrf.mxu0
        %v12121 = vadd.f32 %v12032, %v12120
        %12122 = vmatmul.bf16.gmra.mxu0 %v10881
        %v12123 = vpop.f32.mrf.mxu0
        %v12124 = vadd.f32 %v12035, %v12123
        %v12125 = vpop.f32.mrf.mxu0
        %v12126 = vadd.f32 %v12037, %v12125
        %12127 = vmatmul.bf16.gmra.mxu0 %v10889
        %v12128 = vpop.f32.mrf.mxu0
        %v12129 = vadd.f32 %v12040, %v12128
        %v12130 = vpop.f32.mrf.mxu0
        %v12131 = vadd.f32 %v12042, %v12130
        %12132 = vmatmul.bf16.gmra.mxu0 %v10897
        %v12133 = vpop.f32.mrf.mxu0
        %v12134 = vadd.f32 %v12045, %v12133
        %v12135 = vpop.f32.mrf.mxu0
        %v12136 = vadd.f32 %v12047, %v12135
        %12137 = vmatmul.bf16.gmra.mxu0 %v10905
        %v12138 = vpop.f32.mrf.mxu0
        %v12139 = vadd.f32 %v12050, %v12138
        %v12140 = vpop.f32.mrf.mxu0
        %v12141 = vadd.f32 %v12052, %v12140
        %12142 = vmatmul.bf16.gmra.mxu0 %v10913
        %v12143 = vpop.f32.mrf.mxu0
        %v12144 = vadd.f32 %v12055, %v12143
        %v12145 = vpop.f32.mrf.mxu0
        %v12146 = vadd.f32 %v12057, %v12145
        %12147 = vmatmul.bf16.gmra.mxu0 %v10921
        %v12148 = vpop.f32.mrf.mxu0
        %v12149 = vadd.f32 %v12060, %v12148
        %v12150 = vpop.f32.mrf.mxu0
        %v12151 = vadd.f32 %v12062, %v12150
        %12152 = vmatmul.bf16.gmra.mxu0 %v10929
        %v12153 = vpop.f32.mrf.mxu0
        %v12154 = vadd.f32 %v12065, %v12153
        %v12155 = vpop.f32.mrf.mxu0
        %v12156 = vadd.f32 %v12067, %v12155
        %12157 = vdwg.mxu0
        %v12158 = vmax.f32 %v12079, 0.0
        %v12159 = vmax.f32 %v12081, 0.0
        %v12160 = vmax.f32 %v12084, 0.0
        %v12161 = vmax.f32 %v12086, 0.0
        %v12162 = vmax.f32 %v12089, 0.0
        %v12163 = vmax.f32 %v12091, 0.0
        %v12164 = vmax.f32 %v12094, 0.0
        %v12165 = vmax.f32 %v12096, 0.0
        %v12166 = vmax.f32 %v12099, 0.0
        %v12167 = vmax.f32 %v12101, 0.0
        %v12168 = vmax.f32 %v12104, 0.0
        %v12169 = vmax.f32 %v12106, 0.0
        %v12170 = vmax.f32 %v12109, 0.0
        %v12171 = vmax.f32 %v12111, 0.0
        %v12172 = vmax.f32 %v12114, 0.0
        %v12173 = vmax.f32 %v12116, 0.0
        %v12174 = vmax.f32 %v12119, 0.0
        %v12175 = vmax.f32 %v12121, 0.0
        %v12176 = vmax.f32 %v12124, 0.0
        %v12177 = vmax.f32 %v12126, 0.0
        %v12178 = vmax.f32 %v12129, 0.0
        %v12179 = vmax.f32 %v12131, 0.0
        %v12180 = vmax.f32 %v12134, 0.0
        %v12181 = vmax.f32 %v12136, 0.0
        %v12182 = vmax.f32 %v12139, 0.0
        %v12183 = vmax.f32 %v12141, 0.0
        %v12184 = vmax.f32 %v12144, 0.0
        %v12185 = vmax.f32 %v12146, 0.0
        %v12186 = vmax.f32 %v12149, 0.0
        %v12187 = vmax.f32 %v12151, 0.0
        %v12188 = vmax.f32 %v12154, 0.0
        %v12189 = vmax.f32 %v12156, 0.0
        %v12190 = vpack.c.bf16 %v12159, %v12158
        %v12191 = vpack.c.bf16 %v12161, %v12160
        %v12192 = vpack.c.bf16 %v12163, %v12162
        %v12193 = vpack.c.bf16 %v12165, %v12164
        %v12194 = vpack.c.bf16 %v12167, %v12166
        %v12195 = vpack.c.bf16 %v12169, %v12168
        %v12196 = vpack.c.bf16 %v12171, %v12170
        %v12197 = vpack.c.bf16 %v12173, %v12172
        %v12198 = vpack.c.bf16 %v12175, %v12174
        %v12199 = vpack.c.bf16 %v12177, %v12176
        %v12200 = vpack.c.bf16 %v12179, %v12178
        %v12201 = vpack.c.bf16 %v12181, %v12180
        %v12202 = vpack.c.bf16 %v12183, %v12182
        %v12203 = vpack.c.bf16 %v12185, %v12184
        %v12204 = vpack.c.bf16 %v12187, %v12186
        %v12205 = vpack.c.bf16 %v12189, %v12188
        %v12206 = vld [vmem:[%s7] sm:$0xf]
        %v12207 = vld [vmem:[%s7 + $0x4] sm:$0xf]
        %v12208 = vld [vmem:[%s7 + $0x8] sm:$0xf]
        %v12209 = vld [vmem:[%s7 + $0xc] sm:$0xf]
        %v12210 = vld [vmem:[%s7 + $0x10] sm:$0xf]
        %v12211 = vld [vmem:[%s7 + $0x14] sm:$0xf]
        %v12212 = vld [vmem:[%s7 + $0x18] sm:$0xf]
        %v12213 = vld [vmem:[%s7 + $0x1c] sm:$0xf]
        %v12214 = vld [vmem:[%s8] sm:$0x1]
        %v12216 = vperm.slane %v12214, 0
        %v12226 = vunpack.c.l.b16 %v12206
        %v12227 = vunpack.c.l.b16 %v12207
        %v12228 = vunpack.c.l.b16 %v12208
        %v12229 = vunpack.c.l.b16 %v12209
        %v12230 = vunpack.c.l.b16 %v12210
        %v12231 = vunpack.c.l.b16 %v12211
        %v12232 = vunpack.c.l.b16 %v12212
        %v12233 = vunpack.c.l.b16 %v12213
        %v12234 = vpack.c.b16 %v12227, %v12226
        %v12235 = vpack.c.b16 %v12229, %v12228
        %v12236 = vpack.c.b16 %v12231, %v12230
        %v12237 = vpack.c.b16 %v12233, %v12232
        %vm12242 = vcmask 523264
        %v12244 = vsel %vm12242, %v12190, 0
        %v12247 = vsel %vm12242, %v12191, 0
        %v12250 = vsel %vm12242, %v12192, 0
        %v12253 = vsel %vm12242, %v12193, 0
        %v12256 = vsel %vm12242, %v12194, 0
        %v12259 = vsel %vm12242, %v12195, 0
        %v12262 = vsel %vm12242, %v12196, 0
        %v12265 = vsel %vm12242, %v12197, 0
        %v12268 = vsel %vm12242, %v12198, 0
        %v12271 = vsel %vm12242, %v12199, 0
        %v12274 = vsel %vm12242, %v12200, 0
        %v12277 = vsel %vm12242, %v12201, 0
        %v12280 = vsel %vm12242, %v12202, 0
        %v12283 = vsel %vm12242, %v12203, 0
        %v12286 = vsel %vm12242, %v12204, 0
        %v12289 = vsel %vm12242, %v12205, 0
        %12291 = vmatpush.bf16.msra.mxu0 0
        %12292 = vmatpush.bf16.msra.mxu0 0
        %12293 = vmatpush.bf16.msra.mxu0 0
        %12294 = vmatpush.bf16.msra.mxu0 0
        %12295 = vmatpush.bf16.msra.mxu0 %v12237
        %12296 = vmatpush.bf16.msra.mxu0 %v12236
        %12297 = vmatpush.bf16.msra.mxu0 %v12235
        %12298 = vmatpush.bf16.msra.mxu0 %v12234
        %12299 = vmatmul.bf16.gmra.mxu0 %v12244
        %v12300 = vpop.f32.mrf.mxu0
        %v12301 = vadd.f32 %v12216, %v12300
        %v12302 = vpop.f32.mrf.mxu0
        %v12303 = vadd.f32 %v12216, %v12302
        %12304 = vmatmul.bf16.gmra.mxu0 %v12247
        %v12305 = vpop.f32.mrf.mxu0
        %v12306 = vadd.f32 %v12216, %v12305
        %v12307 = vpop.f32.mrf.mxu0
        %v12308 = vadd.f32 %v12216, %v12307
        %12309 = vmatmul.bf16.gmra.mxu0 %v12250
        %v12310 = vpop.f32.mrf.mxu0
        %v12311 = vadd.f32 %v12216, %v12310
        %v12312 = vpop.f32.mrf.mxu0
        %v12313 = vadd.f32 %v12216, %v12312
        %12314 = vmatmul.bf16.gmra.mxu0 %v12253
        %v12315 = vpop.f32.mrf.mxu0
        %v12316 = vadd.f32 %v12216, %v12315
        %v12317 = vpop.f32.mrf.mxu0
        %v12318 = vadd.f32 %v12216, %v12317
        %12319 = vmatmul.bf16.gmra.mxu0 %v12256
        %v12320 = vpop.f32.mrf.mxu0
        %v12321 = vadd.f32 %v12216, %v12320
        %v12322 = vpop.f32.mrf.mxu0
        %v12323 = vadd.f32 %v12216, %v12322
        %12324 = vmatmul.bf16.gmra.mxu0 %v12259
        %v12325 = vpop.f32.mrf.mxu0
        %v12326 = vadd.f32 %v12216, %v12325
        %v12327 = vpop.f32.mrf.mxu0
        %v12328 = vadd.f32 %v12216, %v12327
        %12329 = vmatmul.bf16.gmra.mxu0 %v12262
        %v12330 = vpop.f32.mrf.mxu0
        %v12331 = vadd.f32 %v12216, %v12330
        %v12332 = vpop.f32.mrf.mxu0
        %v12333 = vadd.f32 %v12216, %v12332
        %12334 = vmatmul.bf16.gmra.mxu0 %v12265
        %v12335 = vpop.f32.mrf.mxu0
        %v12336 = vadd.f32 %v12216, %v12335
        %v12337 = vpop.f32.mrf.mxu0
        %v12338 = vadd.f32 %v12216, %v12337
        %12339 = vmatmul.bf16.gmra.mxu0 %v12268
        %v12340 = vpop.f32.mrf.mxu0
        %v12341 = vadd.f32 %v12216, %v12340
        %v12342 = vpop.f32.mrf.mxu0
        %v12343 = vadd.f32 %v12216, %v12342
        %12344 = vmatmul.bf16.gmra.mxu0 %v12271
        %v12345 = vpop.f32.mrf.mxu0
        %v12346 = vadd.f32 %v12216, %v12345
        %v12347 = vpop.f32.mrf.mxu0
        %v12348 = vadd.f32 %v12216, %v12347
        %12349 = vmatmul.bf16.gmra.mxu0 %v12274
        %v12350 = vpop.f32.mrf.mxu0
        %v12351 = vadd.f32 %v12216, %v12350
        %v12352 = vpop.f32.mrf.mxu0
        %v12353 = vadd.f32 %v12216, %v12352
        %12354 = vmatmul.bf16.gmra.mxu0 %v12277
        %v12355 = vpop.f32.mrf.mxu0
        %v12356 = vadd.f32 %v12216, %v12355
        %v12357 = vpop.f32.mrf.mxu0
        %v12358 = vadd.f32 %v12216, %v12357
        %12359 = vmatmul.bf16.gmra.mxu0 %v12280
        %v12360 = vpop.f32.mrf.mxu0
        %v12361 = vadd.f32 %v12216, %v12360
        %v12362 = vpop.f32.mrf.mxu0
        %v12363 = vadd.f32 %v12216, %v12362
        %12364 = vmatmul.bf16.gmra.mxu0 %v12283
        %v12365 = vpop.f32.mrf.mxu0
        %v12366 = vadd.f32 %v12216, %v12365
        %v12367 = vpop.f32.mrf.mxu0
        %v12368 = vadd.f32 %v12216, %v12367
        %12369 = vmatmul.bf16.gmra.mxu0 %v12286
        %v12370 = vpop.f32.mrf.mxu0
        %v12371 = vadd.f32 %v12216, %v12370
        %v12372 = vpop.f32.mrf.mxu0
        %v12373 = vadd.f32 %v12216, %v12372
        %12374 = vmatmul.bf16.gmra.mxu0 %v12289
        %v12375 = vpop.f32.mrf.mxu0
        %v12376 = vadd.f32 %v12216, %v12375
        %v12377 = vpop.f32.mrf.mxu0
        %v12378 = vadd.f32 %v12216, %v12377
        %12379 = vdwg.mxu0
        %v12380 = vmax.f32 %v12301, 0.0
        %v12381 = vmax.f32 %v12303, 0.0
        %v12382 = vmax.f32 %v12306, 0.0
        %v12383 = vmax.f32 %v12308, 0.0
        %v12384 = vmax.f32 %v12311, 0.0
        %v12385 = vmax.f32 %v12313, 0.0
        %v12386 = vmax.f32 %v12316, 0.0
        %v12387 = vmax.f32 %v12318, 0.0
        %v12388 = vmax.f32 %v12321, 0.0
        %v12389 = vmax.f32 %v12323, 0.0
        %v12390 = vmax.f32 %v12326, 0.0
        %v12391 = vmax.f32 %v12328, 0.0
        %v12392 = vmax.f32 %v12331, 0.0
        %v12393 = vmax.f32 %v12333, 0.0
        %v12394 = vmax.f32 %v12336, 0.0
        %v12395 = vmax.f32 %v12338, 0.0
        %v12396 = vmax.f32 %v12341, 0.0
        %v12397 = vmax.f32 %v12343, 0.0
        %v12398 = vmax.f32 %v12346, 0.0
        %v12399 = vmax.f32 %v12348, 0.0
        %v12400 = vmax.f32 %v12351, 0.0
        %v12401 = vmax.f32 %v12353, 0.0
        %v12402 = vmax.f32 %v12356, 0.0
        %v12403 = vmax.f32 %v12358, 0.0
        %v12404 = vmax.f32 %v12361, 0.0
        %v12405 = vmax.f32 %v12363, 0.0
        %v12406 = vmax.f32 %v12366, 0.0
        %v12407 = vmax.f32 %v12368, 0.0
        %v12408 = vmax.f32 %v12371, 0.0
        %v12409 = vmax.f32 %v12373, 0.0
        %v12410 = vmax.f32 %v12376, 0.0
        %v12411 = vmax.f32 %v12378, 0.0
        %v12412 = vpack.c.bf16 %v12381, %v12380
        %v12413 = vpack.c.bf16 %v12383, %v12382
        %v12414 = vpack.c.bf16 %v12385, %v12384
        %v12415 = vpack.c.bf16 %v12387, %v12386
        %v12416 = vpack.c.bf16 %v12389, %v12388
        %v12417 = vpack.c.bf16 %v12391, %v12390
        %v12418 = vpack.c.bf16 %v12393, %v12392
        %v12419 = vpack.c.bf16 %v12395, %v12394
        %v12420 = vpack.c.bf16 %v12397, %v12396
        %v12421 = vpack.c.bf16 %v12399, %v12398
        %v12422 = vpack.c.bf16 %v12401, %v12400
        %v12423 = vpack.c.bf16 %v12403, %v12402
        %v12424 = vpack.c.bf16 %v12405, %v12404
        %v12425 = vpack.c.bf16 %v12407, %v12406
        %v12426 = vpack.c.bf16 %v12409, %v12408
        %v12427 = vpack.c.bf16 %v12411, %v12410
        %v12428 = vld [vmem:[%s9] sm:$0xf]
        %v12429 = vld [vmem:[%s9 + $0x4] sm:$0xf]
        %v12430 = vld [vmem:[%s9 + $0x8] sm:$0xf]
        %v12431 = vld [vmem:[%s9 + $0xc] sm:$0xf]
        %v12432 = vld [vmem:[%s9 + $0x10] sm:$0xf]
        %v12433 = vld [vmem:[%s9 + $0x14] sm:$0xf]
        %v12434 = vld [vmem:[%s9 + $0x18] sm:$0xf]
        %v12435 = vld [vmem:[%s9 + $0x1c] sm:$0xf]
        %v12436 = vld [vmem:[%s10] sm:$0x1]
        %v12438 = vperm.slane %v12436, 0
        %v12448 = vunpack.c.l.b16 %v12428
        %v12449 = vunpack.c.l.b16 %v12429
        %v12450 = vunpack.c.l.b16 %v12430
        %v12451 = vunpack.c.l.b16 %v12431
        %v12452 = vunpack.c.l.b16 %v12432
        %v12453 = vunpack.c.l.b16 %v12433
        %v12454 = vunpack.c.l.b16 %v12434
        %v12455 = vunpack.c.l.b16 %v12435
        %v12456 = vpack.c.b16 %v12449, %v12448
        %v12457 = vpack.c.b16 %v12451, %v12450
        %v12458 = vpack.c.b16 %v12453, %v12452
        %v12459 = vpack.c.b16 %v12455, %v12454
        %v12465 = vsel %vm12242, %v12412, 0
        %v12468 = vsel %vm12242, %v12413, 0
        %v12471 = vsel %vm12242, %v12414, 0
        %v12474 = vsel %vm12242, %v12415, 0
        %v12477 = vsel %vm12242, %v12416, 0
        %v12480 = vsel %vm12242, %v12417, 0
        %v12483 = vsel %vm12242, %v12418, 0
        %v12486 = vsel %vm12242, %v12419, 0
        %v12489 = vsel %vm12242, %v12420, 0
        %v12492 = vsel %vm12242, %v12421, 0
        %v12495 = vsel %vm12242, %v12422, 0
        %v12498 = vsel %vm12242, %v12423, 0
        %v12501 = vsel %vm12242, %v12424, 0
        %v12504 = vsel %vm12242, %v12425, 0
        %v12507 = vsel %vm12242, %v12426, 0
        %v12510 = vsel %vm12242, %v12427, 0
        %12512 = vmatpush.bf16.msra.mxu0 0
        %12513 = vmatpush.bf16.msra.mxu0 0
        %12514 = vmatpush.bf16.msra.mxu0 0
        %12515 = vmatpush.bf16.msra.mxu0 0
        %12516 = vmatpush.bf16.msra.mxu0 %v12459
        %12517 = vmatpush.bf16.msra.mxu0 %v12458
        %12518 = vmatpush.bf16.msra.mxu0 %v12457
        %12519 = vmatpush.bf16.msra.mxu0 %v12456
        %12520 = vmatmul.bf16.gmra.mxu0 %v12465
        %v12521 = vpop.f32.mrf.mxu0
        %v12522 = vadd.f32 %v12438, %v12521
        %v12523 = vpop.f32.mrf.mxu0
        %v12524 = vadd.f32 %v12438, %v12523
        %12525 = vmatmul.bf16.gmra.mxu0 %v12468
        %v12526 = vpop.f32.mrf.mxu0
        %v12527 = vadd.f32 %v12438, %v12526
        %v12528 = vpop.f32.mrf.mxu0
        %v12529 = vadd.f32 %v12438, %v12528
        %12530 = vmatmul.bf16.gmra.mxu0 %v12471
        %v12531 = vpop.f32.mrf.mxu0
        %v12532 = vadd.f32 %v12438, %v12531
        %v12533 = vpop.f32.mrf.mxu0
        %v12534 = vadd.f32 %v12438, %v12533
        %12535 = vmatmul.bf16.gmra.mxu0 %v12474
        %v12536 = vpop.f32.mrf.mxu0
        %v12537 = vadd.f32 %v12438, %v12536
        %v12538 = vpop.f32.mrf.mxu0
        %v12539 = vadd.f32 %v12438, %v12538
        %12540 = vmatmul.bf16.gmra.mxu0 %v12477
        %v12541 = vpop.f32.mrf.mxu0
        %v12542 = vadd.f32 %v12438, %v12541
        %v12543 = vpop.f32.mrf.mxu0
        %v12544 = vadd.f32 %v12438, %v12543
        %12545 = vmatmul.bf16.gmra.mxu0 %v12480
        %v12546 = vpop.f32.mrf.mxu0
        %v12547 = vadd.f32 %v12438, %v12546
        %v12548 = vpop.f32.mrf.mxu0
        %v12549 = vadd.f32 %v12438, %v12548
        %12550 = vmatmul.bf16.gmra.mxu0 %v12483
        %v12551 = vpop.f32.mrf.mxu0
        %v12552 = vadd.f32 %v12438, %v12551
        %v12553 = vpop.f32.mrf.mxu0
        %v12554 = vadd.f32 %v12438, %v12553
        %12555 = vmatmul.bf16.gmra.mxu0 %v12486
        %v12556 = vpop.f32.mrf.mxu0
        %v12557 = vadd.f32 %v12438, %v12556
        %v12558 = vpop.f32.mrf.mxu0
        %v12559 = vadd.f32 %v12438, %v12558
        %12560 = vmatmul.bf16.gmra.mxu0 %v12489
        %v12561 = vpop.f32.mrf.mxu0
        %v12562 = vadd.f32 %v12438, %v12561
        %v12563 = vpop.f32.mrf.mxu0
        %v12564 = vadd.f32 %v12438, %v12563
        %12565 = vmatmul.bf16.gmra.mxu0 %v12492
        %v12566 = vpop.f32.mrf.mxu0
        %v12567 = vadd.f32 %v12438, %v12566
        %v12568 = vpop.f32.mrf.mxu0
        %v12569 = vadd.f32 %v12438, %v12568
        %12570 = vmatmul.bf16.gmra.mxu0 %v12495
        %v12571 = vpop.f32.mrf.mxu0
        %v12572 = vadd.f32 %v12438, %v12571
        %v12573 = vpop.f32.mrf.mxu0
        %v12574 = vadd.f32 %v12438, %v12573
        %12575 = vmatmul.bf16.gmra.mxu0 %v12498
        %v12576 = vpop.f32.mrf.mxu0
        %v12577 = vadd.f32 %v12438, %v12576
        %v12578 = vpop.f32.mrf.mxu0
        %v12579 = vadd.f32 %v12438, %v12578
        %12580 = vmatmul.bf16.gmra.mxu0 %v12501
        %v12581 = vpop.f32.mrf.mxu0
        %v12582 = vadd.f32 %v12438, %v12581
        %v12583 = vpop.f32.mrf.mxu0
        %v12584 = vadd.f32 %v12438, %v12583
        %12585 = vmatmul.bf16.gmra.mxu0 %v12504
        %v12586 = vpop.f32.mrf.mxu0
        %v12587 = vadd.f32 %v12438, %v12586
        %v12588 = vpop.f32.mrf.mxu0
        %v12589 = vadd.f32 %v12438, %v12588
        %12590 = vmatmul.bf16.gmra.mxu0 %v12507
        %v12591 = vpop.f32.mrf.mxu0
        %v12592 = vadd.f32 %v12438, %v12591
        %v12593 = vpop.f32.mrf.mxu0
        %v12594 = vadd.f32 %v12438, %v12593
        %12595 = vmatmul.bf16.gmra.mxu0 %v12510
        %v12596 = vpop.f32.mrf.mxu0
        %v12597 = vadd.f32 %v12438, %v12596
        %v12598 = vpop.f32.mrf.mxu0
        %v12599 = vadd.f32 %v12438, %v12598
        %12600 = vdwg.mxu0
        %12601 = vst [vmem:[%s380] sm:$0xff] %v12522
        %12602 = vst [vmem:[%s380 + $0x8] sm:$0xff] %v12524
        %12603 = vst [vmem:[%s380 + $0x10] sm:$0xff] %v12527
        %12604 = vst [vmem:[%s380 + $0x18] sm:$0xff] %v12529
        %12605 = vst [vmem:[%s380 + $0x20] sm:$0xff] %v12532
        %12606 = vst [vmem:[%s380 + $0x28] sm:$0xff] %v12534
        %12607 = vst [vmem:[%s380 + $0x30] sm:$0xff] %v12537
        %12608 = vst [vmem:[%s380 + $0x38] sm:$0xff] %v12539
        %12609 = vst [vmem:[%s380 + $0x40] sm:$0xff] %v12542
        %12610 = vst [vmem:[%s380 + $0x48] sm:$0xff] %v12544
        %12611 = vst [vmem:[%s380 + $0x50] sm:$0xff] %v12547
        %12612 = vst [vmem:[%s380 + $0x58] sm:$0xff] %v12549
        %12613 = vst [vmem:[%s380 + $0x60] sm:$0xff] %v12552
        %12614 = vst [vmem:[%s380 + $0x68] sm:$0xff] %v12554
        %12615 = vst [vmem:[%s380 + $0x70] sm:$0xff] %v12557
        %12616 = vst [vmem:[%s380 + $0x78] sm:$0xff] %v12559
        %12617 = vst [vmem:[%s380 + $0x80] sm:$0xff] %v12562
        %12618 = vst [vmem:[%s380 + $0x88] sm:$0xff] %v12564
        %12619 = vst [vmem:[%s380 + $0x90] sm:$0xff] %v12567
        %12620 = vst [vmem:[%s380 + $0x98] sm:$0xff] %v12569
        %12621 = vst [vmem:[%s380 + $0xa0] sm:$0xff] %v12572
        %12622 = vst [vmem:[%s380 + $0xa8] sm:$0xff] %v12574
        %12623 = vst [vmem:[%s380 + $0xb0] sm:$0xff] %v12577
        %12624 = vst [vmem:[%s380 + $0xb8] sm:$0xff] %v12579
        %12625 = vst [vmem:[%s380 + $0xc0] sm:$0xff] %v12582
        %12626 = vst [vmem:[%s380 + $0xc8] sm:$0xff] %v12584
        %12627 = vst [vmem:[%s380 + $0xd0] sm:$0xff] %v12587
        %12628 = vst [vmem:[%s380 + $0xd8] sm:$0xff] %v12589
        %12629 = vst [vmem:[%s380 + $0xe0] sm:$0xff] %v12592
        %12630 = vst [vmem:[%s380 + $0xe8] sm:$0xff] %v12594
        %12631 = vst [vmem:[%s380 + $0xf0] sm:$0xff] %v12597
        %12632 = vst [vmem:[%s380 + $0xf8] sm:$0xff] %v12599
        %s12633 = sand.u32 %s269, 1
        %s12634 = scalar_lea.sflag [#allocation3], %s12633
        %s12635 = sand.u32 %s269, 1
        %s12636 = smul.addr %s12635, 256
        %s12637 = scalar_lea.vmem [#allocation2], %s12636
        // Predicated region
        $region65: #{_net_forward_impl.1} parent=63 // pred_check
          %p12638 = pneg %p279
        $region66: #{_net_forward_impl.1} parent=63 // pred_check_branch
          %12640 = sbr.rel (%p12638) target = $region68
        $region67: #{_net_forward_impl.1} parent=63 // pred_region
          %s12641 = smul.u32 32, %s25
          %12643 = vsyncadd %s12634, 0
          %s12644 = smul.addr %s12641, 8
          %s12645 = scalar_lea.hbm %s11, %s12644
          %s12646 = sshll.u32 %s12637, 4
          %s12647 = int_to_ptr.vmem [resolvable:$true] %s12646
          %s12648 = sshll.u32 %s12645, 4
          %s12649 = int_to_ptr.hbm [resolvable:$true] %s12648
          %12654 = dma.vmem_to_hbm [thread:$0]  %s12647, 4096, %s12649, %s12634, 128, 128, 8
        $region68: #{_net_forward_impl.1} parent=63 // pred_fallthru
          _
      $region64: #{_net_forward_impl.1} parent=5 // pred_fallthru
        _
      %p12655 = scmp.le.s32.totalorder 2, %s20
      // Predicated region
      $region69: #{_net_forward_impl.1} parent=5 // pred_check
        %p12656 = pneg %p12655
      $region70: #{_net_forward_impl.1} parent=5 // pred_check_branch
        %12658 = sbr.rel (%p12656) target = $region72
      $region71: #{_net_forward_impl.1} parent=5 // pred_region
        %s12659 = ssub.s32 %s20, 2
        // Predicated region
        $region73: #{_net_forward_impl.1} parent=71 // pred_check
          %p12660 = pneg %p285
        $region74: #{_net_forward_impl.1} parent=71 // pred_check_branch
          %12662 = sbr.rel (%p12660) target = $region76
        $region75: #{_net_forward_impl.1} parent=71 // pred_region
          %s12663 = sand.u32 %s270, 1
          %s12664 = scalar_lea.sflag [#allocation3], %s12663
          %s12665 = sand.u32 %s270, 1
          %s12666 = smul.addr %s12665, 256
          %s12667 = scalar_lea.vmem [#allocation2], %s12666
          %12669 = dma.done %s12664, 4096
        $region76: #{_net_forward_impl.1} parent=71 // pred_fallthru
          _
      $region72: #{_net_forward_impl.1} parent=5 // pred_fallthru
        _
    $region6: #{_net_forward_impl.1} parent=1 // loop_footer
      %s24 = sadd.s32 1, %s20
    $region7: #{_net_forward_impl.1} parent=1 // loop_footer_branch
      %19 = sbr.rel target = $region3
    $region8: #{_net_forward_impl.1} parent=1 // loop_exit
      _
    %12670 = vsyncpa [#allocation3], 1
    %s12671 = scalar_lea.sflag [#allocation3], 1
    %12672 = vsyncpa %s12671, 1

</llo_original>
